<compile_context>
chip_gen: v7x
topology: tpu7x:2x2x1
jax: 0.10.0
libtpu: 0.0.40
codegen_flags: <defaults>
</compile_context>

<pallas_src>
import numpy as np

import jax
import jax.numpy as jnp
from jax import lax
from jax.experimental import pallas as pl
from jax.experimental.pallas import tpu as pltpu

# Fixed DCGAN generator geometry (from the PyTorch module).
_H1, _C1 = 7, 64           # after Linear + reshape: (B, 64, 7, 7)
_H2, _C2 = 14, 32          # after deconv1:          (B, 32, 14, 14)
_H3, _C3 = 28, 16          # after deconv2:          (B, 16, 28, 28)
_EPS = 1e-5

_WP1 = _H1 + 2             # padded x extent of layer-1 slab (9)
_WP2 = _H2 + 2             # padded x extent of layer-2 slabs (16)
_L1 = _WP1 * _C1           # 576 lanes: (padded_x, ci) of layer-1 slab
_L2 = _WP2 * _C2           # 512 lanes: (padded_ox1, c1) of layer-2 slabs / deconv-1 N
_N2 = _H3 * _C3            # 448 lanes: (ox2, c2) of deconv-2 outputs
_NO = 4 * _H3              # 112 lanes of the final output slab (4 y-phases x 28)

# deconv-2 y-tap table.  Output block blk = 2*r + py2 holds rows oy2 = 4*m+blk.
# For tap dy2 -> (source phase slab q, half-row offset off): input half-row
# m + off of phase slab xq[q] (padded with one zero row-block on each side).
_TAPS2 = (((1, -1), (0, 0)),    # blk 0: oy2 = 4m
          ((0, 0), (1, 0)),     # blk 1: oy2 = 4m+1
          ((0, 0), (1, 0)),     # blk 2: oy2 = 4m+2
          ((1, 0), (0, 1)))     # blk 3: oy2 = 4m+3


# ----------------------------------------------------------------------------
# The single fused kernel
# ----------------------------------------------------------------------------
def _generator_kernel(x_ref, w1e_ref, b1e_ref, rhs1_ref, rhs2_ref,
                      g1_ref, bt1_ref, g2_ref, bt2_ref,
                      sel1_ref, sel1t_ref, sel2_ref, sel2t_ref, w3e_ref,
                      out_ref,
                      xp1_ref, xq0_ref, xq1_ref):
    f32, bf16 = jnp.float32, jnp.bfloat16
    B = x_ref.shape[0]

    # Zero-fill the padded activation slabs (covers the global pad rows/cols).
    xp1_ref[...] = jnp.zeros(xp1_ref.shape, f32)
    xq0_ref[...] = jnp.zeros(xq0_ref.shape, f32)
    xq1_ref[...] = jnp.zeros(xq1_ref.shape, f32)

    # ---------------- Linear(z -> 7*7*64) + ReLU, written straight into the
    # padded layer-1 slab.  Slab rows = (padded_y, b), lanes = (padded_x, ci);
    # the x-pad lanes carry zero weights/bias so ReLU leaves them zero.
    xb = x_ref[...].astype(bf16)
    for y in range(_H1):
        hy = jnp.dot(xb, w1e_ref[y], preferred_element_type=f32) + b1e_ref[y]
        xp1_ref[(y + 1) * B:(y + 2) * B, :] = jnp.maximum(hy, 0.0)

    # ---------------- deconv1 (64->32, k4 s2 p1): per output-row parity py,
    # two y-tap matmuls on row-shifted sub-views of the padded slab
    # (no im2col, no lhs scratch).
    o1 = []
    for py in range(2):
        acc = None
        for dy in range(2):
            lhs = xp1_ref[(py + dy) * B:(py + dy + _H1) * B, :].astype(bf16)
            t = jnp.dot(lhs, rhs1_ref[py, dy], preferred_element_type=f32)
            acc = t if acc is None else acc + t
        o1.append(acc)                                         # (7B, 512) f32

    # ---------------- BatchNorm2d(32): batch stats (training mode) + ReLU.
    n1 = float(B * _H2 * _H2)
    ls = jnp.sum(o1[0], axis=0, keepdims=True) + jnp.sum(o1[1], axis=0, keepdims=True)
    lq = (jnp.sum(o1[0] * o1[0], axis=0, keepdims=True)
          + jnp.sum(o1[1] * o1[1], axis=0, keepdims=True))
    red = jnp.dot(jnp.concatenate([ls, lq], axis=0), sel1_ref[...],
                  preferred_element_type=f32) * (1.0 / n1)                # (2, 32)
    mean = red[0:1, :]
    var = jnp.maximum(red[1:2, :] - mean * mean, 0.0)
    sc = g1_ref[...] * lax.rsqrt(var + _EPS)
    sh = bt1_ref[...] - mean * sc
    coef = jnp.dot(jnp.concatenate([sc, sh], axis=0), sel1t_ref[...],
                   preferred_element_type=f32)                            # (2, 512)

    # Normalize + ReLU and drop each parity slab into its padded layer-2 slab
    # with ONE full-lane-width bulk store (x-pad lanes are already zero).
    xq = (xq0_ref, xq1_ref)
    for py in range(2):
        a1 = jnp.maximum(o1[py] * coef[0:1, :] + coef[1:2, :], 0.0)
        xq[py][B:(_H1 + 1) * B, :] = a1

    # ---------------- deconv2 (32->16, k4 s2 p1): 4 output y-phase blocks
    # (oy2 = 4*m + blk), each is 2 matmuls on row-shifted phase-slab sub-views.
    o2 = []
    for blk in range(4):
        py2 = blk % 2
        acc = None
        for dy2 in range(2):
            q, off = _TAPS2[blk][dy2]
            lhs = xq[q][(1 + off) * B:(1 + off + _H1) * B, :].astype(bf16)
            t = jnp.dot(lhs, rhs2_ref[py2, dy2], preferred_element_type=f32)
            acc = t if acc is None else acc + t
        o2.append(acc)                                         # (7B, 448) f32

    # ---------------- BatchNorm2d(16) + ReLU + Conv2d(16->1, 1x1) + Tanh.
    n2 = float(B * _H3 * _H3)
    ls = jnp.sum(o2[0], axis=0, keepdims=True)
    lq = jnp.sum(o2[0] * o2[0], axis=0, keepdims=True)
    for blk in range(1, 4):
        ls = ls + jnp.sum(o2[blk], axis=0, keepdims=True)
        lq = lq + jnp.sum(o2[blk] * o2[blk], axis=0, keepdims=True)
    red = jnp.dot(jnp.concatenate([ls, lq], axis=0), sel2_ref[...],
                  preferred_element_type=f32) * (1.0 / n2)                # (2, 16)
    mean = red[0:1, :]
    var = jnp.maximum(red[1:2, :] - mean * mean, 0.0)
    sc = g2_ref[...] * lax.rsqrt(var + _EPS)
    sh = bt2_ref[...] - mean * sc
    coef = jnp.dot(jnp.concatenate([sc, sh], axis=0), sel2t_ref[...],
                   preferred_element_type=f32)                            # (2, 448)

    # 1x1 conv per phase block lands in its own 28-lane window of a single
    # (7B, 112) slab -> one lane-dense bulk store; y interleave happens outside.
    acc = None
    for blk in range(4):
        a2 = jnp.maximum(o2[blk] * coef[0:1, :] + coef[1:2, :], 0.0)
        t = jnp.dot(a2, w3e_ref[blk], preferred_element_type=f32)         # (7B, 112)
        acc = t if acc is None else acc + t
    out_ref[...] = jnp.tanh(acc)


# ----------------------------------------------------------------------------
# One-time host-side weight re-layout (outside jit)
# ----------------------------------------------------------------------------
def _build_deconv_rhs(wt, h_in, pad_out_x):
    """Per-(py, dy) band weight for the k4/s2/p1 transposed conv.

    Returns (2, 2, (h_in+2)*Cin, (2*h_in + 2*pad_out_x)*Cout) with
      rhs[py, dy, (j', ci), (pad_out_x + ox, co)] = W[ci, co, 3-py-2dy, 3-px-2dx]
    for ox = 2*jx + px and padded input column j' = jx + px + dx; zero elsewhere.
    `pad_out_x` adds zero lane-columns on each side of the output x axis so the
    result can be bulk-stored into the next layer's padded slab.
    """
    wt = np.asarray(wt, np.float32)                    # (Cin, Cout, 4, 4) torch layout
    cin, cout = wt.shape[0], wt.shape[1]
    wp, wout = h_in + 2, 2 * h_in
    wlan = wout + 2 * pad_out_x
    rhs = np.zeros((2, 2, wp, cin, wlan, cout), np.float32)
    for py in range(2):
        for dy in range(2):
            ky = 3 - py - 2 * dy
            for ox in range(wout):
                jx, px = ox // 2, ox % 2
                for dx in range(2):
                    jcol = jx + px + dx
                    kx = 3 - px - 2 * dx
                    rhs[py, dy, jcol, :, pad_out_x + ox, :] += wt[:, :, ky, kx]
    return rhs.reshape(2, 2, wp * cin, wlan * cout)


def _bn_selector(wlan, c, pad_x):
    """0/1 matrices mapping (x, c) lanes <-> per-channel c (pad columns masked)."""
    sel = np.zeros((wlan, c, c), np.float32)
    sel[pad_x:wlan - pad_x if pad_x else wlan] = np.eye(c, dtype=np.float32)
    sel = sel.reshape(wlan * c, c)
    return sel, np.ascontiguousarray(sel.T)


def prepare_params(p):
    """Host-side, one-time re-layout of the torch-style parameters."""
    w1 = np.asarray(p["w1"], np.float32)                           # (3136, z)
    z = w1.shape[1]
    # Linear weight -> (y, z, (padded_x, ci)) so each per-y matmul directly emits a
    # full 576-lane padded slab row block (pad lanes carry zero weight/bias).
    w1r = w1.reshape(_C1, _H1, _H1, z).transpose(1, 3, 2, 0)       # (y, z, x, c)
    w1e = np.zeros((_H1, z, _WP1, _C1), np.float32)
    w1e[:, :, 1:1 + _H1, :] = w1r
    w1e = w1e.reshape(_H1, z, _L1)

    b1 = np.asarray(p["b1"], np.float32).reshape(_C1, _H1, _H1).transpose(1, 2, 0)
    b1e = np.zeros((_H1, 1, _WP1, _C1), np.float32)
    b1e[:, 0, 1:1 + _H1, :] = b1
    b1e = b1e.reshape(_H1, 1, _L1)

    sel1, sel1t = _bn_selector(_WP2, _C2, 1)                       # (512, 32), (32, 512)
    sel2, sel2t = _bn_selector(_H3, _C3, 0)                        # (448, 16), (16, 448)

    w3 = np.asarray(p["w3"], np.float32).reshape(_C3)
    w3e = np.zeros((4, _H3, _C3, _NO), np.float32)                 # 1x1 conv, per y-phase lane window
    for blk in range(4):
        for ox in range(_H3):
            w3e[blk, ox, :, blk * _H3 + ox] = w3
    w3e = w3e.reshape(4, _H3 * _C3, _NO)

    return dict(
        w1e=jnp.asarray(w1e, jnp.bfloat16),
        b1e=jnp.asarray(b1e, jnp.float32),
        rhs1=jnp.asarray(_build_deconv_rhs(p["wt1"], _H1, 1), jnp.bfloat16),   # (2,2,576,512)
        rhs2=jnp.asarray(_build_deconv_rhs(p["wt2"], _H2, 0), jnp.bfloat16),   # (2,2,512,448)
        g1=jnp.asarray(np.asarray(p["g1"], np.float32).reshape(1, _C2)),
        bt1=jnp.asarray(np.asarray(p["beta1"], np.float32).reshape(1, _C2)),
        g2=jnp.asarray(np.asarray(p["g2"], np.float32).reshape(1, _C3)),
        bt2=jnp.asarray(np.asarray(p["beta2"], np.float32).reshape(1, _C3)),
        sel1=jnp.asarray(sel1), sel1t=jnp.asarray(sel1t),
        sel2=jnp.asarray(sel2), sel2t=jnp.asarray(sel2t),
        w3e=jnp.asarray(w3e))


# ----------------------------------------------------------------------------
# Forward wrapper (single pallas_call, no grid -> single-buffered VMEM operands)
# ----------------------------------------------------------------------------
def generator_forward(x, prep):
    b = x.shape[0]
    operands = (x, prep["w1e"], prep["b1e"], prep["rhs1"], prep["rhs2"],
                prep["g1"], prep["bt1"], prep["g2"], prep["bt2"],
                prep["sel1"], prep["sel1t"], prep["sel2"], prep["sel2t"],
                prep["w3e"])
    vmem = pl.BlockSpec(memory_space=pltpu.MemorySpace.VMEM)
    out2d = pl.pallas_call(
        _generator_kernel,
        out_shape=jax.ShapeDtypeStruct((_H1 * b, _NO), jnp.float32),
        in_specs=[vmem] * len(operands),
        out_specs=vmem,
        scratch_shapes=[
            pltpu.VMEM(((_H1 + 2) * b, _L1), jnp.float32),   # padded layer-1 slab (9B, 576)
            pltpu.VMEM(((_H1 + 2) * b, _L2), jnp.float32),   # padded layer-2 slab, parity 0
            pltpu.VMEM(((_H1 + 2) * b, _L2), jnp.float32),   # padded layer-2 slab, parity 1
        ],
        compiler_params=pltpu.CompilerParams(vmem_limit_bytes=24 * 1024 * 1024),
    )(*operands)
    # (m, b) rows x (blk, ox) lanes -> (B, 1, 28, 28) with oy = 4*m + blk.
    img = out2d.reshape(_H1, b, 4, _H3).transpose(1, 0, 2, 3).reshape(b, _H3, _H3)
    return img[:, None, :, :]


# ----------------------------------------------------------------------------
# Parameter init (torch-layout) and a pure-JAX reference for validation
# ----------------------------------------------------------------------------
def init_params(key, z):
    ks = jax.random.split(key, 10)
    s = 0.05
    return {
        "w1": jax.random.normal(ks[0], (_H1 * _H1 * _C1, z), jnp.float32) * s,
        "b1": jax.random.normal(ks[1], (_H1 * _H1 * _C1,), jnp.float32) * s,
        "wt1": jax.random.normal(ks[2], (_C1, _C2, 4, 4), jnp.float32) * s,
        "g1": 1.0 + 0.1 * jax.random.normal(ks[3], (_C2,), jnp.float32),
        "beta1": 0.1 * jax.random.normal(ks[4], (_C2,), jnp.float32),
        "wt2": jax.random.normal(ks[5], (_C2, _C3, 4, 4), jnp.float32) * s,
        "g2": 1.0 + 0.1 * jax.random.normal(ks[6], (_C3,), jnp.float32),
        "beta2": 0.1 * jax.random.normal(ks[7], (_C3,), jnp.float32),
        "w3": jax.random.normal(ks[8], (1, _C3, 1, 1), jnp.float32) * s,
    }


def _reference_forward(x, p):
    """Pure-JAX/XLA reference of the PyTorch module (validation only)."""
    hp = lax.Precision.HIGHEST
    h = jnp.maximum(jnp.dot(x, p["w1"].T, precision=hp) + p["b1"], 0.0)
    h = h.reshape(-1, _C1, _H1, _H1)

    def deconv(t, wt):   # ConvTranspose2d(k=4, s=2, p=1, bias=False)
        w = jnp.flip(wt, (2, 3)).transpose(1, 0, 2, 3)             # (Cout, Cin, 4, 4)
        return lax.conv_general_dilated(
            t, w, window_strides=(1, 1), padding=[(2, 2), (2, 2)],
            lhs_dilation=(2, 2), rhs_dilation=(1, 1),
            dimension_numbers=("NCHW", "OIHW", "NCHW"), precision=hp)

    def bn_relu(t, g, b):   # training-mode BN: batch stats, biased var
        m = jnp.mean(t, axis=(0, 2, 3), keepdims=True)
        v = jnp.mean(jnp.square(t - m), axis=(0, 2, 3), keepdims=True)
        return jnp.maximum((t - m) * lax.rsqrt(v + _EPS) * g.reshape(1, -1, 1, 1)
                           + b.reshape(1, -1, 1, 1), 0.0)

    h = bn_relu(deconv(h, p["wt1"]), p["g1"], p["beta1"])
    h = bn_relu(deconv(h, p["wt2"]), p["g2"], p["beta2"])
    y = jnp.einsum("bchw,oc->bohw", h, p["w3"].reshape(1, _C3), precision=hp)
    return jnp.tanh(y)


if __name__ == "__main__":
    Z, B = 64, 2
    key = jax.random.PRNGKey(0)
    k_param, k_x = jax.random.split(key)
    params = init_params(k_param, Z)
    x = jax.random.normal(k_x, (B, Z), jnp.float32)

    prep = prepare_params(params)            # one-time host-side weight re-layout
    fwd = jax.jit(generator_forward)
    out = jax.block_until_ready(fwd(x, prep))

    assert out.shape == (B, 1, _H3, _H3), out.shape
    assert out.dtype == jnp.float32
    assert bool(jnp.all(jnp.isfinite(out)))
    assert bool(jnp.all(jnp.abs(out) <= 1.0))            # tanh range

    ref = _reference_forward(x, params)
    err = float(jnp.max(jnp.abs(out - ref)))
    assert err < 2e-2, f"max abs error vs reference: {err}"
    print("KERNEL_OK")
</pallas_src>

<mosaic_0001>
module attributes {stable_mosaic.version = 11 : i64} {
  func.func @_generator_kernel(%arg0: memref<2x64xf32, #tpu.memory_space<vmem>>, %arg1: memref<7x64x576xbf16, #tpu.memory_space<vmem>>, %arg2: memref<7x1x576xf32, #tpu.memory_space<vmem>>, %arg3: memref<2x2x576x512xbf16, #tpu.memory_space<vmem>>, %arg4: memref<2x2x512x448xbf16, #tpu.memory_space<vmem>>, %arg5: memref<1x32xf32, #tpu.memory_space<vmem>>, %arg6: memref<1x32xf32, #tpu.memory_space<vmem>>, %arg7: memref<1x16xf32, #tpu.memory_space<vmem>>, %arg8: memref<1x16xf32, #tpu.memory_space<vmem>>, %arg9: memref<512x32xf32, #tpu.memory_space<vmem>>, %arg10: memref<32x512xf32, #tpu.memory_space<vmem>>, %arg11: memref<448x16xf32, #tpu.memory_space<vmem>>, %arg12: memref<16x448xf32, #tpu.memory_space<vmem>>, %arg13: memref<4x448x112xf32, #tpu.memory_space<vmem>>, %arg14: memref<14x112xf32, #tpu.memory_space<vmem>>, %arg15: memref<18x576xf32, #tpu.memory_space<vmem>>, %arg16: memref<18x512xf32, #tpu.memory_space<vmem>>, %arg17: memref<18x512xf32, #tpu.memory_space<vmem>>) attributes {dimension_semantics = [], scalar_prefetch = 0 : i64, scratch_operands = 3 : i64, tpu.core_type = #tpu.core_type<tc>} {
    %cst = arith.constant 0.000000e+00 : f32
    %0 = vector.broadcast %cst : f32 to vector<18x576xf32>
    %c0 = arith.constant 0 : index
    %c0_0 = arith.constant 0 : index
    %1 = vector.load %arg15[%c0, %c0_0] : memref<18x576xf32, #tpu.memory_space<vmem>>, vector<18x576xf32>
    tpu.vector_store %arg15[%c0, %c0_0], %0 {strides = array<i32>} : memref<18x576xf32, #tpu.memory_space<vmem>>, vector<18x576xf32>,
    %cst_1 = arith.constant 0.000000e+00 : f32
    %2 = vector.broadcast %cst_1 : f32 to vector<18x512xf32>
    %c0_2 = arith.constant 0 : index
    %c0_3 = arith.constant 0 : index
    %3 = vector.load %arg16[%c0_2, %c0_3] : memref<18x512xf32, #tpu.memory_space<vmem>>, vector<18x512xf32>
    tpu.vector_store %arg16[%c0_2, %c0_3], %2 {strides = array<i32>} : memref<18x512xf32, #tpu.memory_space<vmem>>, vector<18x512xf32>,
    %cst_4 = arith.constant 0.000000e+00 : f32
    %4 = vector.broadcast %cst_4 : f32 to vector<18x512xf32>
    %c0_5 = arith.constant 0 : index
    %c0_6 = arith.constant 0 : index
    %5 = vector.load %arg17[%c0_5, %c0_6] : memref<18x512xf32, #tpu.memory_space<vmem>>, vector<18x512xf32>
    tpu.vector_store %arg17[%c0_5, %c0_6], %4 {strides = array<i32>} : memref<18x512xf32, #tpu.memory_space<vmem>>, vector<18x512xf32>,
    %c0_7 = arith.constant 0 : index
    %c0_8 = arith.constant 0 : index
    %6 = vector.load %arg0[%c0_7, %c0_8] : memref<2x64xf32, #tpu.memory_space<vmem>>, vector<2x64xf32>
    %7 = arith.truncf %6 : vector<2x64xf32> to vector<2x64xbf16>
    %c0_9 = arith.constant 0 : index
    %c0_10 = arith.constant 0 : index
    %c0_11 = arith.constant 0 : index
    %8 = vector.load %arg1[%c0_9, %c0_10, %c0_11] : memref<7x64x576xbf16, #tpu.memory_space<vmem>>, vector<1x64x576xbf16>
    %9 = vector.shape_cast %8 : vector<1x64x576xbf16> to vector<64x576xbf16>
    %cst_12 = arith.constant dense<0.000000e+00> : vector<2x576xf32>
    %10 = tpu.matmul %7, %9, %cst_12 {dimension_numbers = #tpu.dot_dimension_numbers<[1], [0], [0], [1], [0, 0, 1, 1], [], []>} : vector<2x64xbf16>, vector<64x576xbf16>, vector<2x576xf32> -> vector<2x576xf32>
    %c0_13 = arith.constant 0 : index
    %c0_14 = arith.constant 0 : index
    %c0_15 = arith.constant 0 : index
    %11 = vector.load %arg2[%c0_13, %c0_14, %c0_15] : memref<7x1x576xf32, #tpu.memory_space<vmem>>, vector<1x1x576xf32>
    %12 = vector.shape_cast %11 : vector<1x1x576xf32> to vector<1x576xf32>
    %13 = vector.broadcast %12 : vector<1x576xf32> to vector<2x576xf32>
    %14 = arith.addf %10, %13 : vector<2x576xf32>
    %cst_16 = arith.constant 0.000000e+00 : f32
    %15 = vector.broadcast %cst_16 : f32 to vector<2x576xf32>
    %16 = arith.maximumf %14, %15 : vector<2x576xf32>
    %c2 = arith.constant 2 : index
    %c0_17 = arith.constant 0 : index
    %17 = vector.load %arg15[%c2, %c0_17] : memref<18x576xf32, #tpu.memory_space<vmem>>, vector<2x576xf32>
    tpu.vector_store %arg15[%c2, %c0_17], %16 {strides = array<i32>} : memref<18x576xf32, #tpu.memory_space<vmem>>, vector<2x576xf32>,
    %c1 = arith.constant 1 : index
    %c0_18 = arith.constant 0 : index
    %c0_19 = arith.constant 0 : index
    %18 = vector.load %arg1[%c1, %c0_18, %c0_19] : memref<7x64x576xbf16, #tpu.memory_space<vmem>>, vector<1x64x576xbf16>
    %19 = vector.shape_cast %18 : vector<1x64x576xbf16> to vector<64x576xbf16>
    %cst_20 = arith.constant dense<0.000000e+00> : vector<2x576xf32>
    %20 = tpu.matmul %7, %19, %cst_20 {dimension_numbers = #tpu.dot_dimension_numbers<[1], [0], [0], [1], [0, 0, 1, 1], [], []>} : vector<2x64xbf16>, vector<64x576xbf16>, vector<2x576xf32> -> vector<2x576xf32>
    %c1_21 = arith.constant 1 : index
    %c0_22 = arith.constant 0 : index
    %c0_23 = arith.constant 0 : index
    %21 = vector.load %arg2[%c1_21, %c0_22, %c0_23] : memref<7x1x576xf32, #tpu.memory_space<vmem>>, vector<1x1x576xf32>
    %22 = vector.shape_cast %21 : vector<1x1x576xf32> to vector<1x576xf32>
    %23 = vector.broadcast %22 : vector<1x576xf32> to vector<2x576xf32>
    %24 = arith.addf %20, %23 : vector<2x576xf32>
    %cst_24 = arith.constant 0.000000e+00 : f32
    %25 = vector.broadcast %cst_24 : f32 to vector<2x576xf32>
    %26 = arith.maximumf %24, %25 : vector<2x576xf32>
    %c4 = arith.constant 4 : index
    %c0_25 = arith.constant 0 : index
    %27 = vector.load %arg15[%c4, %c0_25] : memref<18x576xf32, #tpu.memory_space<vmem>>, vector<2x576xf32>
    tpu.vector_store %arg15[%c4, %c0_25], %26 {strides = array<i32>} : memref<18x576xf32, #tpu.memory_space<vmem>>, vector<2x576xf32>,
    %c2_26 = arith.constant 2 : index
    %c0_27 = arith.constant 0 : index
    %c0_28 = arith.constant 0 : index
    %28 = vector.load %arg1[%c2_26, %c0_27, %c0_28] : memref<7x64x576xbf16, #tpu.memory_space<vmem>>, vector<1x64x576xbf16>
    %29 = vector.shape_cast %28 : vector<1x64x576xbf16> to vector<64x576xbf16>
    %cst_29 = arith.constant dense<0.000000e+00> : vector<2x576xf32>
    %30 = tpu.matmul %7, %29, %cst_29 {dimension_numbers = #tpu.dot_dimension_numbers<[1], [0], [0], [1], [0, 0, 1, 1], [], []>} : vector<2x64xbf16>, vector<64x576xbf16>, vector<2x576xf32> -> vector<2x576xf32>
    %c2_30 = arith.constant 2 : index
    %c0_31 = arith.constant 0 : index
    %c0_32 = arith.constant 0 : index
    %31 = vector.load %arg2[%c2_30, %c0_31, %c0_32] : memref<7x1x576xf32, #tpu.memory_space<vmem>>, vector<1x1x576xf32>
    %32 = vector.shape_cast %31 : vector<1x1x576xf32> to vector<1x576xf32>
    %33 = vector.broadcast %32 : vector<1x576xf32> to vector<2x576xf32>
    %34 = arith.addf %30, %33 : vector<2x576xf32>
    %cst_33 = arith.constant 0.000000e+00 : f32
    %35 = vector.broadcast %cst_33 : f32 to vector<2x576xf32>
    %36 = arith.maximumf %34, %35 : vector<2x576xf32>
    %c6 = arith.constant 6 : index
    %c0_34 = arith.constant 0 : index
    %37 = vector.load %arg15[%c6, %c0_34] : memref<18x576xf32, #tpu.memory_space<vmem>>, vector<2x576xf32>
    tpu.vector_store %arg15[%c6, %c0_34], %36 {strides = array<i32>} : memref<18x576xf32, #tpu.memory_space<vmem>>, vector<2x576xf32>,
    %c3 = arith.constant 3 : index
    %c0_35 = arith.constant 0 : index
    %c0_36 = arith.constant 0 : index
    %38 = vector.load %arg1[%c3, %c0_35, %c0_36] : memref<7x64x576xbf16, #tpu.memory_space<vmem>>, vector<1x64x576xbf16>
    %39 = vector.shape_cast %38 : vector<1x64x576xbf16> to vector<64x576xbf16>
    %cst_37 = arith.constant dense<0.000000e+00> : vector<2x576xf32>
    %40 = tpu.matmul %7, %39, %cst_37 {dimension_numbers = #tpu.dot_dimension_numbers<[1], [0], [0], [1], [0, 0, 1, 1], [], []>} : vector<2x64xbf16>, vector<64x576xbf16>, vector<2x576xf32> -> vector<2x576xf32>
    %c3_38 = arith.constant 3 : index
    %c0_39 = arith.constant 0 : index
    %c0_40 = arith.constant 0 : index
    %41 = vector.load %arg2[%c3_38, %c0_39, %c0_40] : memref<7x1x576xf32, #tpu.memory_space<vmem>>, vector<1x1x576xf32>
    %42 = vector.shape_cast %41 : vector<1x1x576xf32> to vector<1x576xf32>
    %43 = vector.broadcast %42 : vector<1x576xf32> to vector<2x576xf32>
    %44 = arith.addf %40, %43 : vector<2x576xf32>
    %cst_41 = arith.constant 0.000000e+00 : f32
    %45 = vector.broadcast %cst_41 : f32 to vector<2x576xf32>
    %46 = arith.maximumf %44, %45 : vector<2x576xf32>
    %c8 = arith.constant 8 : index
    %c0_42 = arith.constant 0 : index
    %47 = vector.load %arg15[%c8, %c0_42] : memref<18x576xf32, #tpu.memory_space<vmem>>, vector<2x576xf32>
    tpu.vector_store %arg15[%c8, %c0_42], %46 {strides = array<i32>} : memref<18x576xf32, #tpu.memory_space<vmem>>, vector<2x576xf32>,
    %c4_43 = arith.constant 4 : index
    %c0_44 = arith.constant 0 : index
    %c0_45 = arith.constant 0 : index
    %48 = vector.load %arg1[%c4_43, %c0_44, %c0_45] : memref<7x64x576xbf16, #tpu.memory_space<vmem>>, vector<1x64x576xbf16>
    %49 = vector.shape_cast %48 : vector<1x64x576xbf16> to vector<64x576xbf16>
    %cst_46 = arith.constant dense<0.000000e+00> : vector<2x576xf32>
    %50 = tpu.matmul %7, %49, %cst_46 {dimension_numbers = #tpu.dot_dimension_numbers<[1], [0], [0], [1], [0, 0, 1, 1], [], []>} : vector<2x64xbf16>, vector<64x576xbf16>, vector<2x576xf32> -> vector<2x576xf32>
    %c4_47 = arith.constant 4 : index
    %c0_48 = arith.constant 0 : index
    %c0_49 = arith.constant 0 : index
    %51 = vector.load %arg2[%c4_47, %c0_48, %c0_49] : memref<7x1x576xf32, #tpu.memory_space<vmem>>, vector<1x1x576xf32>
    %52 = vector.shape_cast %51 : vector<1x1x576xf32> to vector<1x576xf32>
    %53 = vector.broadcast %52 : vector<1x576xf32> to vector<2x576xf32>
    %54 = arith.addf %50, %53 : vector<2x576xf32>
    %cst_50 = arith.constant 0.000000e+00 : f32
    %55 = vector.broadcast %cst_50 : f32 to vector<2x576xf32>
    %56 = arith.maximumf %54, %55 : vector<2x576xf32>
    %c10 = arith.constant 10 : index
    %c0_51 = arith.constant 0 : index
    %57 = vector.load %arg15[%c10, %c0_51] : memref<18x576xf32, #tpu.memory_space<vmem>>, vector<2x576xf32>
    tpu.vector_store %arg15[%c10, %c0_51], %56 {strides = array<i32>} : memref<18x576xf32, #tpu.memory_space<vmem>>, vector<2x576xf32>,
    %c5 = arith.constant 5 : index
    %c0_52 = arith.constant 0 : index
    %c0_53 = arith.constant 0 : index
    %58 = vector.load %arg1[%c5, %c0_52, %c0_53] : memref<7x64x576xbf16, #tpu.memory_space<vmem>>, vector<1x64x576xbf16>
    %59 = vector.shape_cast %58 : vector<1x64x576xbf16> to vector<64x576xbf16>
    %cst_54 = arith.constant dense<0.000000e+00> : vector<2x576xf32>
    %60 = tpu.matmul %7, %59, %cst_54 {dimension_numbers = #tpu.dot_dimension_numbers<[1], [0], [0], [1], [0, 0, 1, 1], [], []>} : vector<2x64xbf16>, vector<64x576xbf16>, vector<2x576xf32> -> vector<2x576xf32>
    %c5_55 = arith.constant 5 : index
    %c0_56 = arith.constant 0 : index
    %c0_57 = arith.constant 0 : index
    %61 = vector.load %arg2[%c5_55, %c0_56, %c0_57] : memref<7x1x576xf32, #tpu.memory_space<vmem>>, vector<1x1x576xf32>
    %62 = vector.shape_cast %61 : vector<1x1x576xf32> to vector<1x576xf32>
    %63 = vector.broadcast %62 : vector<1x576xf32> to vector<2x576xf32>
    %64 = arith.addf %60, %63 : vector<2x576xf32>
    %cst_58 = arith.constant 0.000000e+00 : f32
    %65 = vector.broadcast %cst_58 : f32 to vector<2x576xf32>
    %66 = arith.maximumf %64, %65 : vector<2x576xf32>
    %c12 = arith.constant 12 : index
    %c0_59 = arith.constant 0 : index
    %67 = vector.load %arg15[%c12, %c0_59] : memref<18x576xf32, #tpu.memory_space<vmem>>, vector<2x576xf32>
    tpu.vector_store %arg15[%c12, %c0_59], %66 {strides = array<i32>} : memref<18x576xf32, #tpu.memory_space<vmem>>, vector<2x576xf32>,
    %c6_60 = arith.constant 6 : index
    %c0_61 = arith.constant 0 : index
    %c0_62 = arith.constant 0 : index
    %68 = vector.load %arg1[%c6_60, %c0_61, %c0_62] : memref<7x64x576xbf16, #tpu.memory_space<vmem>>, vector<1x64x576xbf16>
    %69 = vector.shape_cast %68 : vector<1x64x576xbf16> to vector<64x576xbf16>
    %cst_63 = arith.constant dense<0.000000e+00> : vector<2x576xf32>
    %70 = tpu.matmul %7, %69, %cst_63 {dimension_numbers = #tpu.dot_dimension_numbers<[1], [0], [0], [1], [0, 0, 1, 1], [], []>} : vector<2x64xbf16>, vector<64x576xbf16>, vector<2x576xf32> -> vector<2x576xf32>
    %c6_64 = arith.constant 6 : index
    %c0_65 = arith.constant 0 : index
    %c0_66 = arith.constant 0 : index
    %71 = vector.load %arg2[%c6_64, %c0_65, %c0_66] : memref<7x1x576xf32, #tpu.memory_space<vmem>>, vector<1x1x576xf32>
    %72 = vector.shape_cast %71 : vector<1x1x576xf32> to vector<1x576xf32>
    %73 = vector.broadcast %72 : vector<1x576xf32> to vector<2x576xf32>
    %74 = arith.addf %70, %73 : vector<2x576xf32>
    %cst_67 = arith.constant 0.000000e+00 : f32
    %75 = vector.broadcast %cst_67 : f32 to vector<2x576xf32>
    %76 = arith.maximumf %74, %75 : vector<2x576xf32>
    %c14 = arith.constant 14 : index
    %c0_68 = arith.constant 0 : index
    %77 = vector.load %arg15[%c14, %c0_68] : memref<18x576xf32, #tpu.memory_space<vmem>>, vector<2x576xf32>
    tpu.vector_store %arg15[%c14, %c0_68], %76 {strides = array<i32>} : memref<18x576xf32, #tpu.memory_space<vmem>>, vector<2x576xf32>,
    %c0_69 = arith.constant 0 : index
    %c0_70 = arith.constant 0 : index
    %78 = vector.load %arg15[%c0_69, %c0_70] : memref<18x576xf32, #tpu.memory_space<vmem>>, vector<14x576xf32>
    %79 = arith.truncf %78 : vector<14x576xf32> to vector<14x576xbf16>
    %c0_71 = arith.constant 0 : index
    %c0_72 = arith.constant 0 : index
    %c0_73 = arith.constant 0 : index
    %c0_74 = arith.constant 0 : index
    %80 = vector.load %arg3[%c0_71, %c0_72, %c0_73, %c0_74] : memref<2x2x576x512xbf16, #tpu.memory_space<vmem>>, vector<1x1x576x512xbf16>
    %81 = vector.shape_cast %80 : vector<1x1x576x512xbf16> to vector<576x512xbf16>
    %cst_75 = arith.constant dense<0.000000e+00> : vector<14x512xf32>
    %82 = tpu.matmul %79, %81, %cst_75 {dimension_numbers = #tpu.dot_dimension_numbers<[1], [0], [0], [1], [0, 0, 1, 1], [], []>} : vector<14x576xbf16>, vector<576x512xbf16>, vector<14x512xf32> -> vector<14x512xf32>
    %c2_76 = arith.constant 2 : index
    %c0_77 = arith.constant 0 : index
    %83 = vector.load %arg15[%c2_76, %c0_77] : memref<18x576xf32, #tpu.memory_space<vmem>>, vector<14x576xf32>
    %84 = arith.truncf %83 : vector<14x576xf32> to vector<14x576xbf16>
    %c0_78 = arith.constant 0 : index
    %c1_79 = arith.constant 1 : index
    %c0_80 = arith.constant 0 : index
    %c0_81 = arith.constant 0 : index
    %85 = vector.load %arg3[%c0_78, %c1_79, %c0_80, %c0_81] : memref<2x2x576x512xbf16, #tpu.memory_space<vmem>>, vector<1x1x576x512xbf16>
    %86 = vector.shape_cast %85 : vector<1x1x576x512xbf16> to vector<576x512xbf16>
    %cst_82 = arith.constant dense<0.000000e+00> : vector<14x512xf32>
    %87 = tpu.matmul %84, %86, %cst_82 {dimension_numbers = #tpu.dot_dimension_numbers<[1], [0], [0], [1], [0, 0, 1, 1], [], []>} : vector<14x576xbf16>, vector<576x512xbf16>, vector<14x512xf32> -> vector<14x512xf32>
    %88 = arith.addf %82, %87 : vector<14x512xf32>
    %c2_83 = arith.constant 2 : index
    %c0_84 = arith.constant 0 : index
    %89 = vector.load %arg15[%c2_83, %c0_84] : memref<18x576xf32, #tpu.memory_space<vmem>>, vector<14x576xf32>
    %90 = arith.truncf %89 : vector<14x576xf32> to vector<14x576xbf16>
    %c1_85 = arith.constant 1 : index
    %c0_86 = arith.constant 0 : index
    %c0_87 = arith.constant 0 : index
    %c0_88 = arith.constant 0 : index
    %91 = vector.load %arg3[%c1_85, %c0_86, %c0_87, %c0_88] : memref<2x2x576x512xbf16, #tpu.memory_space<vmem>>, vector<1x1x576x512xbf16>
    %92 = vector.shape_cast %91 : vector<1x1x576x512xbf16> to vector<576x512xbf16>
    %cst_89 = arith.constant dense<0.000000e+00> : vector<14x512xf32>
    %93 = tpu.matmul %90, %92, %cst_89 {dimension_numbers = #tpu.dot_dimension_numbers<[1], [0], [0], [1], [0, 0, 1, 1], [], []>} : vector<14x576xbf16>, vector<576x512xbf16>, vector<14x512xf32> -> vector<14x512xf32>
    %c4_90 = arith.constant 4 : index
    %c0_91 = arith.constant 0 : index
    %94 = vector.load %arg15[%c4_90, %c0_91] : memref<18x576xf32, #tpu.memory_space<vmem>>, vector<14x576xf32>
    %95 = arith.truncf %94 : vector<14x576xf32> to vector<14x576xbf16>
    %c1_92 = arith.constant 1 : index
    %c1_93 = arith.constant 1 : index
    %c0_94 = arith.constant 0 : index
    %c0_95 = arith.constant 0 : index
    %96 = vector.load %arg3[%c1_92, %c1_93, %c0_94, %c0_95] : memref<2x2x576x512xbf16, #tpu.memory_space<vmem>>, vector<1x1x576x512xbf16>
    %97 = vector.shape_cast %96 : vector<1x1x576x512xbf16> to vector<576x512xbf16>
    %cst_96 = arith.constant dense<0.000000e+00> : vector<14x512xf32>
    %98 = tpu.matmul %95, %97, %cst_96 {dimension_numbers = #tpu.dot_dimension_numbers<[1], [0], [0], [1], [0, 0, 1, 1], [], []>} : vector<14x576xbf16>, vector<576x512xbf16>, vector<14x512xf32> -> vector<14x512xf32>
    %99 = arith.addf %93, %98 : vector<14x512xf32>
    %cst_97 = arith.constant dense<0.000000e+00> : vector<512xf32>
    %100 = vector.multi_reduction <add>, %88, %cst_97 [0] : vector<14x512xf32> to vector<512xf32>
    %101 = vector.shape_cast %100 : vector<512xf32> to vector<1x512xf32>
    %cst_98 = arith.constant dense<0.000000e+00> : vector<512xf32>
    %102 = vector.multi_reduction <add>, %99, %cst_98 [0] : vector<14x512xf32> to vector<512xf32>
    %103 = vector.shape_cast %102 : vector<512xf32> to vector<1x512xf32>
    %104 = arith.addf %101, %103 : vector<1x512xf32>
    %105 = arith.mulf %88, %88 : vector<14x512xf32>
    %cst_99 = arith.constant dense<0.000000e+00> : vector<512xf32>
    %106 = vector.multi_reduction <add>, %105, %cst_99 [0] : vector<14x512xf32> to vector<512xf32>
    %107 = vector.shape_cast %106 : vector<512xf32> to vector<1x512xf32>
    %108 = arith.mulf %99, %99 : vector<14x512xf32>
    %cst_100 = arith.constant dense<0.000000e+00> : vector<512xf32>
    %109 = vector.multi_reduction <add>, %108, %cst_100 [0] : vector<14x512xf32> to vector<512xf32>
    %110 = vector.shape_cast %109 : vector<512xf32> to vector<1x512xf32>
    %111 = arith.addf %107, %110 : vector<1x512xf32>
    %112 = tpu.concatenate %104, %111 in 0 : vector<1x512xf32>, vector<1x512xf32> -> vector<2x512xf32>
    %c0_101 = arith.constant 0 : index
    %c0_102 = arith.constant 0 : index
    %113 = vector.load %arg9[%c0_101, %c0_102] : memref<512x32xf32, #tpu.memory_space<vmem>>, vector<512x32xf32>
    %cst_103 = arith.constant dense<0.000000e+00> : vector<2x32xf32>
    %114 = tpu.matmul %112, %113, %cst_103 {dimension_numbers = #tpu.dot_dimension_numbers<[1], [0], [0], [1], [0, 0, 1, 1], [], []>} : vector<2x512xf32>, vector<512x32xf32>, vector<2x32xf32> -> vector<2x32xf32>
    %cst_104 = arith.constant 0.00255102036 : f32
    %115 = vector.broadcast %cst_104 : f32 to vector<2x32xf32>
    %116 = arith.mulf %114, %115 : vector<2x32xf32>
    %117 = vector.extract_strided_slice %116 {offsets = [0, 0], sizes = [1, 32], strides = [1, 1]} : vector<2x32xf32> to vector<1x32xf32>
    %118 = vector.extract_strided_slice %116 {offsets = [1, 0], sizes = [1, 32], strides = [1, 1]} : vector<2x32xf32> to vector<1x32xf32>
    %119 = arith.mulf %117, %117 : vector<1x32xf32>
    %120 = arith.subf %118, %119 : vector<1x32xf32>
    %cst_105 = arith.constant 0.000000e+00 : f32
    %121 = vector.broadcast %cst_105 : f32 to vector<1x32xf32>
    %122 = arith.maximumf %120, %121 : vector<1x32xf32>
    %c0_106 = arith.constant 0 : index
    %c0_107 = arith.constant 0 : index
    %123 = vector.load %arg5[%c0_106, %c0_107] : memref<1x32xf32, #tpu.memory_space<vmem>>, vector<1x32xf32>
    %cst_108 = arith.constant 9.99999974E-6 : f32
    %124 = vector.broadcast %cst_108 : f32 to vector<1x32xf32>
    %125 = arith.addf %122, %124 : vector<1x32xf32>
    %126 = math.rsqrt %125 : vector<1x32xf32>
    %127 = arith.mulf %123, %126 : vector<1x32xf32>
    %c0_109 = arith.constant 0 : index
    %c0_110 = arith.constant 0 : index
    %128 = vector.load %arg6[%c0_109, %c0_110] : memref<1x32xf32, #tpu.memory_space<vmem>>, vector<1x32xf32>
    %129 = arith.mulf %117, %127 : vector<1x32xf32>
    %130 = arith.subf %128, %129 : vector<1x32xf32>
    %131 = tpu.concatenate %127, %130 in 0 : vector<1x32xf32>, vector<1x32xf32> -> vector<2x32xf32>
    %c0_111 = arith.constant 0 : index
    %c0_112 = arith.constant 0 : index
    %132 = vector.load %arg10[%c0_111, %c0_112] : memref<32x512xf32, #tpu.memory_space<vmem>>, vector<32x512xf32>
    %cst_113 = arith.constant dense<0.000000e+00> : vector<2x512xf32>
    %133 = tpu.matmul %131, %132, %cst_113 {dimension_numbers = #tpu.dot_dimension_numbers<[1], [0], [0], [1], [0, 0, 1, 1], [], []>} : vector<2x32xf32>, vector<32x512xf32>, vector<2x512xf32> -> vector<2x512xf32>
    %134 = vector.extract_strided_slice %133 {offsets = [0, 0], sizes = [1, 512], strides = [1, 1]} : vector<2x512xf32> to vector<1x512xf32>
    %135 = vector.broadcast %134 : vector<1x512xf32> to vector<14x512xf32>
    %136 = arith.mulf %88, %135 : vector<14x512xf32>
    %137 = vector.extract_strided_slice %133 {offsets = [1, 0], sizes = [1, 512], strides = [1, 1]} : vector<2x512xf32> to vector<1x512xf32>
    %138 = vector.broadcast %137 : vector<1x512xf32> to vector<14x512xf32>
    %139 = arith.addf %136, %138 : vector<14x512xf32>
    %cst_114 = arith.constant 0.000000e+00 : f32
    %140 = vector.broadcast %cst_114 : f32 to vector<14x512xf32>
    %141 = arith.maximumf %139, %140 : vector<14x512xf32>
    %c2_115 = arith.constant 2 : index
    %c0_116 = arith.constant 0 : index
    %142 = vector.load %arg16[%c2_115, %c0_116] : memref<18x512xf32, #tpu.memory_space<vmem>>, vector<14x512xf32>
    tpu.vector_store %arg16[%c2_115, %c0_116], %141 {strides = array<i32>} : memref<18x512xf32, #tpu.memory_space<vmem>>, vector<14x512xf32>,
    %143 = vector.extract_strided_slice %133 {offsets = [0, 0], sizes = [1, 512], strides = [1, 1]} : vector<2x512xf32> to vector<1x512xf32>
    %144 = vector.broadcast %143 : vector<1x512xf32> to vector<14x512xf32>
    %145 = arith.mulf %99, %144 : vector<14x512xf32>
    %146 = vector.extract_strided_slice %133 {offsets = [1, 0], sizes = [1, 512], strides = [1, 1]} : vector<2x512xf32> to vector<1x512xf32>
    %147 = vector.broadcast %146 : vector<1x512xf32> to vector<14x512xf32>
    %148 = arith.addf %145, %147 : vector<14x512xf32>
    %cst_117 = arith.constant 0.000000e+00 : f32
    %149 = vector.broadcast %cst_117 : f32 to vector<14x512xf32>
    %150 = arith.maximumf %148, %149 : vector<14x512xf32>
    %c2_118 = arith.constant 2 : index
    %c0_119 = arith.constant 0 : index
    %151 = vector.load %arg17[%c2_118, %c0_119] : memref<18x512xf32, #tpu.memory_space<vmem>>, vector<14x512xf32>
    tpu.vector_store %arg17[%c2_118, %c0_119], %150 {strides = array<i32>} : memref<18x512xf32, #tpu.memory_space<vmem>>, vector<14x512xf32>,
    %c0_120 = arith.constant 0 : index
    %c0_121 = arith.constant 0 : index
    %152 = vector.load %arg17[%c0_120, %c0_121] : memref<18x512xf32, #tpu.memory_space<vmem>>, vector<14x512xf32>
    %153 = arith.truncf %152 : vector<14x512xf32> to vector<14x512xbf16>
    %c0_122 = arith.constant 0 : index
    %c0_123 = arith.constant 0 : index
    %c0_124 = arith.constant 0 : index
    %c0_125 = arith.constant 0 : index
    %154 = vector.load %arg4[%c0_122, %c0_123, %c0_124, %c0_125] : memref<2x2x512x448xbf16, #tpu.memory_space<vmem>>, vector<1x1x512x448xbf16>
    %155 = vector.shape_cast %154 : vector<1x1x512x448xbf16> to vector<512x448xbf16>
    %cst_126 = arith.constant dense<0.000000e+00> : vector<14x448xf32>
    %156 = tpu.matmul %153, %155, %cst_126 {dimension_numbers = #tpu.dot_dimension_numbers<[1], [0], [0], [1], [0, 0, 1, 1], [], []>} : vector<14x512xbf16>, vector<512x448xbf16>, vector<14x448xf32> -> vector<14x448xf32>
    %c2_127 = arith.constant 2 : index
    %c0_128 = arith.constant 0 : index
    %157 = vector.load %arg16[%c2_127, %c0_128] : memref<18x512xf32, #tpu.memory_space<vmem>>, vector<14x512xf32>
    %158 = arith.truncf %157 : vector<14x512xf32> to vector<14x512xbf16>
    %c0_129 = arith.constant 0 : index
    %c1_130 = arith.constant 1 : index
    %c0_131 = arith.constant 0 : index
    %c0_132 = arith.constant 0 : index
    %159 = vector.load %arg4[%c0_129, %c1_130, %c0_131, %c0_132] : memref<2x2x512x448xbf16, #tpu.memory_space<vmem>>, vector<1x1x512x448xbf16>
    %160 = vector.shape_cast %159 : vector<1x1x512x448xbf16> to vector<512x448xbf16>
    %cst_133 = arith.constant dense<0.000000e+00> : vector<14x448xf32>
    %161 = tpu.matmul %158, %160, %cst_133 {dimension_numbers = #tpu.dot_dimension_numbers<[1], [0], [0], [1], [0, 0, 1, 1], [], []>} : vector<14x512xbf16>, vector<512x448xbf16>, vector<14x448xf32> -> vector<14x448xf32>
    %162 = arith.addf %156, %161 : vector<14x448xf32>
    %c2_134 = arith.constant 2 : index
    %c0_135 = arith.constant 0 : index
    %163 = vector.load %arg16[%c2_134, %c0_135] : memref<18x512xf32, #tpu.memory_space<vmem>>, vector<14x512xf32>
    %164 = arith.truncf %163 : vector<14x512xf32> to vector<14x512xbf16>
    %c1_136 = arith.constant 1 : index
    %c0_137 = arith.constant 0 : index
    %c0_138 = arith.constant 0 : index
    %c0_139 = arith.constant 0 : index
    %165 = vector.load %arg4[%c1_136, %c0_137, %c0_138, %c0_139] : memref<2x2x512x448xbf16, #tpu.memory_space<vmem>>, vector<1x1x512x448xbf16>
    %166 = vector.shape_cast %165 : vector<1x1x512x448xbf16> to vector<512x448xbf16>
    %cst_140 = arith.constant dense<0.000000e+00> : vector<14x448xf32>
    %167 = tpu.matmul %164, %166, %cst_140 {dimension_numbers = #tpu.dot_dimension_numbers<[1], [0], [0], [1], [0, 0, 1, 1], [], []>} : vector<14x512xbf16>, vector<512x448xbf16>, vector<14x448xf32> -> vector<14x448xf32>
    %c2_141 = arith.constant 2 : index
    %c0_142 = arith.constant 0 : index
    %168 = vector.load %arg17[%c2_141, %c0_142] : memref<18x512xf32, #tpu.memory_space<vmem>>, vector<14x512xf32>
    %169 = arith.truncf %168 : vector<14x512xf32> to vector<14x512xbf16>
    %c1_143 = arith.constant 1 : index
    %c1_144 = arith.constant 1 : index
    %c0_145 = arith.constant 0 : index
    %c0_146 = arith.constant 0 : index
    %170 = vector.load %arg4[%c1_143, %c1_144, %c0_145, %c0_146] : memref<2x2x512x448xbf16, #tpu.memory_space<vmem>>, vector<1x1x512x448xbf16>
    %171 = vector.shape_cast %170 : vector<1x1x512x448xbf16> to vector<512x448xbf16>
    %cst_147 = arith.constant dense<0.000000e+00> : vector<14x448xf32>
    %172 = tpu.matmul %169, %171, %cst_147 {dimension_numbers = #tpu.dot_dimension_numbers<[1], [0], [0], [1], [0, 0, 1, 1], [], []>} : vector<14x512xbf16>, vector<512x448xbf16>, vector<14x448xf32> -> vector<14x448xf32>
    %173 = arith.addf %167, %172 : vector<14x448xf32>
    %c2_148 = arith.constant 2 : index
    %c0_149 = arith.constant 0 : index
    %174 = vector.load %arg16[%c2_148, %c0_149] : memref<18x512xf32, #tpu.memory_space<vmem>>, vector<14x512xf32>
    %175 = arith.truncf %174 : vector<14x512xf32> to vector<14x512xbf16>
    %c0_150 = arith.constant 0 : index
    %c0_151 = arith.constant 0 : index
    %c0_152 = arith.constant 0 : index
    %c0_153 = arith.constant 0 : index
    %176 = vector.load %arg4[%c0_150, %c0_151, %c0_152, %c0_153] : memref<2x2x512x448xbf16, #tpu.memory_space<vmem>>, vector<1x1x512x448xbf16>
    %177 = vector.shape_cast %176 : vector<1x1x512x448xbf16> to vector<512x448xbf16>
    %cst_154 = arith.constant dense<0.000000e+00> : vector<14x448xf32>
    %178 = tpu.matmul %175, %177, %cst_154 {dimension_numbers = #tpu.dot_dimension_numbers<[1], [0], [0], [1], [0, 0, 1, 1], [], []>} : vector<14x512xbf16>, vector<512x448xbf16>, vector<14x448xf32> -> vector<14x448xf32>
    %c2_155 = arith.constant 2 : index
    %c0_156 = arith.constant 0 : index
    %179 = vector.load %arg17[%c2_155, %c0_156] : memref<18x512xf32, #tpu.memory_space<vmem>>, vector<14x512xf32>
    %180 = arith.truncf %179 : vector<14x512xf32> to vector<14x512xbf16>
    %c0_157 = arith.constant 0 : index
    %c1_158 = arith.constant 1 : index
    %c0_159 = arith.constant 0 : index
    %c0_160 = arith.constant 0 : index
    %181 = vector.load %arg4[%c0_157, %c1_158, %c0_159, %c0_160] : memref<2x2x512x448xbf16, #tpu.memory_space<vmem>>, vector<1x1x512x448xbf16>
    %182 = vector.shape_cast %181 : vector<1x1x512x448xbf16> to vector<512x448xbf16>
    %cst_161 = arith.constant dense<0.000000e+00> : vector<14x448xf32>
    %183 = tpu.matmul %180, %182, %cst_161 {dimension_numbers = #tpu.dot_dimension_numbers<[1], [0], [0], [1], [0, 0, 1, 1], [], []>} : vector<14x512xbf16>, vector<512x448xbf16>, vector<14x448xf32> -> vector<14x448xf32>
    %184 = arith.addf %178, %183 : vector<14x448xf32>
    %c2_162 = arith.constant 2 : index
    %c0_163 = arith.constant 0 : index
    %185 = vector.load %arg17[%c2_162, %c0_163] : memref<18x512xf32, #tpu.memory_space<vmem>>, vector<14x512xf32>
    %186 = arith.truncf %185 : vector<14x512xf32> to vector<14x512xbf16>
    %c1_164 = arith.constant 1 : index
    %c0_165 = arith.constant 0 : index
    %c0_166 = arith.constant 0 : index
    %c0_167 = arith.constant 0 : index
    %187 = vector.load %arg4[%c1_164, %c0_165, %c0_166, %c0_167] : memref<2x2x512x448xbf16, #tpu.memory_space<vmem>>, vector<1x1x512x448xbf16>
    %188 = vector.shape_cast %187 : vector<1x1x512x448xbf16> to vector<512x448xbf16>
    %cst_168 = arith.constant dense<0.000000e+00> : vector<14x448xf32>
    %189 = tpu.matmul %186, %188, %cst_168 {dimension_numbers = #tpu.dot_dimension_numbers<[1], [0], [0], [1], [0, 0, 1, 1], [], []>} : vector<14x512xbf16>, vector<512x448xbf16>, vector<14x448xf32> -> vector<14x448xf32>
    %c4_169 = arith.constant 4 : index
    %c0_170 = arith.constant 0 : index
    %190 = vector.load %arg16[%c4_169, %c0_170] : memref<18x512xf32, #tpu.memory_space<vmem>>, vector<14x512xf32>
    %191 = arith.truncf %190 : vector<14x512xf32> to vector<14x512xbf16>
    %c1_171 = arith.constant 1 : index
    %c1_172 = arith.constant 1 : index
    %c0_173 = arith.constant 0 : index
    %c0_174 = arith.constant 0 : index
    %192 = vector.load %arg4[%c1_171, %c1_172, %c0_173, %c0_174] : memref<2x2x512x448xbf16, #tpu.memory_space<vmem>>, vector<1x1x512x448xbf16>
    %193 = vector.shape_cast %192 : vector<1x1x512x448xbf16> to vector<512x448xbf16>
    %cst_175 = arith.constant dense<0.000000e+00> : vector<14x448xf32>
    %194 = tpu.matmul %191, %193, %cst_175 {dimension_numbers = #tpu.dot_dimension_numbers<[1], [0], [0], [1], [0, 0, 1, 1], [], []>} : vector<14x512xbf16>, vector<512x448xbf16>, vector<14x448xf32> -> vector<14x448xf32>
    %195 = arith.addf %189, %194 : vector<14x448xf32>
    %cst_176 = arith.constant dense<0.000000e+00> : vector<448xf32>
    %196 = vector.multi_reduction <add>, %162, %cst_176 [0] : vector<14x448xf32> to vector<448xf32>
    %197 = vector.shape_cast %196 : vector<448xf32> to vector<1x448xf32>
    %198 = arith.mulf %162, %162 : vector<14x448xf32>
    %cst_177 = arith.constant dense<0.000000e+00> : vector<448xf32>
    %199 = vector.multi_reduction <add>, %198, %cst_177 [0] : vector<14x448xf32> to vector<448xf32>
    %200 = vector.shape_cast %199 : vector<448xf32> to vector<1x448xf32>
    %cst_178 = arith.constant dense<0.000000e+00> : vector<448xf32>
    %201 = vector.multi_reduction <add>, %173, %cst_178 [0] : vector<14x448xf32> to vector<448xf32>
    %202 = vector.shape_cast %201 : vector<448xf32> to vector<1x448xf32>
    %203 = arith.addf %197, %202 : vector<1x448xf32>
    %204 = arith.mulf %173, %173 : vector<14x448xf32>
    %cst_179 = arith.constant dense<0.000000e+00> : vector<448xf32>
    %205 = vector.multi_reduction <add>, %204, %cst_179 [0] : vector<14x448xf32> to vector<448xf32>
    %206 = vector.shape_cast %205 : vector<448xf32> to vector<1x448xf32>
    %207 = arith.addf %200, %206 : vector<1x448xf32>
    %cst_180 = arith.constant dense<0.000000e+00> : vector<448xf32>
    %208 = vector.multi_reduction <add>, %184, %cst_180 [0] : vector<14x448xf32> to vector<448xf32>
    %209 = vector.shape_cast %208 : vector<448xf32> to vector<1x448xf32>
    %210 = arith.addf %203, %209 : vector<1x448xf32>
    %211 = arith.mulf %184, %184 : vector<14x448xf32>
    %cst_181 = arith.constant dense<0.000000e+00> : vector<448xf32>
    %212 = vector.multi_reduction <add>, %211, %cst_181 [0] : vector<14x448xf32> to vector<448xf32>
    %213 = vector.shape_cast %212 : vector<448xf32> to vector<1x448xf32>
    %214 = arith.addf %207, %213 : vector<1x448xf32>
    %cst_182 = arith.constant dense<0.000000e+00> : vector<448xf32>
    %215 = vector.multi_reduction <add>, %195, %cst_182 [0] : vector<14x448xf32> to vector<448xf32>
    %216 = vector.shape_cast %215 : vector<448xf32> to vector<1x448xf32>
    %217 = arith.addf %210, %216 : vector<1x448xf32>
    %218 = arith.mulf %195, %195 : vector<14x448xf32>
    %cst_183 = arith.constant dense<0.000000e+00> : vector<448xf32>
    %219 = vector.multi_reduction <add>, %218, %cst_183 [0] : vector<14x448xf32> to vector<448xf32>
    %220 = vector.shape_cast %219 : vector<448xf32> to vector<1x448xf32>
    %221 = arith.addf %214, %220 : vector<1x448xf32>
    %222 = tpu.concatenate %217, %221 in 0 : vector<1x448xf32>, vector<1x448xf32> -> vector<2x448xf32>
    %c0_184 = arith.constant 0 : index
    %c0_185 = arith.constant 0 : index
    %223 = vector.load %arg11[%c0_184, %c0_185] : memref<448x16xf32, #tpu.memory_space<vmem>>, vector<448x16xf32>
    %cst_186 = arith.constant dense<0.000000e+00> : vector<2x16xf32>
    %224 = tpu.matmul %222, %223, %cst_186 {dimension_numbers = #tpu.dot_dimension_numbers<[1], [0], [0], [1], [0, 0, 1, 1], [], []>} : vector<2x448xf32>, vector<448x16xf32>, vector<2x16xf32> -> vector<2x16xf32>
    %cst_187 = arith.constant 6.37755089E-4 : f32
    %225 = vector.broadcast %cst_187 : f32 to vector<2x16xf32>
    %226 = arith.mulf %224, %225 : vector<2x16xf32>
    %227 = vector.extract_strided_slice %226 {offsets = [0, 0], sizes = [1, 16], strides = [1, 1]} : vector<2x16xf32> to vector<1x16xf32>
    %228 = vector.extract_strided_slice %226 {offsets = [1, 0], sizes = [1, 16], strides = [1, 1]} : vector<2x16xf32> to vector<1x16xf32>
    %229 = arith.mulf %227, %227 : vector<1x16xf32>
    %230 = arith.subf %228, %229 : vector<1x16xf32>
    %cst_188 = arith.constant 0.000000e+00 : f32
    %231 = vector.broadcast %cst_188 : f32 to vector<1x16xf32>
    %232 = arith.maximumf %230, %231 : vector<1x16xf32>
    %c0_189 = arith.constant 0 : index
    %c0_190 = arith.constant 0 : index
    %233 = vector.load %arg7[%c0_189, %c0_190] : memref<1x16xf32, #tpu.memory_space<vmem>>, vector<1x16xf32>
    %cst_191 = arith.constant 9.99999974E-6 : f32
    %234 = vector.broadcast %cst_191 : f32 to vector<1x16xf32>
    %235 = arith.addf %232, %234 : vector<1x16xf32>
    %236 = math.rsqrt %235 : vector<1x16xf32>
    %237 = arith.mulf %233, %236 : vector<1x16xf32>
    %c0_192 = arith.constant 0 : index
    %c0_193 = arith.constant 0 : index
    %238 = vector.load %arg8[%c0_192, %c0_193] : memref<1x16xf32, #tpu.memory_space<vmem>>, vector<1x16xf32>
    %239 = arith.mulf %227, %237 : vector<1x16xf32>
    %240 = arith.subf %238, %239 : vector<1x16xf32>
    %241 = tpu.concatenate %237, %240 in 0 : vector<1x16xf32>, vector<1x16xf32> -> vector<2x16xf32>
    %c0_194 = arith.constant 0 : index
    %c0_195 = arith.constant 0 : index
    %242 = vector.load %arg12[%c0_194, %c0_195] : memref<16x448xf32, #tpu.memory_space<vmem>>, vector<16x448xf32>
    %cst_196 = arith.constant dense<0.000000e+00> : vector<2x448xf32>
    %243 = tpu.matmul %241, %242, %cst_196 {dimension_numbers = #tpu.dot_dimension_numbers<[1], [0], [0], [1], [0, 0, 1, 1], [], []>} : vector<2x16xf32>, vector<16x448xf32>, vector<2x448xf32> -> vector<2x448xf32>
    %244 = vector.extract_strided_slice %243 {offsets = [0, 0], sizes = [1, 448], strides = [1, 1]} : vector<2x448xf32> to vector<1x448xf32>
    %245 = vector.broadcast %244 : vector<1x448xf32> to vector<14x448xf32>
    %246 = arith.mulf %162, %245 : vector<14x448xf32>
    %247 = vector.extract_strided_slice %243 {offsets = [1, 0], sizes = [1, 448], strides = [1, 1]} : vector<2x448xf32> to vector<1x448xf32>
    %248 = vector.broadcast %247 : vector<1x448xf32> to vector<14x448xf32>
    %249 = arith.addf %246, %248 : vector<14x448xf32>
    %cst_197 = arith.constant 0.000000e+00 : f32
    %250 = vector.broadcast %cst_197 : f32 to vector<14x448xf32>
    %251 = arith.maximumf %249, %250 : vector<14x448xf32>
    %c0_198 = arith.constant 0 : index
    %c0_199 = arith.constant 0 : index
    %c0_200 = arith.constant 0 : index
    %252 = vector.load %arg13[%c0_198, %c0_199, %c0_200] : memref<4x448x112xf32, #tpu.memory_space<vmem>>, vector<1x448x112xf32>
    %253 = vector.shape_cast %252 : vector<1x448x112xf32> to vector<448x112xf32>
    %cst_201 = arith.constant dense<0.000000e+00> : vector<14x112xf32>
    %254 = tpu.matmul %251, %253, %cst_201 {dimension_numbers = #tpu.dot_dimension_numbers<[1], [0], [0], [1], [0, 0, 1, 1], [], []>} : vector<14x448xf32>, vector<448x112xf32>, vector<14x112xf32> -> vector<14x112xf32>
    %255 = vector.extract_strided_slice %243 {offsets = [0, 0], sizes = [1, 448], strides = [1, 1]} : vector<2x448xf32> to vector<1x448xf32>
    %256 = vector.broadcast %255 : vector<1x448xf32> to vector<14x448xf32>
    %257 = arith.mulf %173, %256 : vector<14x448xf32>
    %258 = vector.extract_strided_slice %243 {offsets = [1, 0], sizes = [1, 448], strides = [1, 1]} : vector<2x448xf32> to vector<1x448xf32>
    %259 = vector.broadcast %258 : vector<1x448xf32> to vector<14x448xf32>
    %260 = arith.addf %257, %259 : vector<14x448xf32>
    %cst_202 = arith.constant 0.000000e+00 : f32
    %261 = vector.broadcast %cst_202 : f32 to vector<14x448xf32>
    %262 = arith.maximumf %260, %261 : vector<14x448xf32>
    %c1_203 = arith.constant 1 : index
    %c0_204 = arith.constant 0 : index
    %c0_205 = arith.constant 0 : index
    %263 = vector.load %arg13[%c1_203, %c0_204, %c0_205] : memref<4x448x112xf32, #tpu.memory_space<vmem>>, vector<1x448x112xf32>
    %264 = vector.shape_cast %263 : vector<1x448x112xf32> to vector<448x112xf32>
    %cst_206 = arith.constant dense<0.000000e+00> : vector<14x112xf32>
    %265 = tpu.matmul %262, %264, %cst_206 {dimension_numbers = #tpu.dot_dimension_numbers<[1], [0], [0], [1], [0, 0, 1, 1], [], []>} : vector<14x448xf32>, vector<448x112xf32>, vector<14x112xf32> -> vector<14x112xf32>
    %266 = arith.addf %254, %265 : vector<14x112xf32>
    %267 = vector.extract_strided_slice %243 {offsets = [0, 0], sizes = [1, 448], strides = [1, 1]} : vector<2x448xf32> to vector<1x448xf32>
    %268 = vector.broadcast %267 : vector<1x448xf32> to vector<14x448xf32>
    %269 = arith.mulf %184, %268 : vector<14x448xf32>
    %270 = vector.extract_strided_slice %243 {offsets = [1, 0], sizes = [1, 448], strides = [1, 1]} : vector<2x448xf32> to vector<1x448xf32>
    %271 = vector.broadcast %270 : vector<1x448xf32> to vector<14x448xf32>
    %272 = arith.addf %269, %271 : vector<14x448xf32>
    %cst_207 = arith.constant 0.000000e+00 : f32
    %273 = vector.broadcast %cst_207 : f32 to vector<14x448xf32>
    %274 = arith.maximumf %272, %273 : vector<14x448xf32>
    %c2_208 = arith.constant 2 : index
    %c0_209 = arith.constant 0 : index
    %c0_210 = arith.constant 0 : index
    %275 = vector.load %arg13[%c2_208, %c0_209, %c0_210] : memref<4x448x112xf32, #tpu.memory_space<vmem>>, vector<1x448x112xf32>
    %276 = vector.shape_cast %275 : vector<1x448x112xf32> to vector<448x112xf32>
    %cst_211 = arith.constant dense<0.000000e+00> : vector<14x112xf32>
    %277 = tpu.matmul %274, %276, %cst_211 {dimension_numbers = #tpu.dot_dimension_numbers<[1], [0], [0], [1], [0, 0, 1, 1], [], []>} : vector<14x448xf32>, vector<448x112xf32>, vector<14x112xf32> -> vector<14x112xf32>
    %278 = arith.addf %266, %277 : vector<14x112xf32>
    %279 = vector.extract_strided_slice %243 {offsets = [0, 0], sizes = [1, 448], strides = [1, 1]} : vector<2x448xf32> to vector<1x448xf32>
    %280 = vector.broadcast %279 : vector<1x448xf32> to vector<14x448xf32>
    %281 = arith.mulf %195, %280 : vector<14x448xf32>
    %282 = vector.extract_strided_slice %243 {offsets = [1, 0], sizes = [1, 448], strides = [1, 1]} : vector<2x448xf32> to vector<1x448xf32>
    %283 = vector.broadcast %282 : vector<1x448xf32> to vector<14x448xf32>
    %284 = arith.addf %281, %283 : vector<14x448xf32>
    %cst_212 = arith.constant 0.000000e+00 : f32
    %285 = vector.broadcast %cst_212 : f32 to vector<14x448xf32>
    %286 = arith.maximumf %284, %285 : vector<14x448xf32>
    %c3_213 = arith.constant 3 : index
    %c0_214 = arith.constant 0 : index
    %c0_215 = arith.constant 0 : index
    %287 = vector.load %arg13[%c3_213, %c0_214, %c0_215] : memref<4x448x112xf32, #tpu.memory_space<vmem>>, vector<1x448x112xf32>
    %288 = vector.shape_cast %287 : vector<1x448x112xf32> to vector<448x112xf32>
    %cst_216 = arith.constant dense<0.000000e+00> : vector<14x112xf32>
    %289 = tpu.matmul %286, %288, %cst_216 {dimension_numbers = #tpu.dot_dimension_numbers<[1], [0], [0], [1], [0, 0, 1, 1], [], []>} : vector<14x448xf32>, vector<448x112xf32>, vector<14x112xf32> -> vector<14x112xf32>
    %290 = arith.addf %278, %289 : vector<14x112xf32>
    %291 = math.tanh %290 : vector<14x112xf32>
    %c0_217 = arith.constant 0 : index
    %c0_218 = arith.constant 0 : index
    %292 = vector.load %arg14[%c0_217, %c0_218] : memref<14x112xf32, #tpu.memory_space<vmem>>, vector<14x112xf32>
    tpu.vector_store %arg14[%c0_217, %c0_218], %291 {strides = array<i32>} : memref<14x112xf32, #tpu.memory_space<vmem>>, vector<14x112xf32>,
    return
  }
}

</mosaic_0001>

<llo_original>
// kernel: generator_forward.1
$region0: #{generator_forward.1}
  #allocation0 [shape = 'u32[]', space=smem, size = 0x4, offset = 0x4, fixed_abs, tag = 'smem constant byte address 0x4 - core index']
  #allocation1 [shape = 'u32[144,128]{1,0:T(1,128)}', space=vmem, size = 0x12000, scoped, tag = 'internal scratch']
  #allocation2 [shape = 'f32[18,576]{1,0:T(8,128)}', space=vmem, size = 0xf000, scoped, tag = 'scratch operand']
  #allocation3 [shape = 'f32[18,512]{1,0:T(8,128)}', space=vmem, size = 0xc000, scoped, tag = 'scratch operand']
  #allocation4 [shape = 'f32[18,512]{1,0:T(8,128)}', space=vmem, size = 0xc000, scoped, tag = 'scratch operand']
  %s0 = inlined_call_operand.vmem [shape: f32[2,64], index: 0, kind: input, shape index: {}]
  %s1 = inlined_call_operand.vmem [shape: bf16[7,64,576], index: 1, kind: input, shape index: {}]
  %s2 = inlined_call_operand.vmem [shape: f32[7,1,576], index: 2, kind: input, shape index: {}]
  %s3 = inlined_call_operand.vmem [shape: bf16[2,2,576,512], index: 3, kind: input, shape index: {}]
  %s4 = inlined_call_operand.vmem [shape: bf16[2,2,512,448], index: 4, kind: input, shape index: {}]
  %s5 = inlined_call_operand.vmem [shape: f32[1,32], index: 5, kind: input, shape index: {}]
  %s6 = inlined_call_operand.vmem [shape: f32[1,32], index: 6, kind: input, shape index: {}]
  %s7 = inlined_call_operand.vmem [shape: f32[1,16], index: 7, kind: input, shape index: {}]
  %s8 = inlined_call_operand.vmem [shape: f32[1,16], index: 8, kind: input, shape index: {}]
  %s9 = inlined_call_operand.vmem [shape: f32[512,32], index: 9, kind: input, shape index: {}]
  %s10 = inlined_call_operand.vmem [shape: f32[32,512], index: 10, kind: input, shape index: {}]
  %s11 = inlined_call_operand.vmem [shape: f32[448,16], index: 11, kind: input, shape index: {}]
  %s12 = inlined_call_operand.vmem [shape: f32[16,448], index: 12, kind: input, shape index: {}]
  %s13 = inlined_call_operand.vmem [shape: f32[4,448,112], index: 13, kind: input, shape index: {}]
  %s14 = inlined_call_operand.vmem [shape: f32[14,112], index: 14, kind: output, shape index: {}]
  %s15 = sld [smem:[#allocation0]]
  $region66: #{generator_forward.1} parent=0
    _
  %s17 = ssub.s32 1, %s15
  %s18 = scalar_select 0, %s17, %s15
  // Predicated region
  $region2: #{generator_forward.1} parent=0 // pred_check
    _
  $region3: #{generator_forward.1} parent=0 // pred_check_branch
    %20 = sbr.rel (0) target = $region5
  $region4: #{generator_forward.1} parent=0 // pred_region
    _
  $region5: #{generator_forward.1} parent=0 // pred_fallthru
    _
  // Predicated region
  $region6: #{generator_forward.1} parent=0 // pred_check
    _
  $region7: #{generator_forward.1} parent=0 // pred_check_branch
    %22 = sbr.rel (0) target = $region9
  $region8: #{generator_forward.1} parent=0 // pred_region
    _
  $region9: #{generator_forward.1} parent=0 // pred_fallthru
    _
  // Predicated region
  $region10: #{generator_forward.1} parent=0 // pred_check
    _
  $region11: #{generator_forward.1} parent=0 // pred_check_branch
    %24 = sbr.rel (0) target = $region13
  $region12: #{generator_forward.1} parent=0 // pred_region
    _
  $region13: #{generator_forward.1} parent=0 // pred_fallthru
    _
  // Predicated region
  $region14: #{generator_forward.1} parent=0 // pred_check
    _
  $region15: #{generator_forward.1} parent=0 // pred_check_branch
    %26 = sbr.rel (0) target = $region17
  $region16: #{generator_forward.1} parent=0 // pred_region
    _
  $region17: #{generator_forward.1} parent=0 // pred_fallthru
    _
  // Predicated region
  $region18: #{generator_forward.1} parent=0 // pred_check
    _
  $region19: #{generator_forward.1} parent=0 // pred_check_branch
    %28 = sbr.rel (0) target = $region21
  $region20: #{generator_forward.1} parent=0 // pred_region
    _
  $region21: #{generator_forward.1} parent=0 // pred_fallthru
    _
  // Predicated region
  $region22: #{generator_forward.1} parent=0 // pred_check
    _
  $region23: #{generator_forward.1} parent=0 // pred_check_branch
    %30 = sbr.rel (0) target = $region25
  $region24: #{generator_forward.1} parent=0 // pred_region
    _
  $region25: #{generator_forward.1} parent=0 // pred_fallthru
    _
  // Predicated region
  $region26: #{generator_forward.1} parent=0 // pred_check
    _
  $region27: #{generator_forward.1} parent=0 // pred_check_branch
    %32 = sbr.rel (0) target = $region29
  $region28: #{generator_forward.1} parent=0 // pred_region
    _
  $region29: #{generator_forward.1} parent=0 // pred_fallthru
    _
  // Predicated region
  $region30: #{generator_forward.1} parent=0 // pred_check
    _
  $region31: #{generator_forward.1} parent=0 // pred_check_branch
    %34 = sbr.rel (0) target = $region33
  $region32: #{generator_forward.1} parent=0 // pred_region
    _
  $region33: #{generator_forward.1} parent=0 // pred_fallthru
    _
  // Predicated region
  $region34: #{generator_forward.1} parent=0 // pred_check
    _
  $region35: #{generator_forward.1} parent=0 // pred_check_branch
    %36 = sbr.rel (0) target = $region37
  $region36: #{generator_forward.1} parent=0 // pred_region
    _
  $region37: #{generator_forward.1} parent=0 // pred_fallthru
    _
  // Predicated region
  $region38: #{generator_forward.1} parent=0 // pred_check
    _
  $region39: #{generator_forward.1} parent=0 // pred_check_branch
    %38 = sbr.rel (0) target = $region41
  $region40: #{generator_forward.1} parent=0 // pred_region
    _
  $region41: #{generator_forward.1} parent=0 // pred_fallthru
    _
  // Predicated region
  $region42: #{generator_forward.1} parent=0 // pred_check
    _
  $region43: #{generator_forward.1} parent=0 // pred_check_branch
    %40 = sbr.rel (0) target = $region45
  $region44: #{generator_forward.1} parent=0 // pred_region
    _
  $region45: #{generator_forward.1} parent=0 // pred_fallthru
    _
  // Predicated region
  $region46: #{generator_forward.1} parent=0 // pred_check
    _
  $region47: #{generator_forward.1} parent=0 // pred_check_branch
    %42 = sbr.rel (0) target = $region49
  $region48: #{generator_forward.1} parent=0 // pred_region
    _
  $region49: #{generator_forward.1} parent=0 // pred_fallthru
    _
  // Predicated region
  $region50: #{generator_forward.1} parent=0 // pred_check
    _
  $region51: #{generator_forward.1} parent=0 // pred_check_branch
    %44 = sbr.rel (0) target = $region53
  $region52: #{generator_forward.1} parent=0 // pred_region
    _
  $region53: #{generator_forward.1} parent=0 // pred_fallthru
    _
  // Predicated region
  $region54: #{generator_forward.1} parent=0 // pred_check
    _
  $region55: #{generator_forward.1} parent=0 // pred_check_branch
    %46 = sbr.rel (0) target = $region57
  $region56: #{generator_forward.1} parent=0 // pred_region
    _
  $region57: #{generator_forward.1} parent=0 // pred_fallthru
    _
  %48 = vst [vmem:[#allocation2] sm:$0xff] 0.0
  %49 = vst [vmem:[#allocation2 + $0x8] sm:$0xff] 0.0
  %50 = vst [vmem:[#allocation2 + $0x10] sm:$0xff] 0.0
  %51 = vst [vmem:[#allocation2 + $0x18] sm:$0xff] 0.0
  %vm52 = vcmask 523264
  %53 = vst.msk [vmem:[#allocation2 + $0x20] sm:$0xff] %vm52, 0.0
  %54 = vst [vmem:[#allocation2 + $0x28] sm:$0xff] 0.0
  %55 = vst [vmem:[#allocation2 + $0x30] sm:$0xff] 0.0
  %56 = vst [vmem:[#allocation2 + $0x38] sm:$0xff] 0.0
  %57 = vst [vmem:[#allocation2 + $0x40] sm:$0xff] 0.0
  %58 = vst.msk [vmem:[#allocation2 + $0x48] sm:$0xff] %vm52, 0.0
  %59 = vst [vmem:[#allocation2 + $0x50] sm:$0x3] 0.0
  %60 = vst [vmem:[#allocation2 + $0x58] sm:$0x3] 0.0
  %61 = vst [vmem:[#allocation2 + $0x60] sm:$0x3] 0.0
  %62 = vst [vmem:[#allocation2 + $0x68] sm:$0x3] 0.0
  %vm63 = vcmask 517120
  %64 = vst.msk [vmem:[#allocation2 + $0x70] sm:$0x3] %vm63, 0.0
  %65 = vst [vmem:[#allocation3] sm:$0xff] 0.0
  %66 = vst [vmem:[#allocation3 + $0x8] sm:$0xff] 0.0
  %67 = vst [vmem:[#allocation3 + $0x10] sm:$0xff] 0.0
  %68 = vst [vmem:[#allocation3 + $0x18] sm:$0xff] 0.0
  %69 = vst [vmem:[#allocation3 + $0x20] sm:$0xff] 0.0
  %70 = vst [vmem:[#allocation3 + $0x28] sm:$0xff] 0.0
  %71 = vst [vmem:[#allocation3 + $0x30] sm:$0xff] 0.0
  %72 = vst [vmem:[#allocation3 + $0x38] sm:$0xff] 0.0
  %73 = vst [vmem:[#allocation3 + $0x40] sm:$0x3] 0.0
  %74 = vst [vmem:[#allocation3 + $0x48] sm:$0x3] 0.0
  %75 = vst [vmem:[#allocation3 + $0x50] sm:$0x3] 0.0
  %76 = vst [vmem:[#allocation3 + $0x58] sm:$0x3] 0.0
  %77 = vst [vmem:[#allocation4] sm:$0xff] 0.0
  %78 = vst [vmem:[#allocation4 + $0x8] sm:$0xff] 0.0
  %79 = vst [vmem:[#allocation4 + $0x10] sm:$0xff] 0.0
  %80 = vst [vmem:[#allocation4 + $0x18] sm:$0xff] 0.0
  %81 = vst [vmem:[#allocation4 + $0x20] sm:$0xff] 0.0
  %82 = vst [vmem:[#allocation4 + $0x28] sm:$0xff] 0.0
  %83 = vst [vmem:[#allocation4 + $0x30] sm:$0xff] 0.0
  %84 = vst [vmem:[#allocation4 + $0x38] sm:$0xff] 0.0
  %85 = vst [vmem:[#allocation4 + $0x40] sm:$0x3] 0.0
  %86 = vst [vmem:[#allocation4 + $0x48] sm:$0x3] 0.0
  %87 = vst [vmem:[#allocation4 + $0x50] sm:$0x3] 0.0
  %88 = vst [vmem:[#allocation4 + $0x58] sm:$0x3] 0.0
  %v89 = vld [vmem:[%s0] sm:$0x3]
  %v90 = vpack.c.bf16 %v89, %v89
  %v91 = vld [vmem:[%s1] sm:$0xff]
  %v92 = vld [vmem:[%s1 + $0x8] sm:$0xff]
  %v93 = vld [vmem:[%s1 + $0x10] sm:$0xf]
  %v94 = vld [vmem:[%s1 + $0x14] sm:$0xff]
  %v95 = vld [vmem:[%s1 + $0x1c] sm:$0xff]
  %v96 = vld [vmem:[%s1 + $0x24] sm:$0xf]
  %v97 = vld [vmem:[%s1 + $0x28] sm:$0xff]
  %v98 = vld [vmem:[%s1 + $0x30] sm:$0xff]
  %v99 = vld [vmem:[%s1 + $0x38] sm:$0xf]
  %v100 = vld [vmem:[%s1 + $0x3c] sm:$0xff]
  %v101 = vld [vmem:[%s1 + $0x44] sm:$0xff]
  %v102 = vld [vmem:[%s1 + $0x4c] sm:$0xf]
  %v103 = vld [vmem:[%s1 + $0x50] sm:$0xff]
  %v104 = vld [vmem:[%s1 + $0x58] sm:$0xff]
  %v105 = vld [vmem:[%s1 + $0x60] sm:$0xf]
  %v106 = vld [vmem:[%s1 + $0x64] sm:$0xff]
  %v107 = vld [vmem:[%s1 + $0x6c] sm:$0xff]
  %v108 = vld [vmem:[%s1 + $0x74] sm:$0xf]
  %v109 = vld [vmem:[%s1 + $0x78] sm:$0xff]
  %v110 = vld [vmem:[%s1 + $0x80] sm:$0xff]
  %v111 = vld [vmem:[%s1 + $0x88] sm:$0xf]
  %v112 = vld [vmem:[%s1 + $0x8c] sm:$0xff]
  %v113 = vld [vmem:[%s1 + $0x94] sm:$0xff]
  %v114 = vld [vmem:[%s1 + $0x9c] sm:$0xf]
  %v115 = vld [vmem:[%s2] sm:$0x1f]
  %v117 = vlaneseq
  %v118 = vshrl.u32 %v117, 7
  %v119 = vsub.s32 0, %v118
  %v120 = vrot.slane %v115, %v119
  %v121 = vlaneseq
  %v122 = vshrl.u32 %v121, 7
  %v123 = vsub.s32 1, %v122
  %v124 = vrot.slane %v115, %v123
  %v125 = vlaneseq
  %v126 = vshrl.u32 %v125, 7
  %v127 = vsub.s32 2, %v126
  %v128 = vrot.slane %v115, %v127
  %v129 = vlaneseq
  %v130 = vshrl.u32 %v129, 7
  %v131 = vsub.s32 3, %v130
  %v132 = vrot.slane %v115, %v131
  %v133 = vlaneseq
  %v134 = vshrl.u32 %v133, 7
  %v135 = vsub.s32 4, %v134
  %v136 = vrot.slane %v115, %v135
  %v166 = vunpack.c.l.b16 %v91
  %v167 = vunpack.c.h.b16 %v91
  %v168 = vunpack.c.l.b16 %v92
  %v169 = vunpack.c.h.b16 %v92
  %v170 = vunpack.c.l.b16 %v93
  %v171 = vunpack.c.l.b16 %v94
  %v172 = vunpack.c.h.b16 %v94
  %v173 = vunpack.c.l.b16 %v95
  %v174 = vunpack.c.h.b16 %v95
  %v175 = vunpack.c.l.b16 %v96
  %v176 = vunpack.c.l.b16 %v97
  %v177 = vunpack.c.h.b16 %v97
  %v178 = vunpack.c.l.b16 %v98
  %v179 = vunpack.c.h.b16 %v98
  %v180 = vunpack.c.l.b16 %v99
  %v181 = vunpack.c.l.b16 %v100
  %v182 = vunpack.c.h.b16 %v100
  %v183 = vunpack.c.l.b16 %v101
  %v184 = vunpack.c.h.b16 %v101
  %v185 = vunpack.c.l.b16 %v102
  %v186 = vunpack.c.l.b16 %v103
  %v187 = vunpack.c.h.b16 %v103
  %v188 = vunpack.c.l.b16 %v104
  %v189 = vunpack.c.h.b16 %v104
  %v190 = vunpack.c.l.b16 %v105
  %v191 = vunpack.c.l.b16 %v106
  %v192 = vunpack.c.h.b16 %v106
  %v193 = vunpack.c.l.b16 %v107
  %v194 = vunpack.c.h.b16 %v107
  %v195 = vunpack.c.l.b16 %v108
  %v196 = vunpack.c.l.b16 %v109
  %v197 = vunpack.c.h.b16 %v109
  %v198 = vunpack.c.l.b16 %v110
  %v199 = vunpack.c.h.b16 %v110
  %v200 = vunpack.c.l.b16 %v111
  %v201 = vunpack.c.l.b16 %v112
  %v202 = vunpack.c.h.b16 %v112
  %v203 = vunpack.c.l.b16 %v113
  %v204 = vunpack.c.h.b16 %v113
  %v205 = vunpack.c.l.b16 %v114
  %v206 = vpack.c.b16 %v171, %v166
  %v207 = vpack.c.b16 %v172, %v167
  %v208 = vpack.c.b16 %v173, %v168
  %v209 = vpack.c.b16 %v174, %v169
  %v210 = vpack.c.b16 %v175, %v170
  %v211 = vpack.c.b16 %v181, %v176
  %v212 = vpack.c.b16 %v182, %v177
  %v213 = vpack.c.b16 %v183, %v178
  %v214 = vpack.c.b16 %v184, %v179
  %v215 = vpack.c.b16 %v185, %v180
  %v216 = vpack.c.b16 %v191, %v186
  %v217 = vpack.c.b16 %v192, %v187
  %v218 = vpack.c.b16 %v193, %v188
  %v219 = vpack.c.b16 %v194, %v189
  %v220 = vpack.c.b16 %v195, %v190
  %v221 = vpack.c.b16 %v201, %v196
  %v222 = vpack.c.b16 %v202, %v197
  %v223 = vpack.c.b16 %v203, %v198
  %v224 = vpack.c.b16 %v204, %v199
  %v225 = vpack.c.b16 %v205, %v200
  %v247 = vsel %vm52, %v90, 0
  %249 = vmatprep.subr.bf16.mxu0 %v207
  %250 = vmatpush1.bf16.msra.mxu0 %v206
  %251 = vmatprep.subr.bf16.mxu0 %v212
  %252 = vmatpush1.bf16.msra.mxu0 %v211
  %253 = vmatprep.subr.bf16.mxu0 %v217
  %254 = vmatpush1.bf16.msra.mxu0 %v216
  %255 = vmatprep.subr.bf16.mxu0 %v222
  %256 = vmatpush1.bf16.msra.mxu0 %v221
  %257 = vmatprep.subr.bf16.mxu0 0
  %258 = vmatpush1.bf16.msra.mxu0 0
  %259 = vmatprep.subr.bf16.mxu0 0
  %260 = vmatpush1.bf16.msra.mxu0 0
  %261 = vmatprep.subr.bf16.mxu0 0
  %262 = vmatpush1.bf16.msra.mxu0 0
  %263 = vmatprep.subr.bf16.mxu0 0
  %264 = vmatpush1.bf16.msra.mxu0 0
  %265 = vmatprep.subr.bf16.mxu0 0
  %266 = vmatpush1.bf16.msra.mxu0 0
  %267 = vmatprep.subr.bf16.mxu0 0
  %268 = vmatpush1.bf16.msra.mxu0 0
  %269 = vmatprep.subr.bf16.mxu0 0
  %270 = vmatpush1.bf16.msra.mxu0 0
  %271 = vmatprep.subr.bf16.mxu0 0
  %272 = vmatpush1.bf16.msra.mxu0 0
  %273 = vmatprep.subr.bf16.mxu0 0
  %274 = vmatpush1.bf16.msra.mxu0 0
  %275 = vmatprep.subr.bf16.mxu0 0
  %276 = vmatpush1.bf16.msra.mxu0 0
  %277 = vmatprep.subr.bf16.mxu0 0
  %278 = vmatpush1.bf16.msra.mxu0 0
  %279 = vmatprep.subr.bf16.mxu0 0
  %280 = vmatpush1.bf16.msra.mxu0 0
  %281 = vmatprep.mubr.bf16.mxu0 0
  %282 = vmatmul.mubr.bf16.gmra.mrb[0].mxu0 %v247
  %v283 = vpop.f32.mrb[0].mxu0
  %v284 = vadd.f32 %v120, %v283
  %v285 = vpop.f32.mrb[0].mxu0
  %v286 = vadd.f32 %v124, %v285
  %v287 = vpop.f32.mrb[0].mxu0
  %v288 = vpop.f32.mrb[0].mxu0
  %289 = vdwg.mxu0
  %290 = vmatprep.subr.bf16.mxu0 %v209
  %291 = vmatpush1.bf16.msra.mxu0 %v208
  %292 = vmatprep.subr.bf16.mxu0 %v214
  %293 = vmatpush1.bf16.msra.mxu0 %v213
  %294 = vmatprep.subr.bf16.mxu0 %v219
  %295 = vmatpush1.bf16.msra.mxu0 %v218
  %296 = vmatprep.subr.bf16.mxu0 %v224
  %297 = vmatpush1.bf16.msra.mxu0 %v223
  %298 = vmatprep.subr.bf16.mxu0 0
  %299 = vmatpush1.bf16.msra.mxu0 0
  %300 = vmatprep.subr.bf16.mxu0 0
  %301 = vmatpush1.bf16.msra.mxu0 0
  %302 = vmatprep.subr.bf16.mxu0 0
  %303 = vmatpush1.bf16.msra.mxu0 0
  %304 = vmatprep.subr.bf16.mxu0 0
  %305 = vmatpush1.bf16.msra.mxu0 0
  %306 = vmatprep.subr.bf16.mxu0 0
  %307 = vmatpush1.bf16.msra.mxu0 0
  %308 = vmatprep.subr.bf16.mxu0 0
  %309 = vmatpush1.bf16.msra.mxu0 0
  %310 = vmatprep.subr.bf16.mxu0 0
  %311 = vmatpush1.bf16.msra.mxu0 0
  %312 = vmatprep.subr.bf16.mxu0 0
  %313 = vmatpush1.bf16.msra.mxu0 0
  %314 = vmatprep.subr.bf16.mxu0 0
  %315 = vmatpush1.bf16.msra.mxu0 0
  %316 = vmatprep.subr.bf16.mxu0 0
  %317 = vmatpush1.bf16.msra.mxu0 0
  %318 = vmatprep.subr.bf16.mxu0 0
  %319 = vmatpush1.bf16.msra.mxu0 0
  %320 = vmatprep.subr.bf16.mxu0 0
  %321 = vmatpush1.bf16.msra.mxu0 0
  %322 = vmatprep.mubr.bf16.mxu0 0
  %323 = vmatmul.mubr.bf16.gmra.mrb[0].mxu0 %v247
  %v324 = vpop.f32.mrb[0].mxu0
  %v325 = vadd.f32 %v128, %v324
  %v326 = vpop.f32.mrb[0].mxu0
  %v327 = vadd.f32 %v132, %v326
  %v328 = vpop.f32.mrb[0].mxu0
  %v329 = vpop.f32.mrb[0].mxu0
  %330 = vdwg.mxu0
  %331 = vmatprep.subr.bf16.mxu0 0
  %332 = vmatpush1.bf16.msra.mxu0 %v210
  %333 = vmatprep.subr.bf16.mxu0 0
  %334 = vmatpush1.bf16.msra.mxu0 %v215
  %335 = vmatprep.subr.bf16.mxu0 0
  %336 = vmatpush1.bf16.msra.mxu0 %v220
  %337 = vmatprep.subr.bf16.mxu0 0
  %338 = vmatpush1.bf16.msra.mxu0 %v225
  %339 = vmatprep.subr.bf16.mxu0 0
  %340 = vmatpush1.bf16.msra.mxu0 0
  %341 = vmatprep.subr.bf16.mxu0 0
  %342 = vmatpush1.bf16.msra.mxu0 0
  %343 = vmatprep.subr.bf16.mxu0 0
  %344 = vmatpush1.bf16.msra.mxu0 0
  %345 = vmatprep.subr.bf16.mxu0 0
  %346 = vmatpush1.bf16.msra.mxu0 0
  %347 = vmatprep.subr.bf16.mxu0 0
  %348 = vmatpush1.bf16.msra.mxu0 0
  %349 = vmatprep.subr.bf16.mxu0 0
  %350 = vmatpush1.bf16.msra.mxu0 0
  %351 = vmatprep.subr.bf16.mxu0 0
  %352 = vmatpush1.bf16.msra.mxu0 0
  %353 = vmatprep.subr.bf16.mxu0 0
  %354 = vmatpush1.bf16.msra.mxu0 0
  %355 = vmatprep.subr.bf16.mxu0 0
  %356 = vmatpush1.bf16.msra.mxu0 0
  %357 = vmatprep.subr.bf16.mxu0 0
  %358 = vmatpush1.bf16.msra.mxu0 0
  %359 = vmatprep.subr.bf16.mxu0 0
  %360 = vmatpush1.bf16.msra.mxu0 0
  %361 = vmatprep.subr.bf16.mxu0 0
  %362 = vmatpush1.bf16.msra.mxu0 0
  %363 = vmatprep.mubr.bf16.mxu0 0
  %364 = vmatmul.mubr.bf16.gmra.mrb[0].mxu0 %v247
  %v365 = vpop.f32.mrb[0].mxu0
  %v366 = vadd.f32 %v136, %v365
  %v367 = vpop.f32.mrb[0].mxu0
  %v368 = vpop.f32.mrb[0].mxu0
  %v369 = vpop.f32.mrb[0].mxu0
  %370 = vdwg.mxu0
  %v371 = vmax.f32 %v284, 0.0
  %v372 = vmax.f32 %v286, 0.0
  %v373 = vmax.f32 %v325, 0.0
  %v374 = vmax.f32 %v327, 0.0
  %v375 = vmax.f32 %v366, 0.0
  %v381 = vrot.slane %v371, 6
  %v382 = vrot.slane %v372, 6
  %v383 = vrot.slane %v373, 6
  %v384 = vrot.slane %v374, 6
  %v385 = vrot.slane %v375, 6
  %391 = vst [vmem:[#allocation2] sm:$0xc] %v381
  %392 = vst [vmem:[#allocation2 + $0x8] sm:$0xc] %v382
  %393 = vst [vmem:[#allocation2 + $0x10] sm:$0xc] %v383
  %394 = vst [vmem:[#allocation2 + $0x18] sm:$0xc] %v384
  %vm395 = vcmask 519170
  %396 = vst.msk [vmem:[#allocation2 + $0x20] sm:$0xc] %vm395, %v385
  %s397 = scalar_lea.vmem %s1, 160
  %v398 = vld [vmem:[%s397] sm:$0xff]
  %v399 = vld [vmem:[%s397 + $0x8] sm:$0xff]
  %v400 = vld [vmem:[%s397 + $0x10] sm:$0xf]
  %v401 = vld [vmem:[%s397 + $0x14] sm:$0xff]
  %v402 = vld [vmem:[%s397 + $0x1c] sm:$0xff]
  %v403 = vld [vmem:[%s397 + $0x24] sm:$0xf]
  %v404 = vld [vmem:[%s397 + $0x28] sm:$0xff]
  %v405 = vld [vmem:[%s397 + $0x30] sm:$0xff]
  %v406 = vld [vmem:[%s397 + $0x38] sm:$0xf]
  %v407 = vld [vmem:[%s397 + $0x3c] sm:$0xff]
  %v408 = vld [vmem:[%s397 + $0x44] sm:$0xff]
  %v409 = vld [vmem:[%s397 + $0x4c] sm:$0xf]
  %v410 = vld [vmem:[%s397 + $0x50] sm:$0xff]
  %v411 = vld [vmem:[%s397 + $0x58] sm:$0xff]
  %v412 = vld [vmem:[%s397 + $0x60] sm:$0xf]
  %v413 = vld [vmem:[%s397 + $0x64] sm:$0xff]
  %v414 = vld [vmem:[%s397 + $0x6c] sm:$0xff]
  %v415 = vld [vmem:[%s397 + $0x74] sm:$0xf]
  %v416 = vld [vmem:[%s397 + $0x78] sm:$0xff]
  %v417 = vld [vmem:[%s397 + $0x80] sm:$0xff]
  %v418 = vld [vmem:[%s397 + $0x88] sm:$0xf]
  %v419 = vld [vmem:[%s397 + $0x8c] sm:$0xff]
  %v420 = vld [vmem:[%s397 + $0x94] sm:$0xff]
  %v421 = vld [vmem:[%s397 + $0x9c] sm:$0xf]
  %s422 = scalar_lea.vmem %s2, 5
  %v423 = vld [vmem:[%s422] sm:$0x1f]
  %v425 = vlaneseq
  %v426 = vshrl.u32 %v425, 7
  %v427 = vsub.s32 0, %v426
  %v428 = vrot.slane %v423, %v427
  %v429 = vlaneseq
  %v430 = vshrl.u32 %v429, 7
  %v431 = vsub.s32 1, %v430
  %v432 = vrot.slane %v423, %v431
  %v433 = vlaneseq
  %v434 = vshrl.u32 %v433, 7
  %v435 = vsub.s32 2, %v434
  %v436 = vrot.slane %v423, %v435
  %v437 = vlaneseq
  %v438 = vshrl.u32 %v437, 7
  %v439 = vsub.s32 3, %v438
  %v440 = vrot.slane %v423, %v439
  %v441 = vlaneseq
  %v442 = vshrl.u32 %v441, 7
  %v443 = vsub.s32 4, %v442
  %v444 = vrot.slane %v423, %v443
  %v474 = vunpack.c.l.b16 %v398
  %v475 = vunpack.c.h.b16 %v398
  %v476 = vunpack.c.l.b16 %v399
  %v477 = vunpack.c.h.b16 %v399
  %v478 = vunpack.c.l.b16 %v400
  %v479 = vunpack.c.l.b16 %v401
  %v480 = vunpack.c.h.b16 %v401
  %v481 = vunpack.c.l.b16 %v402
  %v482 = vunpack.c.h.b16 %v402
  %v483 = vunpack.c.l.b16 %v403
  %v484 = vunpack.c.l.b16 %v404
  %v485 = vunpack.c.h.b16 %v404
  %v486 = vunpack.c.l.b16 %v405
  %v487 = vunpack.c.h.b16 %v405
  %v488 = vunpack.c.l.b16 %v406
  %v489 = vunpack.c.l.b16 %v407
  %v490 = vunpack.c.h.b16 %v407
  %v491 = vunpack.c.l.b16 %v408
  %v492 = vunpack.c.h.b16 %v408
  %v493 = vunpack.c.l.b16 %v409
  %v494 = vunpack.c.l.b16 %v410
  %v495 = vunpack.c.h.b16 %v410
  %v496 = vunpack.c.l.b16 %v411
  %v497 = vunpack.c.h.b16 %v411
  %v498 = vunpack.c.l.b16 %v412
  %v499 = vunpack.c.l.b16 %v413
  %v500 = vunpack.c.h.b16 %v413
  %v501 = vunpack.c.l.b16 %v414
  %v502 = vunpack.c.h.b16 %v414
  %v503 = vunpack.c.l.b16 %v415
  %v504 = vunpack.c.l.b16 %v416
  %v505 = vunpack.c.h.b16 %v416
  %v506 = vunpack.c.l.b16 %v417
  %v507 = vunpack.c.h.b16 %v417
  %v508 = vunpack.c.l.b16 %v418
  %v509 = vunpack.c.l.b16 %v419
  %v510 = vunpack.c.h.b16 %v419
  %v511 = vunpack.c.l.b16 %v420
  %v512 = vunpack.c.h.b16 %v420
  %v513 = vunpack.c.l.b16 %v421
  %v514 = vpack.c.b16 %v479, %v474
  %v515 = vpack.c.b16 %v480, %v475
  %v516 = vpack.c.b16 %v481, %v476
  %v517 = vpack.c.b16 %v482, %v477
  %v518 = vpack.c.b16 %v483, %v478
  %v519 = vpack.c.b16 %v489, %v484
  %v520 = vpack.c.b16 %v490, %v485
  %v521 = vpack.c.b16 %v491, %v486
  %v522 = vpack.c.b16 %v492, %v487
  %v523 = vpack.c.b16 %v493, %v488
  %v524 = vpack.c.b16 %v499, %v494
  %v525 = vpack.c.b16 %v500, %v495
  %v526 = vpack.c.b16 %v501, %v496
  %v527 = vpack.c.b16 %v502, %v497
  %v528 = vpack.c.b16 %v503, %v498
  %v529 = vpack.c.b16 %v509, %v504
  %v530 = vpack.c.b16 %v510, %v505
  %v531 = vpack.c.b16 %v511, %v506
  %v532 = vpack.c.b16 %v512, %v507
  %v533 = vpack.c.b16 %v513, %v508
  %554 = vmatprep.subr.bf16.mxu0 %v515
  %555 = vmatpush1.bf16.msra.mxu0 %v514
  %556 = vmatprep.subr.bf16.mxu0 %v520
  %557 = vmatpush1.bf16.msra.mxu0 %v519
  %558 = vmatprep.subr.bf16.mxu0 %v525
  %559 = vmatpush1.bf16.msra.mxu0 %v524
  %560 = vmatprep.subr.bf16.mxu0 %v530
  %561 = vmatpush1.bf16.msra.mxu0 %v529
  %562 = vmatprep.subr.bf16.mxu0 0
  %563 = vmatpush1.bf16.msra.mxu0 0
  %564 = vmatprep.subr.bf16.mxu0 0
  %565 = vmatpush1.bf16.msra.mxu0 0
  %566 = vmatprep.subr.bf16.mxu0 0
  %567 = vmatpush1.bf16.msra.mxu0 0
  %568 = vmatprep.subr.bf16.mxu0 0
  %569 = vmatpush1.bf16.msra.mxu0 0
  %570 = vmatprep.subr.bf16.mxu0 0
  %571 = vmatpush1.bf16.msra.mxu0 0
  %572 = vmatprep.subr.bf16.mxu0 0
  %573 = vmatpush1.bf16.msra.mxu0 0
  %574 = vmatprep.subr.bf16.mxu0 0
  %575 = vmatpush1.bf16.msra.mxu0 0
  %576 = vmatprep.subr.bf16.mxu0 0
  %577 = vmatpush1.bf16.msra.mxu0 0
  %578 = vmatprep.subr.bf16.mxu0 0
  %579 = vmatpush1.bf16.msra.mxu0 0
  %580 = vmatprep.subr.bf16.mxu0 0
  %581 = vmatpush1.bf16.msra.mxu0 0
  %582 = vmatprep.subr.bf16.mxu0 0
  %583 = vmatpush1.bf16.msra.mxu0 0
  %584 = vmatprep.subr.bf16.mxu0 0
  %585 = vmatpush1.bf16.msra.mxu0 0
  %586 = vmatprep.mubr.bf16.mxu0 0
  %587 = vmatmul.mubr.bf16.gmra.mrb[0].mxu0 %v247
  %v588 = vpop.f32.mrb[0].mxu0
  %v589 = vadd.f32 %v428, %v588
  %v590 = vpop.f32.mrb[0].mxu0
  %v591 = vadd.f32 %v432, %v590
  %v592 = vpop.f32.mrb[0].mxu0
  %v593 = vpop.f32.mrb[0].mxu0
  %594 = vdwg.mxu0
  %595 = vmatprep.subr.bf16.mxu0 %v517
  %596 = vmatpush1.bf16.msra.mxu0 %v516
  %597 = vmatprep.subr.bf16.mxu0 %v522
  %598 = vmatpush1.bf16.msra.mxu0 %v521
  %599 = vmatprep.subr.bf16.mxu0 %v527
  %600 = vmatpush1.bf16.msra.mxu0 %v526
  %601 = vmatprep.subr.bf16.mxu0 %v532
  %602 = vmatpush1.bf16.msra.mxu0 %v531
  %603 = vmatprep.subr.bf16.mxu0 0
  %604 = vmatpush1.bf16.msra.mxu0 0
  %605 = vmatprep.subr.bf16.mxu0 0
  %606 = vmatpush1.bf16.msra.mxu0 0
  %607 = vmatprep.subr.bf16.mxu0 0
  %608 = vmatpush1.bf16.msra.mxu0 0
  %609 = vmatprep.subr.bf16.mxu0 0
  %610 = vmatpush1.bf16.msra.mxu0 0
  %611 = vmatprep.subr.bf16.mxu0 0
  %612 = vmatpush1.bf16.msra.mxu0 0
  %613 = vmatprep.subr.bf16.mxu0 0
  %614 = vmatpush1.bf16.msra.mxu0 0
  %615 = vmatprep.subr.bf16.mxu0 0
  %616 = vmatpush1.bf16.msra.mxu0 0
  %617 = vmatprep.subr.bf16.mxu0 0
  %618 = vmatpush1.bf16.msra.mxu0 0
  %619 = vmatprep.subr.bf16.mxu0 0
  %620 = vmatpush1.bf16.msra.mxu0 0
  %621 = vmatprep.subr.bf16.mxu0 0
  %622 = vmatpush1.bf16.msra.mxu0 0
  %623 = vmatprep.subr.bf16.mxu0 0
  %624 = vmatpush1.bf16.msra.mxu0 0
  %625 = vmatprep.subr.bf16.mxu0 0
  %626 = vmatpush1.bf16.msra.mxu0 0
  %627 = vmatprep.mubr.bf16.mxu0 0
  %628 = vmatmul.mubr.bf16.gmra.mrb[0].mxu0 %v247
  %v629 = vpop.f32.mrb[0].mxu0
  %v630 = vadd.f32 %v436, %v629
  %v631 = vpop.f32.mrb[0].mxu0
  %v632 = vadd.f32 %v440, %v631
  %v633 = vpop.f32.mrb[0].mxu0
  %v634 = vpop.f32.mrb[0].mxu0
  %635 = vdwg.mxu0
  %636 = vmatprep.subr.bf16.mxu0 0
  %637 = vmatpush1.bf16.msra.mxu0 %v518
  %638 = vmatprep.subr.bf16.mxu0 0
  %639 = vmatpush1.bf16.msra.mxu0 %v523
  %640 = vmatprep.subr.bf16.mxu0 0
  %641 = vmatpush1.bf16.msra.mxu0 %v528
  %642 = vmatprep.subr.bf16.mxu0 0
  %643 = vmatpush1.bf16.msra.mxu0 %v533
  %644 = vmatprep.subr.bf16.mxu0 0
  %645 = vmatpush1.bf16.msra.mxu0 0
  %646 = vmatprep.subr.bf16.mxu0 0
  %647 = vmatpush1.bf16.msra.mxu0 0
  %648 = vmatprep.subr.bf16.mxu0 0
  %649 = vmatpush1.bf16.msra.mxu0 0
  %650 = vmatprep.subr.bf16.mxu0 0
  %651 = vmatpush1.bf16.msra.mxu0 0
  %652 = vmatprep.subr.bf16.mxu0 0
  %653 = vmatpush1.bf16.msra.mxu0 0
  %654 = vmatprep.subr.bf16.mxu0 0
  %655 = vmatpush1.bf16.msra.mxu0 0
  %656 = vmatprep.subr.bf16.mxu0 0
  %657 = vmatpush1.bf16.msra.mxu0 0
  %658 = vmatprep.subr.bf16.mxu0 0
  %659 = vmatpush1.bf16.msra.mxu0 0
  %660 = vmatprep.subr.bf16.mxu0 0
  %661 = vmatpush1.bf16.msra.mxu0 0
  %662 = vmatprep.subr.bf16.mxu0 0
  %663 = vmatpush1.bf16.msra.mxu0 0
  %664 = vmatprep.subr.bf16.mxu0 0
  %665 = vmatpush1.bf16.msra.mxu0 0
  %666 = vmatprep.subr.bf16.mxu0 0
  %667 = vmatpush1.bf16.msra.mxu0 0
  %668 = vmatprep.mubr.bf16.mxu0 0
  %669 = vmatmul.mubr.bf16.gmra.mrb[0].mxu0 %v247
  %v670 = vpop.f32.mrb[0].mxu0
  %v671 = vadd.f32 %v444, %v670
  %v672 = vpop.f32.mrb[0].mxu0
  %v673 = vpop.f32.mrb[0].mxu0
  %v674 = vpop.f32.mrb[0].mxu0
  %675 = vdwg.mxu0
  %v676 = vmax.f32 %v589, 0.0
  %v677 = vmax.f32 %v591, 0.0
  %v678 = vmax.f32 %v630, 0.0
  %v679 = vmax.f32 %v632, 0.0
  %v680 = vmax.f32 %v671, 0.0
  %v686 = vrot.slane %v676, 4
  %v687 = vrot.slane %v677, 4
  %v688 = vrot.slane %v678, 4
  %v689 = vrot.slane %v679, 4
  %v690 = vrot.slane %v680, 4
  %696 = vst [vmem:[#allocation2] sm:$0x30] %v686
  %697 = vst [vmem:[#allocation2 + $0x8] sm:$0x30] %v687
  %698 = vst [vmem:[#allocation2 + $0x10] sm:$0x30] %v688
  %699 = vst [vmem:[#allocation2 + $0x18] sm:$0x30] %v689
  %vm700 = vcmask 521220
  %701 = vst.msk [vmem:[#allocation2 + $0x20] sm:$0x30] %vm700, %v690
  %s702 = scalar_lea.vmem %s1, 320
  %v703 = vld [vmem:[%s702] sm:$0xff]
  %v704 = vld [vmem:[%s702 + $0x8] sm:$0xff]
  %v705 = vld [vmem:[%s702 + $0x10] sm:$0xf]
  %v706 = vld [vmem:[%s702 + $0x14] sm:$0xff]
  %v707 = vld [vmem:[%s702 + $0x1c] sm:$0xff]
  %v708 = vld [vmem:[%s702 + $0x24] sm:$0xf]
  %v709 = vld [vmem:[%s702 + $0x28] sm:$0xff]
  %v710 = vld [vmem:[%s702 + $0x30] sm:$0xff]
  %v711 = vld [vmem:[%s702 + $0x38] sm:$0xf]
  %v712 = vld [vmem:[%s702 + $0x3c] sm:$0xff]
  %v713 = vld [vmem:[%s702 + $0x44] sm:$0xff]
  %v714 = vld [vmem:[%s702 + $0x4c] sm:$0xf]
  %v715 = vld [vmem:[%s702 + $0x50] sm:$0xff]
  %v716 = vld [vmem:[%s702 + $0x58] sm:$0xff]
  %v717 = vld [vmem:[%s702 + $0x60] sm:$0xf]
  %v718 = vld [vmem:[%s702 + $0x64] sm:$0xff]
  %v719 = vld [vmem:[%s702 + $0x6c] sm:$0xff]
  %v720 = vld [vmem:[%s702 + $0x74] sm:$0xf]
  %v721 = vld [vmem:[%s702 + $0x78] sm:$0xff]
  %v722 = vld [vmem:[%s702 + $0x80] sm:$0xff]
  %v723 = vld [vmem:[%s702 + $0x88] sm:$0xf]
  %v724 = vld [vmem:[%s702 + $0x8c] sm:$0xff]
  %v725 = vld [vmem:[%s702 + $0x94] sm:$0xff]
  %v726 = vld [vmem:[%s702 + $0x9c] sm:$0xf]
  %s727 = scalar_lea.vmem %s2, 10
  %v728 = vld [vmem:[%s727] sm:$0x1f]
  %v730 = vlaneseq
  %v731 = vshrl.u32 %v730, 7
  %v732 = vsub.s32 0, %v731
  %v733 = vrot.slane %v728, %v732
  %v734 = vlaneseq
  %v735 = vshrl.u32 %v734, 7
  %v736 = vsub.s32 1, %v735
  %v737 = vrot.slane %v728, %v736
  %v738 = vlaneseq
  %v739 = vshrl.u32 %v738, 7
  %v740 = vsub.s32 2, %v739
  %v741 = vrot.slane %v728, %v740
  %v742 = vlaneseq
  %v743 = vshrl.u32 %v742, 7
  %v744 = vsub.s32 3, %v743
  %v745 = vrot.slane %v728, %v744
  %v746 = vlaneseq
  %v747 = vshrl.u32 %v746, 7
  %v748 = vsub.s32 4, %v747
  %v749 = vrot.slane %v728, %v748
  %v779 = vunpack.c.l.b16 %v703
  %v780 = vunpack.c.h.b16 %v703
  %v781 = vunpack.c.l.b16 %v704
  %v782 = vunpack.c.h.b16 %v704
  %v783 = vunpack.c.l.b16 %v705
  %v784 = vunpack.c.l.b16 %v706
  %v785 = vunpack.c.h.b16 %v706
  %v786 = vunpack.c.l.b16 %v707
  %v787 = vunpack.c.h.b16 %v707
  %v788 = vunpack.c.l.b16 %v708
  %v789 = vunpack.c.l.b16 %v709
  %v790 = vunpack.c.h.b16 %v709
  %v791 = vunpack.c.l.b16 %v710
  %v792 = vunpack.c.h.b16 %v710
  %v793 = vunpack.c.l.b16 %v711
  %v794 = vunpack.c.l.b16 %v712
  %v795 = vunpack.c.h.b16 %v712
  %v796 = vunpack.c.l.b16 %v713
  %v797 = vunpack.c.h.b16 %v713
  %v798 = vunpack.c.l.b16 %v714
  %v799 = vunpack.c.l.b16 %v715
  %v800 = vunpack.c.h.b16 %v715
  %v801 = vunpack.c.l.b16 %v716
  %v802 = vunpack.c.h.b16 %v716
  %v803 = vunpack.c.l.b16 %v717
  %v804 = vunpack.c.l.b16 %v718
  %v805 = vunpack.c.h.b16 %v718
  %v806 = vunpack.c.l.b16 %v719
  %v807 = vunpack.c.h.b16 %v719
  %v808 = vunpack.c.l.b16 %v720
  %v809 = vunpack.c.l.b16 %v721
  %v810 = vunpack.c.h.b16 %v721
  %v811 = vunpack.c.l.b16 %v722
  %v812 = vunpack.c.h.b16 %v722
  %v813 = vunpack.c.l.b16 %v723
  %v814 = vunpack.c.l.b16 %v724
  %v815 = vunpack.c.h.b16 %v724
  %v816 = vunpack.c.l.b16 %v725
  %v817 = vunpack.c.h.b16 %v725
  %v818 = vunpack.c.l.b16 %v726
  %v819 = vpack.c.b16 %v784, %v779
  %v820 = vpack.c.b16 %v785, %v780
  %v821 = vpack.c.b16 %v786, %v781
  %v822 = vpack.c.b16 %v787, %v782
  %v823 = vpack.c.b16 %v788, %v783
  %v824 = vpack.c.b16 %v794, %v789
  %v825 = vpack.c.b16 %v795, %v790
  %v826 = vpack.c.b16 %v796, %v791
  %v827 = vpack.c.b16 %v797, %v792
  %v828 = vpack.c.b16 %v798, %v793
  %v829 = vpack.c.b16 %v804, %v799
  %v830 = vpack.c.b16 %v805, %v800
  %v831 = vpack.c.b16 %v806, %v801
  %v832 = vpack.c.b16 %v807, %v802
  %v833 = vpack.c.b16 %v808, %v803
  %v834 = vpack.c.b16 %v814, %v809
  %v835 = vpack.c.b16 %v815, %v810
  %v836 = vpack.c.b16 %v816, %v811
  %v837 = vpack.c.b16 %v817, %v812
  %v838 = vpack.c.b16 %v818, %v813
  %859 = vmatprep.subr.bf16.mxu0 %v820
  %860 = vmatpush1.bf16.msra.mxu0 %v819
  %861 = vmatprep.subr.bf16.mxu0 %v825
  %862 = vmatpush1.bf16.msra.mxu0 %v824
  %863 = vmatprep.subr.bf16.mxu0 %v830
  %864 = vmatpush1.bf16.msra.mxu0 %v829
  %865 = vmatprep.subr.bf16.mxu0 %v835
  %866 = vmatpush1.bf16.msra.mxu0 %v834
  %867 = vmatprep.subr.bf16.mxu0 0
  %868 = vmatpush1.bf16.msra.mxu0 0
  %869 = vmatprep.subr.bf16.mxu0 0
  %870 = vmatpush1.bf16.msra.mxu0 0
  %871 = vmatprep.subr.bf16.mxu0 0
  %872 = vmatpush1.bf16.msra.mxu0 0
  %873 = vmatprep.subr.bf16.mxu0 0
  %874 = vmatpush1.bf16.msra.mxu0 0
  %875 = vmatprep.subr.bf16.mxu0 0
  %876 = vmatpush1.bf16.msra.mxu0 0
  %877 = vmatprep.subr.bf16.mxu0 0
  %878 = vmatpush1.bf16.msra.mxu0 0
  %879 = vmatprep.subr.bf16.mxu0 0
  %880 = vmatpush1.bf16.msra.mxu0 0
  %881 = vmatprep.subr.bf16.mxu0 0
  %882 = vmatpush1.bf16.msra.mxu0 0
  %883 = vmatprep.subr.bf16.mxu0 0
  %884 = vmatpush1.bf16.msra.mxu0 0
  %885 = vmatprep.subr.bf16.mxu0 0
  %886 = vmatpush1.bf16.msra.mxu0 0
  %887 = vmatprep.subr.bf16.mxu0 0
  %888 = vmatpush1.bf16.msra.mxu0 0
  %889 = vmatprep.subr.bf16.mxu0 0
  %890 = vmatpush1.bf16.msra.mxu0 0
  %891 = vmatprep.mubr.bf16.mxu0 0
  %892 = vmatmul.mubr.bf16.gmra.mrb[0].mxu0 %v247
  %v893 = vpop.f32.mrb[0].mxu0
  %v894 = vadd.f32 %v733, %v893
  %v895 = vpop.f32.mrb[0].mxu0
  %v896 = vadd.f32 %v737, %v895
  %v897 = vpop.f32.mrb[0].mxu0
  %v898 = vpop.f32.mrb[0].mxu0
  %899 = vdwg.mxu0
  %900 = vmatprep.subr.bf16.mxu0 %v822
  %901 = vmatpush1.bf16.msra.mxu0 %v821
  %902 = vmatprep.subr.bf16.mxu0 %v827
  %903 = vmatpush1.bf16.msra.mxu0 %v826
  %904 = vmatprep.subr.bf16.mxu0 %v832
  %905 = vmatpush1.bf16.msra.mxu0 %v831
  %906 = vmatprep.subr.bf16.mxu0 %v837
  %907 = vmatpush1.bf16.msra.mxu0 %v836
  %908 = vmatprep.subr.bf16.mxu0 0
  %909 = vmatpush1.bf16.msra.mxu0 0
  %910 = vmatprep.subr.bf16.mxu0 0
  %911 = vmatpush1.bf16.msra.mxu0 0
  %912 = vmatprep.subr.bf16.mxu0 0
  %913 = vmatpush1.bf16.msra.mxu0 0
  %914 = vmatprep.subr.bf16.mxu0 0
  %915 = vmatpush1.bf16.msra.mxu0 0
  %916 = vmatprep.subr.bf16.mxu0 0
  %917 = vmatpush1.bf16.msra.mxu0 0
  %918 = vmatprep.subr.bf16.mxu0 0
  %919 = vmatpush1.bf16.msra.mxu0 0
  %920 = vmatprep.subr.bf16.mxu0 0
  %921 = vmatpush1.bf16.msra.mxu0 0
  %922 = vmatprep.subr.bf16.mxu0 0
  %923 = vmatpush1.bf16.msra.mxu0 0
  %924 = vmatprep.subr.bf16.mxu0 0
  %925 = vmatpush1.bf16.msra.mxu0 0
  %926 = vmatprep.subr.bf16.mxu0 0
  %927 = vmatpush1.bf16.msra.mxu0 0
  %928 = vmatprep.subr.bf16.mxu0 0
  %929 = vmatpush1.bf16.msra.mxu0 0
  %930 = vmatprep.subr.bf16.mxu0 0
  %931 = vmatpush1.bf16.msra.mxu0 0
  %932 = vmatprep.mubr.bf16.mxu0 0
  %933 = vmatmul.mubr.bf16.gmra.mrb[0].mxu0 %v247
  %v934 = vpop.f32.mrb[0].mxu0
  %v935 = vadd.f32 %v741, %v934
  %v936 = vpop.f32.mrb[0].mxu0
  %v937 = vadd.f32 %v745, %v936
  %v938 = vpop.f32.mrb[0].mxu0
  %v939 = vpop.f32.mrb[0].mxu0
  %940 = vdwg.mxu0
  %941 = vmatprep.subr.bf16.mxu0 0
  %942 = vmatpush1.bf16.msra.mxu0 %v823
  %943 = vmatprep.subr.bf16.mxu0 0
  %944 = vmatpush1.bf16.msra.mxu0 %v828
  %945 = vmatprep.subr.bf16.mxu0 0
  %946 = vmatpush1.bf16.msra.mxu0 %v833
  %947 = vmatprep.subr.bf16.mxu0 0
  %948 = vmatpush1.bf16.msra.mxu0 %v838
  %949 = vmatprep.subr.bf16.mxu0 0
  %950 = vmatpush1.bf16.msra.mxu0 0
  %951 = vmatprep.subr.bf16.mxu0 0
  %952 = vmatpush1.bf16.msra.mxu0 0
  %953 = vmatprep.subr.bf16.mxu0 0
  %954 = vmatpush1.bf16.msra.mxu0 0
  %955 = vmatprep.subr.bf16.mxu0 0
  %956 = vmatpush1.bf16.msra.mxu0 0
  %957 = vmatprep.subr.bf16.mxu0 0
  %958 = vmatpush1.bf16.msra.mxu0 0
  %959 = vmatprep.subr.bf16.mxu0 0
  %960 = vmatpush1.bf16.msra.mxu0 0
  %961 = vmatprep.subr.bf16.mxu0 0
  %962 = vmatpush1.bf16.msra.mxu0 0
  %963 = vmatprep.subr.bf16.mxu0 0
  %964 = vmatpush1.bf16.msra.mxu0 0
  %965 = vmatprep.subr.bf16.mxu0 0
  %966 = vmatpush1.bf16.msra.mxu0 0
  %967 = vmatprep.subr.bf16.mxu0 0
  %968 = vmatpush1.bf16.msra.mxu0 0
  %969 = vmatprep.subr.bf16.mxu0 0
  %970 = vmatpush1.bf16.msra.mxu0 0
  %971 = vmatprep.subr.bf16.mxu0 0
  %972 = vmatpush1.bf16.msra.mxu0 0
  %973 = vmatprep.mubr.bf16.mxu0 0
  %974 = vmatmul.mubr.bf16.gmra.mrb[0].mxu0 %v247
  %v975 = vpop.f32.mrb[0].mxu0
  %v976 = vadd.f32 %v749, %v975
  %v977 = vpop.f32.mrb[0].mxu0
  %v978 = vpop.f32.mrb[0].mxu0
  %v979 = vpop.f32.mrb[0].mxu0
  %980 = vdwg.mxu0
  %v981 = vmax.f32 %v894, 0.0
  %v982 = vmax.f32 %v896, 0.0
  %v983 = vmax.f32 %v935, 0.0
  %v984 = vmax.f32 %v937, 0.0
  %v985 = vmax.f32 %v976, 0.0
  %v991 = vrot.slane %v981, 2
  %v992 = vrot.slane %v982, 2
  %v993 = vrot.slane %v983, 2
  %v994 = vrot.slane %v984, 2
  %v995 = vrot.slane %v985, 2
  %1001 = vst [vmem:[#allocation2] sm:$0xc0] %v991
  %1002 = vst [vmem:[#allocation2 + $0x8] sm:$0xc0] %v992
  %1003 = vst [vmem:[#allocation2 + $0x10] sm:$0xc0] %v993
  %1004 = vst [vmem:[#allocation2 + $0x18] sm:$0xc0] %v994
  %vm1005 = vcmask 523270
  %1006 = vst.msk [vmem:[#allocation2 + $0x20] sm:$0xc0] %vm1005, %v995
  %s1007 = scalar_lea.vmem %s1, 480
  %v1008 = vld [vmem:[%s1007] sm:$0xff]
  %v1009 = vld [vmem:[%s1007 + $0x8] sm:$0xff]
  %v1010 = vld [vmem:[%s1007 + $0x10] sm:$0xf]
  %v1011 = vld [vmem:[%s1007 + $0x14] sm:$0xff]
  %v1012 = vld [vmem:[%s1007 + $0x1c] sm:$0xff]
  %v1013 = vld [vmem:[%s1007 + $0x24] sm:$0xf]
  %v1014 = vld [vmem:[%s1007 + $0x28] sm:$0xff]
  %v1015 = vld [vmem:[%s1007 + $0x30] sm:$0xff]
  %v1016 = vld [vmem:[%s1007 + $0x38] sm:$0xf]
  %v1017 = vld [vmem:[%s1007 + $0x3c] sm:$0xff]
  %v1018 = vld [vmem:[%s1007 + $0x44] sm:$0xff]
  %v1019 = vld [vmem:[%s1007 + $0x4c] sm:$0xf]
  %v1020 = vld [vmem:[%s1007 + $0x50] sm:$0xff]
  %v1021 = vld [vmem:[%s1007 + $0x58] sm:$0xff]
  %v1022 = vld [vmem:[%s1007 + $0x60] sm:$0xf]
  %v1023 = vld [vmem:[%s1007 + $0x64] sm:$0xff]
  %v1024 = vld [vmem:[%s1007 + $0x6c] sm:$0xff]
  %v1025 = vld [vmem:[%s1007 + $0x74] sm:$0xf]
  %v1026 = vld [vmem:[%s1007 + $0x78] sm:$0xff]
  %v1027 = vld [vmem:[%s1007 + $0x80] sm:$0xff]
  %v1028 = vld [vmem:[%s1007 + $0x88] sm:$0xf]
  %v1029 = vld [vmem:[%s1007 + $0x8c] sm:$0xff]
  %v1030 = vld [vmem:[%s1007 + $0x94] sm:$0xff]
  %v1031 = vld [vmem:[%s1007 + $0x9c] sm:$0xf]
  %s1032 = scalar_lea.vmem %s2, 15
  %v1033 = vld [vmem:[%s1032] sm:$0x1f]
  %v1035 = vlaneseq
  %v1036 = vshrl.u32 %v1035, 7
  %v1037 = vsub.s32 0, %v1036
  %v1038 = vrot.slane %v1033, %v1037
  %v1039 = vlaneseq
  %v1040 = vshrl.u32 %v1039, 7
  %v1041 = vsub.s32 1, %v1040
  %v1042 = vrot.slane %v1033, %v1041
  %v1043 = vlaneseq
  %v1044 = vshrl.u32 %v1043, 7
  %v1045 = vsub.s32 2, %v1044
  %v1046 = vrot.slane %v1033, %v1045
  %v1047 = vlaneseq
  %v1048 = vshrl.u32 %v1047, 7
  %v1049 = vsub.s32 3, %v1048
  %v1050 = vrot.slane %v1033, %v1049
  %v1051 = vlaneseq
  %v1052 = vshrl.u32 %v1051, 7
  %v1053 = vsub.s32 4, %v1052
  %v1054 = vrot.slane %v1033, %v1053
  %v1084 = vunpack.c.l.b16 %v1008
  %v1085 = vunpack.c.h.b16 %v1008
  %v1086 = vunpack.c.l.b16 %v1009
  %v1087 = vunpack.c.h.b16 %v1009
  %v1088 = vunpack.c.l.b16 %v1010
  %v1089 = vunpack.c.l.b16 %v1011
  %v1090 = vunpack.c.h.b16 %v1011
  %v1091 = vunpack.c.l.b16 %v1012
  %v1092 = vunpack.c.h.b16 %v1012
  %v1093 = vunpack.c.l.b16 %v1013
  %v1094 = vunpack.c.l.b16 %v1014
  %v1095 = vunpack.c.h.b16 %v1014
  %v1096 = vunpack.c.l.b16 %v1015
  %v1097 = vunpack.c.h.b16 %v1015
  %v1098 = vunpack.c.l.b16 %v1016
  %v1099 = vunpack.c.l.b16 %v1017
  %v1100 = vunpack.c.h.b16 %v1017
  %v1101 = vunpack.c.l.b16 %v1018
  %v1102 = vunpack.c.h.b16 %v1018
  %v1103 = vunpack.c.l.b16 %v1019
  %v1104 = vunpack.c.l.b16 %v1020
  %v1105 = vunpack.c.h.b16 %v1020
  %v1106 = vunpack.c.l.b16 %v1021
  %v1107 = vunpack.c.h.b16 %v1021
  %v1108 = vunpack.c.l.b16 %v1022
  %v1109 = vunpack.c.l.b16 %v1023
  %v1110 = vunpack.c.h.b16 %v1023
  %v1111 = vunpack.c.l.b16 %v1024
  %v1112 = vunpack.c.h.b16 %v1024
  %v1113 = vunpack.c.l.b16 %v1025
  %v1114 = vunpack.c.l.b16 %v1026
  %v1115 = vunpack.c.h.b16 %v1026
  %v1116 = vunpack.c.l.b16 %v1027
  %v1117 = vunpack.c.h.b16 %v1027
  %v1118 = vunpack.c.l.b16 %v1028
  %v1119 = vunpack.c.l.b16 %v1029
  %v1120 = vunpack.c.h.b16 %v1029
  %v1121 = vunpack.c.l.b16 %v1030
  %v1122 = vunpack.c.h.b16 %v1030
  %v1123 = vunpack.c.l.b16 %v1031
  %v1124 = vpack.c.b16 %v1089, %v1084
  %v1125 = vpack.c.b16 %v1090, %v1085
  %v1126 = vpack.c.b16 %v1091, %v1086
  %v1127 = vpack.c.b16 %v1092, %v1087
  %v1128 = vpack.c.b16 %v1093, %v1088
  %v1129 = vpack.c.b16 %v1099, %v1094
  %v1130 = vpack.c.b16 %v1100, %v1095
  %v1131 = vpack.c.b16 %v1101, %v1096
  %v1132 = vpack.c.b16 %v1102, %v1097
  %v1133 = vpack.c.b16 %v1103, %v1098
  %v1134 = vpack.c.b16 %v1109, %v1104
  %v1135 = vpack.c.b16 %v1110, %v1105
  %v1136 = vpack.c.b16 %v1111, %v1106
  %v1137 = vpack.c.b16 %v1112, %v1107
  %v1138 = vpack.c.b16 %v1113, %v1108
  %v1139 = vpack.c.b16 %v1119, %v1114
  %v1140 = vpack.c.b16 %v1120, %v1115
  %v1141 = vpack.c.b16 %v1121, %v1116
  %v1142 = vpack.c.b16 %v1122, %v1117
  %v1143 = vpack.c.b16 %v1123, %v1118
  %1164 = vmatprep.subr.bf16.mxu0 %v1125
  %1165 = vmatpush1.bf16.msra.mxu0 %v1124
  %1166 = vmatprep.subr.bf16.mxu0 %v1130
  %1167 = vmatpush1.bf16.msra.mxu0 %v1129
  %1168 = vmatprep.subr.bf16.mxu0 %v1135
  %1169 = vmatpush1.bf16.msra.mxu0 %v1134
  %1170 = vmatprep.subr.bf16.mxu0 %v1140
  %1171 = vmatpush1.bf16.msra.mxu0 %v1139
  %1172 = vmatprep.subr.bf16.mxu0 0
  %1173 = vmatpush1.bf16.msra.mxu0 0
  %1174 = vmatprep.subr.bf16.mxu0 0
  %1175 = vmatpush1.bf16.msra.mxu0 0
  %1176 = vmatprep.subr.bf16.mxu0 0
  %1177 = vmatpush1.bf16.msra.mxu0 0
  %1178 = vmatprep.subr.bf16.mxu0 0
  %1179 = vmatpush1.bf16.msra.mxu0 0
  %1180 = vmatprep.subr.bf16.mxu0 0
  %1181 = vmatpush1.bf16.msra.mxu0 0
  %1182 = vmatprep.subr.bf16.mxu0 0
  %1183 = vmatpush1.bf16.msra.mxu0 0
  %1184 = vmatprep.subr.bf16.mxu0 0
  %1185 = vmatpush1.bf16.msra.mxu0 0
  %1186 = vmatprep.subr.bf16.mxu0 0
  %1187 = vmatpush1.bf16.msra.mxu0 0
  %1188 = vmatprep.subr.bf16.mxu0 0
  %1189 = vmatpush1.bf16.msra.mxu0 0
  %1190 = vmatprep.subr.bf16.mxu0 0
  %1191 = vmatpush1.bf16.msra.mxu0 0
  %1192 = vmatprep.subr.bf16.mxu0 0
  %1193 = vmatpush1.bf16.msra.mxu0 0
  %1194 = vmatprep.subr.bf16.mxu0 0
  %1195 = vmatpush1.bf16.msra.mxu0 0
  %1196 = vmatprep.mubr.bf16.mxu0 0
  %1197 = vmatmul.mubr.bf16.gmra.mrb[0].mxu0 %v247
  %v1198 = vpop.f32.mrb[0].mxu0
  %v1199 = vadd.f32 %v1038, %v1198
  %v1200 = vpop.f32.mrb[0].mxu0
  %v1201 = vadd.f32 %v1042, %v1200
  %v1202 = vpop.f32.mrb[0].mxu0
  %v1203 = vpop.f32.mrb[0].mxu0
  %1204 = vdwg.mxu0
  %1205 = vmatprep.subr.bf16.mxu0 %v1127
  %1206 = vmatpush1.bf16.msra.mxu0 %v1126
  %1207 = vmatprep.subr.bf16.mxu0 %v1132
  %1208 = vmatpush1.bf16.msra.mxu0 %v1131
  %1209 = vmatprep.subr.bf16.mxu0 %v1137
  %1210 = vmatpush1.bf16.msra.mxu0 %v1136
  %1211 = vmatprep.subr.bf16.mxu0 %v1142
  %1212 = vmatpush1.bf16.msra.mxu0 %v1141
  %1213 = vmatprep.subr.bf16.mxu0 0
  %1214 = vmatpush1.bf16.msra.mxu0 0
  %1215 = vmatprep.subr.bf16.mxu0 0
  %1216 = vmatpush1.bf16.msra.mxu0 0
  %1217 = vmatprep.subr.bf16.mxu0 0
  %1218 = vmatpush1.bf16.msra.mxu0 0
  %1219 = vmatprep.subr.bf16.mxu0 0
  %1220 = vmatpush1.bf16.msra.mxu0 0
  %1221 = vmatprep.subr.bf16.mxu0 0
  %1222 = vmatpush1.bf16.msra.mxu0 0
  %1223 = vmatprep.subr.bf16.mxu0 0
  %1224 = vmatpush1.bf16.msra.mxu0 0
  %1225 = vmatprep.subr.bf16.mxu0 0
  %1226 = vmatpush1.bf16.msra.mxu0 0
  %1227 = vmatprep.subr.bf16.mxu0 0
  %1228 = vmatpush1.bf16.msra.mxu0 0
  %1229 = vmatprep.subr.bf16.mxu0 0
  %1230 = vmatpush1.bf16.msra.mxu0 0
  %1231 = vmatprep.subr.bf16.mxu0 0
  %1232 = vmatpush1.bf16.msra.mxu0 0
  %1233 = vmatprep.subr.bf16.mxu0 0
  %1234 = vmatpush1.bf16.msra.mxu0 0
  %1235 = vmatprep.subr.bf16.mxu0 0
  %1236 = vmatpush1.bf16.msra.mxu0 0
  %1237 = vmatprep.mubr.bf16.mxu0 0
  %1238 = vmatmul.mubr.bf16.gmra.mrb[0].mxu0 %v247
  %v1239 = vpop.f32.mrb[0].mxu0
  %v1240 = vadd.f32 %v1046, %v1239
  %v1241 = vpop.f32.mrb[0].mxu0
  %v1242 = vadd.f32 %v1050, %v1241
  %v1243 = vpop.f32.mrb[0].mxu0
  %v1244 = vpop.f32.mrb[0].mxu0
  %1245 = vdwg.mxu0
  %1246 = vmatprep.subr.bf16.mxu0 0
  %1247 = vmatpush1.bf16.msra.mxu0 %v1128
  %1248 = vmatprep.subr.bf16.mxu0 0
  %1249 = vmatpush1.bf16.msra.mxu0 %v1133
  %1250 = vmatprep.subr.bf16.mxu0 0
  %1251 = vmatpush1.bf16.msra.mxu0 %v1138
  %1252 = vmatprep.subr.bf16.mxu0 0
  %1253 = vmatpush1.bf16.msra.mxu0 %v1143
  %1254 = vmatprep.subr.bf16.mxu0 0
  %1255 = vmatpush1.bf16.msra.mxu0 0
  %1256 = vmatprep.subr.bf16.mxu0 0
  %1257 = vmatpush1.bf16.msra.mxu0 0
  %1258 = vmatprep.subr.bf16.mxu0 0
  %1259 = vmatpush1.bf16.msra.mxu0 0
  %1260 = vmatprep.subr.bf16.mxu0 0
  %1261 = vmatpush1.bf16.msra.mxu0 0
  %1262 = vmatprep.subr.bf16.mxu0 0
  %1263 = vmatpush1.bf16.msra.mxu0 0
  %1264 = vmatprep.subr.bf16.mxu0 0
  %1265 = vmatpush1.bf16.msra.mxu0 0
  %1266 = vmatprep.subr.bf16.mxu0 0
  %1267 = vmatpush1.bf16.msra.mxu0 0
  %1268 = vmatprep.subr.bf16.mxu0 0
  %1269 = vmatpush1.bf16.msra.mxu0 0
  %1270 = vmatprep.subr.bf16.mxu0 0
  %1271 = vmatpush1.bf16.msra.mxu0 0
  %1272 = vmatprep.subr.bf16.mxu0 0
  %1273 = vmatpush1.bf16.msra.mxu0 0
  %1274 = vmatprep.subr.bf16.mxu0 0
  %1275 = vmatpush1.bf16.msra.mxu0 0
  %1276 = vmatprep.subr.bf16.mxu0 0
  %1277 = vmatpush1.bf16.msra.mxu0 0
  %1278 = vmatprep.mubr.bf16.mxu0 0
  %1279 = vmatmul.mubr.bf16.gmra.mrb[0].mxu0 %v247
  %v1280 = vpop.f32.mrb[0].mxu0
  %v1281 = vadd.f32 %v1054, %v1280
  %v1282 = vpop.f32.mrb[0].mxu0
  %v1283 = vpop.f32.mrb[0].mxu0
  %v1284 = vpop.f32.mrb[0].mxu0
  %1285 = vdwg.mxu0
  %v1286 = vmax.f32 %v1199, 0.0
  %v1287 = vmax.f32 %v1201, 0.0
  %v1288 = vmax.f32 %v1240, 0.0
  %v1289 = vmax.f32 %v1242, 0.0
  %v1290 = vmax.f32 %v1281, 0.0
  %1291 = vst [vmem:[#allocation2 + $0x28] sm:$0x3] %v1286
  %1292 = vst [vmem:[#allocation2 + $0x30] sm:$0x3] %v1287
  %1293 = vst [vmem:[#allocation2 + $0x38] sm:$0x3] %v1288
  %1294 = vst [vmem:[#allocation2 + $0x40] sm:$0x3] %v1289
  %1295 = vst.msk [vmem:[#allocation2 + $0x48] sm:$0x3] %vm63, %v1290
  %s1296 = scalar_lea.vmem %s1, 640
  %v1297 = vld [vmem:[%s1296] sm:$0xff]
  %v1298 = vld [vmem:[%s1296 + $0x8] sm:$0xff]
  %v1299 = vld [vmem:[%s1296 + $0x10] sm:$0xf]
  %v1300 = vld [vmem:[%s1296 + $0x14] sm:$0xff]
  %v1301 = vld [vmem:[%s1296 + $0x1c] sm:$0xff]
  %v1302 = vld [vmem:[%s1296 + $0x24] sm:$0xf]
  %v1303 = vld [vmem:[%s1296 + $0x28] sm:$0xff]
  %v1304 = vld [vmem:[%s1296 + $0x30] sm:$0xff]
  %v1305 = vld [vmem:[%s1296 + $0x38] sm:$0xf]
  %v1306 = vld [vmem:[%s1296 + $0x3c] sm:$0xff]
  %v1307 = vld [vmem:[%s1296 + $0x44] sm:$0xff]
  %v1308 = vld [vmem:[%s1296 + $0x4c] sm:$0xf]
  %v1309 = vld [vmem:[%s1296 + $0x50] sm:$0xff]
  %v1310 = vld [vmem:[%s1296 + $0x58] sm:$0xff]
  %v1311 = vld [vmem:[%s1296 + $0x60] sm:$0xf]
  %v1312 = vld [vmem:[%s1296 + $0x64] sm:$0xff]
  %v1313 = vld [vmem:[%s1296 + $0x6c] sm:$0xff]
  %v1314 = vld [vmem:[%s1296 + $0x74] sm:$0xf]
  %v1315 = vld [vmem:[%s1296 + $0x78] sm:$0xff]
  %v1316 = vld [vmem:[%s1296 + $0x80] sm:$0xff]
  %v1317 = vld [vmem:[%s1296 + $0x88] sm:$0xf]
  %v1318 = vld [vmem:[%s1296 + $0x8c] sm:$0xff]
  %v1319 = vld [vmem:[%s1296 + $0x94] sm:$0xff]
  %v1320 = vld [vmem:[%s1296 + $0x9c] sm:$0xf]
  %s1321 = scalar_lea.vmem %s2, 20
  %v1322 = vld [vmem:[%s1321] sm:$0x1f]
  %v1324 = vlaneseq
  %v1325 = vshrl.u32 %v1324, 7
  %v1326 = vsub.s32 0, %v1325
  %v1327 = vrot.slane %v1322, %v1326
  %v1328 = vlaneseq
  %v1329 = vshrl.u32 %v1328, 7
  %v1330 = vsub.s32 1, %v1329
  %v1331 = vrot.slane %v1322, %v1330
  %v1332 = vlaneseq
  %v1333 = vshrl.u32 %v1332, 7
  %v1334 = vsub.s32 2, %v1333
  %v1335 = vrot.slane %v1322, %v1334
  %v1336 = vlaneseq
  %v1337 = vshrl.u32 %v1336, 7
  %v1338 = vsub.s32 3, %v1337
  %v1339 = vrot.slane %v1322, %v1338
  %v1340 = vlaneseq
  %v1341 = vshrl.u32 %v1340, 7
  %v1342 = vsub.s32 4, %v1341
  %v1343 = vrot.slane %v1322, %v1342
  %v1373 = vunpack.c.l.b16 %v1297
  %v1374 = vunpack.c.h.b16 %v1297
  %v1375 = vunpack.c.l.b16 %v1298
  %v1376 = vunpack.c.h.b16 %v1298
  %v1377 = vunpack.c.l.b16 %v1299
  %v1378 = vunpack.c.l.b16 %v1300
  %v1379 = vunpack.c.h.b16 %v1300
  %v1380 = vunpack.c.l.b16 %v1301
  %v1381 = vunpack.c.h.b16 %v1301
  %v1382 = vunpack.c.l.b16 %v1302
  %v1383 = vunpack.c.l.b16 %v1303
  %v1384 = vunpack.c.h.b16 %v1303
  %v1385 = vunpack.c.l.b16 %v1304
  %v1386 = vunpack.c.h.b16 %v1304
  %v1387 = vunpack.c.l.b16 %v1305
  %v1388 = vunpack.c.l.b16 %v1306
  %v1389 = vunpack.c.h.b16 %v1306
  %v1390 = vunpack.c.l.b16 %v1307
  %v1391 = vunpack.c.h.b16 %v1307
  %v1392 = vunpack.c.l.b16 %v1308
  %v1393 = vunpack.c.l.b16 %v1309
  %v1394 = vunpack.c.h.b16 %v1309
  %v1395 = vunpack.c.l.b16 %v1310
  %v1396 = vunpack.c.h.b16 %v1310
  %v1397 = vunpack.c.l.b16 %v1311
  %v1398 = vunpack.c.l.b16 %v1312
  %v1399 = vunpack.c.h.b16 %v1312
  %v1400 = vunpack.c.l.b16 %v1313
  %v1401 = vunpack.c.h.b16 %v1313
  %v1402 = vunpack.c.l.b16 %v1314
  %v1403 = vunpack.c.l.b16 %v1315
  %v1404 = vunpack.c.h.b16 %v1315
  %v1405 = vunpack.c.l.b16 %v1316
  %v1406 = vunpack.c.h.b16 %v1316
  %v1407 = vunpack.c.l.b16 %v1317
  %v1408 = vunpack.c.l.b16 %v1318
  %v1409 = vunpack.c.h.b16 %v1318
  %v1410 = vunpack.c.l.b16 %v1319
  %v1411 = vunpack.c.h.b16 %v1319
  %v1412 = vunpack.c.l.b16 %v1320
  %v1413 = vpack.c.b16 %v1378, %v1373
  %v1414 = vpack.c.b16 %v1379, %v1374
  %v1415 = vpack.c.b16 %v1380, %v1375
  %v1416 = vpack.c.b16 %v1381, %v1376
  %v1417 = vpack.c.b16 %v1382, %v1377
  %v1418 = vpack.c.b16 %v1388, %v1383
  %v1419 = vpack.c.b16 %v1389, %v1384
  %v1420 = vpack.c.b16 %v1390, %v1385
  %v1421 = vpack.c.b16 %v1391, %v1386
  %v1422 = vpack.c.b16 %v1392, %v1387
  %v1423 = vpack.c.b16 %v1398, %v1393
  %v1424 = vpack.c.b16 %v1399, %v1394
  %v1425 = vpack.c.b16 %v1400, %v1395
  %v1426 = vpack.c.b16 %v1401, %v1396
  %v1427 = vpack.c.b16 %v1402, %v1397
  %v1428 = vpack.c.b16 %v1408, %v1403
  %v1429 = vpack.c.b16 %v1409, %v1404
  %v1430 = vpack.c.b16 %v1410, %v1405
  %v1431 = vpack.c.b16 %v1411, %v1406
  %v1432 = vpack.c.b16 %v1412, %v1407
  %1453 = vmatprep.subr.bf16.mxu0 %v1414
  %1454 = vmatpush1.bf16.msra.mxu0 %v1413
  %1455 = vmatprep.subr.bf16.mxu0 %v1419
  %1456 = vmatpush1.bf16.msra.mxu0 %v1418
  %1457 = vmatprep.subr.bf16.mxu0 %v1424
  %1458 = vmatpush1.bf16.msra.mxu0 %v1423
  %1459 = vmatprep.subr.bf16.mxu0 %v1429
  %1460 = vmatpush1.bf16.msra.mxu0 %v1428
  %1461 = vmatprep.subr.bf16.mxu0 0
  %1462 = vmatpush1.bf16.msra.mxu0 0
  %1463 = vmatprep.subr.bf16.mxu0 0
  %1464 = vmatpush1.bf16.msra.mxu0 0
  %1465 = vmatprep.subr.bf16.mxu0 0
  %1466 = vmatpush1.bf16.msra.mxu0 0
  %1467 = vmatprep.subr.bf16.mxu0 0
  %1468 = vmatpush1.bf16.msra.mxu0 0
  %1469 = vmatprep.subr.bf16.mxu0 0
  %1470 = vmatpush1.bf16.msra.mxu0 0
  %1471 = vmatprep.subr.bf16.mxu0 0
  %1472 = vmatpush1.bf16.msra.mxu0 0
  %1473 = vmatprep.subr.bf16.mxu0 0
  %1474 = vmatpush1.bf16.msra.mxu0 0
  %1475 = vmatprep.subr.bf16.mxu0 0
  %1476 = vmatpush1.bf16.msra.mxu0 0
  %1477 = vmatprep.subr.bf16.mxu0 0
  %1478 = vmatpush1.bf16.msra.mxu0 0
  %1479 = vmatprep.subr.bf16.mxu0 0
  %1480 = vmatpush1.bf16.msra.mxu0 0
  %1481 = vmatprep.subr.bf16.mxu0 0
  %1482 = vmatpush1.bf16.msra.mxu0 0
  %1483 = vmatprep.subr.bf16.mxu0 0
  %1484 = vmatpush1.bf16.msra.mxu0 0
  %1485 = vmatprep.mubr.bf16.mxu0 0
  %1486 = vmatmul.mubr.bf16.gmra.mrb[0].mxu0 %v247
  %v1487 = vpop.f32.mrb[0].mxu0
  %v1488 = vadd.f32 %v1327, %v1487
  %v1489 = vpop.f32.mrb[0].mxu0
  %v1490 = vadd.f32 %v1331, %v1489
  %v1491 = vpop.f32.mrb[0].mxu0
  %v1492 = vpop.f32.mrb[0].mxu0
  %1493 = vdwg.mxu0
  %1494 = vmatprep.subr.bf16.mxu0 %v1416
  %1495 = vmatpush1.bf16.msra.mxu0 %v1415
  %1496 = vmatprep.subr.bf16.mxu0 %v1421
  %1497 = vmatpush1.bf16.msra.mxu0 %v1420
  %1498 = vmatprep.subr.bf16.mxu0 %v1426
  %1499 = vmatpush1.bf16.msra.mxu0 %v1425
  %1500 = vmatprep.subr.bf16.mxu0 %v1431
  %1501 = vmatpush1.bf16.msra.mxu0 %v1430
  %1502 = vmatprep.subr.bf16.mxu0 0
  %1503 = vmatpush1.bf16.msra.mxu0 0
  %1504 = vmatprep.subr.bf16.mxu0 0
  %1505 = vmatpush1.bf16.msra.mxu0 0
  %1506 = vmatprep.subr.bf16.mxu0 0
  %1507 = vmatpush1.bf16.msra.mxu0 0
  %1508 = vmatprep.subr.bf16.mxu0 0
  %1509 = vmatpush1.bf16.msra.mxu0 0
  %1510 = vmatprep.subr.bf16.mxu0 0
  %1511 = vmatpush1.bf16.msra.mxu0 0
  %1512 = vmatprep.subr.bf16.mxu0 0
  %1513 = vmatpush1.bf16.msra.mxu0 0
  %1514 = vmatprep.subr.bf16.mxu0 0
  %1515 = vmatpush1.bf16.msra.mxu0 0
  %1516 = vmatprep.subr.bf16.mxu0 0
  %1517 = vmatpush1.bf16.msra.mxu0 0
  %1518 = vmatprep.subr.bf16.mxu0 0
  %1519 = vmatpush1.bf16.msra.mxu0 0
  %1520 = vmatprep.subr.bf16.mxu0 0
  %1521 = vmatpush1.bf16.msra.mxu0 0
  %1522 = vmatprep.subr.bf16.mxu0 0
  %1523 = vmatpush1.bf16.msra.mxu0 0
  %1524 = vmatprep.subr.bf16.mxu0 0
  %1525 = vmatpush1.bf16.msra.mxu0 0
  %1526 = vmatprep.mubr.bf16.mxu0 0
  %1527 = vmatmul.mubr.bf16.gmra.mrb[0].mxu0 %v247
  %v1528 = vpop.f32.mrb[0].mxu0
  %v1529 = vadd.f32 %v1335, %v1528
  %v1530 = vpop.f32.mrb[0].mxu0
  %v1531 = vadd.f32 %v1339, %v1530
  %v1532 = vpop.f32.mrb[0].mxu0
  %v1533 = vpop.f32.mrb[0].mxu0
  %1534 = vdwg.mxu0
  %1535 = vmatprep.subr.bf16.mxu0 0
  %1536 = vmatpush1.bf16.msra.mxu0 %v1417
  %1537 = vmatprep.subr.bf16.mxu0 0
  %1538 = vmatpush1.bf16.msra.mxu0 %v1422
  %1539 = vmatprep.subr.bf16.mxu0 0
  %1540 = vmatpush1.bf16.msra.mxu0 %v1427
  %1541 = vmatprep.subr.bf16.mxu0 0
  %1542 = vmatpush1.bf16.msra.mxu0 %v1432
  %1543 = vmatprep.subr.bf16.mxu0 0
  %1544 = vmatpush1.bf16.msra.mxu0 0
  %1545 = vmatprep.subr.bf16.mxu0 0
  %1546 = vmatpush1.bf16.msra.mxu0 0
  %1547 = vmatprep.subr.bf16.mxu0 0
  %1548 = vmatpush1.bf16.msra.mxu0 0
  %1549 = vmatprep.subr.bf16.mxu0 0
  %1550 = vmatpush1.bf16.msra.mxu0 0
  %1551 = vmatprep.subr.bf16.mxu0 0
  %1552 = vmatpush1.bf16.msra.mxu0 0
  %1553 = vmatprep.subr.bf16.mxu0 0
  %1554 = vmatpush1.bf16.msra.mxu0 0
  %1555 = vmatprep.subr.bf16.mxu0 0
  %1556 = vmatpush1.bf16.msra.mxu0 0
  %1557 = vmatprep.subr.bf16.mxu0 0
  %1558 = vmatpush1.bf16.msra.mxu0 0
  %1559 = vmatprep.subr.bf16.mxu0 0
  %1560 = vmatpush1.bf16.msra.mxu0 0
  %1561 = vmatprep.subr.bf16.mxu0 0
  %1562 = vmatpush1.bf16.msra.mxu0 0
  %1563 = vmatprep.subr.bf16.mxu0 0
  %1564 = vmatpush1.bf16.msra.mxu0 0
  %1565 = vmatprep.subr.bf16.mxu0 0
  %1566 = vmatpush1.bf16.msra.mxu0 0
  %1567 = vmatprep.mubr.bf16.mxu0 0
  %1568 = vmatmul.mubr.bf16.gmra.mrb[0].mxu0 %v247
  %v1569 = vpop.f32.mrb[0].mxu0
  %v1570 = vadd.f32 %v1343, %v1569
  %v1571 = vpop.f32.mrb[0].mxu0
  %v1572 = vpop.f32.mrb[0].mxu0
  %v1573 = vpop.f32.mrb[0].mxu0
  %1574 = vdwg.mxu0
  %v1575 = vmax.f32 %v1488, 0.0
  %v1576 = vmax.f32 %v1490, 0.0
  %v1577 = vmax.f32 %v1529, 0.0
  %v1578 = vmax.f32 %v1531, 0.0
  %v1579 = vmax.f32 %v1570, 0.0
  %v1585 = vrot.slane %v1575, 6
  %v1586 = vrot.slane %v1576, 6
  %v1587 = vrot.slane %v1577, 6
  %v1588 = vrot.slane %v1578, 6
  %v1589 = vrot.slane %v1579, 6
  %1595 = vst [vmem:[#allocation2 + $0x28] sm:$0xc] %v1585
  %1596 = vst [vmem:[#allocation2 + $0x30] sm:$0xc] %v1586
  %1597 = vst [vmem:[#allocation2 + $0x38] sm:$0xc] %v1587
  %1598 = vst [vmem:[#allocation2 + $0x40] sm:$0xc] %v1588
  %1599 = vst.msk [vmem:[#allocation2 + $0x48] sm:$0xc] %vm395, %v1589
  %s1600 = scalar_lea.vmem %s1, 800
  %v1601 = vld [vmem:[%s1600] sm:$0xff]
  %v1602 = vld [vmem:[%s1600 + $0x8] sm:$0xff]
  %v1603 = vld [vmem:[%s1600 + $0x10] sm:$0xf]
  %v1604 = vld [vmem:[%s1600 + $0x14] sm:$0xff]
  %v1605 = vld [vmem:[%s1600 + $0x1c] sm:$0xff]
  %v1606 = vld [vmem:[%s1600 + $0x24] sm:$0xf]
  %v1607 = vld [vmem:[%s1600 + $0x28] sm:$0xff]
  %v1608 = vld [vmem:[%s1600 + $0x30] sm:$0xff]
  %v1609 = vld [vmem:[%s1600 + $0x38] sm:$0xf]
  %v1610 = vld [vmem:[%s1600 + $0x3c] sm:$0xff]
  %v1611 = vld [vmem:[%s1600 + $0x44] sm:$0xff]
  %v1612 = vld [vmem:[%s1600 + $0x4c] sm:$0xf]
  %v1613 = vld [vmem:[%s1600 + $0x50] sm:$0xff]
  %v1614 = vld [vmem:[%s1600 + $0x58] sm:$0xff]
  %v1615 = vld [vmem:[%s1600 + $0x60] sm:$0xf]
  %v1616 = vld [vmem:[%s1600 + $0x64] sm:$0xff]
  %v1617 = vld [vmem:[%s1600 + $0x6c] sm:$0xff]
  %v1618 = vld [vmem:[%s1600 + $0x74] sm:$0xf]
  %v1619 = vld [vmem:[%s1600 + $0x78] sm:$0xff]
  %v1620 = vld [vmem:[%s1600 + $0x80] sm:$0xff]
  %v1621 = vld [vmem:[%s1600 + $0x88] sm:$0xf]
  %v1622 = vld [vmem:[%s1600 + $0x8c] sm:$0xff]
  %v1623 = vld [vmem:[%s1600 + $0x94] sm:$0xff]
  %v1624 = vld [vmem:[%s1600 + $0x9c] sm:$0xf]
  %s1625 = scalar_lea.vmem %s2, 25
  %v1626 = vld [vmem:[%s1625] sm:$0x1f]
  %v1628 = vlaneseq
  %v1629 = vshrl.u32 %v1628, 7
  %v1630 = vsub.s32 0, %v1629
  %v1631 = vrot.slane %v1626, %v1630
  %v1632 = vlaneseq
  %v1633 = vshrl.u32 %v1632, 7
  %v1634 = vsub.s32 1, %v1633
  %v1635 = vrot.slane %v1626, %v1634
  %v1636 = vlaneseq
  %v1637 = vshrl.u32 %v1636, 7
  %v1638 = vsub.s32 2, %v1637
  %v1639 = vrot.slane %v1626, %v1638
  %v1640 = vlaneseq
  %v1641 = vshrl.u32 %v1640, 7
  %v1642 = vsub.s32 3, %v1641
  %v1643 = vrot.slane %v1626, %v1642
  %v1644 = vlaneseq
  %v1645 = vshrl.u32 %v1644, 7
  %v1646 = vsub.s32 4, %v1645
  %v1647 = vrot.slane %v1626, %v1646
  %v1677 = vunpack.c.l.b16 %v1601
  %v1678 = vunpack.c.h.b16 %v1601
  %v1679 = vunpack.c.l.b16 %v1602
  %v1680 = vunpack.c.h.b16 %v1602
  %v1681 = vunpack.c.l.b16 %v1603
  %v1682 = vunpack.c.l.b16 %v1604
  %v1683 = vunpack.c.h.b16 %v1604
  %v1684 = vunpack.c.l.b16 %v1605
  %v1685 = vunpack.c.h.b16 %v1605
  %v1686 = vunpack.c.l.b16 %v1606
  %v1687 = vunpack.c.l.b16 %v1607
  %v1688 = vunpack.c.h.b16 %v1607
  %v1689 = vunpack.c.l.b16 %v1608
  %v1690 = vunpack.c.h.b16 %v1608
  %v1691 = vunpack.c.l.b16 %v1609
  %v1692 = vunpack.c.l.b16 %v1610
  %v1693 = vunpack.c.h.b16 %v1610
  %v1694 = vunpack.c.l.b16 %v1611
  %v1695 = vunpack.c.h.b16 %v1611
  %v1696 = vunpack.c.l.b16 %v1612
  %v1697 = vunpack.c.l.b16 %v1613
  %v1698 = vunpack.c.h.b16 %v1613
  %v1699 = vunpack.c.l.b16 %v1614
  %v1700 = vunpack.c.h.b16 %v1614
  %v1701 = vunpack.c.l.b16 %v1615
  %v1702 = vunpack.c.l.b16 %v1616
  %v1703 = vunpack.c.h.b16 %v1616
  %v1704 = vunpack.c.l.b16 %v1617
  %v1705 = vunpack.c.h.b16 %v1617
  %v1706 = vunpack.c.l.b16 %v1618
  %v1707 = vunpack.c.l.b16 %v1619
  %v1708 = vunpack.c.h.b16 %v1619
  %v1709 = vunpack.c.l.b16 %v1620
  %v1710 = vunpack.c.h.b16 %v1620
  %v1711 = vunpack.c.l.b16 %v1621
  %v1712 = vunpack.c.l.b16 %v1622
  %v1713 = vunpack.c.h.b16 %v1622
  %v1714 = vunpack.c.l.b16 %v1623
  %v1715 = vunpack.c.h.b16 %v1623
  %v1716 = vunpack.c.l.b16 %v1624
  %v1717 = vpack.c.b16 %v1682, %v1677
  %v1718 = vpack.c.b16 %v1683, %v1678
  %v1719 = vpack.c.b16 %v1684, %v1679
  %v1720 = vpack.c.b16 %v1685, %v1680
  %v1721 = vpack.c.b16 %v1686, %v1681
  %v1722 = vpack.c.b16 %v1692, %v1687
  %v1723 = vpack.c.b16 %v1693, %v1688
  %v1724 = vpack.c.b16 %v1694, %v1689
  %v1725 = vpack.c.b16 %v1695, %v1690
  %v1726 = vpack.c.b16 %v1696, %v1691
  %v1727 = vpack.c.b16 %v1702, %v1697
  %v1728 = vpack.c.b16 %v1703, %v1698
  %v1729 = vpack.c.b16 %v1704, %v1699
  %v1730 = vpack.c.b16 %v1705, %v1700
  %v1731 = vpack.c.b16 %v1706, %v1701
  %v1732 = vpack.c.b16 %v1712, %v1707
  %v1733 = vpack.c.b16 %v1713, %v1708
  %v1734 = vpack.c.b16 %v1714, %v1709
  %v1735 = vpack.c.b16 %v1715, %v1710
  %v1736 = vpack.c.b16 %v1716, %v1711
  %1757 = vmatprep.subr.bf16.mxu0 %v1718
  %1758 = vmatpush1.bf16.msra.mxu0 %v1717
  %1759 = vmatprep.subr.bf16.mxu0 %v1723
  %1760 = vmatpush1.bf16.msra.mxu0 %v1722
  %1761 = vmatprep.subr.bf16.mxu0 %v1728
  %1762 = vmatpush1.bf16.msra.mxu0 %v1727
  %1763 = vmatprep.subr.bf16.mxu0 %v1733
  %1764 = vmatpush1.bf16.msra.mxu0 %v1732
  %1765 = vmatprep.subr.bf16.mxu0 0
  %1766 = vmatpush1.bf16.msra.mxu0 0
  %1767 = vmatprep.subr.bf16.mxu0 0
  %1768 = vmatpush1.bf16.msra.mxu0 0
  %1769 = vmatprep.subr.bf16.mxu0 0
  %1770 = vmatpush1.bf16.msra.mxu0 0
  %1771 = vmatprep.subr.bf16.mxu0 0
  %1772 = vmatpush1.bf16.msra.mxu0 0
  %1773 = vmatprep.subr.bf16.mxu0 0
  %1774 = vmatpush1.bf16.msra.mxu0 0
  %1775 = vmatprep.subr.bf16.mxu0 0
  %1776 = vmatpush1.bf16.msra.mxu0 0
  %1777 = vmatprep.subr.bf16.mxu0 0
  %1778 = vmatpush1.bf16.msra.mxu0 0
  %1779 = vmatprep.subr.bf16.mxu0 0
  %1780 = vmatpush1.bf16.msra.mxu0 0
  %1781 = vmatprep.subr.bf16.mxu0 0
  %1782 = vmatpush1.bf16.msra.mxu0 0
  %1783 = vmatprep.subr.bf16.mxu0 0
  %1784 = vmatpush1.bf16.msra.mxu0 0
  %1785 = vmatprep.subr.bf16.mxu0 0
  %1786 = vmatpush1.bf16.msra.mxu0 0
  %1787 = vmatprep.subr.bf16.mxu0 0
  %1788 = vmatpush1.bf16.msra.mxu0 0
  %1789 = vmatprep.mubr.bf16.mxu0 0
  %1790 = vmatmul.mubr.bf16.gmra.mrb[0].mxu0 %v247
  %v1791 = vpop.f32.mrb[0].mxu0
  %v1792 = vadd.f32 %v1631, %v1791
  %v1793 = vpop.f32.mrb[0].mxu0
  %v1794 = vadd.f32 %v1635, %v1793
  %v1795 = vpop.f32.mrb[0].mxu0
  %v1796 = vpop.f32.mrb[0].mxu0
  %1797 = vdwg.mxu0
  %1798 = vmatprep.subr.bf16.mxu0 %v1720
  %1799 = vmatpush1.bf16.msra.mxu0 %v1719
  %1800 = vmatprep.subr.bf16.mxu0 %v1725
  %1801 = vmatpush1.bf16.msra.mxu0 %v1724
  %1802 = vmatprep.subr.bf16.mxu0 %v1730
  %1803 = vmatpush1.bf16.msra.mxu0 %v1729
  %1804 = vmatprep.subr.bf16.mxu0 %v1735
  %1805 = vmatpush1.bf16.msra.mxu0 %v1734
  %1806 = vmatprep.subr.bf16.mxu0 0
  %1807 = vmatpush1.bf16.msra.mxu0 0
  %1808 = vmatprep.subr.bf16.mxu0 0
  %1809 = vmatpush1.bf16.msra.mxu0 0
  %1810 = vmatprep.subr.bf16.mxu0 0
  %1811 = vmatpush1.bf16.msra.mxu0 0
  %1812 = vmatprep.subr.bf16.mxu0 0
  %1813 = vmatpush1.bf16.msra.mxu0 0
  %1814 = vmatprep.subr.bf16.mxu0 0
  %1815 = vmatpush1.bf16.msra.mxu0 0
  %1816 = vmatprep.subr.bf16.mxu0 0
  %1817 = vmatpush1.bf16.msra.mxu0 0
  %1818 = vmatprep.subr.bf16.mxu0 0
  %1819 = vmatpush1.bf16.msra.mxu0 0
  %1820 = vmatprep.subr.bf16.mxu0 0
  %1821 = vmatpush1.bf16.msra.mxu0 0
  %1822 = vmatprep.subr.bf16.mxu0 0
  %1823 = vmatpush1.bf16.msra.mxu0 0
  %1824 = vmatprep.subr.bf16.mxu0 0
  %1825 = vmatpush1.bf16.msra.mxu0 0
  %1826 = vmatprep.subr.bf16.mxu0 0
  %1827 = vmatpush1.bf16.msra.mxu0 0
  %1828 = vmatprep.subr.bf16.mxu0 0
  %1829 = vmatpush1.bf16.msra.mxu0 0
  %1830 = vmatprep.mubr.bf16.mxu0 0
  %1831 = vmatmul.mubr.bf16.gmra.mrb[0].mxu0 %v247
  %v1832 = vpop.f32.mrb[0].mxu0
  %v1833 = vadd.f32 %v1639, %v1832
  %v1834 = vpop.f32.mrb[0].mxu0
  %v1835 = vadd.f32 %v1643, %v1834
  %v1836 = vpop.f32.mrb[0].mxu0
  %v1837 = vpop.f32.mrb[0].mxu0
  %1838 = vdwg.mxu0
  %1839 = vmatprep.subr.bf16.mxu0 0
  %1840 = vmatpush1.bf16.msra.mxu0 %v1721
  %1841 = vmatprep.subr.bf16.mxu0 0
  %1842 = vmatpush1.bf16.msra.mxu0 %v1726
  %1843 = vmatprep.subr.bf16.mxu0 0
  %1844 = vmatpush1.bf16.msra.mxu0 %v1731
  %1845 = vmatprep.subr.bf16.mxu0 0
  %1846 = vmatpush1.bf16.msra.mxu0 %v1736
  %1847 = vmatprep.subr.bf16.mxu0 0
  %1848 = vmatpush1.bf16.msra.mxu0 0
  %1849 = vmatprep.subr.bf16.mxu0 0
  %1850 = vmatpush1.bf16.msra.mxu0 0
  %1851 = vmatprep.subr.bf16.mxu0 0
  %1852 = vmatpush1.bf16.msra.mxu0 0
  %1853 = vmatprep.subr.bf16.mxu0 0
  %1854 = vmatpush1.bf16.msra.mxu0 0
  %1855 = vmatprep.subr.bf16.mxu0 0
  %1856 = vmatpush1.bf16.msra.mxu0 0
  %1857 = vmatprep.subr.bf16.mxu0 0
  %1858 = vmatpush1.bf16.msra.mxu0 0
  %1859 = vmatprep.subr.bf16.mxu0 0
  %1860 = vmatpush1.bf16.msra.mxu0 0
  %1861 = vmatprep.subr.bf16.mxu0 0
  %1862 = vmatpush1.bf16.msra.mxu0 0
  %1863 = vmatprep.subr.bf16.mxu0 0
  %1864 = vmatpush1.bf16.msra.mxu0 0
  %1865 = vmatprep.subr.bf16.mxu0 0
  %1866 = vmatpush1.bf16.msra.mxu0 0
  %1867 = vmatprep.subr.bf16.mxu0 0
  %1868 = vmatpush1.bf16.msra.mxu0 0
  %1869 = vmatprep.subr.bf16.mxu0 0
  %1870 = vmatpush1.bf16.msra.mxu0 0
  %1871 = vmatprep.mubr.bf16.mxu0 0
  %1872 = vmatmul.mubr.bf16.gmra.mrb[0].mxu0 %v247
  %v1873 = vpop.f32.mrb[0].mxu0
  %v1874 = vadd.f32 %v1647, %v1873
  %v1875 = vpop.f32.mrb[0].mxu0
  %v1876 = vpop.f32.mrb[0].mxu0
  %v1877 = vpop.f32.mrb[0].mxu0
  %1878 = vdwg.mxu0
  %v1879 = vmax.f32 %v1792, 0.0
  %v1880 = vmax.f32 %v1794, 0.0
  %v1881 = vmax.f32 %v1833, 0.0
  %v1882 = vmax.f32 %v1835, 0.0
  %v1883 = vmax.f32 %v1874, 0.0
  %v1889 = vrot.slane %v1879, 4
  %v1890 = vrot.slane %v1880, 4
  %v1891 = vrot.slane %v1881, 4
  %v1892 = vrot.slane %v1882, 4
  %v1893 = vrot.slane %v1883, 4
  %1899 = vst [vmem:[#allocation2 + $0x28] sm:$0x30] %v1889
  %1900 = vst [vmem:[#allocation2 + $0x30] sm:$0x30] %v1890
  %1901 = vst [vmem:[#allocation2 + $0x38] sm:$0x30] %v1891
  %1902 = vst [vmem:[#allocation2 + $0x40] sm:$0x30] %v1892
  %1903 = vst.msk [vmem:[#allocation2 + $0x48] sm:$0x30] %vm700, %v1893
  %s1904 = scalar_lea.vmem %s1, 960
  %v1905 = vld [vmem:[%s1904] sm:$0xff]
  %v1906 = vld [vmem:[%s1904 + $0x8] sm:$0xff]
  %v1907 = vld [vmem:[%s1904 + $0x10] sm:$0xf]
  %v1908 = vld [vmem:[%s1904 + $0x14] sm:$0xff]
  %v1909 = vld [vmem:[%s1904 + $0x1c] sm:$0xff]
  %v1910 = vld [vmem:[%s1904 + $0x24] sm:$0xf]
  %v1911 = vld [vmem:[%s1904 + $0x28] sm:$0xff]
  %v1912 = vld [vmem:[%s1904 + $0x30] sm:$0xff]
  %v1913 = vld [vmem:[%s1904 + $0x38] sm:$0xf]
  %v1914 = vld [vmem:[%s1904 + $0x3c] sm:$0xff]
  %v1915 = vld [vmem:[%s1904 + $0x44] sm:$0xff]
  %v1916 = vld [vmem:[%s1904 + $0x4c] sm:$0xf]
  %v1917 = vld [vmem:[%s1904 + $0x50] sm:$0xff]
  %v1918 = vld [vmem:[%s1904 + $0x58] sm:$0xff]
  %v1919 = vld [vmem:[%s1904 + $0x60] sm:$0xf]
  %v1920 = vld [vmem:[%s1904 + $0x64] sm:$0xff]
  %v1921 = vld [vmem:[%s1904 + $0x6c] sm:$0xff]
  %v1922 = vld [vmem:[%s1904 + $0x74] sm:$0xf]
  %v1923 = vld [vmem:[%s1904 + $0x78] sm:$0xff]
  %v1924 = vld [vmem:[%s1904 + $0x80] sm:$0xff]
  %v1925 = vld [vmem:[%s1904 + $0x88] sm:$0xf]
  %v1926 = vld [vmem:[%s1904 + $0x8c] sm:$0xff]
  %v1927 = vld [vmem:[%s1904 + $0x94] sm:$0xff]
  %v1928 = vld [vmem:[%s1904 + $0x9c] sm:$0xf]
  %s1929 = scalar_lea.vmem %s2, 30
  %v1930 = vld [vmem:[%s1929] sm:$0x1f]
  %v1932 = vlaneseq
  %v1933 = vshrl.u32 %v1932, 7
  %v1934 = vsub.s32 0, %v1933
  %v1935 = vrot.slane %v1930, %v1934
  %v1936 = vlaneseq
  %v1937 = vshrl.u32 %v1936, 7
  %v1938 = vsub.s32 1, %v1937
  %v1939 = vrot.slane %v1930, %v1938
  %v1940 = vlaneseq
  %v1941 = vshrl.u32 %v1940, 7
  %v1942 = vsub.s32 2, %v1941
  %v1943 = vrot.slane %v1930, %v1942
  %v1944 = vlaneseq
  %v1945 = vshrl.u32 %v1944, 7
  %v1946 = vsub.s32 3, %v1945
  %v1947 = vrot.slane %v1930, %v1946
  %v1948 = vlaneseq
  %v1949 = vshrl.u32 %v1948, 7
  %v1950 = vsub.s32 4, %v1949
  %v1951 = vrot.slane %v1930, %v1950
  %v1981 = vunpack.c.l.b16 %v1905
  %v1982 = vunpack.c.h.b16 %v1905
  %v1983 = vunpack.c.l.b16 %v1906
  %v1984 = vunpack.c.h.b16 %v1906
  %v1985 = vunpack.c.l.b16 %v1907
  %v1986 = vunpack.c.l.b16 %v1908
  %v1987 = vunpack.c.h.b16 %v1908
  %v1988 = vunpack.c.l.b16 %v1909
  %v1989 = vunpack.c.h.b16 %v1909
  %v1990 = vunpack.c.l.b16 %v1910
  %v1991 = vunpack.c.l.b16 %v1911
  %v1992 = vunpack.c.h.b16 %v1911
  %v1993 = vunpack.c.l.b16 %v1912
  %v1994 = vunpack.c.h.b16 %v1912
  %v1995 = vunpack.c.l.b16 %v1913
  %v1996 = vunpack.c.l.b16 %v1914
  %v1997 = vunpack.c.h.b16 %v1914
  %v1998 = vunpack.c.l.b16 %v1915
  %v1999 = vunpack.c.h.b16 %v1915
  %v2000 = vunpack.c.l.b16 %v1916
  %v2001 = vunpack.c.l.b16 %v1917
  %v2002 = vunpack.c.h.b16 %v1917
  %v2003 = vunpack.c.l.b16 %v1918
  %v2004 = vunpack.c.h.b16 %v1918
  %v2005 = vunpack.c.l.b16 %v1919
  %v2006 = vunpack.c.l.b16 %v1920
  %v2007 = vunpack.c.h.b16 %v1920
  %v2008 = vunpack.c.l.b16 %v1921
  %v2009 = vunpack.c.h.b16 %v1921
  %v2010 = vunpack.c.l.b16 %v1922
  %v2011 = vunpack.c.l.b16 %v1923
  %v2012 = vunpack.c.h.b16 %v1923
  %v2013 = vunpack.c.l.b16 %v1924
  %v2014 = vunpack.c.h.b16 %v1924
  %v2015 = vunpack.c.l.b16 %v1925
  %v2016 = vunpack.c.l.b16 %v1926
  %v2017 = vunpack.c.h.b16 %v1926
  %v2018 = vunpack.c.l.b16 %v1927
  %v2019 = vunpack.c.h.b16 %v1927
  %v2020 = vunpack.c.l.b16 %v1928
  %v2021 = vpack.c.b16 %v1986, %v1981
  %v2022 = vpack.c.b16 %v1987, %v1982
  %v2023 = vpack.c.b16 %v1988, %v1983
  %v2024 = vpack.c.b16 %v1989, %v1984
  %v2025 = vpack.c.b16 %v1990, %v1985
  %v2026 = vpack.c.b16 %v1996, %v1991
  %v2027 = vpack.c.b16 %v1997, %v1992
  %v2028 = vpack.c.b16 %v1998, %v1993
  %v2029 = vpack.c.b16 %v1999, %v1994
  %v2030 = vpack.c.b16 %v2000, %v1995
  %v2031 = vpack.c.b16 %v2006, %v2001
  %v2032 = vpack.c.b16 %v2007, %v2002
  %v2033 = vpack.c.b16 %v2008, %v2003
  %v2034 = vpack.c.b16 %v2009, %v2004
  %v2035 = vpack.c.b16 %v2010, %v2005
  %v2036 = vpack.c.b16 %v2016, %v2011
  %v2037 = vpack.c.b16 %v2017, %v2012
  %v2038 = vpack.c.b16 %v2018, %v2013
  %v2039 = vpack.c.b16 %v2019, %v2014
  %v2040 = vpack.c.b16 %v2020, %v2015
  %2061 = vmatprep.subr.bf16.mxu0 %v2022
  %2062 = vmatpush1.bf16.msra.mxu0 %v2021
  %2063 = vmatprep.subr.bf16.mxu0 %v2027
  %2064 = vmatpush1.bf16.msra.mxu0 %v2026
  %2065 = vmatprep.subr.bf16.mxu0 %v2032
  %2066 = vmatpush1.bf16.msra.mxu0 %v2031
  %2067 = vmatprep.subr.bf16.mxu0 %v2037
  %2068 = vmatpush1.bf16.msra.mxu0 %v2036
  %2069 = vmatprep.subr.bf16.mxu0 0
  %2070 = vmatpush1.bf16.msra.mxu0 0
  %2071 = vmatprep.subr.bf16.mxu0 0
  %2072 = vmatpush1.bf16.msra.mxu0 0
  %2073 = vmatprep.subr.bf16.mxu0 0
  %2074 = vmatpush1.bf16.msra.mxu0 0
  %2075 = vmatprep.subr.bf16.mxu0 0
  %2076 = vmatpush1.bf16.msra.mxu0 0
  %2077 = vmatprep.subr.bf16.mxu0 0
  %2078 = vmatpush1.bf16.msra.mxu0 0
  %2079 = vmatprep.subr.bf16.mxu0 0
  %2080 = vmatpush1.bf16.msra.mxu0 0
  %2081 = vmatprep.subr.bf16.mxu0 0
  %2082 = vmatpush1.bf16.msra.mxu0 0
  %2083 = vmatprep.subr.bf16.mxu0 0
  %2084 = vmatpush1.bf16.msra.mxu0 0
  %2085 = vmatprep.subr.bf16.mxu0 0
  %2086 = vmatpush1.bf16.msra.mxu0 0
  %2087 = vmatprep.subr.bf16.mxu0 0
  %2088 = vmatpush1.bf16.msra.mxu0 0
  %2089 = vmatprep.subr.bf16.mxu0 0
  %2090 = vmatpush1.bf16.msra.mxu0 0
  %2091 = vmatprep.subr.bf16.mxu0 0
  %2092 = vmatpush1.bf16.msra.mxu0 0
  %2093 = vmatprep.mubr.bf16.mxu0 0
  %2094 = vmatmul.mubr.bf16.gmra.mrb[0].mxu0 %v247
  %v2095 = vpop.f32.mrb[0].mxu0
  %v2096 = vadd.f32 %v1935, %v2095
  %v2097 = vpop.f32.mrb[0].mxu0
  %v2098 = vadd.f32 %v1939, %v2097
  %v2099 = vpop.f32.mrb[0].mxu0
  %v2100 = vpop.f32.mrb[0].mxu0
  %2101 = vdwg.mxu0
  %2102 = vmatprep.subr.bf16.mxu0 %v2024
  %2103 = vmatpush1.bf16.msra.mxu0 %v2023
  %2104 = vmatprep.subr.bf16.mxu0 %v2029
  %2105 = vmatpush1.bf16.msra.mxu0 %v2028
  %2106 = vmatprep.subr.bf16.mxu0 %v2034
  %2107 = vmatpush1.bf16.msra.mxu0 %v2033
  %2108 = vmatprep.subr.bf16.mxu0 %v2039
  %2109 = vmatpush1.bf16.msra.mxu0 %v2038
  %2110 = vmatprep.subr.bf16.mxu0 0
  %2111 = vmatpush1.bf16.msra.mxu0 0
  %2112 = vmatprep.subr.bf16.mxu0 0
  %2113 = vmatpush1.bf16.msra.mxu0 0
  %2114 = vmatprep.subr.bf16.mxu0 0
  %2115 = vmatpush1.bf16.msra.mxu0 0
  %2116 = vmatprep.subr.bf16.mxu0 0
  %2117 = vmatpush1.bf16.msra.mxu0 0
  %2118 = vmatprep.subr.bf16.mxu0 0
  %2119 = vmatpush1.bf16.msra.mxu0 0
  %2120 = vmatprep.subr.bf16.mxu0 0
  %2121 = vmatpush1.bf16.msra.mxu0 0
  %2122 = vmatprep.subr.bf16.mxu0 0
  %2123 = vmatpush1.bf16.msra.mxu0 0
  %2124 = vmatprep.subr.bf16.mxu0 0
  %2125 = vmatpush1.bf16.msra.mxu0 0
  %2126 = vmatprep.subr.bf16.mxu0 0
  %2127 = vmatpush1.bf16.msra.mxu0 0
  %2128 = vmatprep.subr.bf16.mxu0 0
  %2129 = vmatpush1.bf16.msra.mxu0 0
  %2130 = vmatprep.subr.bf16.mxu0 0
  %2131 = vmatpush1.bf16.msra.mxu0 0
  %2132 = vmatprep.subr.bf16.mxu0 0
  %2133 = vmatpush1.bf16.msra.mxu0 0
  %2134 = vmatprep.mubr.bf16.mxu0 0
  %2135 = vmatmul.mubr.bf16.gmra.mrb[0].mxu0 %v247
  %v2136 = vpop.f32.mrb[0].mxu0
  %v2137 = vadd.f32 %v1943, %v2136
  %v2138 = vpop.f32.mrb[0].mxu0
  %v2139 = vadd.f32 %v1947, %v2138
  %v2140 = vpop.f32.mrb[0].mxu0
  %v2141 = vpop.f32.mrb[0].mxu0
  %2142 = vdwg.mxu0
  %2143 = vmatprep.subr.bf16.mxu0 0
  %2144 = vmatpush1.bf16.msra.mxu0 %v2025
  %2145 = vmatprep.subr.bf16.mxu0 0
  %2146 = vmatpush1.bf16.msra.mxu0 %v2030
  %2147 = vmatprep.subr.bf16.mxu0 0
  %2148 = vmatpush1.bf16.msra.mxu0 %v2035
  %2149 = vmatprep.subr.bf16.mxu0 0
  %2150 = vmatpush1.bf16.msra.mxu0 %v2040
  %2151 = vmatprep.subr.bf16.mxu0 0
  %2152 = vmatpush1.bf16.msra.mxu0 0
  %2153 = vmatprep.subr.bf16.mxu0 0
  %2154 = vmatpush1.bf16.msra.mxu0 0
  %2155 = vmatprep.subr.bf16.mxu0 0
  %2156 = vmatpush1.bf16.msra.mxu0 0
  %2157 = vmatprep.subr.bf16.mxu0 0
  %2158 = vmatpush1.bf16.msra.mxu0 0
  %2159 = vmatprep.subr.bf16.mxu0 0
  %2160 = vmatpush1.bf16.msra.mxu0 0
  %2161 = vmatprep.subr.bf16.mxu0 0
  %2162 = vmatpush1.bf16.msra.mxu0 0
  %2163 = vmatprep.subr.bf16.mxu0 0
  %2164 = vmatpush1.bf16.msra.mxu0 0
  %2165 = vmatprep.subr.bf16.mxu0 0
  %2166 = vmatpush1.bf16.msra.mxu0 0
  %2167 = vmatprep.subr.bf16.mxu0 0
  %2168 = vmatpush1.bf16.msra.mxu0 0
  %2169 = vmatprep.subr.bf16.mxu0 0
  %2170 = vmatpush1.bf16.msra.mxu0 0
  %2171 = vmatprep.subr.bf16.mxu0 0
  %2172 = vmatpush1.bf16.msra.mxu0 0
  %2173 = vmatprep.subr.bf16.mxu0 0
  %2174 = vmatpush1.bf16.msra.mxu0 0
  %2175 = vmatprep.mubr.bf16.mxu0 0
  %2176 = vmatmul.mubr.bf16.gmra.mrb[0].mxu0 %v247
  %v2177 = vpop.f32.mrb[0].mxu0
  %v2178 = vadd.f32 %v1951, %v2177
  %v2179 = vpop.f32.mrb[0].mxu0
  %v2180 = vpop.f32.mrb[0].mxu0
  %v2181 = vpop.f32.mrb[0].mxu0
  %2182 = vdwg.mxu0
  %v2183 = vmax.f32 %v2096, 0.0
  %v2184 = vmax.f32 %v2098, 0.0
  %v2185 = vmax.f32 %v2137, 0.0
  %v2186 = vmax.f32 %v2139, 0.0
  %v2187 = vmax.f32 %v2178, 0.0
  %v2193 = vrot.slane %v2183, 2
  %v2194 = vrot.slane %v2184, 2
  %v2195 = vrot.slane %v2185, 2
  %v2196 = vrot.slane %v2186, 2
  %v2197 = vrot.slane %v2187, 2
  %2203 = vst [vmem:[#allocation2 + $0x28] sm:$0xc0] %v2193
  %2204 = vst [vmem:[#allocation2 + $0x30] sm:$0xc0] %v2194
  %2205 = vst [vmem:[#allocation2 + $0x38] sm:$0xc0] %v2195
  %2206 = vst [vmem:[#allocation2 + $0x40] sm:$0xc0] %v2196
  %2207 = vst.msk [vmem:[#allocation2 + $0x48] sm:$0xc0] %vm1005, %v2197
  %v2208 = vld [vmem:[#allocation2] sm:$0xff]
  %v2209 = vld [vmem:[#allocation2 + $0x8] sm:$0xff]
  %v2210 = vld [vmem:[#allocation2 + $0x10] sm:$0xff]
  %v2211 = vld [vmem:[#allocation2 + $0x18] sm:$0xff]
  %v2212 = vld [vmem:[#allocation2 + $0x20] sm:$0xff]
  %v2213 = vld [vmem:[#allocation2 + $0x28] sm:$0x3f]
  %v2214 = vld [vmem:[#allocation2 + $0x30] sm:$0x3f]
  %v2215 = vld [vmem:[#allocation2 + $0x38] sm:$0x3f]
  %v2216 = vld [vmem:[#allocation2 + $0x40] sm:$0x3f]
  %v2217 = vld [vmem:[#allocation2 + $0x48] sm:$0x3f]
  %v2218 = vpack.c.bf16 %v2213, %v2208
  %v2219 = vpack.c.bf16 %v2214, %v2209
  %v2220 = vpack.c.bf16 %v2215, %v2210
  %v2221 = vpack.c.bf16 %v2216, %v2211
  %v2222 = vpack.c.bf16 %v2217, %v2212
  %v2223 = vld [vmem:[%s3] sm:$0xff]
  %v2224 = vld [vmem:[%s3 + $0x8] sm:$0xff]
  %v2225 = vld [vmem:[%s3 + $0x10] sm:$0xff]
  %v2226 = vld [vmem:[%s3 + $0x18] sm:$0xff]
  %v2227 = vld [vmem:[%s3 + $0x20] sm:$0xff]
  %v2228 = vld [vmem:[%s3 + $0x28] sm:$0xff]
  %v2229 = vld [vmem:[%s3 + $0x30] sm:$0xff]
  %v2230 = vld [vmem:[%s3 + $0x38] sm:$0xff]
  %v2231 = vld [vmem:[%s3 + $0x40] sm:$0xff]
  %v2232 = vld [vmem:[%s3 + $0x48] sm:$0xff]
  %v2233 = vld [vmem:[%s3 + $0x50] sm:$0xff]
  %v2234 = vld [vmem:[%s3 + $0x58] sm:$0xff]
  %v2235 = vld [vmem:[%s3 + $0x60] sm:$0xff]
  %v2236 = vld [vmem:[%s3 + $0x68] sm:$0xff]
  %v2237 = vld [vmem:[%s3 + $0x70] sm:$0xff]
  %v2238 = vld [vmem:[%s3 + $0x78] sm:$0xff]
  %v2239 = vld [vmem:[%s3 + $0x80] sm:$0xff]
  %v2240 = vld [vmem:[%s3 + $0x88] sm:$0xff]
  %v2241 = vld [vmem:[%s3 + $0x90] sm:$0xff]
  %v2242 = vld [vmem:[%s3 + $0x98] sm:$0xff]
  %v2243 = vld [vmem:[%s3 + $0xa0] sm:$0xff]
  %v2244 = vld [vmem:[%s3 + $0xa8] sm:$0xff]
  %v2245 = vld [vmem:[%s3 + $0xb0] sm:$0xff]
  %v2246 = vld [vmem:[%s3 + $0xb8] sm:$0xff]
  %v2247 = vld [vmem:[%s3 + $0xc0] sm:$0xff]
  %v2248 = vld [vmem:[%s3 + $0xc8] sm:$0xff]
  %v2249 = vld [vmem:[%s3 + $0xd0] sm:$0xff]
  %v2250 = vld [vmem:[%s3 + $0xd8] sm:$0xff]
  %v2251 = vld [vmem:[%s3 + $0xe0] sm:$0xff]
  %v2252 = vld [vmem:[%s3 + $0xe8] sm:$0xff]
  %v2253 = vld [vmem:[%s3 + $0xf0] sm:$0xff]
  %v2254 = vld [vmem:[%s3 + $0xf8] sm:$0xff]
  %v2255 = vld [vmem:[%s3 + $0x100] sm:$0xff]
  %v2256 = vld [vmem:[%s3 + $0x108] sm:$0xff]
  %v2257 = vld [vmem:[%s3 + $0x110] sm:$0xff]
  %v2258 = vld [vmem:[%s3 + $0x118] sm:$0xff]
  %v2259 = vld [vmem:[%s3 + $0x120] sm:$0xff]
  %v2260 = vld [vmem:[%s3 + $0x128] sm:$0xff]
  %v2261 = vld [vmem:[%s3 + $0x130] sm:$0xff]
  %v2262 = vld [vmem:[%s3 + $0x138] sm:$0xff]
  %v2263 = vld [vmem:[%s3 + $0x140] sm:$0xff]
  %v2264 = vld [vmem:[%s3 + $0x148] sm:$0xff]
  %v2265 = vld [vmem:[%s3 + $0x150] sm:$0xff]
  %v2266 = vld [vmem:[%s3 + $0x158] sm:$0xff]
  %v2267 = vld [vmem:[%s3 + $0x160] sm:$0xff]
  %v2268 = vld [vmem:[%s3 + $0x168] sm:$0xff]
  %v2269 = vld [vmem:[%s3 + $0x170] sm:$0xff]
  %v2270 = vld [vmem:[%s3 + $0x178] sm:$0xff]
  %v2271 = vld [vmem:[%s3 + $0x180] sm:$0xff]
  %v2272 = vld [vmem:[%s3 + $0x188] sm:$0xff]
  %v2273 = vld [vmem:[%s3 + $0x190] sm:$0xff]
  %v2274 = vld [vmem:[%s3 + $0x198] sm:$0xff]
  %v2275 = vld [vmem:[%s3 + $0x1a0] sm:$0xff]
  %v2276 = vld [vmem:[%s3 + $0x1a8] sm:$0xff]
  %v2277 = vld [vmem:[%s3 + $0x1b0] sm:$0xff]
  %v2278 = vld [vmem:[%s3 + $0x1b8] sm:$0xff]
  %v2279 = vld [vmem:[%s3 + $0x1c0] sm:$0xff]
  %v2280 = vld [vmem:[%s3 + $0x1c8] sm:$0xff]
  %v2281 = vld [vmem:[%s3 + $0x1d0] sm:$0xff]
  %v2282 = vld [vmem:[%s3 + $0x1d8] sm:$0xff]
  %v2283 = vld [vmem:[%s3 + $0x1e0] sm:$0xff]
  %v2284 = vld [vmem:[%s3 + $0x1e8] sm:$0xff]
  %v2285 = vld [vmem:[%s3 + $0x1f0] sm:$0xff]
  %v2286 = vld [vmem:[%s3 + $0x1f8] sm:$0xff]
  %v2287 = vld [vmem:[%s3 + $0x200] sm:$0xff]
  %v2288 = vld [vmem:[%s3 + $0x208] sm:$0xff]
  %v2289 = vld [vmem:[%s3 + $0x210] sm:$0xff]
  %v2290 = vld [vmem:[%s3 + $0x218] sm:$0xff]
  %v2291 = vld [vmem:[%s3 + $0x220] sm:$0xff]
  %v2292 = vld [vmem:[%s3 + $0x228] sm:$0xff]
  %v2293 = vld [vmem:[%s3 + $0x230] sm:$0xff]
  %v2294 = vld [vmem:[%s3 + $0x238] sm:$0xff]
  %v2295 = vld [vmem:[%s3 + $0x240] sm:$0xff]
  %v2296 = vld [vmem:[%s3 + $0x248] sm:$0xff]
  %v2297 = vld [vmem:[%s3 + $0x250] sm:$0xff]
  %v2298 = vld [vmem:[%s3 + $0x258] sm:$0xff]
  %v2299 = vld [vmem:[%s3 + $0x260] sm:$0xff]
  %v2300 = vld [vmem:[%s3 + $0x268] sm:$0xff]
  %v2301 = vld [vmem:[%s3 + $0x270] sm:$0xff]
  %v2302 = vld [vmem:[%s3 + $0x278] sm:$0xff]
  %v2303 = vld [vmem:[%s3 + $0x280] sm:$0xff]
  %v2304 = vld [vmem:[%s3 + $0x288] sm:$0xff]
  %v2305 = vld [vmem:[%s3 + $0x290] sm:$0xff]
  %v2306 = vld [vmem:[%s3 + $0x298] sm:$0xff]
  %v2307 = vld [vmem:[%s3 + $0x2a0] sm:$0xff]
  %v2308 = vld [vmem:[%s3 + $0x2a8] sm:$0xff]
  %v2309 = vld [vmem:[%s3 + $0x2b0] sm:$0xff]
  %v2310 = vld [vmem:[%s3 + $0x2b8] sm:$0xff]
  %v2311 = vld [vmem:[%s3 + $0x2c0] sm:$0xff]
  %v2312 = vld [vmem:[%s3 + $0x2c8] sm:$0xff]
  %v2313 = vld [vmem:[%s3 + $0x2d0] sm:$0xff]
  %v2314 = vld [vmem:[%s3 + $0x2d8] sm:$0xff]
  %v2315 = vld [vmem:[%s3 + $0x2e0] sm:$0xff]
  %v2316 = vld [vmem:[%s3 + $0x2e8] sm:$0xff]
  %v2317 = vld [vmem:[%s3 + $0x2f0] sm:$0xff]
  %v2318 = vld [vmem:[%s3 + $0x2f8] sm:$0xff]
  %v2319 = vld [vmem:[%s3 + $0x300] sm:$0xff]
  %v2320 = vld [vmem:[%s3 + $0x308] sm:$0xff]
  %v2321 = vld [vmem:[%s3 + $0x310] sm:$0xff]
  %v2322 = vld [vmem:[%s3 + $0x318] sm:$0xff]
  %v2323 = vld [vmem:[%s3 + $0x320] sm:$0xff]
  %v2324 = vld [vmem:[%s3 + $0x328] sm:$0xff]
  %v2325 = vld [vmem:[%s3 + $0x330] sm:$0xff]
  %v2326 = vld [vmem:[%s3 + $0x338] sm:$0xff]
  %v2327 = vld [vmem:[%s3 + $0x340] sm:$0xff]
  %v2328 = vld [vmem:[%s3 + $0x348] sm:$0xff]
  %v2329 = vld [vmem:[%s3 + $0x350] sm:$0xff]
  %v2330 = vld [vmem:[%s3 + $0x358] sm:$0xff]
  %v2331 = vld [vmem:[%s3 + $0x360] sm:$0xff]
  %v2332 = vld [vmem:[%s3 + $0x368] sm:$0xff]
  %v2333 = vld [vmem:[%s3 + $0x370] sm:$0xff]
  %v2334 = vld [vmem:[%s3 + $0x378] sm:$0xff]
  %v2335 = vld [vmem:[%s3 + $0x380] sm:$0xff]
  %v2336 = vld [vmem:[%s3 + $0x388] sm:$0xff]
  %v2337 = vld [vmem:[%s3 + $0x390] sm:$0xff]
  %v2338 = vld [vmem:[%s3 + $0x398] sm:$0xff]
  %v2339 = vld [vmem:[%s3 + $0x3a0] sm:$0xff]
  %v2340 = vld [vmem:[%s3 + $0x3a8] sm:$0xff]
  %v2341 = vld [vmem:[%s3 + $0x3b0] sm:$0xff]
  %v2342 = vld [vmem:[%s3 + $0x3b8] sm:$0xff]
  %v2343 = vld [vmem:[%s3 + $0x3c0] sm:$0xff]
  %v2344 = vld [vmem:[%s3 + $0x3c8] sm:$0xff]
  %v2345 = vld [vmem:[%s3 + $0x3d0] sm:$0xff]
  %v2346 = vld [vmem:[%s3 + $0x3d8] sm:$0xff]
  %v2347 = vld [vmem:[%s3 + $0x3e0] sm:$0xff]
  %v2348 = vld [vmem:[%s3 + $0x3e8] sm:$0xff]
  %v2349 = vld [vmem:[%s3 + $0x3f0] sm:$0xff]
  %v2350 = vld [vmem:[%s3 + $0x3f8] sm:$0xff]
  %v2351 = vld [vmem:[%s3 + $0x400] sm:$0xff]
  %v2352 = vld [vmem:[%s3 + $0x408] sm:$0xff]
  %v2353 = vld [vmem:[%s3 + $0x410] sm:$0xff]
  %v2354 = vld [vmem:[%s3 + $0x418] sm:$0xff]
  %v2355 = vld [vmem:[%s3 + $0x420] sm:$0xff]
  %v2356 = vld [vmem:[%s3 + $0x428] sm:$0xff]
  %v2357 = vld [vmem:[%s3 + $0x430] sm:$0xff]
  %v2358 = vld [vmem:[%s3 + $0x438] sm:$0xff]
  %v2359 = vld [vmem:[%s3 + $0x440] sm:$0xff]
  %v2360 = vld [vmem:[%s3 + $0x448] sm:$0xff]
  %v2361 = vld [vmem:[%s3 + $0x450] sm:$0xff]
  %v2362 = vld [vmem:[%s3 + $0x458] sm:$0xff]
  %v2363 = vld [vmem:[%s3 + $0x460] sm:$0xff]
  %v2364 = vld [vmem:[%s3 + $0x468] sm:$0xff]
  %v2365 = vld [vmem:[%s3 + $0x470] sm:$0xff]
  %v2366 = vld [vmem:[%s3 + $0x478] sm:$0xff]
  %v2367 = vld [vmem:[#allocation2] sm:$0xfc]
  %v2368 = vld [vmem:[#allocation2 + $0x8] sm:$0xfc]
  %v2369 = vld [vmem:[#allocation2 + $0x10] sm:$0xfc]
  %v2370 = vld [vmem:[#allocation2 + $0x18] sm:$0xfc]
  %v2371 = vld [vmem:[#allocation2 + $0x20] sm:$0xfc]
  %v2372 = vld [vmem:[#allocation2 + $0x28] sm:$0xff]
  %v2373 = vld [vmem:[#allocation2 + $0x30] sm:$0xff]
  %v2374 = vld [vmem:[#allocation2 + $0x38] sm:$0xff]
  %v2375 = vld [vmem:[#allocation2 + $0x40] sm:$0xff]
  %v2376 = vld [vmem:[#allocation2 + $0x48] sm:$0xff]
  %v2377 = vpack.c.bf16 %v2372, %v2367
  %v2378 = vpack.c.bf16 %v2373, %v2368
  %v2379 = vpack.c.bf16 %v2374, %v2369
  %v2380 = vpack.c.bf16 %v2375, %v2370
  %v2381 = vpack.c.bf16 %v2376, %v2371
  %s2382 = scalar_lea.vmem %s3, 1152
  %v2383 = vld [vmem:[%s2382] sm:$0xff]
  %v2384 = vld [vmem:[%s2382 + $0x8] sm:$0xff]
  %v2385 = vld [vmem:[%s2382 + $0x10] sm:$0xff]
  %v2386 = vld [vmem:[%s2382 + $0x18] sm:$0xff]
  %v2387 = vld [vmem:[%s2382 + $0x20] sm:$0xff]
  %v2388 = vld [vmem:[%s2382 + $0x28] sm:$0xff]
  %v2389 = vld [vmem:[%s2382 + $0x30] sm:$0xff]
  %v2390 = vld [vmem:[%s2382 + $0x38] sm:$0xff]
  %v2391 = vld [vmem:[%s2382 + $0x40] sm:$0xff]
  %v2392 = vld [vmem:[%s2382 + $0x48] sm:$0xff]
  %v2393 = vld [vmem:[%s2382 + $0x50] sm:$0xff]
  %v2394 = vld [vmem:[%s2382 + $0x58] sm:$0xff]
  %v2395 = vld [vmem:[%s2382 + $0x60] sm:$0xff]
  %v2396 = vld [vmem:[%s2382 + $0x68] sm:$0xff]
  %v2397 = vld [vmem:[%s2382 + $0x70] sm:$0xff]
  %v2398 = vld [vmem:[%s2382 + $0x78] sm:$0xff]
  %v2399 = vld [vmem:[%s2382 + $0x80] sm:$0xff]
  %v2400 = vld [vmem:[%s2382 + $0x88] sm:$0xff]
  %v2401 = vld [vmem:[%s2382 + $0x90] sm:$0xff]
  %v2402 = vld [vmem:[%s2382 + $0x98] sm:$0xff]
  %v2403 = vld [vmem:[%s2382 + $0xa0] sm:$0xff]
  %v2404 = vld [vmem:[%s2382 + $0xa8] sm:$0xff]
  %v2405 = vld [vmem:[%s2382 + $0xb0] sm:$0xff]
  %v2406 = vld [vmem:[%s2382 + $0xb8] sm:$0xff]
  %v2407 = vld [vmem:[%s2382 + $0xc0] sm:$0xff]
  %v2408 = vld [vmem:[%s2382 + $0xc8] sm:$0xff]
  %v2409 = vld [vmem:[%s2382 + $0xd0] sm:$0xff]
  %v2410 = vld [vmem:[%s2382 + $0xd8] sm:$0xff]
  %v2411 = vld [vmem:[%s2382 + $0xe0] sm:$0xff]
  %v2412 = vld [vmem:[%s2382 + $0xe8] sm:$0xff]
  %v2413 = vld [vmem:[%s2382 + $0xf0] sm:$0xff]
  %v2414 = vld [vmem:[%s2382 + $0xf8] sm:$0xff]
  %v2415 = vld [vmem:[%s2382 + $0x100] sm:$0xff]
  %v2416 = vld [vmem:[%s2382 + $0x108] sm:$0xff]
  %v2417 = vld [vmem:[%s2382 + $0x110] sm:$0xff]
  %v2418 = vld [vmem:[%s2382 + $0x118] sm:$0xff]
  %v2419 = vld [vmem:[%s2382 + $0x120] sm:$0xff]
  %v2420 = vld [vmem:[%s2382 + $0x128] sm:$0xff]
  %v2421 = vld [vmem:[%s2382 + $0x130] sm:$0xff]
  %v2422 = vld [vmem:[%s2382 + $0x138] sm:$0xff]
  %v2423 = vld [vmem:[%s2382 + $0x140] sm:$0xff]
  %v2424 = vld [vmem:[%s2382 + $0x148] sm:$0xff]
  %v2425 = vld [vmem:[%s2382 + $0x150] sm:$0xff]
  %v2426 = vld [vmem:[%s2382 + $0x158] sm:$0xff]
  %v2427 = vld [vmem:[%s2382 + $0x160] sm:$0xff]
  %v2428 = vld [vmem:[%s2382 + $0x168] sm:$0xff]
  %v2429 = vld [vmem:[%s2382 + $0x170] sm:$0xff]
  %v2430 = vld [vmem:[%s2382 + $0x178] sm:$0xff]
  %v2431 = vld [vmem:[%s2382 + $0x180] sm:$0xff]
  %v2432 = vld [vmem:[%s2382 + $0x188] sm:$0xff]
  %v2433 = vld [vmem:[%s2382 + $0x190] sm:$0xff]
  %v2434 = vld [vmem:[%s2382 + $0x198] sm:$0xff]
  %v2435 = vld [vmem:[%s2382 + $0x1a0] sm:$0xff]
  %v2436 = vld [vmem:[%s2382 + $0x1a8] sm:$0xff]
  %v2437 = vld [vmem:[%s2382 + $0x1b0] sm:$0xff]
  %v2438 = vld [vmem:[%s2382 + $0x1b8] sm:$0xff]
  %v2439 = vld [vmem:[%s2382 + $0x1c0] sm:$0xff]
  %v2440 = vld [vmem:[%s2382 + $0x1c8] sm:$0xff]
  %v2441 = vld [vmem:[%s2382 + $0x1d0] sm:$0xff]
  %v2442 = vld [vmem:[%s2382 + $0x1d8] sm:$0xff]
  %v2443 = vld [vmem:[%s2382 + $0x1e0] sm:$0xff]
  %v2444 = vld [vmem:[%s2382 + $0x1e8] sm:$0xff]
  %v2445 = vld [vmem:[%s2382 + $0x1f0] sm:$0xff]
  %v2446 = vld [vmem:[%s2382 + $0x1f8] sm:$0xff]
  %v2447 = vld [vmem:[%s2382 + $0x200] sm:$0xff]
  %v2448 = vld [vmem:[%s2382 + $0x208] sm:$0xff]
  %v2449 = vld [vmem:[%s2382 + $0x210] sm:$0xff]
  %v2450 = vld [vmem:[%s2382 + $0x218] sm:$0xff]
  %v2451 = vld [vmem:[%s2382 + $0x220] sm:$0xff]
  %v2452 = vld [vmem:[%s2382 + $0x228] sm:$0xff]
  %v2453 = vld [vmem:[%s2382 + $0x230] sm:$0xff]
  %v2454 = vld [vmem:[%s2382 + $0x238] sm:$0xff]
  %v2455 = vld [vmem:[%s2382 + $0x240] sm:$0xff]
  %v2456 = vld [vmem:[%s2382 + $0x248] sm:$0xff]
  %v2457 = vld [vmem:[%s2382 + $0x250] sm:$0xff]
  %v2458 = vld [vmem:[%s2382 + $0x258] sm:$0xff]
  %v2459 = vld [vmem:[%s2382 + $0x260] sm:$0xff]
  %v2460 = vld [vmem:[%s2382 + $0x268] sm:$0xff]
  %v2461 = vld [vmem:[%s2382 + $0x270] sm:$0xff]
  %v2462 = vld [vmem:[%s2382 + $0x278] sm:$0xff]
  %v2463 = vld [vmem:[%s2382 + $0x280] sm:$0xff]
  %v2464 = vld [vmem:[%s2382 + $0x288] sm:$0xff]
  %v2465 = vld [vmem:[%s2382 + $0x290] sm:$0xff]
  %v2466 = vld [vmem:[%s2382 + $0x298] sm:$0xff]
  %v2467 = vld [vmem:[%s2382 + $0x2a0] sm:$0xff]
  %v2468 = vld [vmem:[%s2382 + $0x2a8] sm:$0xff]
  %v2469 = vld [vmem:[%s2382 + $0x2b0] sm:$0xff]
  %v2470 = vld [vmem:[%s2382 + $0x2b8] sm:$0xff]
  %v2471 = vld [vmem:[%s2382 + $0x2c0] sm:$0xff]
  %v2472 = vld [vmem:[%s2382 + $0x2c8] sm:$0xff]
  %v2473 = vld [vmem:[%s2382 + $0x2d0] sm:$0xff]
  %v2474 = vld [vmem:[%s2382 + $0x2d8] sm:$0xff]
  %v2475 = vld [vmem:[%s2382 + $0x2e0] sm:$0xff]
  %v2476 = vld [vmem:[%s2382 + $0x2e8] sm:$0xff]
  %v2477 = vld [vmem:[%s2382 + $0x2f0] sm:$0xff]
  %v2478 = vld [vmem:[%s2382 + $0x2f8] sm:$0xff]
  %v2479 = vld [vmem:[%s2382 + $0x300] sm:$0xff]
  %v2480 = vld [vmem:[%s2382 + $0x308] sm:$0xff]
  %v2481 = vld [vmem:[%s2382 + $0x310] sm:$0xff]
  %v2482 = vld [vmem:[%s2382 + $0x318] sm:$0xff]
  %v2483 = vld [vmem:[%s2382 + $0x320] sm:$0xff]
  %v2484 = vld [vmem:[%s2382 + $0x328] sm:$0xff]
  %v2485 = vld [vmem:[%s2382 + $0x330] sm:$0xff]
  %v2486 = vld [vmem:[%s2382 + $0x338] sm:$0xff]
  %v2487 = vld [vmem:[%s2382 + $0x340] sm:$0xff]
  %v2488 = vld [vmem:[%s2382 + $0x348] sm:$0xff]
  %v2489 = vld [vmem:[%s2382 + $0x350] sm:$0xff]
  %v2490 = vld [vmem:[%s2382 + $0x358] sm:$0xff]
  %v2491 = vld [vmem:[%s2382 + $0x360] sm:$0xff]
  %v2492 = vld [vmem:[%s2382 + $0x368] sm:$0xff]
  %v2493 = vld [vmem:[%s2382 + $0x370] sm:$0xff]
  %v2494 = vld [vmem:[%s2382 + $0x378] sm:$0xff]
  %v2495 = vld [vmem:[%s2382 + $0x380] sm:$0xff]
  %v2496 = vld [vmem:[%s2382 + $0x388] sm:$0xff]
  %v2497 = vld [vmem:[%s2382 + $0x390] sm:$0xff]
  %v2498 = vld [vmem:[%s2382 + $0x398] sm:$0xff]
  %v2499 = vld [vmem:[%s2382 + $0x3a0] sm:$0xff]
  %v2500 = vld [vmem:[%s2382 + $0x3a8] sm:$0xff]
  %v2501 = vld [vmem:[%s2382 + $0x3b0] sm:$0xff]
  %v2502 = vld [vmem:[%s2382 + $0x3b8] sm:$0xff]
  %v2503 = vld [vmem:[%s2382 + $0x3c0] sm:$0xff]
  %v2504 = vld [vmem:[%s2382 + $0x3c8] sm:$0xff]
  %v2505 = vld [vmem:[%s2382 + $0x3d0] sm:$0xff]
  %v2506 = vld [vmem:[%s2382 + $0x3d8] sm:$0xff]
  %v2507 = vld [vmem:[%s2382 + $0x3e0] sm:$0xff]
  %v2508 = vld [vmem:[%s2382 + $0x3e8] sm:$0xff]
  %v2509 = vld [vmem:[%s2382 + $0x3f0] sm:$0xff]
  %v2510 = vld [vmem:[%s2382 + $0x3f8] sm:$0xff]
  %v2511 = vld [vmem:[%s2382 + $0x400] sm:$0xff]
  %v2512 = vld [vmem:[%s2382 + $0x408] sm:$0xff]
  %v2513 = vld [vmem:[%s2382 + $0x410] sm:$0xff]
  %v2514 = vld [vmem:[%s2382 + $0x418] sm:$0xff]
  %v2515 = vld [vmem:[%s2382 + $0x420] sm:$0xff]
  %v2516 = vld [vmem:[%s2382 + $0x428] sm:$0xff]
  %v2517 = vld [vmem:[%s2382 + $0x430] sm:$0xff]
  %v2518 = vld [vmem:[%s2382 + $0x438] sm:$0xff]
  %v2519 = vld [vmem:[%s2382 + $0x440] sm:$0xff]
  %v2520 = vld [vmem:[%s2382 + $0x448] sm:$0xff]
  %v2521 = vld [vmem:[%s2382 + $0x450] sm:$0xff]
  %v2522 = vld [vmem:[%s2382 + $0x458] sm:$0xff]
  %v2523 = vld [vmem:[%s2382 + $0x460] sm:$0xff]
  %v2524 = vld [vmem:[%s2382 + $0x468] sm:$0xff]
  %v2525 = vld [vmem:[%s2382 + $0x470] sm:$0xff]
  %v2526 = vld [vmem:[%s2382 + $0x478] sm:$0xff]
  %v2532 = vrot.slane %v2377, 1
  %v2533 = vrot.slane %v2378, 1
  %v2534 = vrot.slane %v2379, 1
  %v2535 = vrot.slane %v2380, 1
  %v2536 = vrot.slane %v2381, 1
  %v2685 = vunpack.c.l.b16 %v2383
  %v2686 = vunpack.c.h.b16 %v2383
  %v2687 = vunpack.c.l.b16 %v2384
  %v2688 = vunpack.c.h.b16 %v2384
  %v2689 = vunpack.c.l.b16 %v2385
  %v2690 = vunpack.c.h.b16 %v2385
  %v2691 = vunpack.c.l.b16 %v2386
  %v2692 = vunpack.c.h.b16 %v2386
  %v2693 = vunpack.c.l.b16 %v2387
  %v2694 = vunpack.c.h.b16 %v2387
  %v2695 = vunpack.c.l.b16 %v2388
  %v2696 = vunpack.c.h.b16 %v2388
  %v2697 = vunpack.c.l.b16 %v2389
  %v2698 = vunpack.c.h.b16 %v2389
  %v2699 = vunpack.c.l.b16 %v2390
  %v2700 = vunpack.c.h.b16 %v2390
  %v2701 = vunpack.c.l.b16 %v2391
  %v2702 = vunpack.c.h.b16 %v2391
  %v2703 = vunpack.c.l.b16 %v2392
  %v2704 = vunpack.c.h.b16 %v2392
  %v2705 = vunpack.c.l.b16 %v2393
  %v2706 = vunpack.c.h.b16 %v2393
  %v2707 = vunpack.c.l.b16 %v2394
  %v2708 = vunpack.c.h.b16 %v2394
  %v2709 = vunpack.c.l.b16 %v2395
  %v2710 = vunpack.c.h.b16 %v2395
  %v2711 = vunpack.c.l.b16 %v2396
  %v2712 = vunpack.c.h.b16 %v2396
  %v2713 = vunpack.c.l.b16 %v2397
  %v2714 = vunpack.c.h.b16 %v2397
  %v2715 = vunpack.c.l.b16 %v2398
  %v2716 = vunpack.c.h.b16 %v2398
  %v2717 = vunpack.c.l.b16 %v2399
  %v2718 = vunpack.c.h.b16 %v2399
  %v2719 = vunpack.c.l.b16 %v2400
  %v2720 = vunpack.c.h.b16 %v2400
  %v2721 = vunpack.c.l.b16 %v2401
  %v2722 = vunpack.c.h.b16 %v2401
  %v2723 = vunpack.c.l.b16 %v2402
  %v2724 = vunpack.c.h.b16 %v2402
  %v2725 = vunpack.c.l.b16 %v2403
  %v2726 = vunpack.c.h.b16 %v2403
  %v2727 = vunpack.c.l.b16 %v2404
  %v2728 = vunpack.c.h.b16 %v2404
  %v2729 = vunpack.c.l.b16 %v2405
  %v2730 = vunpack.c.h.b16 %v2405
  %v2731 = vunpack.c.l.b16 %v2406
  %v2732 = vunpack.c.h.b16 %v2406
  %v2733 = vunpack.c.l.b16 %v2407
  %v2734 = vunpack.c.h.b16 %v2407
  %v2735 = vunpack.c.l.b16 %v2408
  %v2736 = vunpack.c.h.b16 %v2408
  %v2737 = vunpack.c.l.b16 %v2409
  %v2738 = vunpack.c.h.b16 %v2409
  %v2739 = vunpack.c.l.b16 %v2410
  %v2740 = vunpack.c.h.b16 %v2410
  %v2741 = vunpack.c.l.b16 %v2411
  %v2742 = vunpack.c.h.b16 %v2411
  %v2743 = vunpack.c.l.b16 %v2412
  %v2744 = vunpack.c.h.b16 %v2412
  %v2745 = vunpack.c.l.b16 %v2413
  %v2746 = vunpack.c.h.b16 %v2413
  %v2747 = vunpack.c.l.b16 %v2414
  %v2748 = vunpack.c.h.b16 %v2414
  %v2749 = vunpack.c.l.b16 %v2415
  %v2750 = vunpack.c.h.b16 %v2415
  %v2751 = vunpack.c.l.b16 %v2416
  %v2752 = vunpack.c.h.b16 %v2416
  %v2753 = vunpack.c.l.b16 %v2417
  %v2754 = vunpack.c.h.b16 %v2417
  %v2755 = vunpack.c.l.b16 %v2418
  %v2756 = vunpack.c.h.b16 %v2418
  %v2757 = vunpack.c.l.b16 %v2419
  %v2758 = vunpack.c.h.b16 %v2419
  %v2759 = vunpack.c.l.b16 %v2420
  %v2760 = vunpack.c.h.b16 %v2420
  %v2761 = vunpack.c.l.b16 %v2421
  %v2762 = vunpack.c.h.b16 %v2421
  %v2763 = vunpack.c.l.b16 %v2422
  %v2764 = vunpack.c.h.b16 %v2422
  %v2765 = vunpack.c.l.b16 %v2423
  %v2766 = vunpack.c.h.b16 %v2423
  %v2767 = vunpack.c.l.b16 %v2424
  %v2768 = vunpack.c.h.b16 %v2424
  %v2769 = vunpack.c.l.b16 %v2425
  %v2770 = vunpack.c.h.b16 %v2425
  %v2771 = vunpack.c.l.b16 %v2426
  %v2772 = vunpack.c.h.b16 %v2426
  %v2773 = vunpack.c.l.b16 %v2427
  %v2774 = vunpack.c.h.b16 %v2427
  %v2775 = vunpack.c.l.b16 %v2428
  %v2776 = vunpack.c.h.b16 %v2428
  %v2777 = vunpack.c.l.b16 %v2429
  %v2778 = vunpack.c.h.b16 %v2429
  %v2779 = vunpack.c.l.b16 %v2430
  %v2780 = vunpack.c.h.b16 %v2430
  %v2781 = vunpack.c.l.b16 %v2431
  %v2782 = vunpack.c.h.b16 %v2431
  %v2783 = vunpack.c.l.b16 %v2432
  %v2784 = vunpack.c.h.b16 %v2432
  %v2785 = vunpack.c.l.b16 %v2433
  %v2786 = vunpack.c.h.b16 %v2433
  %v2787 = vunpack.c.l.b16 %v2434
  %v2788 = vunpack.c.h.b16 %v2434
  %v2789 = vunpack.c.l.b16 %v2435
  %v2790 = vunpack.c.h.b16 %v2435
  %v2791 = vunpack.c.l.b16 %v2436
  %v2792 = vunpack.c.h.b16 %v2436
  %v2793 = vunpack.c.l.b16 %v2437
  %v2794 = vunpack.c.h.b16 %v2437
  %v2795 = vunpack.c.l.b16 %v2438
  %v2796 = vunpack.c.h.b16 %v2438
  %v2797 = vunpack.c.l.b16 %v2439
  %v2798 = vunpack.c.h.b16 %v2439
  %v2799 = vunpack.c.l.b16 %v2440
  %v2800 = vunpack.c.h.b16 %v2440
  %v2801 = vunpack.c.l.b16 %v2441
  %v2802 = vunpack.c.h.b16 %v2441
  %v2803 = vunpack.c.l.b16 %v2442
  %v2804 = vunpack.c.h.b16 %v2442
  %v2805 = vunpack.c.l.b16 %v2443
  %v2806 = vunpack.c.h.b16 %v2443
  %v2807 = vunpack.c.l.b16 %v2444
  %v2808 = vunpack.c.h.b16 %v2444
  %v2809 = vunpack.c.l.b16 %v2445
  %v2810 = vunpack.c.h.b16 %v2445
  %v2811 = vunpack.c.l.b16 %v2446
  %v2812 = vunpack.c.h.b16 %v2446
  %v2813 = vunpack.c.l.b16 %v2447
  %v2814 = vunpack.c.h.b16 %v2447
  %v2815 = vunpack.c.l.b16 %v2448
  %v2816 = vunpack.c.h.b16 %v2448
  %v2817 = vunpack.c.l.b16 %v2449
  %v2818 = vunpack.c.h.b16 %v2449
  %v2819 = vunpack.c.l.b16 %v2450
  %v2820 = vunpack.c.h.b16 %v2450
  %v2821 = vunpack.c.l.b16 %v2451
  %v2822 = vunpack.c.h.b16 %v2451
  %v2823 = vunpack.c.l.b16 %v2452
  %v2824 = vunpack.c.h.b16 %v2452
  %v2825 = vunpack.c.l.b16 %v2453
  %v2826 = vunpack.c.h.b16 %v2453
  %v2827 = vunpack.c.l.b16 %v2454
  %v2828 = vunpack.c.h.b16 %v2454
  %v2829 = vunpack.c.l.b16 %v2455
  %v2830 = vunpack.c.h.b16 %v2455
  %v2831 = vunpack.c.l.b16 %v2456
  %v2832 = vunpack.c.h.b16 %v2456
  %v2833 = vunpack.c.l.b16 %v2457
  %v2834 = vunpack.c.h.b16 %v2457
  %v2835 = vunpack.c.l.b16 %v2458
  %v2836 = vunpack.c.h.b16 %v2458
  %v2837 = vunpack.c.l.b16 %v2459
  %v2838 = vunpack.c.h.b16 %v2459
  %v2839 = vunpack.c.l.b16 %v2460
  %v2840 = vunpack.c.h.b16 %v2460
  %v2841 = vunpack.c.l.b16 %v2461
  %v2842 = vunpack.c.h.b16 %v2461
  %v2843 = vunpack.c.l.b16 %v2462
  %v2844 = vunpack.c.h.b16 %v2462
  %v2845 = vunpack.c.l.b16 %v2463
  %v2846 = vunpack.c.h.b16 %v2463
  %v2847 = vunpack.c.l.b16 %v2464
  %v2848 = vunpack.c.h.b16 %v2464
  %v2849 = vunpack.c.l.b16 %v2465
  %v2850 = vunpack.c.h.b16 %v2465
  %v2851 = vunpack.c.l.b16 %v2466
  %v2852 = vunpack.c.h.b16 %v2466
  %v2853 = vunpack.c.l.b16 %v2467
  %v2854 = vunpack.c.h.b16 %v2467
  %v2855 = vunpack.c.l.b16 %v2468
  %v2856 = vunpack.c.h.b16 %v2468
  %v2857 = vunpack.c.l.b16 %v2469
  %v2858 = vunpack.c.h.b16 %v2469
  %v2859 = vunpack.c.l.b16 %v2470
  %v2860 = vunpack.c.h.b16 %v2470
  %v2861 = vunpack.c.l.b16 %v2471
  %v2862 = vunpack.c.h.b16 %v2471
  %v2863 = vunpack.c.l.b16 %v2472
  %v2864 = vunpack.c.h.b16 %v2472
  %v2865 = vunpack.c.l.b16 %v2473
  %v2866 = vunpack.c.h.b16 %v2473
  %v2867 = vunpack.c.l.b16 %v2474
  %v2868 = vunpack.c.h.b16 %v2474
  %v2869 = vunpack.c.l.b16 %v2475
  %v2870 = vunpack.c.h.b16 %v2475
  %v2871 = vunpack.c.l.b16 %v2476
  %v2872 = vunpack.c.h.b16 %v2476
  %v2873 = vunpack.c.l.b16 %v2477
  %v2874 = vunpack.c.h.b16 %v2477
  %v2875 = vunpack.c.l.b16 %v2478
  %v2876 = vunpack.c.h.b16 %v2478
  %v2877 = vunpack.c.l.b16 %v2479
  %v2878 = vunpack.c.h.b16 %v2479
  %v2879 = vunpack.c.l.b16 %v2480
  %v2880 = vunpack.c.h.b16 %v2480
  %v2881 = vunpack.c.l.b16 %v2481
  %v2882 = vunpack.c.h.b16 %v2481
  %v2883 = vunpack.c.l.b16 %v2482
  %v2884 = vunpack.c.h.b16 %v2482
  %v2885 = vunpack.c.l.b16 %v2483
  %v2886 = vunpack.c.h.b16 %v2483
  %v2887 = vunpack.c.l.b16 %v2484
  %v2888 = vunpack.c.h.b16 %v2484
  %v2889 = vunpack.c.l.b16 %v2485
  %v2890 = vunpack.c.h.b16 %v2485
  %v2891 = vunpack.c.l.b16 %v2486
  %v2892 = vunpack.c.h.b16 %v2486
  %v2893 = vunpack.c.l.b16 %v2487
  %v2894 = vunpack.c.h.b16 %v2487
  %v2895 = vunpack.c.l.b16 %v2488
  %v2896 = vunpack.c.h.b16 %v2488
  %v2897 = vunpack.c.l.b16 %v2489
  %v2898 = vunpack.c.h.b16 %v2489
  %v2899 = vunpack.c.l.b16 %v2490
  %v2900 = vunpack.c.h.b16 %v2490
  %v2901 = vunpack.c.l.b16 %v2491
  %v2902 = vunpack.c.h.b16 %v2491
  %v2903 = vunpack.c.l.b16 %v2492
  %v2904 = vunpack.c.h.b16 %v2492
  %v2905 = vunpack.c.l.b16 %v2493
  %v2906 = vunpack.c.h.b16 %v2493
  %v2907 = vunpack.c.l.b16 %v2494
  %v2908 = vunpack.c.h.b16 %v2494
  %v2909 = vunpack.c.l.b16 %v2495
  %v2910 = vunpack.c.h.b16 %v2495
  %v2911 = vunpack.c.l.b16 %v2496
  %v2912 = vunpack.c.h.b16 %v2496
  %v2913 = vunpack.c.l.b16 %v2497
  %v2914 = vunpack.c.h.b16 %v2497
  %v2915 = vunpack.c.l.b16 %v2498
  %v2916 = vunpack.c.h.b16 %v2498
  %v2917 = vunpack.c.l.b16 %v2499
  %v2918 = vunpack.c.h.b16 %v2499
  %v2919 = vunpack.c.l.b16 %v2500
  %v2920 = vunpack.c.h.b16 %v2500
  %v2921 = vunpack.c.l.b16 %v2501
  %v2922 = vunpack.c.h.b16 %v2501
  %v2923 = vunpack.c.l.b16 %v2502
  %v2924 = vunpack.c.h.b16 %v2502
  %v2925 = vunpack.c.l.b16 %v2503
  %v2926 = vunpack.c.h.b16 %v2503
  %v2927 = vunpack.c.l.b16 %v2504
  %v2928 = vunpack.c.h.b16 %v2504
  %v2929 = vunpack.c.l.b16 %v2505
  %v2930 = vunpack.c.h.b16 %v2505
  %v2931 = vunpack.c.l.b16 %v2506
  %v2932 = vunpack.c.h.b16 %v2506
  %v2933 = vunpack.c.l.b16 %v2507
  %v2934 = vunpack.c.h.b16 %v2507
  %v2935 = vunpack.c.l.b16 %v2508
  %v2936 = vunpack.c.h.b16 %v2508
  %v2937 = vunpack.c.l.b16 %v2509
  %v2938 = vunpack.c.h.b16 %v2509
  %v2939 = vunpack.c.l.b16 %v2510
  %v2940 = vunpack.c.h.b16 %v2510
  %v2941 = vunpack.c.l.b16 %v2511
  %v2942 = vunpack.c.h.b16 %v2511
  %v2943 = vunpack.c.l.b16 %v2512
  %v2944 = vunpack.c.h.b16 %v2512
  %v2945 = vunpack.c.l.b16 %v2513
  %v2946 = vunpack.c.h.b16 %v2513
  %v2947 = vunpack.c.l.b16 %v2514
  %v2948 = vunpack.c.h.b16 %v2514
  %v2949 = vunpack.c.l.b16 %v2515
  %v2950 = vunpack.c.h.b16 %v2515
  %v2951 = vunpack.c.l.b16 %v2516
  %v2952 = vunpack.c.h.b16 %v2516
  %v2953 = vunpack.c.l.b16 %v2517
  %v2954 = vunpack.c.h.b16 %v2517
  %v2955 = vunpack.c.l.b16 %v2518
  %v2956 = vunpack.c.h.b16 %v2518
  %v2957 = vunpack.c.l.b16 %v2519
  %v2958 = vunpack.c.h.b16 %v2519
  %v2959 = vunpack.c.l.b16 %v2520
  %v2960 = vunpack.c.h.b16 %v2520
  %v2961 = vunpack.c.l.b16 %v2521
  %v2962 = vunpack.c.h.b16 %v2521
  %v2963 = vunpack.c.l.b16 %v2522
  %v2964 = vunpack.c.h.b16 %v2522
  %v2965 = vunpack.c.l.b16 %v2523
  %v2966 = vunpack.c.h.b16 %v2523
  %v2967 = vunpack.c.l.b16 %v2524
  %v2968 = vunpack.c.h.b16 %v2524
  %v2969 = vunpack.c.l.b16 %v2525
  %v2970 = vunpack.c.h.b16 %v2525
  %v2971 = vunpack.c.l.b16 %v2526
  %v2972 = vunpack.c.h.b16 %v2526
  %v2973 = vpack.c.b16 %v2689, %v2685
  %v2974 = vpack.c.b16 %v2690, %v2686
  %v2975 = vpack.c.b16 %v2691, %v2687
  %v2976 = vpack.c.b16 %v2692, %v2688
  %v2977 = vpack.c.b16 %v2697, %v2693
  %v2978 = vpack.c.b16 %v2698, %v2694
  %v2979 = vpack.c.b16 %v2699, %v2695
  %v2980 = vpack.c.b16 %v2700, %v2696
  %v2981 = vpack.c.b16 %v2705, %v2701
  %v2982 = vpack.c.b16 %v2706, %v2702
  %v2983 = vpack.c.b16 %v2707, %v2703
  %v2984 = vpack.c.b16 %v2708, %v2704
  %v2985 = vpack.c.b16 %v2713, %v2709
  %v2986 = vpack.c.b16 %v2714, %v2710
  %v2987 = vpack.c.b16 %v2715, %v2711
  %v2988 = vpack.c.b16 %v2716, %v2712
  %v2989 = vpack.c.b16 %v2721, %v2717
  %v2990 = vpack.c.b16 %v2722, %v2718
  %v2991 = vpack.c.b16 %v2723, %v2719
  %v2992 = vpack.c.b16 %v2724, %v2720
  %v2993 = vpack.c.b16 %v2729, %v2725
  %v2994 = vpack.c.b16 %v2730, %v2726
  %v2995 = vpack.c.b16 %v2731, %v2727
  %v2996 = vpack.c.b16 %v2732, %v2728
  %v2997 = vpack.c.b16 %v2737, %v2733
  %v2998 = vpack.c.b16 %v2738, %v2734
  %v2999 = vpack.c.b16 %v2739, %v2735
  %v3000 = vpack.c.b16 %v2740, %v2736
  %v3001 = vpack.c.b16 %v2745, %v2741
  %v3002 = vpack.c.b16 %v2746, %v2742
  %v3003 = vpack.c.b16 %v2747, %v2743
  %v3004 = vpack.c.b16 %v2748, %v2744
  %v3005 = vpack.c.b16 %v2753, %v2749
  %v3006 = vpack.c.b16 %v2754, %v2750
  %v3007 = vpack.c.b16 %v2755, %v2751
  %v3008 = vpack.c.b16 %v2756, %v2752
  %v3009 = vpack.c.b16 %v2761, %v2757
  %v3010 = vpack.c.b16 %v2762, %v2758
  %v3011 = vpack.c.b16 %v2763, %v2759
  %v3012 = vpack.c.b16 %v2764, %v2760
  %v3013 = vpack.c.b16 %v2769, %v2765
  %v3014 = vpack.c.b16 %v2770, %v2766
  %v3015 = vpack.c.b16 %v2771, %v2767
  %v3016 = vpack.c.b16 %v2772, %v2768
  %v3017 = vpack.c.b16 %v2777, %v2773
  %v3018 = vpack.c.b16 %v2778, %v2774
  %v3019 = vpack.c.b16 %v2779, %v2775
  %v3020 = vpack.c.b16 %v2780, %v2776
  %v3021 = vpack.c.b16 %v2785, %v2781
  %v3022 = vpack.c.b16 %v2786, %v2782
  %v3023 = vpack.c.b16 %v2787, %v2783
  %v3024 = vpack.c.b16 %v2788, %v2784
  %v3025 = vpack.c.b16 %v2793, %v2789
  %v3026 = vpack.c.b16 %v2794, %v2790
  %v3027 = vpack.c.b16 %v2795, %v2791
  %v3028 = vpack.c.b16 %v2796, %v2792
  %v3029 = vpack.c.b16 %v2801, %v2797
  %v3030 = vpack.c.b16 %v2802, %v2798
  %v3031 = vpack.c.b16 %v2803, %v2799
  %v3032 = vpack.c.b16 %v2804, %v2800
  %v3033 = vpack.c.b16 %v2809, %v2805
  %v3034 = vpack.c.b16 %v2810, %v2806
  %v3035 = vpack.c.b16 %v2811, %v2807
  %v3036 = vpack.c.b16 %v2812, %v2808
  %v3037 = vpack.c.b16 %v2817, %v2813
  %v3038 = vpack.c.b16 %v2818, %v2814
  %v3039 = vpack.c.b16 %v2819, %v2815
  %v3040 = vpack.c.b16 %v2820, %v2816
  %v3041 = vpack.c.b16 %v2825, %v2821
  %v3042 = vpack.c.b16 %v2826, %v2822
  %v3043 = vpack.c.b16 %v2827, %v2823
  %v3044 = vpack.c.b16 %v2828, %v2824
  %v3045 = vpack.c.b16 %v2833, %v2829
  %v3046 = vpack.c.b16 %v2834, %v2830
  %v3047 = vpack.c.b16 %v2835, %v2831
  %v3048 = vpack.c.b16 %v2836, %v2832
  %v3049 = vpack.c.b16 %v2841, %v2837
  %v3050 = vpack.c.b16 %v2842, %v2838
  %v3051 = vpack.c.b16 %v2843, %v2839
  %v3052 = vpack.c.b16 %v2844, %v2840
  %v3053 = vpack.c.b16 %v2849, %v2845
  %v3054 = vpack.c.b16 %v2850, %v2846
  %v3055 = vpack.c.b16 %v2851, %v2847
  %v3056 = vpack.c.b16 %v2852, %v2848
  %v3057 = vpack.c.b16 %v2857, %v2853
  %v3058 = vpack.c.b16 %v2858, %v2854
  %v3059 = vpack.c.b16 %v2859, %v2855
  %v3060 = vpack.c.b16 %v2860, %v2856
  %v3061 = vpack.c.b16 %v2865, %v2861
  %v3062 = vpack.c.b16 %v2866, %v2862
  %v3063 = vpack.c.b16 %v2867, %v2863
  %v3064 = vpack.c.b16 %v2868, %v2864
  %v3065 = vpack.c.b16 %v2873, %v2869
  %v3066 = vpack.c.b16 %v2874, %v2870
  %v3067 = vpack.c.b16 %v2875, %v2871
  %v3068 = vpack.c.b16 %v2876, %v2872
  %v3069 = vpack.c.b16 %v2881, %v2877
  %v3070 = vpack.c.b16 %v2882, %v2878
  %v3071 = vpack.c.b16 %v2883, %v2879
  %v3072 = vpack.c.b16 %v2884, %v2880
  %v3073 = vpack.c.b16 %v2889, %v2885
  %v3074 = vpack.c.b16 %v2890, %v2886
  %v3075 = vpack.c.b16 %v2891, %v2887
  %v3076 = vpack.c.b16 %v2892, %v2888
  %v3077 = vpack.c.b16 %v2897, %v2893
  %v3078 = vpack.c.b16 %v2898, %v2894
  %v3079 = vpack.c.b16 %v2899, %v2895
  %v3080 = vpack.c.b16 %v2900, %v2896
  %v3081 = vpack.c.b16 %v2905, %v2901
  %v3082 = vpack.c.b16 %v2906, %v2902
  %v3083 = vpack.c.b16 %v2907, %v2903
  %v3084 = vpack.c.b16 %v2908, %v2904
  %v3085 = vpack.c.b16 %v2913, %v2909
  %v3086 = vpack.c.b16 %v2914, %v2910
  %v3087 = vpack.c.b16 %v2915, %v2911
  %v3088 = vpack.c.b16 %v2916, %v2912
  %v3089 = vpack.c.b16 %v2921, %v2917
  %v3090 = vpack.c.b16 %v2922, %v2918
  %v3091 = vpack.c.b16 %v2923, %v2919
  %v3092 = vpack.c.b16 %v2924, %v2920
  %v3093 = vpack.c.b16 %v2929, %v2925
  %v3094 = vpack.c.b16 %v2930, %v2926
  %v3095 = vpack.c.b16 %v2931, %v2927
  %v3096 = vpack.c.b16 %v2932, %v2928
  %v3097 = vpack.c.b16 %v2937, %v2933
  %v3098 = vpack.c.b16 %v2938, %v2934
  %v3099 = vpack.c.b16 %v2939, %v2935
  %v3100 = vpack.c.b16 %v2940, %v2936
  %v3101 = vpack.c.b16 %v2945, %v2941
  %v3102 = vpack.c.b16 %v2946, %v2942
  %v3103 = vpack.c.b16 %v2947, %v2943
  %v3104 = vpack.c.b16 %v2948, %v2944
  %v3105 = vpack.c.b16 %v2953, %v2949
  %v3106 = vpack.c.b16 %v2954, %v2950
  %v3107 = vpack.c.b16 %v2955, %v2951
  %v3108 = vpack.c.b16 %v2956, %v2952
  %v3109 = vpack.c.b16 %v2961, %v2957
  %v3110 = vpack.c.b16 %v2962, %v2958
  %v3111 = vpack.c.b16 %v2963, %v2959
  %v3112 = vpack.c.b16 %v2964, %v2960
  %v3113 = vpack.c.b16 %v2969, %v2965
  %v3114 = vpack.c.b16 %v2970, %v2966
  %v3115 = vpack.c.b16 %v2971, %v2967
  %v3116 = vpack.c.b16 %v2972, %v2968
  %v3262 = vsel %vm52, %v2536, 0
  %3264 = vmatprep.subr.bf16.mxu0 %v2974
  %3265 = vmatpush1.bf16.msra.mxu0 %v2973
  %3266 = vmatprep.subr.bf16.mxu0 %v2978
  %3267 = vmatpush1.bf16.msra.mxu0 %v2977
  %3268 = vmatprep.subr.bf16.mxu0 %v2982
  %3269 = vmatpush1.bf16.msra.mxu0 %v2981
  %3270 = vmatprep.subr.bf16.mxu0 %v2986
  %3271 = vmatpush1.bf16.msra.mxu0 %v2985
  %3272 = vmatprep.subr.bf16.mxu0 %v2990
  %3273 = vmatpush1.bf16.msra.mxu0 %v2989
  %3274 = vmatprep.subr.bf16.mxu0 %v2994
  %3275 = vmatpush1.bf16.msra.mxu0 %v2993
  %3276 = vmatprep.subr.bf16.mxu0 %v2998
  %3277 = vmatpush1.bf16.msra.mxu0 %v2997
  %3278 = vmatprep.subr.bf16.mxu0 %v3002
  %3279 = vmatpush1.bf16.msra.mxu0 %v3001
  %3280 = vmatprep.subr.bf16.mxu0 %v3006
  %3281 = vmatpush1.bf16.msra.mxu0 %v3005
  %3282 = vmatprep.subr.bf16.mxu0 %v3010
  %3283 = vmatpush1.bf16.msra.mxu0 %v3009
  %3284 = vmatprep.subr.bf16.mxu0 %v3014
  %3285 = vmatpush1.bf16.msra.mxu0 %v3013
  %3286 = vmatprep.subr.bf16.mxu0 %v3018
  %3287 = vmatpush1.bf16.msra.mxu0 %v3017
  %3288 = vmatprep.subr.bf16.mxu0 %v3022
  %3289 = vmatpush1.bf16.msra.mxu0 %v3021
  %3290 = vmatprep.subr.bf16.mxu0 %v3026
  %3291 = vmatpush1.bf16.msra.mxu0 %v3025
  %3292 = vmatprep.subr.bf16.mxu0 %v3030
  %3293 = vmatpush1.bf16.msra.mxu0 %v3029
  %3294 = vmatprep.subr.bf16.mxu0 %v3034
  %3295 = vmatpush1.bf16.msra.mxu0 %v3033
  %3296 = vmatprep.mubr.bf16.mxu0 %v2533
  %3297 = vmatmul.mubr.bf16.gmra.mrb[0].mxu0 %v2532
  %v3298 = vpop.f32.mrb[0].mxu0
  %v3299 = vadd.f32 0.0, %v3298
  %v3300 = vpop.f32.mrb[0].mxu0
  %v3301 = vadd.f32 0.0, %v3300
  %v3302 = vpop.f32.mrb[0].mxu0
  %v3303 = vadd.f32 0.0, %v3302
  %v3304 = vpop.f32.mrb[0].mxu0
  %v3305 = vadd.f32 0.0, %v3304
  %3306 = vdwg.mxu0
  %3307 = vmatprep.subr.bf16.mxu0 %v3038
  %3308 = vmatpush1.bf16.msra.mxu0 %v3037
  %3309 = vmatprep.subr.bf16.mxu0 %v3042
  %3310 = vmatpush1.bf16.msra.mxu0 %v3041
  %3311 = vmatprep.subr.bf16.mxu0 %v3046
  %3312 = vmatpush1.bf16.msra.mxu0 %v3045
  %3313 = vmatprep.subr.bf16.mxu0 %v3050
  %3314 = vmatpush1.bf16.msra.mxu0 %v3049
  %3315 = vmatprep.subr.bf16.mxu0 %v3054
  %3316 = vmatpush1.bf16.msra.mxu0 %v3053
  %3317 = vmatprep.subr.bf16.mxu0 %v3058
  %3318 = vmatpush1.bf16.msra.mxu0 %v3057
  %3319 = vmatprep.subr.bf16.mxu0 %v3062
  %3320 = vmatpush1.bf16.msra.mxu0 %v3061
  %3321 = vmatprep.subr.bf16.mxu0 %v3066
  %3322 = vmatpush1.bf16.msra.mxu0 %v3065
  %3323 = vmatprep.subr.bf16.mxu0 %v3070
  %3324 = vmatpush1.bf16.msra.mxu0 %v3069
  %3325 = vmatprep.subr.bf16.mxu0 %v3074
  %3326 = vmatpush1.bf16.msra.mxu0 %v3073
  %3327 = vmatprep.subr.bf16.mxu0 %v3078
  %3328 = vmatpush1.bf16.msra.mxu0 %v3077
  %3329 = vmatprep.subr.bf16.mxu0 %v3082
  %3330 = vmatpush1.bf16.msra.mxu0 %v3081
  %3331 = vmatprep.subr.bf16.mxu0 %v3086
  %3332 = vmatpush1.bf16.msra.mxu0 %v3085
  %3333 = vmatprep.subr.bf16.mxu0 %v3090
  %3334 = vmatpush1.bf16.msra.mxu0 %v3089
  %3335 = vmatprep.subr.bf16.mxu0 %v3094
  %3336 = vmatpush1.bf16.msra.mxu0 %v3093
  %3337 = vmatprep.subr.bf16.mxu0 %v3098
  %3338 = vmatpush1.bf16.msra.mxu0 %v3097
  %3339 = vmatprep.mubr.bf16.mxu0 %v2535
  %3340 = vmatmul.mubr.bf16.gmra.mrb[0].mxu0 %v2534
  %v3341 = vpop.f32.mrb[0].mxu0
  %v3342 = vadd.f32 %v3299, %v3341
  %v3343 = vpop.f32.mrb[0].mxu0
  %v3344 = vadd.f32 %v3301, %v3343
  %v3345 = vpop.f32.mrb[0].mxu0
  %v3346 = vadd.f32 %v3303, %v3345
  %v3347 = vpop.f32.mrb[0].mxu0
  %v3348 = vadd.f32 %v3305, %v3347
  %3349 = vdwg.mxu0
  %3350 = vmatprep.subr.bf16.mxu0 %v3102
  %3351 = vmatpush1.bf16.msra.mxu0 %v3101
  %3352 = vmatprep.subr.bf16.mxu0 %v3106
  %3353 = vmatpush1.bf16.msra.mxu0 %v3105
  %3354 = vmatprep.subr.bf16.mxu0 %v3110
  %3355 = vmatpush1.bf16.msra.mxu0 %v3109
  %3356 = vmatprep.subr.bf16.mxu0 %v3114
  %3357 = vmatpush1.bf16.msra.mxu0 %v3113
  %3358 = vmatprep.subr.bf16.mxu0 0
  %3359 = vmatpush1.bf16.msra.mxu0 0
  %3360 = vmatprep.subr.bf16.mxu0 0
  %3361 = vmatpush1.bf16.msra.mxu0 0
  %3362 = vmatprep.subr.bf16.mxu0 0
  %3363 = vmatpush1.bf16.msra.mxu0 0
  %3364 = vmatprep.subr.bf16.mxu0 0
  %3365 = vmatpush1.bf16.msra.mxu0 0
  %3366 = vmatprep.subr.bf16.mxu0 0
  %3367 = vmatpush1.bf16.msra.mxu0 0
  %3368 = vmatprep.subr.bf16.mxu0 0
  %3369 = vmatpush1.bf16.msra.mxu0 0
  %3370 = vmatprep.subr.bf16.mxu0 0
  %3371 = vmatpush1.bf16.msra.mxu0 0
  %3372 = vmatprep.subr.bf16.mxu0 0
  %3373 = vmatpush1.bf16.msra.mxu0 0
  %3374 = vmatprep.subr.bf16.mxu0 0
  %3375 = vmatpush1.bf16.msra.mxu0 0
  %3376 = vmatprep.subr.bf16.mxu0 0
  %3377 = vmatpush1.bf16.msra.mxu0 0
  %3378 = vmatprep.subr.bf16.mxu0 0
  %3379 = vmatpush1.bf16.msra.mxu0 0
  %3380 = vmatprep.subr.bf16.mxu0 0
  %3381 = vmatpush1.bf16.msra.mxu0 0
  %3382 = vmatprep.mubr.bf16.mxu0 0
  %3383 = vmatmul.mubr.bf16.gmra.mrb[0].mxu0 %v3262
  %v3384 = vpop.f32.mrb[0].mxu0
  %v3385 = vadd.f32 %v3342, %v3384
  %v3386 = vpop.f32.mrb[0].mxu0
  %v3387 = vadd.f32 %v3344, %v3386
  %v3388 = vpop.f32.mrb[0].mxu0
  %v3389 = vadd.f32 %v3346, %v3388
  %v3390 = vpop.f32.mrb[0].mxu0
  %v3391 = vadd.f32 %v3348, %v3390
  %3392 = vdwg.mxu0
  %3393 = vmatprep.subr.bf16.mxu0 %v2976
  %3394 = vmatpush1.bf16.msra.mxu0 %v2975
  %3395 = vmatprep.subr.bf16.mxu0 %v2980
  %3396 = vmatpush1.bf16.msra.mxu0 %v2979
  %3397 = vmatprep.subr.bf16.mxu0 %v2984
  %3398 = vmatpush1.bf16.msra.mxu0 %v2983
  %3399 = vmatprep.subr.bf16.mxu0 %v2988
  %3400 = vmatpush1.bf16.msra.mxu0 %v2987
  %3401 = vmatprep.subr.bf16.mxu0 %v2992
  %3402 = vmatpush1.bf16.msra.mxu0 %v2991
  %3403 = vmatprep.subr.bf16.mxu0 %v2996
  %3404 = vmatpush1.bf16.msra.mxu0 %v2995
  %3405 = vmatprep.subr.bf16.mxu0 %v3000
  %3406 = vmatpush1.bf16.msra.mxu0 %v2999
  %3407 = vmatprep.subr.bf16.mxu0 %v3004
  %3408 = vmatpush1.bf16.msra.mxu0 %v3003
  %3409 = vmatprep.subr.bf16.mxu0 %v3008
  %3410 = vmatpush1.bf16.msra.mxu0 %v3007
  %3411 = vmatprep.subr.bf16.mxu0 %v3012
  %3412 = vmatpush1.bf16.msra.mxu0 %v3011
  %3413 = vmatprep.subr.bf16.mxu0 %v3016
  %3414 = vmatpush1.bf16.msra.mxu0 %v3015
  %3415 = vmatprep.subr.bf16.mxu0 %v3020
  %3416 = vmatpush1.bf16.msra.mxu0 %v3019
  %3417 = vmatprep.subr.bf16.mxu0 %v3024
  %3418 = vmatpush1.bf16.msra.mxu0 %v3023
  %3419 = vmatprep.subr.bf16.mxu0 %v3028
  %3420 = vmatpush1.bf16.msra.mxu0 %v3027
  %3421 = vmatprep.subr.bf16.mxu0 %v3032
  %3422 = vmatpush1.bf16.msra.mxu0 %v3031
  %3423 = vmatprep.subr.bf16.mxu0 %v3036
  %3424 = vmatpush1.bf16.msra.mxu0 %v3035
  %3425 = vmatprep.mubr.bf16.mxu0 %v2533
  %3426 = vmatmul.mubr.bf16.gmra.mrb[0].mxu0 %v2532
  %v3427 = vpop.f32.mrb[0].mxu0
  %v3428 = vadd.f32 0.0, %v3427
  %v3429 = vpop.f32.mrb[0].mxu0
  %v3430 = vadd.f32 0.0, %v3429
  %v3431 = vpop.f32.mrb[0].mxu0
  %v3432 = vadd.f32 0.0, %v3431
  %v3433 = vpop.f32.mrb[0].mxu0
  %v3434 = vadd.f32 0.0, %v3433
  %3435 = vdwg.mxu0
  %3436 = vmatprep.subr.bf16.mxu0 %v3040
  %3437 = vmatpush1.bf16.msra.mxu0 %v3039
  %3438 = vmatprep.subr.bf16.mxu0 %v3044
  %3439 = vmatpush1.bf16.msra.mxu0 %v3043
  %3440 = vmatprep.subr.bf16.mxu0 %v3048
  %3441 = vmatpush1.bf16.msra.mxu0 %v3047
  %3442 = vmatprep.subr.bf16.mxu0 %v3052
  %3443 = vmatpush1.bf16.msra.mxu0 %v3051
  %3444 = vmatprep.subr.bf16.mxu0 %v3056
  %3445 = vmatpush1.bf16.msra.mxu0 %v3055
  %3446 = vmatprep.subr.bf16.mxu0 %v3060
  %3447 = vmatpush1.bf16.msra.mxu0 %v3059
  %3448 = vmatprep.subr.bf16.mxu0 %v3064
  %3449 = vmatpush1.bf16.msra.mxu0 %v3063
  %3450 = vmatprep.subr.bf16.mxu0 %v3068
  %3451 = vmatpush1.bf16.msra.mxu0 %v3067
  %3452 = vmatprep.subr.bf16.mxu0 %v3072
  %3453 = vmatpush1.bf16.msra.mxu0 %v3071
  %3454 = vmatprep.subr.bf16.mxu0 %v3076
  %3455 = vmatpush1.bf16.msra.mxu0 %v3075
  %3456 = vmatprep.subr.bf16.mxu0 %v3080
  %3457 = vmatpush1.bf16.msra.mxu0 %v3079
  %3458 = vmatprep.subr.bf16.mxu0 %v3084
  %3459 = vmatpush1.bf16.msra.mxu0 %v3083
  %3460 = vmatprep.subr.bf16.mxu0 %v3088
  %3461 = vmatpush1.bf16.msra.mxu0 %v3087
  %3462 = vmatprep.subr.bf16.mxu0 %v3092
  %3463 = vmatpush1.bf16.msra.mxu0 %v3091
  %3464 = vmatprep.subr.bf16.mxu0 %v3096
  %3465 = vmatpush1.bf16.msra.mxu0 %v3095
  %3466 = vmatprep.subr.bf16.mxu0 %v3100
  %3467 = vmatpush1.bf16.msra.mxu0 %v3099
  %3468 = vmatprep.mubr.bf16.mxu0 %v2535
  %3469 = vmatmul.mubr.bf16.gmra.mrb[0].mxu0 %v2534
  %v3470 = vpop.f32.mrb[0].mxu0
  %v3471 = vadd.f32 %v3428, %v3470
  %v3472 = vpop.f32.mrb[0].mxu0
  %v3473 = vadd.f32 %v3430, %v3472
  %v3474 = vpop.f32.mrb[0].mxu0
  %v3475 = vadd.f32 %v3432, %v3474
  %v3476 = vpop.f32.mrb[0].mxu0
  %v3477 = vadd.f32 %v3434, %v3476
  %3478 = vdwg.mxu0
  %3479 = vmatprep.subr.bf16.mxu0 %v3104
  %3480 = vmatpush1.bf16.msra.mxu0 %v3103
  %3481 = vmatprep.subr.bf16.mxu0 %v3108
  %3482 = vmatpush1.bf16.msra.mxu0 %v3107
  %3483 = vmatprep.subr.bf16.mxu0 %v3112
  %3484 = vmatpush1.bf16.msra.mxu0 %v3111
  %3485 = vmatprep.subr.bf16.mxu0 %v3116
  %3486 = vmatpush1.bf16.msra.mxu0 %v3115
  %3487 = vmatprep.subr.bf16.mxu0 0
  %3488 = vmatpush1.bf16.msra.mxu0 0
  %3489 = vmatprep.subr.bf16.mxu0 0
  %3490 = vmatpush1.bf16.msra.mxu0 0
  %3491 = vmatprep.subr.bf16.mxu0 0
  %3492 = vmatpush1.bf16.msra.mxu0 0
  %3493 = vmatprep.subr.bf16.mxu0 0
  %3494 = vmatpush1.bf16.msra.mxu0 0
  %3495 = vmatprep.subr.bf16.mxu0 0
  %3496 = vmatpush1.bf16.msra.mxu0 0
  %3497 = vmatprep.subr.bf16.mxu0 0
  %3498 = vmatpush1.bf16.msra.mxu0 0
  %3499 = vmatprep.subr.bf16.mxu0 0
  %3500 = vmatpush1.bf16.msra.mxu0 0
  %3501 = vmatprep.subr.bf16.mxu0 0
  %3502 = vmatpush1.bf16.msra.mxu0 0
  %3503 = vmatprep.subr.bf16.mxu0 0
  %3504 = vmatpush1.bf16.msra.mxu0 0
  %3505 = vmatprep.subr.bf16.mxu0 0
  %3506 = vmatpush1.bf16.msra.mxu0 0
  %3507 = vmatprep.subr.bf16.mxu0 0
  %3508 = vmatpush1.bf16.msra.mxu0 0
  %3509 = vmatprep.subr.bf16.mxu0 0
  %3510 = vmatpush1.bf16.msra.mxu0 0
  %3511 = vmatprep.mubr.bf16.mxu0 0
  %3512 = vmatmul.mubr.bf16.gmra.mrb[0].mxu0 %v3262
  %v3513 = vpop.f32.mrb[0].mxu0
  %v3514 = vadd.f32 %v3471, %v3513
  %v3515 = vpop.f32.mrb[0].mxu0
  %v3516 = vadd.f32 %v3473, %v3515
  %v3517 = vpop.f32.mrb[0].mxu0
  %v3518 = vadd.f32 %v3475, %v3517
  %v3519 = vpop.f32.mrb[0].mxu0
  %v3520 = vadd.f32 %v3477, %v3519
  %3521 = vdwg.mxu0
  %v3666 = vunpack.c.l.b16 %v2223
  %v3667 = vunpack.c.h.b16 %v2223
  %v3668 = vunpack.c.l.b16 %v2224
  %v3669 = vunpack.c.h.b16 %v2224
  %v3670 = vunpack.c.l.b16 %v2225
  %v3671 = vunpack.c.h.b16 %v2225
  %v3672 = vunpack.c.l.b16 %v2226
  %v3673 = vunpack.c.h.b16 %v2226
  %v3674 = vunpack.c.l.b16 %v2227
  %v3675 = vunpack.c.h.b16 %v2227
  %v3676 = vunpack.c.l.b16 %v2228
  %v3677 = vunpack.c.h.b16 %v2228
  %v3678 = vunpack.c.l.b16 %v2229
  %v3679 = vunpack.c.h.b16 %v2229
  %v3680 = vunpack.c.l.b16 %v2230
  %v3681 = vunpack.c.h.b16 %v2230
  %v3682 = vunpack.c.l.b16 %v2231
  %v3683 = vunpack.c.h.b16 %v2231
  %v3684 = vunpack.c.l.b16 %v2232
  %v3685 = vunpack.c.h.b16 %v2232
  %v3686 = vunpack.c.l.b16 %v2233
  %v3687 = vunpack.c.h.b16 %v2233
  %v3688 = vunpack.c.l.b16 %v2234
  %v3689 = vunpack.c.h.b16 %v2234
  %v3690 = vunpack.c.l.b16 %v2235
  %v3691 = vunpack.c.h.b16 %v2235
  %v3692 = vunpack.c.l.b16 %v2236
  %v3693 = vunpack.c.h.b16 %v2236
  %v3694 = vunpack.c.l.b16 %v2237
  %v3695 = vunpack.c.h.b16 %v2237
  %v3696 = vunpack.c.l.b16 %v2238
  %v3697 = vunpack.c.h.b16 %v2238
  %v3698 = vunpack.c.l.b16 %v2239
  %v3699 = vunpack.c.h.b16 %v2239
  %v3700 = vunpack.c.l.b16 %v2240
  %v3701 = vunpack.c.h.b16 %v2240
  %v3702 = vunpack.c.l.b16 %v2241
  %v3703 = vunpack.c.h.b16 %v2241
  %v3704 = vunpack.c.l.b16 %v2242
  %v3705 = vunpack.c.h.b16 %v2242
  %v3706 = vunpack.c.l.b16 %v2243
  %v3707 = vunpack.c.h.b16 %v2243
  %v3708 = vunpack.c.l.b16 %v2244
  %v3709 = vunpack.c.h.b16 %v2244
  %v3710 = vunpack.c.l.b16 %v2245
  %v3711 = vunpack.c.h.b16 %v2245
  %v3712 = vunpack.c.l.b16 %v2246
  %v3713 = vunpack.c.h.b16 %v2246
  %v3714 = vunpack.c.l.b16 %v2247
  %v3715 = vunpack.c.h.b16 %v2247
  %v3716 = vunpack.c.l.b16 %v2248
  %v3717 = vunpack.c.h.b16 %v2248
  %v3718 = vunpack.c.l.b16 %v2249
  %v3719 = vunpack.c.h.b16 %v2249
  %v3720 = vunpack.c.l.b16 %v2250
  %v3721 = vunpack.c.h.b16 %v2250
  %v3722 = vunpack.c.l.b16 %v2251
  %v3723 = vunpack.c.h.b16 %v2251
  %v3724 = vunpack.c.l.b16 %v2252
  %v3725 = vunpack.c.h.b16 %v2252
  %v3726 = vunpack.c.l.b16 %v2253
  %v3727 = vunpack.c.h.b16 %v2253
  %v3728 = vunpack.c.l.b16 %v2254
  %v3729 = vunpack.c.h.b16 %v2254
  %v3730 = vunpack.c.l.b16 %v2255
  %v3731 = vunpack.c.h.b16 %v2255
  %v3732 = vunpack.c.l.b16 %v2256
  %v3733 = vunpack.c.h.b16 %v2256
  %v3734 = vunpack.c.l.b16 %v2257
  %v3735 = vunpack.c.h.b16 %v2257
  %v3736 = vunpack.c.l.b16 %v2258
  %v3737 = vunpack.c.h.b16 %v2258
  %v3738 = vunpack.c.l.b16 %v2259
  %v3739 = vunpack.c.h.b16 %v2259
  %v3740 = vunpack.c.l.b16 %v2260
  %v3741 = vunpack.c.h.b16 %v2260
  %v3742 = vunpack.c.l.b16 %v2261
  %v3743 = vunpack.c.h.b16 %v2261
  %v3744 = vunpack.c.l.b16 %v2262
  %v3745 = vunpack.c.h.b16 %v2262
  %v3746 = vunpack.c.l.b16 %v2263
  %v3747 = vunpack.c.h.b16 %v2263
  %v3748 = vunpack.c.l.b16 %v2264
  %v3749 = vunpack.c.h.b16 %v2264
  %v3750 = vunpack.c.l.b16 %v2265
  %v3751 = vunpack.c.h.b16 %v2265
  %v3752 = vunpack.c.l.b16 %v2266
  %v3753 = vunpack.c.h.b16 %v2266
  %v3754 = vunpack.c.l.b16 %v2267
  %v3755 = vunpack.c.h.b16 %v2267
  %v3756 = vunpack.c.l.b16 %v2268
  %v3757 = vunpack.c.h.b16 %v2268
  %v3758 = vunpack.c.l.b16 %v2269
  %v3759 = vunpack.c.h.b16 %v2269
  %v3760 = vunpack.c.l.b16 %v2270
  %v3761 = vunpack.c.h.b16 %v2270
  %v3762 = vunpack.c.l.b16 %v2271
  %v3763 = vunpack.c.h.b16 %v2271
  %v3764 = vunpack.c.l.b16 %v2272
  %v3765 = vunpack.c.h.b16 %v2272
  %v3766 = vunpack.c.l.b16 %v2273
  %v3767 = vunpack.c.h.b16 %v2273
  %v3768 = vunpack.c.l.b16 %v2274
  %v3769 = vunpack.c.h.b16 %v2274
  %v3770 = vunpack.c.l.b16 %v2275
  %v3771 = vunpack.c.h.b16 %v2275
  %v3772 = vunpack.c.l.b16 %v2276
  %v3773 = vunpack.c.h.b16 %v2276
  %v3774 = vunpack.c.l.b16 %v2277
  %v3775 = vunpack.c.h.b16 %v2277
  %v3776 = vunpack.c.l.b16 %v2278
  %v3777 = vunpack.c.h.b16 %v2278
  %v3778 = vunpack.c.l.b16 %v2279
  %v3779 = vunpack.c.h.b16 %v2279
  %v3780 = vunpack.c.l.b16 %v2280
  %v3781 = vunpack.c.h.b16 %v2280
  %v3782 = vunpack.c.l.b16 %v2281
  %v3783 = vunpack.c.h.b16 %v2281
  %v3784 = vunpack.c.l.b16 %v2282
  %v3785 = vunpack.c.h.b16 %v2282
  %v3786 = vunpack.c.l.b16 %v2283
  %v3787 = vunpack.c.h.b16 %v2283
  %v3788 = vunpack.c.l.b16 %v2284
  %v3789 = vunpack.c.h.b16 %v2284
  %v3790 = vunpack.c.l.b16 %v2285
  %v3791 = vunpack.c.h.b16 %v2285
  %v3792 = vunpack.c.l.b16 %v2286
  %v3793 = vunpack.c.h.b16 %v2286
  %v3794 = vunpack.c.l.b16 %v2287
  %v3795 = vunpack.c.h.b16 %v2287
  %v3796 = vunpack.c.l.b16 %v2288
  %v3797 = vunpack.c.h.b16 %v2288
  %v3798 = vunpack.c.l.b16 %v2289
  %v3799 = vunpack.c.h.b16 %v2289
  %v3800 = vunpack.c.l.b16 %v2290
  %v3801 = vunpack.c.h.b16 %v2290
  %v3802 = vunpack.c.l.b16 %v2291
  %v3803 = vunpack.c.h.b16 %v2291
  %v3804 = vunpack.c.l.b16 %v2292
  %v3805 = vunpack.c.h.b16 %v2292
  %v3806 = vunpack.c.l.b16 %v2293
  %v3807 = vunpack.c.h.b16 %v2293
  %v3808 = vunpack.c.l.b16 %v2294
  %v3809 = vunpack.c.h.b16 %v2294
  %v3810 = vunpack.c.l.b16 %v2295
  %v3811 = vunpack.c.h.b16 %v2295
  %v3812 = vunpack.c.l.b16 %v2296
  %v3813 = vunpack.c.h.b16 %v2296
  %v3814 = vunpack.c.l.b16 %v2297
  %v3815 = vunpack.c.h.b16 %v2297
  %v3816 = vunpack.c.l.b16 %v2298
  %v3817 = vunpack.c.h.b16 %v2298
  %v3818 = vunpack.c.l.b16 %v2299
  %v3819 = vunpack.c.h.b16 %v2299
  %v3820 = vunpack.c.l.b16 %v2300
  %v3821 = vunpack.c.h.b16 %v2300
  %v3822 = vunpack.c.l.b16 %v2301
  %v3823 = vunpack.c.h.b16 %v2301
  %v3824 = vunpack.c.l.b16 %v2302
  %v3825 = vunpack.c.h.b16 %v2302
  %v3826 = vunpack.c.l.b16 %v2303
  %v3827 = vunpack.c.h.b16 %v2303
  %v3828 = vunpack.c.l.b16 %v2304
  %v3829 = vunpack.c.h.b16 %v2304
  %v3830 = vunpack.c.l.b16 %v2305
  %v3831 = vunpack.c.h.b16 %v2305
  %v3832 = vunpack.c.l.b16 %v2306
  %v3833 = vunpack.c.h.b16 %v2306
  %v3834 = vunpack.c.l.b16 %v2307
  %v3835 = vunpack.c.h.b16 %v2307
  %v3836 = vunpack.c.l.b16 %v2308
  %v3837 = vunpack.c.h.b16 %v2308
  %v3838 = vunpack.c.l.b16 %v2309
  %v3839 = vunpack.c.h.b16 %v2309
  %v3840 = vunpack.c.l.b16 %v2310
  %v3841 = vunpack.c.h.b16 %v2310
  %v3842 = vunpack.c.l.b16 %v2311
  %v3843 = vunpack.c.h.b16 %v2311
  %v3844 = vunpack.c.l.b16 %v2312
  %v3845 = vunpack.c.h.b16 %v2312
  %v3846 = vunpack.c.l.b16 %v2313
  %v3847 = vunpack.c.h.b16 %v2313
  %v3848 = vunpack.c.l.b16 %v2314
  %v3849 = vunpack.c.h.b16 %v2314
  %v3850 = vunpack.c.l.b16 %v2315
  %v3851 = vunpack.c.h.b16 %v2315
  %v3852 = vunpack.c.l.b16 %v2316
  %v3853 = vunpack.c.h.b16 %v2316
  %v3854 = vunpack.c.l.b16 %v2317
  %v3855 = vunpack.c.h.b16 %v2317
  %v3856 = vunpack.c.l.b16 %v2318
  %v3857 = vunpack.c.h.b16 %v2318
  %v3858 = vunpack.c.l.b16 %v2319
  %v3859 = vunpack.c.h.b16 %v2319
  %v3860 = vunpack.c.l.b16 %v2320
  %v3861 = vunpack.c.h.b16 %v2320
  %v3862 = vunpack.c.l.b16 %v2321
  %v3863 = vunpack.c.h.b16 %v2321
  %v3864 = vunpack.c.l.b16 %v2322
  %v3865 = vunpack.c.h.b16 %v2322
  %v3866 = vunpack.c.l.b16 %v2323
  %v3867 = vunpack.c.h.b16 %v2323
  %v3868 = vunpack.c.l.b16 %v2324
  %v3869 = vunpack.c.h.b16 %v2324
  %v3870 = vunpack.c.l.b16 %v2325
  %v3871 = vunpack.c.h.b16 %v2325
  %v3872 = vunpack.c.l.b16 %v2326
  %v3873 = vunpack.c.h.b16 %v2326
  %v3874 = vunpack.c.l.b16 %v2327
  %v3875 = vunpack.c.h.b16 %v2327
  %v3876 = vunpack.c.l.b16 %v2328
  %v3877 = vunpack.c.h.b16 %v2328
  %v3878 = vunpack.c.l.b16 %v2329
  %v3879 = vunpack.c.h.b16 %v2329
  %v3880 = vunpack.c.l.b16 %v2330
  %v3881 = vunpack.c.h.b16 %v2330
  %v3882 = vunpack.c.l.b16 %v2331
  %v3883 = vunpack.c.h.b16 %v2331
  %v3884 = vunpack.c.l.b16 %v2332
  %v3885 = vunpack.c.h.b16 %v2332
  %v3886 = vunpack.c.l.b16 %v2333
  %v3887 = vunpack.c.h.b16 %v2333
  %v3888 = vunpack.c.l.b16 %v2334
  %v3889 = vunpack.c.h.b16 %v2334
  %v3890 = vunpack.c.l.b16 %v2335
  %v3891 = vunpack.c.h.b16 %v2335
  %v3892 = vunpack.c.l.b16 %v2336
  %v3893 = vunpack.c.h.b16 %v2336
  %v3894 = vunpack.c.l.b16 %v2337
  %v3895 = vunpack.c.h.b16 %v2337
  %v3896 = vunpack.c.l.b16 %v2338
  %v3897 = vunpack.c.h.b16 %v2338
  %v3898 = vunpack.c.l.b16 %v2339
  %v3899 = vunpack.c.h.b16 %v2339
  %v3900 = vunpack.c.l.b16 %v2340
  %v3901 = vunpack.c.h.b16 %v2340
  %v3902 = vunpack.c.l.b16 %v2341
  %v3903 = vunpack.c.h.b16 %v2341
  %v3904 = vunpack.c.l.b16 %v2342
  %v3905 = vunpack.c.h.b16 %v2342
  %v3906 = vunpack.c.l.b16 %v2343
  %v3907 = vunpack.c.h.b16 %v2343
  %v3908 = vunpack.c.l.b16 %v2344
  %v3909 = vunpack.c.h.b16 %v2344
  %v3910 = vunpack.c.l.b16 %v2345
  %v3911 = vunpack.c.h.b16 %v2345
  %v3912 = vunpack.c.l.b16 %v2346
  %v3913 = vunpack.c.h.b16 %v2346
  %v3914 = vunpack.c.l.b16 %v2347
  %v3915 = vunpack.c.h.b16 %v2347
  %v3916 = vunpack.c.l.b16 %v2348
  %v3917 = vunpack.c.h.b16 %v2348
  %v3918 = vunpack.c.l.b16 %v2349
  %v3919 = vunpack.c.h.b16 %v2349
  %v3920 = vunpack.c.l.b16 %v2350
  %v3921 = vunpack.c.h.b16 %v2350
  %v3922 = vunpack.c.l.b16 %v2351
  %v3923 = vunpack.c.h.b16 %v2351
  %v3924 = vunpack.c.l.b16 %v2352
  %v3925 = vunpack.c.h.b16 %v2352
  %v3926 = vunpack.c.l.b16 %v2353
  %v3927 = vunpack.c.h.b16 %v2353
  %v3928 = vunpack.c.l.b16 %v2354
  %v3929 = vunpack.c.h.b16 %v2354
  %v3930 = vunpack.c.l.b16 %v2355
  %v3931 = vunpack.c.h.b16 %v2355
  %v3932 = vunpack.c.l.b16 %v2356
  %v3933 = vunpack.c.h.b16 %v2356
  %v3934 = vunpack.c.l.b16 %v2357
  %v3935 = vunpack.c.h.b16 %v2357
  %v3936 = vunpack.c.l.b16 %v2358
  %v3937 = vunpack.c.h.b16 %v2358
  %v3938 = vunpack.c.l.b16 %v2359
  %v3939 = vunpack.c.h.b16 %v2359
  %v3940 = vunpack.c.l.b16 %v2360
  %v3941 = vunpack.c.h.b16 %v2360
  %v3942 = vunpack.c.l.b16 %v2361
  %v3943 = vunpack.c.h.b16 %v2361
  %v3944 = vunpack.c.l.b16 %v2362
  %v3945 = vunpack.c.h.b16 %v2362
  %v3946 = vunpack.c.l.b16 %v2363
  %v3947 = vunpack.c.h.b16 %v2363
  %v3948 = vunpack.c.l.b16 %v2364
  %v3949 = vunpack.c.h.b16 %v2364
  %v3950 = vunpack.c.l.b16 %v2365
  %v3951 = vunpack.c.h.b16 %v2365
  %v3952 = vunpack.c.l.b16 %v2366
  %v3953 = vunpack.c.h.b16 %v2366
  %v3954 = vpack.c.b16 %v3670, %v3666
  %v3955 = vpack.c.b16 %v3671, %v3667
  %v3956 = vpack.c.b16 %v3672, %v3668
  %v3957 = vpack.c.b16 %v3673, %v3669
  %v3958 = vpack.c.b16 %v3678, %v3674
  %v3959 = vpack.c.b16 %v3679, %v3675
  %v3960 = vpack.c.b16 %v3680, %v3676
  %v3961 = vpack.c.b16 %v3681, %v3677
  %v3962 = vpack.c.b16 %v3686, %v3682
  %v3963 = vpack.c.b16 %v3687, %v3683
  %v3964 = vpack.c.b16 %v3688, %v3684
  %v3965 = vpack.c.b16 %v3689, %v3685
  %v3966 = vpack.c.b16 %v3694, %v3690
  %v3967 = vpack.c.b16 %v3695, %v3691
  %v3968 = vpack.c.b16 %v3696, %v3692
  %v3969 = vpack.c.b16 %v3697, %v3693
  %v3970 = vpack.c.b16 %v3702, %v3698
  %v3971 = vpack.c.b16 %v3703, %v3699
  %v3972 = vpack.c.b16 %v3704, %v3700
  %v3973 = vpack.c.b16 %v3705, %v3701
  %v3974 = vpack.c.b16 %v3710, %v3706
  %v3975 = vpack.c.b16 %v3711, %v3707
  %v3976 = vpack.c.b16 %v3712, %v3708
  %v3977 = vpack.c.b16 %v3713, %v3709
  %v3978 = vpack.c.b16 %v3718, %v3714
  %v3979 = vpack.c.b16 %v3719, %v3715
  %v3980 = vpack.c.b16 %v3720, %v3716
  %v3981 = vpack.c.b16 %v3721, %v3717
  %v3982 = vpack.c.b16 %v3726, %v3722
  %v3983 = vpack.c.b16 %v3727, %v3723
  %v3984 = vpack.c.b16 %v3728, %v3724
  %v3985 = vpack.c.b16 %v3729, %v3725
  %v3986 = vpack.c.b16 %v3734, %v3730
  %v3987 = vpack.c.b16 %v3735, %v3731
  %v3988 = vpack.c.b16 %v3736, %v3732
  %v3989 = vpack.c.b16 %v3737, %v3733
  %v3990 = vpack.c.b16 %v3742, %v3738
  %v3991 = vpack.c.b16 %v3743, %v3739
  %v3992 = vpack.c.b16 %v3744, %v3740
  %v3993 = vpack.c.b16 %v3745, %v3741
  %v3994 = vpack.c.b16 %v3750, %v3746
  %v3995 = vpack.c.b16 %v3751, %v3747
  %v3996 = vpack.c.b16 %v3752, %v3748
  %v3997 = vpack.c.b16 %v3753, %v3749
  %v3998 = vpack.c.b16 %v3758, %v3754
  %v3999 = vpack.c.b16 %v3759, %v3755
  %v4000 = vpack.c.b16 %v3760, %v3756
  %v4001 = vpack.c.b16 %v3761, %v3757
  %v4002 = vpack.c.b16 %v3766, %v3762
  %v4003 = vpack.c.b16 %v3767, %v3763
  %v4004 = vpack.c.b16 %v3768, %v3764
  %v4005 = vpack.c.b16 %v3769, %v3765
  %v4006 = vpack.c.b16 %v3774, %v3770
  %v4007 = vpack.c.b16 %v3775, %v3771
  %v4008 = vpack.c.b16 %v3776, %v3772
  %v4009 = vpack.c.b16 %v3777, %v3773
  %v4010 = vpack.c.b16 %v3782, %v3778
  %v4011 = vpack.c.b16 %v3783, %v3779
  %v4012 = vpack.c.b16 %v3784, %v3780
  %v4013 = vpack.c.b16 %v3785, %v3781
  %v4014 = vpack.c.b16 %v3790, %v3786
  %v4015 = vpack.c.b16 %v3791, %v3787
  %v4016 = vpack.c.b16 %v3792, %v3788
  %v4017 = vpack.c.b16 %v3793, %v3789
  %v4018 = vpack.c.b16 %v3798, %v3794
  %v4019 = vpack.c.b16 %v3799, %v3795
  %v4020 = vpack.c.b16 %v3800, %v3796
  %v4021 = vpack.c.b16 %v3801, %v3797
  %v4022 = vpack.c.b16 %v3806, %v3802
  %v4023 = vpack.c.b16 %v3807, %v3803
  %v4024 = vpack.c.b16 %v3808, %v3804
  %v4025 = vpack.c.b16 %v3809, %v3805
  %v4026 = vpack.c.b16 %v3814, %v3810
  %v4027 = vpack.c.b16 %v3815, %v3811
  %v4028 = vpack.c.b16 %v3816, %v3812
  %v4029 = vpack.c.b16 %v3817, %v3813
  %v4030 = vpack.c.b16 %v3822, %v3818
  %v4031 = vpack.c.b16 %v3823, %v3819
  %v4032 = vpack.c.b16 %v3824, %v3820
  %v4033 = vpack.c.b16 %v3825, %v3821
  %v4034 = vpack.c.b16 %v3830, %v3826
  %v4035 = vpack.c.b16 %v3831, %v3827
  %v4036 = vpack.c.b16 %v3832, %v3828
  %v4037 = vpack.c.b16 %v3833, %v3829
  %v4038 = vpack.c.b16 %v3838, %v3834
  %v4039 = vpack.c.b16 %v3839, %v3835
  %v4040 = vpack.c.b16 %v3840, %v3836
  %v4041 = vpack.c.b16 %v3841, %v3837
  %v4042 = vpack.c.b16 %v3846, %v3842
  %v4043 = vpack.c.b16 %v3847, %v3843
  %v4044 = vpack.c.b16 %v3848, %v3844
  %v4045 = vpack.c.b16 %v3849, %v3845
  %v4046 = vpack.c.b16 %v3854, %v3850
  %v4047 = vpack.c.b16 %v3855, %v3851
  %v4048 = vpack.c.b16 %v3856, %v3852
  %v4049 = vpack.c.b16 %v3857, %v3853
  %v4050 = vpack.c.b16 %v3862, %v3858
  %v4051 = vpack.c.b16 %v3863, %v3859
  %v4052 = vpack.c.b16 %v3864, %v3860
  %v4053 = vpack.c.b16 %v3865, %v3861
  %v4054 = vpack.c.b16 %v3870, %v3866
  %v4055 = vpack.c.b16 %v3871, %v3867
  %v4056 = vpack.c.b16 %v3872, %v3868
  %v4057 = vpack.c.b16 %v3873, %v3869
  %v4058 = vpack.c.b16 %v3878, %v3874
  %v4059 = vpack.c.b16 %v3879, %v3875
  %v4060 = vpack.c.b16 %v3880, %v3876
  %v4061 = vpack.c.b16 %v3881, %v3877
  %v4062 = vpack.c.b16 %v3886, %v3882
  %v4063 = vpack.c.b16 %v3887, %v3883
  %v4064 = vpack.c.b16 %v3888, %v3884
  %v4065 = vpack.c.b16 %v3889, %v3885
  %v4066 = vpack.c.b16 %v3894, %v3890
  %v4067 = vpack.c.b16 %v3895, %v3891
  %v4068 = vpack.c.b16 %v3896, %v3892
  %v4069 = vpack.c.b16 %v3897, %v3893
  %v4070 = vpack.c.b16 %v3902, %v3898
  %v4071 = vpack.c.b16 %v3903, %v3899
  %v4072 = vpack.c.b16 %v3904, %v3900
  %v4073 = vpack.c.b16 %v3905, %v3901
  %v4074 = vpack.c.b16 %v3910, %v3906
  %v4075 = vpack.c.b16 %v3911, %v3907
  %v4076 = vpack.c.b16 %v3912, %v3908
  %v4077 = vpack.c.b16 %v3913, %v3909
  %v4078 = vpack.c.b16 %v3918, %v3914
  %v4079 = vpack.c.b16 %v3919, %v3915
  %v4080 = vpack.c.b16 %v3920, %v3916
  %v4081 = vpack.c.b16 %v3921, %v3917
  %v4082 = vpack.c.b16 %v3926, %v3922
  %v4083 = vpack.c.b16 %v3927, %v3923
  %v4084 = vpack.c.b16 %v3928, %v3924
  %v4085 = vpack.c.b16 %v3929, %v3925
  %v4086 = vpack.c.b16 %v3934, %v3930
  %v4087 = vpack.c.b16 %v3935, %v3931
  %v4088 = vpack.c.b16 %v3936, %v3932
  %v4089 = vpack.c.b16 %v3937, %v3933
  %v4090 = vpack.c.b16 %v3942, %v3938
  %v4091 = vpack.c.b16 %v3943, %v3939
  %v4092 = vpack.c.b16 %v3944, %v3940
  %v4093 = vpack.c.b16 %v3945, %v3941
  %v4094 = vpack.c.b16 %v3950, %v3946
  %v4095 = vpack.c.b16 %v3951, %v3947
  %v4096 = vpack.c.b16 %v3952, %v3948
  %v4097 = vpack.c.b16 %v3953, %v3949
  %v4243 = vsel %vm52, %v2222, 0
  %4245 = vmatprep.subr.bf16.mxu0 %v3955
  %4246 = vmatpush1.bf16.msra.mxu0 %v3954
  %4247 = vmatprep.subr.bf16.mxu0 %v3959
  %4248 = vmatpush1.bf16.msra.mxu0 %v3958
  %4249 = vmatprep.subr.bf16.mxu0 %v3963
  %4250 = vmatpush1.bf16.msra.mxu0 %v3962
  %4251 = vmatprep.subr.bf16.mxu0 %v3967
  %4252 = vmatpush1.bf16.msra.mxu0 %v3966
  %4253 = vmatprep.subr.bf16.mxu0 %v3971
  %4254 = vmatpush1.bf16.msra.mxu0 %v3970
  %4255 = vmatprep.subr.bf16.mxu0 %v3975
  %4256 = vmatpush1.bf16.msra.mxu0 %v3974
  %4257 = vmatprep.subr.bf16.mxu0 %v3979
  %4258 = vmatpush1.bf16.msra.mxu0 %v3978
  %4259 = vmatprep.subr.bf16.mxu0 %v3983
  %4260 = vmatpush1.bf16.msra.mxu0 %v3982
  %4261 = vmatprep.subr.bf16.mxu0 %v3987
  %4262 = vmatpush1.bf16.msra.mxu0 %v3986
  %4263 = vmatprep.subr.bf16.mxu0 %v3991
  %4264 = vmatpush1.bf16.msra.mxu0 %v3990
  %4265 = vmatprep.subr.bf16.mxu0 %v3995
  %4266 = vmatpush1.bf16.msra.mxu0 %v3994
  %4267 = vmatprep.subr.bf16.mxu0 %v3999
  %4268 = vmatpush1.bf16.msra.mxu0 %v3998
  %4269 = vmatprep.subr.bf16.mxu0 %v4003
  %4270 = vmatpush1.bf16.msra.mxu0 %v4002
  %4271 = vmatprep.subr.bf16.mxu0 %v4007
  %4272 = vmatpush1.bf16.msra.mxu0 %v4006
  %4273 = vmatprep.subr.bf16.mxu0 %v4011
  %4274 = vmatpush1.bf16.msra.mxu0 %v4010
  %4275 = vmatprep.subr.bf16.mxu0 %v4015
  %4276 = vmatpush1.bf16.msra.mxu0 %v4014
  %4277 = vmatprep.mubr.bf16.mxu0 %v2219
  %4278 = vmatmul.mubr.bf16.gmra.mrb[0].mxu0 %v2218
  %v4279 = vpop.f32.mrb[0].mxu0
  %v4280 = vadd.f32 %v3385, %v4279
  %v4281 = vpop.f32.mrb[0].mxu0
  %v4282 = vadd.f32 %v3387, %v4281
  %v4283 = vpop.f32.mrb[0].mxu0
  %v4284 = vadd.f32 %v3389, %v4283
  %v4285 = vpop.f32.mrb[0].mxu0
  %v4286 = vadd.f32 %v3391, %v4285
  %4287 = vdwg.mxu0
  %4288 = vmatprep.subr.bf16.mxu0 %v4019
  %4289 = vmatpush1.bf16.msra.mxu0 %v4018
  %4290 = vmatprep.subr.bf16.mxu0 %v4023
  %4291 = vmatpush1.bf16.msra.mxu0 %v4022
  %4292 = vmatprep.subr.bf16.mxu0 %v4027
  %4293 = vmatpush1.bf16.msra.mxu0 %v4026
  %4294 = vmatprep.subr.bf16.mxu0 %v4031
  %4295 = vmatpush1.bf16.msra.mxu0 %v4030
  %4296 = vmatprep.subr.bf16.mxu0 %v4035
  %4297 = vmatpush1.bf16.msra.mxu0 %v4034
  %4298 = vmatprep.subr.bf16.mxu0 %v4039
  %4299 = vmatpush1.bf16.msra.mxu0 %v4038
  %4300 = vmatprep.subr.bf16.mxu0 %v4043
  %4301 = vmatpush1.bf16.msra.mxu0 %v4042
  %4302 = vmatprep.subr.bf16.mxu0 %v4047
  %4303 = vmatpush1.bf16.msra.mxu0 %v4046
  %4304 = vmatprep.subr.bf16.mxu0 %v4051
  %4305 = vmatpush1.bf16.msra.mxu0 %v4050
  %4306 = vmatprep.subr.bf16.mxu0 %v4055
  %4307 = vmatpush1.bf16.msra.mxu0 %v4054
  %4308 = vmatprep.subr.bf16.mxu0 %v4059
  %4309 = vmatpush1.bf16.msra.mxu0 %v4058
  %4310 = vmatprep.subr.bf16.mxu0 %v4063
  %4311 = vmatpush1.bf16.msra.mxu0 %v4062
  %4312 = vmatprep.subr.bf16.mxu0 %v4067
  %4313 = vmatpush1.bf16.msra.mxu0 %v4066
  %4314 = vmatprep.subr.bf16.mxu0 %v4071
  %4315 = vmatpush1.bf16.msra.mxu0 %v4070
  %4316 = vmatprep.subr.bf16.mxu0 %v4075
  %4317 = vmatpush1.bf16.msra.mxu0 %v4074
  %4318 = vmatprep.subr.bf16.mxu0 %v4079
  %4319 = vmatpush1.bf16.msra.mxu0 %v4078
  %4320 = vmatprep.mubr.bf16.mxu0 %v2221
  %4321 = vmatmul.mubr.bf16.gmra.mrb[0].mxu0 %v2220
  %v4322 = vpop.f32.mrb[0].mxu0
  %v4323 = vadd.f32 %v4280, %v4322
  %v4324 = vpop.f32.mrb[0].mxu0
  %v4325 = vadd.f32 %v4282, %v4324
  %v4326 = vpop.f32.mrb[0].mxu0
  %v4327 = vadd.f32 %v4284, %v4326
  %v4328 = vpop.f32.mrb[0].mxu0
  %v4329 = vadd.f32 %v4286, %v4328
  %4330 = vdwg.mxu0
  %4331 = vmatprep.subr.bf16.mxu0 %v4083
  %4332 = vmatpush1.bf16.msra.mxu0 %v4082
  %4333 = vmatprep.subr.bf16.mxu0 %v4087
  %4334 = vmatpush1.bf16.msra.mxu0 %v4086
  %4335 = vmatprep.subr.bf16.mxu0 %v4091
  %4336 = vmatpush1.bf16.msra.mxu0 %v4090
  %4337 = vmatprep.subr.bf16.mxu0 %v4095
  %4338 = vmatpush1.bf16.msra.mxu0 %v4094
  %4339 = vmatprep.subr.bf16.mxu0 0
  %4340 = vmatpush1.bf16.msra.mxu0 0
  %4341 = vmatprep.subr.bf16.mxu0 0
  %4342 = vmatpush1.bf16.msra.mxu0 0
  %4343 = vmatprep.subr.bf16.mxu0 0
  %4344 = vmatpush1.bf16.msra.mxu0 0
  %4345 = vmatprep.subr.bf16.mxu0 0
  %4346 = vmatpush1.bf16.msra.mxu0 0
  %4347 = vmatprep.subr.bf16.mxu0 0
  %4348 = vmatpush1.bf16.msra.mxu0 0
  %4349 = vmatprep.subr.bf16.mxu0 0
  %4350 = vmatpush1.bf16.msra.mxu0 0
  %4351 = vmatprep.subr.bf16.mxu0 0
  %4352 = vmatpush1.bf16.msra.mxu0 0
  %4353 = vmatprep.subr.bf16.mxu0 0
  %4354 = vmatpush1.bf16.msra.mxu0 0
  %4355 = vmatprep.subr.bf16.mxu0 0
  %4356 = vmatpush1.bf16.msra.mxu0 0
  %4357 = vmatprep.subr.bf16.mxu0 0
  %4358 = vmatpush1.bf16.msra.mxu0 0
  %4359 = vmatprep.subr.bf16.mxu0 0
  %4360 = vmatpush1.bf16.msra.mxu0 0
  %4361 = vmatprep.subr.bf16.mxu0 0
  %4362 = vmatpush1.bf16.msra.mxu0 0
  %4363 = vmatprep.mubr.bf16.mxu0 0
  %4364 = vmatmul.mubr.bf16.gmra.mrb[0].mxu0 %v4243
  %v4365 = vpop.f32.mrb[0].mxu0
  %v4366 = vadd.f32 %v4323, %v4365
  %v4367 = vpop.f32.mrb[0].mxu0
  %v4368 = vadd.f32 %v4325, %v4367
  %v4369 = vpop.f32.mrb[0].mxu0
  %v4370 = vadd.f32 %v4327, %v4369
  %v4371 = vpop.f32.mrb[0].mxu0
  %v4372 = vadd.f32 %v4329, %v4371
  %4373 = vdwg.mxu0
  %4374 = vmatprep.subr.bf16.mxu0 %v3957
  %4375 = vmatpush1.bf16.msra.mxu0 %v3956
  %4376 = vmatprep.subr.bf16.mxu0 %v3961
  %4377 = vmatpush1.bf16.msra.mxu0 %v3960
  %4378 = vmatprep.subr.bf16.mxu0 %v3965
  %4379 = vmatpush1.bf16.msra.mxu0 %v3964
  %4380 = vmatprep.subr.bf16.mxu0 %v3969
  %4381 = vmatpush1.bf16.msra.mxu0 %v3968
  %4382 = vmatprep.subr.bf16.mxu0 %v3973
  %4383 = vmatpush1.bf16.msra.mxu0 %v3972
  %4384 = vmatprep.subr.bf16.mxu0 %v3977
  %4385 = vmatpush1.bf16.msra.mxu0 %v3976
  %4386 = vmatprep.subr.bf16.mxu0 %v3981
  %4387 = vmatpush1.bf16.msra.mxu0 %v3980
  %4388 = vmatprep.subr.bf16.mxu0 %v3985
  %4389 = vmatpush1.bf16.msra.mxu0 %v3984
  %4390 = vmatprep.subr.bf16.mxu0 %v3989
  %4391 = vmatpush1.bf16.msra.mxu0 %v3988
  %4392 = vmatprep.subr.bf16.mxu0 %v3993
  %4393 = vmatpush1.bf16.msra.mxu0 %v3992
  %4394 = vmatprep.subr.bf16.mxu0 %v3997
  %4395 = vmatpush1.bf16.msra.mxu0 %v3996
  %4396 = vmatprep.subr.bf16.mxu0 %v4001
  %4397 = vmatpush1.bf16.msra.mxu0 %v4000
  %4398 = vmatprep.subr.bf16.mxu0 %v4005
  %4399 = vmatpush1.bf16.msra.mxu0 %v4004
  %4400 = vmatprep.subr.bf16.mxu0 %v4009
  %4401 = vmatpush1.bf16.msra.mxu0 %v4008
  %4402 = vmatprep.subr.bf16.mxu0 %v4013
  %4403 = vmatpush1.bf16.msra.mxu0 %v4012
  %4404 = vmatprep.subr.bf16.mxu0 %v4017
  %4405 = vmatpush1.bf16.msra.mxu0 %v4016
  %4406 = vmatprep.mubr.bf16.mxu0 %v2219
  %4407 = vmatmul.mubr.bf16.gmra.mrb[0].mxu0 %v2218
  %v4408 = vpop.f32.mrb[0].mxu0
  %v4409 = vadd.f32 %v3514, %v4408
  %v4410 = vpop.f32.mrb[0].mxu0
  %v4411 = vadd.f32 %v3516, %v4410
  %v4412 = vpop.f32.mrb[0].mxu0
  %v4413 = vadd.f32 %v3518, %v4412
  %v4414 = vpop.f32.mrb[0].mxu0
  %v4415 = vadd.f32 %v3520, %v4414
  %4416 = vdwg.mxu0
  %4417 = vmatprep.subr.bf16.mxu0 %v4021
  %4418 = vmatpush1.bf16.msra.mxu0 %v4020
  %4419 = vmatprep.subr.bf16.mxu0 %v4025
  %4420 = vmatpush1.bf16.msra.mxu0 %v4024
  %4421 = vmatprep.subr.bf16.mxu0 %v4029
  %4422 = vmatpush1.bf16.msra.mxu0 %v4028
  %4423 = vmatprep.subr.bf16.mxu0 %v4033
  %4424 = vmatpush1.bf16.msra.mxu0 %v4032
  %4425 = vmatprep.subr.bf16.mxu0 %v4037
  %4426 = vmatpush1.bf16.msra.mxu0 %v4036
  %4427 = vmatprep.subr.bf16.mxu0 %v4041
  %4428 = vmatpush1.bf16.msra.mxu0 %v4040
  %4429 = vmatprep.subr.bf16.mxu0 %v4045
  %4430 = vmatpush1.bf16.msra.mxu0 %v4044
  %4431 = vmatprep.subr.bf16.mxu0 %v4049
  %4432 = vmatpush1.bf16.msra.mxu0 %v4048
  %4433 = vmatprep.subr.bf16.mxu0 %v4053
  %4434 = vmatpush1.bf16.msra.mxu0 %v4052
  %4435 = vmatprep.subr.bf16.mxu0 %v4057
  %4436 = vmatpush1.bf16.msra.mxu0 %v4056
  %4437 = vmatprep.subr.bf16.mxu0 %v4061
  %4438 = vmatpush1.bf16.msra.mxu0 %v4060
  %4439 = vmatprep.subr.bf16.mxu0 %v4065
  %4440 = vmatpush1.bf16.msra.mxu0 %v4064
  %4441 = vmatprep.subr.bf16.mxu0 %v4069
  %4442 = vmatpush1.bf16.msra.mxu0 %v4068
  %4443 = vmatprep.subr.bf16.mxu0 %v4073
  %4444 = vmatpush1.bf16.msra.mxu0 %v4072
  %4445 = vmatprep.subr.bf16.mxu0 %v4077
  %4446 = vmatpush1.bf16.msra.mxu0 %v4076
  %4447 = vmatprep.subr.bf16.mxu0 %v4081
  %4448 = vmatpush1.bf16.msra.mxu0 %v4080
  %4449 = vmatprep.mubr.bf16.mxu0 %v2221
  %4450 = vmatmul.mubr.bf16.gmra.mrb[0].mxu0 %v2220
  %v4451 = vpop.f32.mrb[0].mxu0
  %v4452 = vadd.f32 %v4409, %v4451
  %v4453 = vpop.f32.mrb[0].mxu0
  %v4454 = vadd.f32 %v4411, %v4453
  %v4455 = vpop.f32.mrb[0].mxu0
  %v4456 = vadd.f32 %v4413, %v4455
  %v4457 = vpop.f32.mrb[0].mxu0
  %v4458 = vadd.f32 %v4415, %v4457
  %4459 = vdwg.mxu0
  %4460 = vmatprep.subr.bf16.mxu0 %v4085
  %4461 = vmatpush1.bf16.msra.mxu0 %v4084
  %4462 = vmatprep.subr.bf16.mxu0 %v4089
  %4463 = vmatpush1.bf16.msra.mxu0 %v4088
  %4464 = vmatprep.subr.bf16.mxu0 %v4093
  %4465 = vmatpush1.bf16.msra.mxu0 %v4092
  %4466 = vmatprep.subr.bf16.mxu0 %v4097
  %4467 = vmatpush1.bf16.msra.mxu0 %v4096
  %4468 = vmatprep.subr.bf16.mxu0 0
  %4469 = vmatpush1.bf16.msra.mxu0 0
  %4470 = vmatprep.subr.bf16.mxu0 0
  %4471 = vmatpush1.bf16.msra.mxu0 0
  %4472 = vmatprep.subr.bf16.mxu0 0
  %4473 = vmatpush1.bf16.msra.mxu0 0
  %4474 = vmatprep.subr.bf16.mxu0 0
  %4475 = vmatpush1.bf16.msra.mxu0 0
  %4476 = vmatprep.subr.bf16.mxu0 0
  %4477 = vmatpush1.bf16.msra.mxu0 0
  %4478 = vmatprep.subr.bf16.mxu0 0
  %4479 = vmatpush1.bf16.msra.mxu0 0
  %4480 = vmatprep.subr.bf16.mxu0 0
  %4481 = vmatpush1.bf16.msra.mxu0 0
  %4482 = vmatprep.subr.bf16.mxu0 0
  %4483 = vmatpush1.bf16.msra.mxu0 0
  %4484 = vmatprep.subr.bf16.mxu0 0
  %4485 = vmatpush1.bf16.msra.mxu0 0
  %4486 = vmatprep.subr.bf16.mxu0 0
  %4487 = vmatpush1.bf16.msra.mxu0 0
  %4488 = vmatprep.subr.bf16.mxu0 0
  %4489 = vmatpush1.bf16.msra.mxu0 0
  %4490 = vmatprep.subr.bf16.mxu0 0
  %4491 = vmatpush1.bf16.msra.mxu0 0
  %4492 = vmatprep.mubr.bf16.mxu0 0
  %4493 = vmatmul.mubr.bf16.gmra.mrb[0].mxu0 %v4243
  %v4494 = vpop.f32.mrb[0].mxu0
  %v4495 = vadd.f32 %v4452, %v4494
  %v4496 = vpop.f32.mrb[0].mxu0
  %v4497 = vadd.f32 %v4454, %v4496
  %v4498 = vpop.f32.mrb[0].mxu0
  %v4499 = vadd.f32 %v4456, %v4498
  %v4500 = vpop.f32.mrb[0].mxu0
  %v4501 = vadd.f32 %v4458, %v4500
  %4502 = vdwg.mxu0
  %s4503 = scalar_lea.vmem %s3, 2304
  %v4504 = vld [vmem:[%s4503] sm:$0xff]
  %v4505 = vld [vmem:[%s4503 + $0x8] sm:$0xff]
  %v4506 = vld [vmem:[%s4503 + $0x10] sm:$0xff]
  %v4507 = vld [vmem:[%s4503 + $0x18] sm:$0xff]
  %v4508 = vld [vmem:[%s4503 + $0x20] sm:$0xff]
  %v4509 = vld [vmem:[%s4503 + $0x28] sm:$0xff]
  %v4510 = vld [vmem:[%s4503 + $0x30] sm:$0xff]
  %v4511 = vld [vmem:[%s4503 + $0x38] sm:$0xff]
  %v4512 = vld [vmem:[%s4503 + $0x40] sm:$0xff]
  %v4513 = vld [vmem:[%s4503 + $0x48] sm:$0xff]
  %v4514 = vld [vmem:[%s4503 + $0x50] sm:$0xff]
  %v4515 = vld [vmem:[%s4503 + $0x58] sm:$0xff]
  %v4516 = vld [vmem:[%s4503 + $0x60] sm:$0xff]
  %v4517 = vld [vmem:[%s4503 + $0x68] sm:$0xff]
  %v4518 = vld [vmem:[%s4503 + $0x70] sm:$0xff]
  %v4519 = vld [vmem:[%s4503 + $0x78] sm:$0xff]
  %v4520 = vld [vmem:[%s4503 + $0x80] sm:$0xff]
  %v4521 = vld [vmem:[%s4503 + $0x88] sm:$0xff]
  %v4522 = vld [vmem:[%s4503 + $0x90] sm:$0xff]
  %v4523 = vld [vmem:[%s4503 + $0x98] sm:$0xff]
  %v4524 = vld [vmem:[%s4503 + $0xa0] sm:$0xff]
  %v4525 = vld [vmem:[%s4503 + $0xa8] sm:$0xff]
  %v4526 = vld [vmem:[%s4503 + $0xb0] sm:$0xff]
  %v4527 = vld [vmem:[%s4503 + $0xb8] sm:$0xff]
  %v4528 = vld [vmem:[%s4503 + $0xc0] sm:$0xff]
  %v4529 = vld [vmem:[%s4503 + $0xc8] sm:$0xff]
  %v4530 = vld [vmem:[%s4503 + $0xd0] sm:$0xff]
  %v4531 = vld [vmem:[%s4503 + $0xd8] sm:$0xff]
  %v4532 = vld [vmem:[%s4503 + $0xe0] sm:$0xff]
  %v4533 = vld [vmem:[%s4503 + $0xe8] sm:$0xff]
  %v4534 = vld [vmem:[%s4503 + $0xf0] sm:$0xff]
  %v4535 = vld [vmem:[%s4503 + $0xf8] sm:$0xff]
  %v4536 = vld [vmem:[%s4503 + $0x100] sm:$0xff]
  %v4537 = vld [vmem:[%s4503 + $0x108] sm:$0xff]
  %v4538 = vld [vmem:[%s4503 + $0x110] sm:$0xff]
  %v4539 = vld [vmem:[%s4503 + $0x118] sm:$0xff]
  %v4540 = vld [vmem:[%s4503 + $0x120] sm:$0xff]
  %v4541 = vld [vmem:[%s4503 + $0x128] sm:$0xff]
  %v4542 = vld [vmem:[%s4503 + $0x130] sm:$0xff]
  %v4543 = vld [vmem:[%s4503 + $0x138] sm:$0xff]
  %v4544 = vld [vmem:[%s4503 + $0x140] sm:$0xff]
  %v4545 = vld [vmem:[%s4503 + $0x148] sm:$0xff]
  %v4546 = vld [vmem:[%s4503 + $0x150] sm:$0xff]
  %v4547 = vld [vmem:[%s4503 + $0x158] sm:$0xff]
  %v4548 = vld [vmem:[%s4503 + $0x160] sm:$0xff]
  %v4549 = vld [vmem:[%s4503 + $0x168] sm:$0xff]
  %v4550 = vld [vmem:[%s4503 + $0x170] sm:$0xff]
  %v4551 = vld [vmem:[%s4503 + $0x178] sm:$0xff]
  %v4552 = vld [vmem:[%s4503 + $0x180] sm:$0xff]
  %v4553 = vld [vmem:[%s4503 + $0x188] sm:$0xff]
  %v4554 = vld [vmem:[%s4503 + $0x190] sm:$0xff]
  %v4555 = vld [vmem:[%s4503 + $0x198] sm:$0xff]
  %v4556 = vld [vmem:[%s4503 + $0x1a0] sm:$0xff]
  %v4557 = vld [vmem:[%s4503 + $0x1a8] sm:$0xff]
  %v4558 = vld [vmem:[%s4503 + $0x1b0] sm:$0xff]
  %v4559 = vld [vmem:[%s4503 + $0x1b8] sm:$0xff]
  %v4560 = vld [vmem:[%s4503 + $0x1c0] sm:$0xff]
  %v4561 = vld [vmem:[%s4503 + $0x1c8] sm:$0xff]
  %v4562 = vld [vmem:[%s4503 + $0x1d0] sm:$0xff]
  %v4563 = vld [vmem:[%s4503 + $0x1d8] sm:$0xff]
  %v4564 = vld [vmem:[%s4503 + $0x1e0] sm:$0xff]
  %v4565 = vld [vmem:[%s4503 + $0x1e8] sm:$0xff]
  %v4566 = vld [vmem:[%s4503 + $0x1f0] sm:$0xff]
  %v4567 = vld [vmem:[%s4503 + $0x1f8] sm:$0xff]
  %v4568 = vld [vmem:[%s4503 + $0x200] sm:$0xff]
  %v4569 = vld [vmem:[%s4503 + $0x208] sm:$0xff]
  %v4570 = vld [vmem:[%s4503 + $0x210] sm:$0xff]
  %v4571 = vld [vmem:[%s4503 + $0x218] sm:$0xff]
  %v4572 = vld [vmem:[%s4503 + $0x220] sm:$0xff]
  %v4573 = vld [vmem:[%s4503 + $0x228] sm:$0xff]
  %v4574 = vld [vmem:[%s4503 + $0x230] sm:$0xff]
  %v4575 = vld [vmem:[%s4503 + $0x238] sm:$0xff]
  %v4576 = vld [vmem:[%s4503 + $0x240] sm:$0xff]
  %v4577 = vld [vmem:[%s4503 + $0x248] sm:$0xff]
  %v4578 = vld [vmem:[%s4503 + $0x250] sm:$0xff]
  %v4579 = vld [vmem:[%s4503 + $0x258] sm:$0xff]
  %v4580 = vld [vmem:[%s4503 + $0x260] sm:$0xff]
  %v4581 = vld [vmem:[%s4503 + $0x268] sm:$0xff]
  %v4582 = vld [vmem:[%s4503 + $0x270] sm:$0xff]
  %v4583 = vld [vmem:[%s4503 + $0x278] sm:$0xff]
  %v4584 = vld [vmem:[%s4503 + $0x280] sm:$0xff]
  %v4585 = vld [vmem:[%s4503 + $0x288] sm:$0xff]
  %v4586 = vld [vmem:[%s4503 + $0x290] sm:$0xff]
  %v4587 = vld [vmem:[%s4503 + $0x298] sm:$0xff]
  %v4588 = vld [vmem:[%s4503 + $0x2a0] sm:$0xff]
  %v4589 = vld [vmem:[%s4503 + $0x2a8] sm:$0xff]
  %v4590 = vld [vmem:[%s4503 + $0x2b0] sm:$0xff]
  %v4591 = vld [vmem:[%s4503 + $0x2b8] sm:$0xff]
  %v4592 = vld [vmem:[%s4503 + $0x2c0] sm:$0xff]
  %v4593 = vld [vmem:[%s4503 + $0x2c8] sm:$0xff]
  %v4594 = vld [vmem:[%s4503 + $0x2d0] sm:$0xff]
  %v4595 = vld [vmem:[%s4503 + $0x2d8] sm:$0xff]
  %v4596 = vld [vmem:[%s4503 + $0x2e0] sm:$0xff]
  %v4597 = vld [vmem:[%s4503 + $0x2e8] sm:$0xff]
  %v4598 = vld [vmem:[%s4503 + $0x2f0] sm:$0xff]
  %v4599 = vld [vmem:[%s4503 + $0x2f8] sm:$0xff]
  %v4600 = vld [vmem:[%s4503 + $0x300] sm:$0xff]
  %v4601 = vld [vmem:[%s4503 + $0x308] sm:$0xff]
  %v4602 = vld [vmem:[%s4503 + $0x310] sm:$0xff]
  %v4603 = vld [vmem:[%s4503 + $0x318] sm:$0xff]
  %v4604 = vld [vmem:[%s4503 + $0x320] sm:$0xff]
  %v4605 = vld [vmem:[%s4503 + $0x328] sm:$0xff]
  %v4606 = vld [vmem:[%s4503 + $0x330] sm:$0xff]
  %v4607 = vld [vmem:[%s4503 + $0x338] sm:$0xff]
  %v4608 = vld [vmem:[%s4503 + $0x340] sm:$0xff]
  %v4609 = vld [vmem:[%s4503 + $0x348] sm:$0xff]
  %v4610 = vld [vmem:[%s4503 + $0x350] sm:$0xff]
  %v4611 = vld [vmem:[%s4503 + $0x358] sm:$0xff]
  %v4612 = vld [vmem:[%s4503 + $0x360] sm:$0xff]
  %v4613 = vld [vmem:[%s4503 + $0x368] sm:$0xff]
  %v4614 = vld [vmem:[%s4503 + $0x370] sm:$0xff]
  %v4615 = vld [vmem:[%s4503 + $0x378] sm:$0xff]
  %v4616 = vld [vmem:[%s4503 + $0x380] sm:$0xff]
  %v4617 = vld [vmem:[%s4503 + $0x388] sm:$0xff]
  %v4618 = vld [vmem:[%s4503 + $0x390] sm:$0xff]
  %v4619 = vld [vmem:[%s4503 + $0x398] sm:$0xff]
  %v4620 = vld [vmem:[%s4503 + $0x3a0] sm:$0xff]
  %v4621 = vld [vmem:[%s4503 + $0x3a8] sm:$0xff]
  %v4622 = vld [vmem:[%s4503 + $0x3b0] sm:$0xff]
  %v4623 = vld [vmem:[%s4503 + $0x3b8] sm:$0xff]
  %v4624 = vld [vmem:[%s4503 + $0x3c0] sm:$0xff]
  %v4625 = vld [vmem:[%s4503 + $0x3c8] sm:$0xff]
  %v4626 = vld [vmem:[%s4503 + $0x3d0] sm:$0xff]
  %v4627 = vld [vmem:[%s4503 + $0x3d8] sm:$0xff]
  %v4628 = vld [vmem:[%s4503 + $0x3e0] sm:$0xff]
  %v4629 = vld [vmem:[%s4503 + $0x3e8] sm:$0xff]
  %v4630 = vld [vmem:[%s4503 + $0x3f0] sm:$0xff]
  %v4631 = vld [vmem:[%s4503 + $0x3f8] sm:$0xff]
  %v4632 = vld [vmem:[%s4503 + $0x400] sm:$0xff]
  %v4633 = vld [vmem:[%s4503 + $0x408] sm:$0xff]
  %v4634 = vld [vmem:[%s4503 + $0x410] sm:$0xff]
  %v4635 = vld [vmem:[%s4503 + $0x418] sm:$0xff]
  %v4636 = vld [vmem:[%s4503 + $0x420] sm:$0xff]
  %v4637 = vld [vmem:[%s4503 + $0x428] sm:$0xff]
  %v4638 = vld [vmem:[%s4503 + $0x430] sm:$0xff]
  %v4639 = vld [vmem:[%s4503 + $0x438] sm:$0xff]
  %v4640 = vld [vmem:[%s4503 + $0x440] sm:$0xff]
  %v4641 = vld [vmem:[%s4503 + $0x448] sm:$0xff]
  %v4642 = vld [vmem:[%s4503 + $0x450] sm:$0xff]
  %v4643 = vld [vmem:[%s4503 + $0x458] sm:$0xff]
  %v4644 = vld [vmem:[%s4503 + $0x460] sm:$0xff]
  %v4645 = vld [vmem:[%s4503 + $0x468] sm:$0xff]
  %v4646 = vld [vmem:[%s4503 + $0x470] sm:$0xff]
  %v4647 = vld [vmem:[%s4503 + $0x478] sm:$0xff]
  %v4648 = vld [vmem:[#allocation2] sm:$0xf0]
  %v4649 = vld [vmem:[#allocation2 + $0x8] sm:$0xf0]
  %v4650 = vld [vmem:[#allocation2 + $0x10] sm:$0xf0]
  %v4651 = vld [vmem:[#allocation2 + $0x18] sm:$0xf0]
  %v4652 = vld [vmem:[#allocation2 + $0x20] sm:$0xf0]
  %v4653 = vld [vmem:[#allocation2 + $0x28] sm:$0xff]
  %v4654 = vld [vmem:[#allocation2 + $0x30] sm:$0xff]
  %v4655 = vld [vmem:[#allocation2 + $0x38] sm:$0xff]
  %v4656 = vld [vmem:[#allocation2 + $0x40] sm:$0xff]
  %v4657 = vld [vmem:[#allocation2 + $0x48] sm:$0xff]
  %v4658 = vld [vmem:[#allocation2 + $0x50] sm:$0x3]
  %v4659 = vld [vmem:[#allocation2 + $0x58] sm:$0x3]
  %v4660 = vld [vmem:[#allocation2 + $0x60] sm:$0x3]
  %v4661 = vld [vmem:[#allocation2 + $0x68] sm:$0x3]
  %v4662 = vld [vmem:[#allocation2 + $0x70] sm:$0x3]
  %v4663 = vpack.c.bf16 %v4653, %v4648
  %v4664 = vpack.c.bf16 %v4654, %v4649
  %v4665 = vpack.c.bf16 %v4655, %v4650
  %v4666 = vpack.c.bf16 %v4656, %v4651
  %v4667 = vpack.c.bf16 %v4657, %v4652
  %v4668 = vpack.c.bf16 %v4658, %v4658
  %v4669 = vpack.c.bf16 %v4659, %v4659
  %v4670 = vpack.c.bf16 %v4660, %v4660
  %v4671 = vpack.c.bf16 %v4661, %v4661
  %v4672 = vpack.c.bf16 %v4662, %v4662
  %s4673 = scalar_lea.vmem %s3, 3456
  %v4674 = vld [vmem:[%s4673] sm:$0xff]
  %v4675 = vld [vmem:[%s4673 + $0x8] sm:$0xff]
  %v4676 = vld [vmem:[%s4673 + $0x10] sm:$0xff]
  %v4677 = vld [vmem:[%s4673 + $0x18] sm:$0xff]
  %v4678 = vld [vmem:[%s4673 + $0x20] sm:$0xff]
  %v4679 = vld [vmem:[%s4673 + $0x28] sm:$0xff]
  %v4680 = vld [vmem:[%s4673 + $0x30] sm:$0xff]
  %v4681 = vld [vmem:[%s4673 + $0x38] sm:$0xff]
  %v4682 = vld [vmem:[%s4673 + $0x40] sm:$0xff]
  %v4683 = vld [vmem:[%s4673 + $0x48] sm:$0xff]
  %v4684 = vld [vmem:[%s4673 + $0x50] sm:$0xff]
  %v4685 = vld [vmem:[%s4673 + $0x58] sm:$0xff]
  %v4686 = vld [vmem:[%s4673 + $0x60] sm:$0xff]
  %v4687 = vld [vmem:[%s4673 + $0x68] sm:$0xff]
  %v4688 = vld [vmem:[%s4673 + $0x70] sm:$0xff]
  %v4689 = vld [vmem:[%s4673 + $0x78] sm:$0xff]
  %v4690 = vld [vmem:[%s4673 + $0x80] sm:$0xff]
  %v4691 = vld [vmem:[%s4673 + $0x88] sm:$0xff]
  %v4692 = vld [vmem:[%s4673 + $0x90] sm:$0xff]
  %v4693 = vld [vmem:[%s4673 + $0x98] sm:$0xff]
  %v4694 = vld [vmem:[%s4673 + $0xa0] sm:$0xff]
  %v4695 = vld [vmem:[%s4673 + $0xa8] sm:$0xff]
  %v4696 = vld [vmem:[%s4673 + $0xb0] sm:$0xff]
  %v4697 = vld [vmem:[%s4673 + $0xb8] sm:$0xff]
  %v4698 = vld [vmem:[%s4673 + $0xc0] sm:$0xff]
  %v4699 = vld [vmem:[%s4673 + $0xc8] sm:$0xff]
  %v4700 = vld [vmem:[%s4673 + $0xd0] sm:$0xff]
  %v4701 = vld [vmem:[%s4673 + $0xd8] sm:$0xff]
  %v4702 = vld [vmem:[%s4673 + $0xe0] sm:$0xff]
  %v4703 = vld [vmem:[%s4673 + $0xe8] sm:$0xff]
  %v4704 = vld [vmem:[%s4673 + $0xf0] sm:$0xff]
  %v4705 = vld [vmem:[%s4673 + $0xf8] sm:$0xff]
  %v4706 = vld [vmem:[%s4673 + $0x100] sm:$0xff]
  %v4707 = vld [vmem:[%s4673 + $0x108] sm:$0xff]
  %v4708 = vld [vmem:[%s4673 + $0x110] sm:$0xff]
  %v4709 = vld [vmem:[%s4673 + $0x118] sm:$0xff]
  %v4710 = vld [vmem:[%s4673 + $0x120] sm:$0xff]
  %v4711 = vld [vmem:[%s4673 + $0x128] sm:$0xff]
  %v4712 = vld [vmem:[%s4673 + $0x130] sm:$0xff]
  %v4713 = vld [vmem:[%s4673 + $0x138] sm:$0xff]
  %v4714 = vld [vmem:[%s4673 + $0x140] sm:$0xff]
  %v4715 = vld [vmem:[%s4673 + $0x148] sm:$0xff]
  %v4716 = vld [vmem:[%s4673 + $0x150] sm:$0xff]
  %v4717 = vld [vmem:[%s4673 + $0x158] sm:$0xff]
  %v4718 = vld [vmem:[%s4673 + $0x160] sm:$0xff]
  %v4719 = vld [vmem:[%s4673 + $0x168] sm:$0xff]
  %v4720 = vld [vmem:[%s4673 + $0x170] sm:$0xff]
  %v4721 = vld [vmem:[%s4673 + $0x178] sm:$0xff]
  %v4722 = vld [vmem:[%s4673 + $0x180] sm:$0xff]
  %v4723 = vld [vmem:[%s4673 + $0x188] sm:$0xff]
  %v4724 = vld [vmem:[%s4673 + $0x190] sm:$0xff]
  %v4725 = vld [vmem:[%s4673 + $0x198] sm:$0xff]
  %v4726 = vld [vmem:[%s4673 + $0x1a0] sm:$0xff]
  %v4727 = vld [vmem:[%s4673 + $0x1a8] sm:$0xff]
  %v4728 = vld [vmem:[%s4673 + $0x1b0] sm:$0xff]
  %v4729 = vld [vmem:[%s4673 + $0x1b8] sm:$0xff]
  %v4730 = vld [vmem:[%s4673 + $0x1c0] sm:$0xff]
  %v4731 = vld [vmem:[%s4673 + $0x1c8] sm:$0xff]
  %v4732 = vld [vmem:[%s4673 + $0x1d0] sm:$0xff]
  %v4733 = vld [vmem:[%s4673 + $0x1d8] sm:$0xff]
  %v4734 = vld [vmem:[%s4673 + $0x1e0] sm:$0xff]
  %v4735 = vld [vmem:[%s4673 + $0x1e8] sm:$0xff]
  %v4736 = vld [vmem:[%s4673 + $0x1f0] sm:$0xff]
  %v4737 = vld [vmem:[%s4673 + $0x1f8] sm:$0xff]
  %v4738 = vld [vmem:[%s4673 + $0x200] sm:$0xff]
  %v4739 = vld [vmem:[%s4673 + $0x208] sm:$0xff]
  %v4740 = vld [vmem:[%s4673 + $0x210] sm:$0xff]
  %v4741 = vld [vmem:[%s4673 + $0x218] sm:$0xff]
  %v4742 = vld [vmem:[%s4673 + $0x220] sm:$0xff]
  %v4743 = vld [vmem:[%s4673 + $0x228] sm:$0xff]
  %v4744 = vld [vmem:[%s4673 + $0x230] sm:$0xff]
  %v4745 = vld [vmem:[%s4673 + $0x238] sm:$0xff]
  %v4746 = vld [vmem:[%s4673 + $0x240] sm:$0xff]
  %v4747 = vld [vmem:[%s4673 + $0x248] sm:$0xff]
  %v4748 = vld [vmem:[%s4673 + $0x250] sm:$0xff]
  %v4749 = vld [vmem:[%s4673 + $0x258] sm:$0xff]
  %v4750 = vld [vmem:[%s4673 + $0x260] sm:$0xff]
  %v4751 = vld [vmem:[%s4673 + $0x268] sm:$0xff]
  %v4752 = vld [vmem:[%s4673 + $0x270] sm:$0xff]
  %v4753 = vld [vmem:[%s4673 + $0x278] sm:$0xff]
  %v4754 = vld [vmem:[%s4673 + $0x280] sm:$0xff]
  %v4755 = vld [vmem:[%s4673 + $0x288] sm:$0xff]
  %v4756 = vld [vmem:[%s4673 + $0x290] sm:$0xff]
  %v4757 = vld [vmem:[%s4673 + $0x298] sm:$0xff]
  %v4758 = vld [vmem:[%s4673 + $0x2a0] sm:$0xff]
  %v4759 = vld [vmem:[%s4673 + $0x2a8] sm:$0xff]
  %v4760 = vld [vmem:[%s4673 + $0x2b0] sm:$0xff]
  %v4761 = vld [vmem:[%s4673 + $0x2b8] sm:$0xff]
  %v4762 = vld [vmem:[%s4673 + $0x2c0] sm:$0xff]
  %v4763 = vld [vmem:[%s4673 + $0x2c8] sm:$0xff]
  %v4764 = vld [vmem:[%s4673 + $0x2d0] sm:$0xff]
  %v4765 = vld [vmem:[%s4673 + $0x2d8] sm:$0xff]
  %v4766 = vld [vmem:[%s4673 + $0x2e0] sm:$0xff]
  %v4767 = vld [vmem:[%s4673 + $0x2e8] sm:$0xff]
  %v4768 = vld [vmem:[%s4673 + $0x2f0] sm:$0xff]
  %v4769 = vld [vmem:[%s4673 + $0x2f8] sm:$0xff]
  %v4770 = vld [vmem:[%s4673 + $0x300] sm:$0xff]
  %v4771 = vld [vmem:[%s4673 + $0x308] sm:$0xff]
  %v4772 = vld [vmem:[%s4673 + $0x310] sm:$0xff]
  %v4773 = vld [vmem:[%s4673 + $0x318] sm:$0xff]
  %v4774 = vld [vmem:[%s4673 + $0x320] sm:$0xff]
  %v4775 = vld [vmem:[%s4673 + $0x328] sm:$0xff]
  %v4776 = vld [vmem:[%s4673 + $0x330] sm:$0xff]
  %v4777 = vld [vmem:[%s4673 + $0x338] sm:$0xff]
  %v4778 = vld [vmem:[%s4673 + $0x340] sm:$0xff]
  %v4779 = vld [vmem:[%s4673 + $0x348] sm:$0xff]
  %v4780 = vld [vmem:[%s4673 + $0x350] sm:$0xff]
  %v4781 = vld [vmem:[%s4673 + $0x358] sm:$0xff]
  %v4782 = vld [vmem:[%s4673 + $0x360] sm:$0xff]
  %v4783 = vld [vmem:[%s4673 + $0x368] sm:$0xff]
  %v4784 = vld [vmem:[%s4673 + $0x370] sm:$0xff]
  %v4785 = vld [vmem:[%s4673 + $0x378] sm:$0xff]
  %v4786 = vld [vmem:[%s4673 + $0x380] sm:$0xff]
  %v4787 = vld [vmem:[%s4673 + $0x388] sm:$0xff]
  %v4788 = vld [vmem:[%s4673 + $0x390] sm:$0xff]
  %v4789 = vld [vmem:[%s4673 + $0x398] sm:$0xff]
  %v4790 = vld [vmem:[%s4673 + $0x3a0] sm:$0xff]
  %v4791 = vld [vmem:[%s4673 + $0x3a8] sm:$0xff]
  %v4792 = vld [vmem:[%s4673 + $0x3b0] sm:$0xff]
  %v4793 = vld [vmem:[%s4673 + $0x3b8] sm:$0xff]
  %v4794 = vld [vmem:[%s4673 + $0x3c0] sm:$0xff]
  %v4795 = vld [vmem:[%s4673 + $0x3c8] sm:$0xff]
  %v4796 = vld [vmem:[%s4673 + $0x3d0] sm:$0xff]
  %v4797 = vld [vmem:[%s4673 + $0x3d8] sm:$0xff]
  %v4798 = vld [vmem:[%s4673 + $0x3e0] sm:$0xff]
  %v4799 = vld [vmem:[%s4673 + $0x3e8] sm:$0xff]
  %v4800 = vld [vmem:[%s4673 + $0x3f0] sm:$0xff]
  %v4801 = vld [vmem:[%s4673 + $0x3f8] sm:$0xff]
  %v4802 = vld [vmem:[%s4673 + $0x400] sm:$0xff]
  %v4803 = vld [vmem:[%s4673 + $0x408] sm:$0xff]
  %v4804 = vld [vmem:[%s4673 + $0x410] sm:$0xff]
  %v4805 = vld [vmem:[%s4673 + $0x418] sm:$0xff]
  %v4806 = vld [vmem:[%s4673 + $0x420] sm:$0xff]
  %v4807 = vld [vmem:[%s4673 + $0x428] sm:$0xff]
  %v4808 = vld [vmem:[%s4673 + $0x430] sm:$0xff]
  %v4809 = vld [vmem:[%s4673 + $0x438] sm:$0xff]
  %v4810 = vld [vmem:[%s4673 + $0x440] sm:$0xff]
  %v4811 = vld [vmem:[%s4673 + $0x448] sm:$0xff]
  %v4812 = vld [vmem:[%s4673 + $0x450] sm:$0xff]
  %v4813 = vld [vmem:[%s4673 + $0x458] sm:$0xff]
  %v4814 = vld [vmem:[%s4673 + $0x460] sm:$0xff]
  %v4815 = vld [vmem:[%s4673 + $0x468] sm:$0xff]
  %v4816 = vld [vmem:[%s4673 + $0x470] sm:$0xff]
  %v4817 = vld [vmem:[%s4673 + $0x478] sm:$0xff]
  %vm4828 = vcmask 1045504
  %v4829 = vrot.slane %v4663, 2
  %v4830 = vrot.slane %v4668, 2
  %v4831 = vsel %vm4828, %v4829, %v4830
  %v4832 = vrot.slane %v4664, 2
  %v4833 = vrot.slane %v4669, 2
  %v4834 = vsel %vm4828, %v4832, %v4833
  %v4835 = vrot.slane %v4665, 2
  %v4836 = vrot.slane %v4670, 2
  %v4837 = vsel %vm4828, %v4835, %v4836
  %v4838 = vrot.slane %v4666, 2
  %v4839 = vrot.slane %v4671, 2
  %v4840 = vsel %vm4828, %v4838, %v4839
  %v4841 = vrot.slane %v4667, 2
  %v4842 = vrot.slane %v4672, 2
  %v4843 = vsel %vm4828, %v4841, %v4842
  %v4992 = vunpack.c.l.b16 %v4674
  %v4993 = vunpack.c.h.b16 %v4674
  %v4994 = vunpack.c.l.b16 %v4675
  %v4995 = vunpack.c.h.b16 %v4675
  %v4996 = vunpack.c.l.b16 %v4676
  %v4997 = vunpack.c.h.b16 %v4676
  %v4998 = vunpack.c.l.b16 %v4677
  %v4999 = vunpack.c.h.b16 %v4677
  %v5000 = vunpack.c.l.b16 %v4678
  %v5001 = vunpack.c.h.b16 %v4678
  %v5002 = vunpack.c.l.b16 %v4679
  %v5003 = vunpack.c.h.b16 %v4679
  %v5004 = vunpack.c.l.b16 %v4680
  %v5005 = vunpack.c.h.b16 %v4680
  %v5006 = vunpack.c.l.b16 %v4681
  %v5007 = vunpack.c.h.b16 %v4681
  %v5008 = vunpack.c.l.b16 %v4682
  %v5009 = vunpack.c.h.b16 %v4682
  %v5010 = vunpack.c.l.b16 %v4683
  %v5011 = vunpack.c.h.b16 %v4683
  %v5012 = vunpack.c.l.b16 %v4684
  %v5013 = vunpack.c.h.b16 %v4684
  %v5014 = vunpack.c.l.b16 %v4685
  %v5015 = vunpack.c.h.b16 %v4685
  %v5016 = vunpack.c.l.b16 %v4686
  %v5017 = vunpack.c.h.b16 %v4686
  %v5018 = vunpack.c.l.b16 %v4687
  %v5019 = vunpack.c.h.b16 %v4687
  %v5020 = vunpack.c.l.b16 %v4688
  %v5021 = vunpack.c.h.b16 %v4688
  %v5022 = vunpack.c.l.b16 %v4689
  %v5023 = vunpack.c.h.b16 %v4689
  %v5024 = vunpack.c.l.b16 %v4690
  %v5025 = vunpack.c.h.b16 %v4690
  %v5026 = vunpack.c.l.b16 %v4691
  %v5027 = vunpack.c.h.b16 %v4691
  %v5028 = vunpack.c.l.b16 %v4692
  %v5029 = vunpack.c.h.b16 %v4692
  %v5030 = vunpack.c.l.b16 %v4693
  %v5031 = vunpack.c.h.b16 %v4693
  %v5032 = vunpack.c.l.b16 %v4694
  %v5033 = vunpack.c.h.b16 %v4694
  %v5034 = vunpack.c.l.b16 %v4695
  %v5035 = vunpack.c.h.b16 %v4695
  %v5036 = vunpack.c.l.b16 %v4696
  %v5037 = vunpack.c.h.b16 %v4696
  %v5038 = vunpack.c.l.b16 %v4697
  %v5039 = vunpack.c.h.b16 %v4697
  %v5040 = vunpack.c.l.b16 %v4698
  %v5041 = vunpack.c.h.b16 %v4698
  %v5042 = vunpack.c.l.b16 %v4699
  %v5043 = vunpack.c.h.b16 %v4699
  %v5044 = vunpack.c.l.b16 %v4700
  %v5045 = vunpack.c.h.b16 %v4700
  %v5046 = vunpack.c.l.b16 %v4701
  %v5047 = vunpack.c.h.b16 %v4701
  %v5048 = vunpack.c.l.b16 %v4702
  %v5049 = vunpack.c.h.b16 %v4702
  %v5050 = vunpack.c.l.b16 %v4703
  %v5051 = vunpack.c.h.b16 %v4703
  %v5052 = vunpack.c.l.b16 %v4704
  %v5053 = vunpack.c.h.b16 %v4704
  %v5054 = vunpack.c.l.b16 %v4705
  %v5055 = vunpack.c.h.b16 %v4705
  %v5056 = vunpack.c.l.b16 %v4706
  %v5057 = vunpack.c.h.b16 %v4706
  %v5058 = vunpack.c.l.b16 %v4707
  %v5059 = vunpack.c.h.b16 %v4707
  %v5060 = vunpack.c.l.b16 %v4708
  %v5061 = vunpack.c.h.b16 %v4708
  %v5062 = vunpack.c.l.b16 %v4709
  %v5063 = vunpack.c.h.b16 %v4709
  %v5064 = vunpack.c.l.b16 %v4710
  %v5065 = vunpack.c.h.b16 %v4710
  %v5066 = vunpack.c.l.b16 %v4711
  %v5067 = vunpack.c.h.b16 %v4711
  %v5068 = vunpack.c.l.b16 %v4712
  %v5069 = vunpack.c.h.b16 %v4712
  %v5070 = vunpack.c.l.b16 %v4713
  %v5071 = vunpack.c.h.b16 %v4713
  %v5072 = vunpack.c.l.b16 %v4714
  %v5073 = vunpack.c.h.b16 %v4714
  %v5074 = vunpack.c.l.b16 %v4715
  %v5075 = vunpack.c.h.b16 %v4715
  %v5076 = vunpack.c.l.b16 %v4716
  %v5077 = vunpack.c.h.b16 %v4716
  %v5078 = vunpack.c.l.b16 %v4717
  %v5079 = vunpack.c.h.b16 %v4717
  %v5080 = vunpack.c.l.b16 %v4718
  %v5081 = vunpack.c.h.b16 %v4718
  %v5082 = vunpack.c.l.b16 %v4719
  %v5083 = vunpack.c.h.b16 %v4719
  %v5084 = vunpack.c.l.b16 %v4720
  %v5085 = vunpack.c.h.b16 %v4720
  %v5086 = vunpack.c.l.b16 %v4721
  %v5087 = vunpack.c.h.b16 %v4721
  %v5088 = vunpack.c.l.b16 %v4722
  %v5089 = vunpack.c.h.b16 %v4722
  %v5090 = vunpack.c.l.b16 %v4723
  %v5091 = vunpack.c.h.b16 %v4723
  %v5092 = vunpack.c.l.b16 %v4724
  %v5093 = vunpack.c.h.b16 %v4724
  %v5094 = vunpack.c.l.b16 %v4725
  %v5095 = vunpack.c.h.b16 %v4725
  %v5096 = vunpack.c.l.b16 %v4726
  %v5097 = vunpack.c.h.b16 %v4726
  %v5098 = vunpack.c.l.b16 %v4727
  %v5099 = vunpack.c.h.b16 %v4727
  %v5100 = vunpack.c.l.b16 %v4728
  %v5101 = vunpack.c.h.b16 %v4728
  %v5102 = vunpack.c.l.b16 %v4729
  %v5103 = vunpack.c.h.b16 %v4729
  %v5104 = vunpack.c.l.b16 %v4730
  %v5105 = vunpack.c.h.b16 %v4730
  %v5106 = vunpack.c.l.b16 %v4731
  %v5107 = vunpack.c.h.b16 %v4731
  %v5108 = vunpack.c.l.b16 %v4732
  %v5109 = vunpack.c.h.b16 %v4732
  %v5110 = vunpack.c.l.b16 %v4733
  %v5111 = vunpack.c.h.b16 %v4733
  %v5112 = vunpack.c.l.b16 %v4734
  %v5113 = vunpack.c.h.b16 %v4734
  %v5114 = vunpack.c.l.b16 %v4735
  %v5115 = vunpack.c.h.b16 %v4735
  %v5116 = vunpack.c.l.b16 %v4736
  %v5117 = vunpack.c.h.b16 %v4736
  %v5118 = vunpack.c.l.b16 %v4737
  %v5119 = vunpack.c.h.b16 %v4737
  %v5120 = vunpack.c.l.b16 %v4738
  %v5121 = vunpack.c.h.b16 %v4738
  %v5122 = vunpack.c.l.b16 %v4739
  %v5123 = vunpack.c.h.b16 %v4739
  %v5124 = vunpack.c.l.b16 %v4740
  %v5125 = vunpack.c.h.b16 %v4740
  %v5126 = vunpack.c.l.b16 %v4741
  %v5127 = vunpack.c.h.b16 %v4741
  %v5128 = vunpack.c.l.b16 %v4742
  %v5129 = vunpack.c.h.b16 %v4742
  %v5130 = vunpack.c.l.b16 %v4743
  %v5131 = vunpack.c.h.b16 %v4743
  %v5132 = vunpack.c.l.b16 %v4744
  %v5133 = vunpack.c.h.b16 %v4744
  %v5134 = vunpack.c.l.b16 %v4745
  %v5135 = vunpack.c.h.b16 %v4745
  %v5136 = vunpack.c.l.b16 %v4746
  %v5137 = vunpack.c.h.b16 %v4746
  %v5138 = vunpack.c.l.b16 %v4747
  %v5139 = vunpack.c.h.b16 %v4747
  %v5140 = vunpack.c.l.b16 %v4748
  %v5141 = vunpack.c.h.b16 %v4748
  %v5142 = vunpack.c.l.b16 %v4749
  %v5143 = vunpack.c.h.b16 %v4749
  %v5144 = vunpack.c.l.b16 %v4750
  %v5145 = vunpack.c.h.b16 %v4750
  %v5146 = vunpack.c.l.b16 %v4751
  %v5147 = vunpack.c.h.b16 %v4751
  %v5148 = vunpack.c.l.b16 %v4752
  %v5149 = vunpack.c.h.b16 %v4752
  %v5150 = vunpack.c.l.b16 %v4753
  %v5151 = vunpack.c.h.b16 %v4753
  %v5152 = vunpack.c.l.b16 %v4754
  %v5153 = vunpack.c.h.b16 %v4754
  %v5154 = vunpack.c.l.b16 %v4755
  %v5155 = vunpack.c.h.b16 %v4755
  %v5156 = vunpack.c.l.b16 %v4756
  %v5157 = vunpack.c.h.b16 %v4756
  %v5158 = vunpack.c.l.b16 %v4757
  %v5159 = vunpack.c.h.b16 %v4757
  %v5160 = vunpack.c.l.b16 %v4758
  %v5161 = vunpack.c.h.b16 %v4758
  %v5162 = vunpack.c.l.b16 %v4759
  %v5163 = vunpack.c.h.b16 %v4759
  %v5164 = vunpack.c.l.b16 %v4760
  %v5165 = vunpack.c.h.b16 %v4760
  %v5166 = vunpack.c.l.b16 %v4761
  %v5167 = vunpack.c.h.b16 %v4761
  %v5168 = vunpack.c.l.b16 %v4762
  %v5169 = vunpack.c.h.b16 %v4762
  %v5170 = vunpack.c.l.b16 %v4763
  %v5171 = vunpack.c.h.b16 %v4763
  %v5172 = vunpack.c.l.b16 %v4764
  %v5173 = vunpack.c.h.b16 %v4764
  %v5174 = vunpack.c.l.b16 %v4765
  %v5175 = vunpack.c.h.b16 %v4765
  %v5176 = vunpack.c.l.b16 %v4766
  %v5177 = vunpack.c.h.b16 %v4766
  %v5178 = vunpack.c.l.b16 %v4767
  %v5179 = vunpack.c.h.b16 %v4767
  %v5180 = vunpack.c.l.b16 %v4768
  %v5181 = vunpack.c.h.b16 %v4768
  %v5182 = vunpack.c.l.b16 %v4769
  %v5183 = vunpack.c.h.b16 %v4769
  %v5184 = vunpack.c.l.b16 %v4770
  %v5185 = vunpack.c.h.b16 %v4770
  %v5186 = vunpack.c.l.b16 %v4771
  %v5187 = vunpack.c.h.b16 %v4771
  %v5188 = vunpack.c.l.b16 %v4772
  %v5189 = vunpack.c.h.b16 %v4772
  %v5190 = vunpack.c.l.b16 %v4773
  %v5191 = vunpack.c.h.b16 %v4773
  %v5192 = vunpack.c.l.b16 %v4774
  %v5193 = vunpack.c.h.b16 %v4774
  %v5194 = vunpack.c.l.b16 %v4775
  %v5195 = vunpack.c.h.b16 %v4775
  %v5196 = vunpack.c.l.b16 %v4776
  %v5197 = vunpack.c.h.b16 %v4776
  %v5198 = vunpack.c.l.b16 %v4777
  %v5199 = vunpack.c.h.b16 %v4777
  %v5200 = vunpack.c.l.b16 %v4778
  %v5201 = vunpack.c.h.b16 %v4778
  %v5202 = vunpack.c.l.b16 %v4779
  %v5203 = vunpack.c.h.b16 %v4779
  %v5204 = vunpack.c.l.b16 %v4780
  %v5205 = vunpack.c.h.b16 %v4780
  %v5206 = vunpack.c.l.b16 %v4781
  %v5207 = vunpack.c.h.b16 %v4781
  %v5208 = vunpack.c.l.b16 %v4782
  %v5209 = vunpack.c.h.b16 %v4782
  %v5210 = vunpack.c.l.b16 %v4783
  %v5211 = vunpack.c.h.b16 %v4783
  %v5212 = vunpack.c.l.b16 %v4784
  %v5213 = vunpack.c.h.b16 %v4784
  %v5214 = vunpack.c.l.b16 %v4785
  %v5215 = vunpack.c.h.b16 %v4785
  %v5216 = vunpack.c.l.b16 %v4786
  %v5217 = vunpack.c.h.b16 %v4786
  %v5218 = vunpack.c.l.b16 %v4787
  %v5219 = vunpack.c.h.b16 %v4787
  %v5220 = vunpack.c.l.b16 %v4788
  %v5221 = vunpack.c.h.b16 %v4788
  %v5222 = vunpack.c.l.b16 %v4789
  %v5223 = vunpack.c.h.b16 %v4789
  %v5224 = vunpack.c.l.b16 %v4790
  %v5225 = vunpack.c.h.b16 %v4790
  %v5226 = vunpack.c.l.b16 %v4791
  %v5227 = vunpack.c.h.b16 %v4791
  %v5228 = vunpack.c.l.b16 %v4792
  %v5229 = vunpack.c.h.b16 %v4792
  %v5230 = vunpack.c.l.b16 %v4793
  %v5231 = vunpack.c.h.b16 %v4793
  %v5232 = vunpack.c.l.b16 %v4794
  %v5233 = vunpack.c.h.b16 %v4794
  %v5234 = vunpack.c.l.b16 %v4795
  %v5235 = vunpack.c.h.b16 %v4795
  %v5236 = vunpack.c.l.b16 %v4796
  %v5237 = vunpack.c.h.b16 %v4796
  %v5238 = vunpack.c.l.b16 %v4797
  %v5239 = vunpack.c.h.b16 %v4797
  %v5240 = vunpack.c.l.b16 %v4798
  %v5241 = vunpack.c.h.b16 %v4798
  %v5242 = vunpack.c.l.b16 %v4799
  %v5243 = vunpack.c.h.b16 %v4799
  %v5244 = vunpack.c.l.b16 %v4800
  %v5245 = vunpack.c.h.b16 %v4800
  %v5246 = vunpack.c.l.b16 %v4801
  %v5247 = vunpack.c.h.b16 %v4801
  %v5248 = vunpack.c.l.b16 %v4802
  %v5249 = vunpack.c.h.b16 %v4802
  %v5250 = vunpack.c.l.b16 %v4803
  %v5251 = vunpack.c.h.b16 %v4803
  %v5252 = vunpack.c.l.b16 %v4804
  %v5253 = vunpack.c.h.b16 %v4804
  %v5254 = vunpack.c.l.b16 %v4805
  %v5255 = vunpack.c.h.b16 %v4805
  %v5256 = vunpack.c.l.b16 %v4806
  %v5257 = vunpack.c.h.b16 %v4806
  %v5258 = vunpack.c.l.b16 %v4807
  %v5259 = vunpack.c.h.b16 %v4807
  %v5260 = vunpack.c.l.b16 %v4808
  %v5261 = vunpack.c.h.b16 %v4808
  %v5262 = vunpack.c.l.b16 %v4809
  %v5263 = vunpack.c.h.b16 %v4809
  %v5264 = vunpack.c.l.b16 %v4810
  %v5265 = vunpack.c.h.b16 %v4810
  %v5266 = vunpack.c.l.b16 %v4811
  %v5267 = vunpack.c.h.b16 %v4811
  %v5268 = vunpack.c.l.b16 %v4812
  %v5269 = vunpack.c.h.b16 %v4812
  %v5270 = vunpack.c.l.b16 %v4813
  %v5271 = vunpack.c.h.b16 %v4813
  %v5272 = vunpack.c.l.b16 %v4814
  %v5273 = vunpack.c.h.b16 %v4814
  %v5274 = vunpack.c.l.b16 %v4815
  %v5275 = vunpack.c.h.b16 %v4815
  %v5276 = vunpack.c.l.b16 %v4816
  %v5277 = vunpack.c.h.b16 %v4816
  %v5278 = vunpack.c.l.b16 %v4817
  %v5279 = vunpack.c.h.b16 %v4817
  %v5280 = vpack.c.b16 %v4996, %v4992
  %v5281 = vpack.c.b16 %v4997, %v4993
  %v5282 = vpack.c.b16 %v4998, %v4994
  %v5283 = vpack.c.b16 %v4999, %v4995
  %v5284 = vpack.c.b16 %v5004, %v5000
  %v5285 = vpack.c.b16 %v5005, %v5001
  %v5286 = vpack.c.b16 %v5006, %v5002
  %v5287 = vpack.c.b16 %v5007, %v5003
  %v5288 = vpack.c.b16 %v5012, %v5008
  %v5289 = vpack.c.b16 %v5013, %v5009
  %v5290 = vpack.c.b16 %v5014, %v5010
  %v5291 = vpack.c.b16 %v5015, %v5011
  %v5292 = vpack.c.b16 %v5020, %v5016
  %v5293 = vpack.c.b16 %v5021, %v5017
  %v5294 = vpack.c.b16 %v5022, %v5018
  %v5295 = vpack.c.b16 %v5023, %v5019
  %v5296 = vpack.c.b16 %v5028, %v5024
  %v5297 = vpack.c.b16 %v5029, %v5025
  %v5298 = vpack.c.b16 %v5030, %v5026
  %v5299 = vpack.c.b16 %v5031, %v5027
  %v5300 = vpack.c.b16 %v5036, %v5032
  %v5301 = vpack.c.b16 %v5037, %v5033
  %v5302 = vpack.c.b16 %v5038, %v5034
  %v5303 = vpack.c.b16 %v5039, %v5035
  %v5304 = vpack.c.b16 %v5044, %v5040
  %v5305 = vpack.c.b16 %v5045, %v5041
  %v5306 = vpack.c.b16 %v5046, %v5042
  %v5307 = vpack.c.b16 %v5047, %v5043
  %v5308 = vpack.c.b16 %v5052, %v5048
  %v5309 = vpack.c.b16 %v5053, %v5049
  %v5310 = vpack.c.b16 %v5054, %v5050
  %v5311 = vpack.c.b16 %v5055, %v5051
  %v5312 = vpack.c.b16 %v5060, %v5056
  %v5313 = vpack.c.b16 %v5061, %v5057
  %v5314 = vpack.c.b16 %v5062, %v5058
  %v5315 = vpack.c.b16 %v5063, %v5059
  %v5316 = vpack.c.b16 %v5068, %v5064
  %v5317 = vpack.c.b16 %v5069, %v5065
  %v5318 = vpack.c.b16 %v5070, %v5066
  %v5319 = vpack.c.b16 %v5071, %v5067
  %v5320 = vpack.c.b16 %v5076, %v5072
  %v5321 = vpack.c.b16 %v5077, %v5073
  %v5322 = vpack.c.b16 %v5078, %v5074
  %v5323 = vpack.c.b16 %v5079, %v5075
  %v5324 = vpack.c.b16 %v5084, %v5080
  %v5325 = vpack.c.b16 %v5085, %v5081
  %v5326 = vpack.c.b16 %v5086, %v5082
  %v5327 = vpack.c.b16 %v5087, %v5083
  %v5328 = vpack.c.b16 %v5092, %v5088
  %v5329 = vpack.c.b16 %v5093, %v5089
  %v5330 = vpack.c.b16 %v5094, %v5090
  %v5331 = vpack.c.b16 %v5095, %v5091
  %v5332 = vpack.c.b16 %v5100, %v5096
  %v5333 = vpack.c.b16 %v5101, %v5097
  %v5334 = vpack.c.b16 %v5102, %v5098
  %v5335 = vpack.c.b16 %v5103, %v5099
  %v5336 = vpack.c.b16 %v5108, %v5104
  %v5337 = vpack.c.b16 %v5109, %v5105
  %v5338 = vpack.c.b16 %v5110, %v5106
  %v5339 = vpack.c.b16 %v5111, %v5107
  %v5340 = vpack.c.b16 %v5116, %v5112
  %v5341 = vpack.c.b16 %v5117, %v5113
  %v5342 = vpack.c.b16 %v5118, %v5114
  %v5343 = vpack.c.b16 %v5119, %v5115
  %v5344 = vpack.c.b16 %v5124, %v5120
  %v5345 = vpack.c.b16 %v5125, %v5121
  %v5346 = vpack.c.b16 %v5126, %v5122
  %v5347 = vpack.c.b16 %v5127, %v5123
  %v5348 = vpack.c.b16 %v5132, %v5128
  %v5349 = vpack.c.b16 %v5133, %v5129
  %v5350 = vpack.c.b16 %v5134, %v5130
  %v5351 = vpack.c.b16 %v5135, %v5131
  %v5352 = vpack.c.b16 %v5140, %v5136
  %v5353 = vpack.c.b16 %v5141, %v5137
  %v5354 = vpack.c.b16 %v5142, %v5138
  %v5355 = vpack.c.b16 %v5143, %v5139
  %v5356 = vpack.c.b16 %v5148, %v5144
  %v5357 = vpack.c.b16 %v5149, %v5145
  %v5358 = vpack.c.b16 %v5150, %v5146
  %v5359 = vpack.c.b16 %v5151, %v5147
  %v5360 = vpack.c.b16 %v5156, %v5152
  %v5361 = vpack.c.b16 %v5157, %v5153
  %v5362 = vpack.c.b16 %v5158, %v5154
  %v5363 = vpack.c.b16 %v5159, %v5155
  %v5364 = vpack.c.b16 %v5164, %v5160
  %v5365 = vpack.c.b16 %v5165, %v5161
  %v5366 = vpack.c.b16 %v5166, %v5162
  %v5367 = vpack.c.b16 %v5167, %v5163
  %v5368 = vpack.c.b16 %v5172, %v5168
  %v5369 = vpack.c.b16 %v5173, %v5169
  %v5370 = vpack.c.b16 %v5174, %v5170
  %v5371 = vpack.c.b16 %v5175, %v5171
  %v5372 = vpack.c.b16 %v5180, %v5176
  %v5373 = vpack.c.b16 %v5181, %v5177
  %v5374 = vpack.c.b16 %v5182, %v5178
  %v5375 = vpack.c.b16 %v5183, %v5179
  %v5376 = vpack.c.b16 %v5188, %v5184
  %v5377 = vpack.c.b16 %v5189, %v5185
  %v5378 = vpack.c.b16 %v5190, %v5186
  %v5379 = vpack.c.b16 %v5191, %v5187
  %v5380 = vpack.c.b16 %v5196, %v5192
  %v5381 = vpack.c.b16 %v5197, %v5193
  %v5382 = vpack.c.b16 %v5198, %v5194
  %v5383 = vpack.c.b16 %v5199, %v5195
  %v5384 = vpack.c.b16 %v5204, %v5200
  %v5385 = vpack.c.b16 %v5205, %v5201
  %v5386 = vpack.c.b16 %v5206, %v5202
  %v5387 = vpack.c.b16 %v5207, %v5203
  %v5388 = vpack.c.b16 %v5212, %v5208
  %v5389 = vpack.c.b16 %v5213, %v5209
  %v5390 = vpack.c.b16 %v5214, %v5210
  %v5391 = vpack.c.b16 %v5215, %v5211
  %v5392 = vpack.c.b16 %v5220, %v5216
  %v5393 = vpack.c.b16 %v5221, %v5217
  %v5394 = vpack.c.b16 %v5222, %v5218
  %v5395 = vpack.c.b16 %v5223, %v5219
  %v5396 = vpack.c.b16 %v5228, %v5224
  %v5397 = vpack.c.b16 %v5229, %v5225
  %v5398 = vpack.c.b16 %v5230, %v5226
  %v5399 = vpack.c.b16 %v5231, %v5227
  %v5400 = vpack.c.b16 %v5236, %v5232
  %v5401 = vpack.c.b16 %v5237, %v5233
  %v5402 = vpack.c.b16 %v5238, %v5234
  %v5403 = vpack.c.b16 %v5239, %v5235
  %v5404 = vpack.c.b16 %v5244, %v5240
  %v5405 = vpack.c.b16 %v5245, %v5241
  %v5406 = vpack.c.b16 %v5246, %v5242
  %v5407 = vpack.c.b16 %v5247, %v5243
  %v5408 = vpack.c.b16 %v5252, %v5248
  %v5409 = vpack.c.b16 %v5253, %v5249
  %v5410 = vpack.c.b16 %v5254, %v5250
  %v5411 = vpack.c.b16 %v5255, %v5251
  %v5412 = vpack.c.b16 %v5260, %v5256
  %v5413 = vpack.c.b16 %v5261, %v5257
  %v5414 = vpack.c.b16 %v5262, %v5258
  %v5415 = vpack.c.b16 %v5263, %v5259
  %v5416 = vpack.c.b16 %v5268, %v5264
  %v5417 = vpack.c.b16 %v5269, %v5265
  %v5418 = vpack.c.b16 %v5270, %v5266
  %v5419 = vpack.c.b16 %v5271, %v5267
  %v5420 = vpack.c.b16 %v5276, %v5272
  %v5421 = vpack.c.b16 %v5277, %v5273
  %v5422 = vpack.c.b16 %v5278, %v5274
  %v5423 = vpack.c.b16 %v5279, %v5275
  %v5569 = vsel %vm52, %v4843, 0
  %5571 = vmatprep.subr.bf16.mxu0 %v5281
  %5572 = vmatpush1.bf16.msra.mxu0 %v5280
  %5573 = vmatprep.subr.bf16.mxu0 %v5285
  %5574 = vmatpush1.bf16.msra.mxu0 %v5284
  %5575 = vmatprep.subr.bf16.mxu0 %v5289
  %5576 = vmatpush1.bf16.msra.mxu0 %v5288
  %5577 = vmatprep.subr.bf16.mxu0 %v5293
  %5578 = vmatpush1.bf16.msra.mxu0 %v5292
  %5579 = vmatprep.subr.bf16.mxu0 %v5297
  %5580 = vmatpush1.bf16.msra.mxu0 %v5296
  %5581 = vmatprep.subr.bf16.mxu0 %v5301
  %5582 = vmatpush1.bf16.msra.mxu0 %v5300
  %5583 = vmatprep.subr.bf16.mxu0 %v5305
  %5584 = vmatpush1.bf16.msra.mxu0 %v5304
  %5585 = vmatprep.subr.bf16.mxu0 %v5309
  %5586 = vmatpush1.bf16.msra.mxu0 %v5308
  %5587 = vmatprep.subr.bf16.mxu0 %v5313
  %5588 = vmatpush1.bf16.msra.mxu0 %v5312
  %5589 = vmatprep.subr.bf16.mxu0 %v5317
  %5590 = vmatpush1.bf16.msra.mxu0 %v5316
  %5591 = vmatprep.subr.bf16.mxu0 %v5321
  %5592 = vmatpush1.bf16.msra.mxu0 %v5320
  %5593 = vmatprep.subr.bf16.mxu0 %v5325
  %5594 = vmatpush1.bf16.msra.mxu0 %v5324
  %5595 = vmatprep.subr.bf16.mxu0 %v5329
  %5596 = vmatpush1.bf16.msra.mxu0 %v5328
  %5597 = vmatprep.subr.bf16.mxu0 %v5333
  %5598 = vmatpush1.bf16.msra.mxu0 %v5332
  %5599 = vmatprep.subr.bf16.mxu0 %v5337
  %5600 = vmatpush1.bf16.msra.mxu0 %v5336
  %5601 = vmatprep.subr.bf16.mxu0 %v5341
  %5602 = vmatpush1.bf16.msra.mxu0 %v5340
  %5603 = vmatprep.mubr.bf16.mxu0 %v4834
  %5604 = vmatmul.mubr.bf16.gmra.mrb[0].mxu0 %v4831
  %v5605 = vpop.f32.mrb[0].mxu0
  %v5606 = vadd.f32 0.0, %v5605
  %v5607 = vpop.f32.mrb[0].mxu0
  %v5608 = vadd.f32 0.0, %v5607
  %v5609 = vpop.f32.mrb[0].mxu0
  %v5610 = vadd.f32 0.0, %v5609
  %v5611 = vpop.f32.mrb[0].mxu0
  %v5612 = vadd.f32 0.0, %v5611
  %5613 = vdwg.mxu0
  %5614 = vmatprep.subr.bf16.mxu0 %v5345
  %5615 = vmatpush1.bf16.msra.mxu0 %v5344
  %5616 = vmatprep.subr.bf16.mxu0 %v5349
  %5617 = vmatpush1.bf16.msra.mxu0 %v5348
  %5618 = vmatprep.subr.bf16.mxu0 %v5353
  %5619 = vmatpush1.bf16.msra.mxu0 %v5352
  %5620 = vmatprep.subr.bf16.mxu0 %v5357
  %5621 = vmatpush1.bf16.msra.mxu0 %v5356
  %5622 = vmatprep.subr.bf16.mxu0 %v5361
  %5623 = vmatpush1.bf16.msra.mxu0 %v5360
  %5624 = vmatprep.subr.bf16.mxu0 %v5365
  %5625 = vmatpush1.bf16.msra.mxu0 %v5364
  %5626 = vmatprep.subr.bf16.mxu0 %v5369
  %5627 = vmatpush1.bf16.msra.mxu0 %v5368
  %5628 = vmatprep.subr.bf16.mxu0 %v5373
  %5629 = vmatpush1.bf16.msra.mxu0 %v5372
  %5630 = vmatprep.subr.bf16.mxu0 %v5377
  %5631 = vmatpush1.bf16.msra.mxu0 %v5376
  %5632 = vmatprep.subr.bf16.mxu0 %v5381
  %5633 = vmatpush1.bf16.msra.mxu0 %v5380
  %5634 = vmatprep.subr.bf16.mxu0 %v5385
  %5635 = vmatpush1.bf16.msra.mxu0 %v5384
  %5636 = vmatprep.subr.bf16.mxu0 %v5389
  %5637 = vmatpush1.bf16.msra.mxu0 %v5388
  %5638 = vmatprep.subr.bf16.mxu0 %v5393
  %5639 = vmatpush1.bf16.msra.mxu0 %v5392
  %5640 = vmatprep.subr.bf16.mxu0 %v5397
  %5641 = vmatpush1.bf16.msra.mxu0 %v5396
  %5642 = vmatprep.subr.bf16.mxu0 %v5401
  %5643 = vmatpush1.bf16.msra.mxu0 %v5400
  %5644 = vmatprep.subr.bf16.mxu0 %v5405
  %5645 = vmatpush1.bf16.msra.mxu0 %v5404
  %5646 = vmatprep.mubr.bf16.mxu0 %v4840
  %5647 = vmatmul.mubr.bf16.gmra.mrb[0].mxu0 %v4837
  %v5648 = vpop.f32.mrb[0].mxu0
  %v5649 = vadd.f32 %v5606, %v5648
  %v5650 = vpop.f32.mrb[0].mxu0
  %v5651 = vadd.f32 %v5608, %v5650
  %v5652 = vpop.f32.mrb[0].mxu0
  %v5653 = vadd.f32 %v5610, %v5652
  %v5654 = vpop.f32.mrb[0].mxu0
  %v5655 = vadd.f32 %v5612, %v5654
  %5656 = vdwg.mxu0
  %5657 = vmatprep.subr.bf16.mxu0 %v5409
  %5658 = vmatpush1.bf16.msra.mxu0 %v5408
  %5659 = vmatprep.subr.bf16.mxu0 %v5413
  %5660 = vmatpush1.bf16.msra.mxu0 %v5412
  %5661 = vmatprep.subr.bf16.mxu0 %v5417
  %5662 = vmatpush1.bf16.msra.mxu0 %v5416
  %5663 = vmatprep.subr.bf16.mxu0 %v5421
  %5664 = vmatpush1.bf16.msra.mxu0 %v5420
  %5665 = vmatprep.subr.bf16.mxu0 0
  %5666 = vmatpush1.bf16.msra.mxu0 0
  %5667 = vmatprep.subr.bf16.mxu0 0
  %5668 = vmatpush1.bf16.msra.mxu0 0
  %5669 = vmatprep.subr.bf16.mxu0 0
  %5670 = vmatpush1.bf16.msra.mxu0 0
  %5671 = vmatprep.subr.bf16.mxu0 0
  %5672 = vmatpush1.bf16.msra.mxu0 0
  %5673 = vmatprep.subr.bf16.mxu0 0
  %5674 = vmatpush1.bf16.msra.mxu0 0
  %5675 = vmatprep.subr.bf16.mxu0 0
  %5676 = vmatpush1.bf16.msra.mxu0 0
  %5677 = vmatprep.subr.bf16.mxu0 0
  %5678 = vmatpush1.bf16.msra.mxu0 0
  %5679 = vmatprep.subr.bf16.mxu0 0
  %5680 = vmatpush1.bf16.msra.mxu0 0
  %5681 = vmatprep.subr.bf16.mxu0 0
  %5682 = vmatpush1.bf16.msra.mxu0 0
  %5683 = vmatprep.subr.bf16.mxu0 0
  %5684 = vmatpush1.bf16.msra.mxu0 0
  %5685 = vmatprep.subr.bf16.mxu0 0
  %5686 = vmatpush1.bf16.msra.mxu0 0
  %5687 = vmatprep.subr.bf16.mxu0 0
  %5688 = vmatpush1.bf16.msra.mxu0 0
  %5689 = vmatprep.mubr.bf16.mxu0 0
  %5690 = vmatmul.mubr.bf16.gmra.mrb[0].mxu0 %v5569
  %v5691 = vpop.f32.mrb[0].mxu0
  %v5692 = vadd.f32 %v5649, %v5691
  %v5693 = vpop.f32.mrb[0].mxu0
  %v5694 = vadd.f32 %v5651, %v5693
  %v5695 = vpop.f32.mrb[0].mxu0
  %v5696 = vadd.f32 %v5653, %v5695
  %v5697 = vpop.f32.mrb[0].mxu0
  %v5698 = vadd.f32 %v5655, %v5697
  %5699 = vdwg.mxu0
  %5700 = vmatprep.subr.bf16.mxu0 %v5283
  %5701 = vmatpush1.bf16.msra.mxu0 %v5282
  %5702 = vmatprep.subr.bf16.mxu0 %v5287
  %5703 = vmatpush1.bf16.msra.mxu0 %v5286
  %5704 = vmatprep.subr.bf16.mxu0 %v5291
  %5705 = vmatpush1.bf16.msra.mxu0 %v5290
  %5706 = vmatprep.subr.bf16.mxu0 %v5295
  %5707 = vmatpush1.bf16.msra.mxu0 %v5294
  %5708 = vmatprep.subr.bf16.mxu0 %v5299
  %5709 = vmatpush1.bf16.msra.mxu0 %v5298
  %5710 = vmatprep.subr.bf16.mxu0 %v5303
  %5711 = vmatpush1.bf16.msra.mxu0 %v5302
  %5712 = vmatprep.subr.bf16.mxu0 %v5307
  %5713 = vmatpush1.bf16.msra.mxu0 %v5306
  %5714 = vmatprep.subr.bf16.mxu0 %v5311
  %5715 = vmatpush1.bf16.msra.mxu0 %v5310
  %5716 = vmatprep.subr.bf16.mxu0 %v5315
  %5717 = vmatpush1.bf16.msra.mxu0 %v5314
  %5718 = vmatprep.subr.bf16.mxu0 %v5319
  %5719 = vmatpush1.bf16.msra.mxu0 %v5318
  %5720 = vmatprep.subr.bf16.mxu0 %v5323
  %5721 = vmatpush1.bf16.msra.mxu0 %v5322
  %5722 = vmatprep.subr.bf16.mxu0 %v5327
  %5723 = vmatpush1.bf16.msra.mxu0 %v5326
  %5724 = vmatprep.subr.bf16.mxu0 %v5331
  %5725 = vmatpush1.bf16.msra.mxu0 %v5330
  %5726 = vmatprep.subr.bf16.mxu0 %v5335
  %5727 = vmatpush1.bf16.msra.mxu0 %v5334
  %5728 = vmatprep.subr.bf16.mxu0 %v5339
  %5729 = vmatpush1.bf16.msra.mxu0 %v5338
  %5730 = vmatprep.subr.bf16.mxu0 %v5343
  %5731 = vmatpush1.bf16.msra.mxu0 %v5342
  %5732 = vmatprep.mubr.bf16.mxu0 %v4834
  %5733 = vmatmul.mubr.bf16.gmra.mrb[0].mxu0 %v4831
  %v5734 = vpop.f32.mrb[0].mxu0
  %v5735 = vadd.f32 0.0, %v5734
  %v5736 = vpop.f32.mrb[0].mxu0
  %v5737 = vadd.f32 0.0, %v5736
  %v5738 = vpop.f32.mrb[0].mxu0
  %v5739 = vadd.f32 0.0, %v5738
  %v5740 = vpop.f32.mrb[0].mxu0
  %v5741 = vadd.f32 0.0, %v5740
  %5742 = vdwg.mxu0
  %5743 = vmatprep.subr.bf16.mxu0 %v5347
  %5744 = vmatpush1.bf16.msra.mxu0 %v5346
  %5745 = vmatprep.subr.bf16.mxu0 %v5351
  %5746 = vmatpush1.bf16.msra.mxu0 %v5350
  %5747 = vmatprep.subr.bf16.mxu0 %v5355
  %5748 = vmatpush1.bf16.msra.mxu0 %v5354
  %5749 = vmatprep.subr.bf16.mxu0 %v5359
  %5750 = vmatpush1.bf16.msra.mxu0 %v5358
  %5751 = vmatprep.subr.bf16.mxu0 %v5363
  %5752 = vmatpush1.bf16.msra.mxu0 %v5362
  %5753 = vmatprep.subr.bf16.mxu0 %v5367
  %5754 = vmatpush1.bf16.msra.mxu0 %v5366
  %5755 = vmatprep.subr.bf16.mxu0 %v5371
  %5756 = vmatpush1.bf16.msra.mxu0 %v5370
  %5757 = vmatprep.subr.bf16.mxu0 %v5375
  %5758 = vmatpush1.bf16.msra.mxu0 %v5374
  %5759 = vmatprep.subr.bf16.mxu0 %v5379
  %5760 = vmatpush1.bf16.msra.mxu0 %v5378
  %5761 = vmatprep.subr.bf16.mxu0 %v5383
  %5762 = vmatpush1.bf16.msra.mxu0 %v5382
  %5763 = vmatprep.subr.bf16.mxu0 %v5387
  %5764 = vmatpush1.bf16.msra.mxu0 %v5386
  %5765 = vmatprep.subr.bf16.mxu0 %v5391
  %5766 = vmatpush1.bf16.msra.mxu0 %v5390
  %5767 = vmatprep.subr.bf16.mxu0 %v5395
  %5768 = vmatpush1.bf16.msra.mxu0 %v5394
  %5769 = vmatprep.subr.bf16.mxu0 %v5399
  %5770 = vmatpush1.bf16.msra.mxu0 %v5398
  %5771 = vmatprep.subr.bf16.mxu0 %v5403
  %5772 = vmatpush1.bf16.msra.mxu0 %v5402
  %5773 = vmatprep.subr.bf16.mxu0 %v5407
  %5774 = vmatpush1.bf16.msra.mxu0 %v5406
  %5775 = vmatprep.mubr.bf16.mxu0 %v4840
  %5776 = vmatmul.mubr.bf16.gmra.mrb[0].mxu0 %v4837
  %v5777 = vpop.f32.mrb[0].mxu0
  %v5778 = vadd.f32 %v5735, %v5777
  %v5779 = vpop.f32.mrb[0].mxu0
  %v5780 = vadd.f32 %v5737, %v5779
  %v5781 = vpop.f32.mrb[0].mxu0
  %v5782 = vadd.f32 %v5739, %v5781
  %v5783 = vpop.f32.mrb[0].mxu0
  %v5784 = vadd.f32 %v5741, %v5783
  %5785 = vdwg.mxu0
  %5786 = vmatprep.subr.bf16.mxu0 %v5411
  %5787 = vmatpush1.bf16.msra.mxu0 %v5410
  %5788 = vmatprep.subr.bf16.mxu0 %v5415
  %5789 = vmatpush1.bf16.msra.mxu0 %v5414
  %5790 = vmatprep.subr.bf16.mxu0 %v5419
  %5791 = vmatpush1.bf16.msra.mxu0 %v5418
  %5792 = vmatprep.subr.bf16.mxu0 %v5423
  %5793 = vmatpush1.bf16.msra.mxu0 %v5422
  %5794 = vmatprep.subr.bf16.mxu0 0
  %5795 = vmatpush1.bf16.msra.mxu0 0
  %5796 = vmatprep.subr.bf16.mxu0 0
  %5797 = vmatpush1.bf16.msra.mxu0 0
  %5798 = vmatprep.subr.bf16.mxu0 0
  %5799 = vmatpush1.bf16.msra.mxu0 0
  %5800 = vmatprep.subr.bf16.mxu0 0
  %5801 = vmatpush1.bf16.msra.mxu0 0
  %5802 = vmatprep.subr.bf16.mxu0 0
  %5803 = vmatpush1.bf16.msra.mxu0 0
  %5804 = vmatprep.subr.bf16.mxu0 0
  %5805 = vmatpush1.bf16.msra.mxu0 0
  %5806 = vmatprep.subr.bf16.mxu0 0
  %5807 = vmatpush1.bf16.msra.mxu0 0
  %5808 = vmatprep.subr.bf16.mxu0 0
  %5809 = vmatpush1.bf16.msra.mxu0 0
  %5810 = vmatprep.subr.bf16.mxu0 0
  %5811 = vmatpush1.bf16.msra.mxu0 0
  %5812 = vmatprep.subr.bf16.mxu0 0
  %5813 = vmatpush1.bf16.msra.mxu0 0
  %5814 = vmatprep.subr.bf16.mxu0 0
  %5815 = vmatpush1.bf16.msra.mxu0 0
  %5816 = vmatprep.subr.bf16.mxu0 0
  %5817 = vmatpush1.bf16.msra.mxu0 0
  %5818 = vmatprep.mubr.bf16.mxu0 0
  %5819 = vmatmul.mubr.bf16.gmra.mrb[0].mxu0 %v5569
  %v5820 = vpop.f32.mrb[0].mxu0
  %v5821 = vadd.f32 %v5778, %v5820
  %v5822 = vpop.f32.mrb[0].mxu0
  %v5823 = vadd.f32 %v5780, %v5822
  %v5824 = vpop.f32.mrb[0].mxu0
  %v5825 = vadd.f32 %v5782, %v5824
  %v5826 = vpop.f32.mrb[0].mxu0
  %v5827 = vadd.f32 %v5784, %v5826
  %5828 = vdwg.mxu0
  %v5973 = vunpack.c.l.b16 %v4504
  %v5974 = vunpack.c.h.b16 %v4504
  %v5975 = vunpack.c.l.b16 %v4505
  %v5976 = vunpack.c.h.b16 %v4505
  %v5977 = vunpack.c.l.b16 %v4506
  %v5978 = vunpack.c.h.b16 %v4506
  %v5979 = vunpack.c.l.b16 %v4507
  %v5980 = vunpack.c.h.b16 %v4507
  %v5981 = vunpack.c.l.b16 %v4508
  %v5982 = vunpack.c.h.b16 %v4508
  %v5983 = vunpack.c.l.b16 %v4509
  %v5984 = vunpack.c.h.b16 %v4509
  %v5985 = vunpack.c.l.b16 %v4510
  %v5986 = vunpack.c.h.b16 %v4510
  %v5987 = vunpack.c.l.b16 %v4511
  %v5988 = vunpack.c.h.b16 %v4511
  %v5989 = vunpack.c.l.b16 %v4512
  %v5990 = vunpack.c.h.b16 %v4512
  %v5991 = vunpack.c.l.b16 %v4513
  %v5992 = vunpack.c.h.b16 %v4513
  %v5993 = vunpack.c.l.b16 %v4514
  %v5994 = vunpack.c.h.b16 %v4514
  %v5995 = vunpack.c.l.b16 %v4515
  %v5996 = vunpack.c.h.b16 %v4515
  %v5997 = vunpack.c.l.b16 %v4516
  %v5998 = vunpack.c.h.b16 %v4516
  %v5999 = vunpack.c.l.b16 %v4517
  %v6000 = vunpack.c.h.b16 %v4517
  %v6001 = vunpack.c.l.b16 %v4518
  %v6002 = vunpack.c.h.b16 %v4518
  %v6003 = vunpack.c.l.b16 %v4519
  %v6004 = vunpack.c.h.b16 %v4519
  %v6005 = vunpack.c.l.b16 %v4520
  %v6006 = vunpack.c.h.b16 %v4520
  %v6007 = vunpack.c.l.b16 %v4521
  %v6008 = vunpack.c.h.b16 %v4521
  %v6009 = vunpack.c.l.b16 %v4522
  %v6010 = vunpack.c.h.b16 %v4522
  %v6011 = vunpack.c.l.b16 %v4523
  %v6012 = vunpack.c.h.b16 %v4523
  %v6013 = vunpack.c.l.b16 %v4524
  %v6014 = vunpack.c.h.b16 %v4524
  %v6015 = vunpack.c.l.b16 %v4525
  %v6016 = vunpack.c.h.b16 %v4525
  %v6017 = vunpack.c.l.b16 %v4526
  %v6018 = vunpack.c.h.b16 %v4526
  %v6019 = vunpack.c.l.b16 %v4527
  %v6020 = vunpack.c.h.b16 %v4527
  %v6021 = vunpack.c.l.b16 %v4528
  %v6022 = vunpack.c.h.b16 %v4528
  %v6023 = vunpack.c.l.b16 %v4529
  %v6024 = vunpack.c.h.b16 %v4529
  %v6025 = vunpack.c.l.b16 %v4530
  %v6026 = vunpack.c.h.b16 %v4530
  %v6027 = vunpack.c.l.b16 %v4531
  %v6028 = vunpack.c.h.b16 %v4531
  %v6029 = vunpack.c.l.b16 %v4532
  %v6030 = vunpack.c.h.b16 %v4532
  %v6031 = vunpack.c.l.b16 %v4533
  %v6032 = vunpack.c.h.b16 %v4533
  %v6033 = vunpack.c.l.b16 %v4534
  %v6034 = vunpack.c.h.b16 %v4534
  %v6035 = vunpack.c.l.b16 %v4535
  %v6036 = vunpack.c.h.b16 %v4535
  %v6037 = vunpack.c.l.b16 %v4536
  %v6038 = vunpack.c.h.b16 %v4536
  %v6039 = vunpack.c.l.b16 %v4537
  %v6040 = vunpack.c.h.b16 %v4537
  %v6041 = vunpack.c.l.b16 %v4538
  %v6042 = vunpack.c.h.b16 %v4538
  %v6043 = vunpack.c.l.b16 %v4539
  %v6044 = vunpack.c.h.b16 %v4539
  %v6045 = vunpack.c.l.b16 %v4540
  %v6046 = vunpack.c.h.b16 %v4540
  %v6047 = vunpack.c.l.b16 %v4541
  %v6048 = vunpack.c.h.b16 %v4541
  %v6049 = vunpack.c.l.b16 %v4542
  %v6050 = vunpack.c.h.b16 %v4542
  %v6051 = vunpack.c.l.b16 %v4543
  %v6052 = vunpack.c.h.b16 %v4543
  %v6053 = vunpack.c.l.b16 %v4544
  %v6054 = vunpack.c.h.b16 %v4544
  %v6055 = vunpack.c.l.b16 %v4545
  %v6056 = vunpack.c.h.b16 %v4545
  %v6057 = vunpack.c.l.b16 %v4546
  %v6058 = vunpack.c.h.b16 %v4546
  %v6059 = vunpack.c.l.b16 %v4547
  %v6060 = vunpack.c.h.b16 %v4547
  %v6061 = vunpack.c.l.b16 %v4548
  %v6062 = vunpack.c.h.b16 %v4548
  %v6063 = vunpack.c.l.b16 %v4549
  %v6064 = vunpack.c.h.b16 %v4549
  %v6065 = vunpack.c.l.b16 %v4550
  %v6066 = vunpack.c.h.b16 %v4550
  %v6067 = vunpack.c.l.b16 %v4551
  %v6068 = vunpack.c.h.b16 %v4551
  %v6069 = vunpack.c.l.b16 %v4552
  %v6070 = vunpack.c.h.b16 %v4552
  %v6071 = vunpack.c.l.b16 %v4553
  %v6072 = vunpack.c.h.b16 %v4553
  %v6073 = vunpack.c.l.b16 %v4554
  %v6074 = vunpack.c.h.b16 %v4554
  %v6075 = vunpack.c.l.b16 %v4555
  %v6076 = vunpack.c.h.b16 %v4555
  %v6077 = vunpack.c.l.b16 %v4556
  %v6078 = vunpack.c.h.b16 %v4556
  %v6079 = vunpack.c.l.b16 %v4557
  %v6080 = vunpack.c.h.b16 %v4557
  %v6081 = vunpack.c.l.b16 %v4558
  %v6082 = vunpack.c.h.b16 %v4558
  %v6083 = vunpack.c.l.b16 %v4559
  %v6084 = vunpack.c.h.b16 %v4559
  %v6085 = vunpack.c.l.b16 %v4560
  %v6086 = vunpack.c.h.b16 %v4560
  %v6087 = vunpack.c.l.b16 %v4561
  %v6088 = vunpack.c.h.b16 %v4561
  %v6089 = vunpack.c.l.b16 %v4562
  %v6090 = vunpack.c.h.b16 %v4562
  %v6091 = vunpack.c.l.b16 %v4563
  %v6092 = vunpack.c.h.b16 %v4563
  %v6093 = vunpack.c.l.b16 %v4564
  %v6094 = vunpack.c.h.b16 %v4564
  %v6095 = vunpack.c.l.b16 %v4565
  %v6096 = vunpack.c.h.b16 %v4565
  %v6097 = vunpack.c.l.b16 %v4566
  %v6098 = vunpack.c.h.b16 %v4566
  %v6099 = vunpack.c.l.b16 %v4567
  %v6100 = vunpack.c.h.b16 %v4567
  %v6101 = vunpack.c.l.b16 %v4568
  %v6102 = vunpack.c.h.b16 %v4568
  %v6103 = vunpack.c.l.b16 %v4569
  %v6104 = vunpack.c.h.b16 %v4569
  %v6105 = vunpack.c.l.b16 %v4570
  %v6106 = vunpack.c.h.b16 %v4570
  %v6107 = vunpack.c.l.b16 %v4571
  %v6108 = vunpack.c.h.b16 %v4571
  %v6109 = vunpack.c.l.b16 %v4572
  %v6110 = vunpack.c.h.b16 %v4572
  %v6111 = vunpack.c.l.b16 %v4573
  %v6112 = vunpack.c.h.b16 %v4573
  %v6113 = vunpack.c.l.b16 %v4574
  %v6114 = vunpack.c.h.b16 %v4574
  %v6115 = vunpack.c.l.b16 %v4575
  %v6116 = vunpack.c.h.b16 %v4575
  %v6117 = vunpack.c.l.b16 %v4576
  %v6118 = vunpack.c.h.b16 %v4576
  %v6119 = vunpack.c.l.b16 %v4577
  %v6120 = vunpack.c.h.b16 %v4577
  %v6121 = vunpack.c.l.b16 %v4578
  %v6122 = vunpack.c.h.b16 %v4578
  %v6123 = vunpack.c.l.b16 %v4579
  %v6124 = vunpack.c.h.b16 %v4579
  %v6125 = vunpack.c.l.b16 %v4580
  %v6126 = vunpack.c.h.b16 %v4580
  %v6127 = vunpack.c.l.b16 %v4581
  %v6128 = vunpack.c.h.b16 %v4581
  %v6129 = vunpack.c.l.b16 %v4582
  %v6130 = vunpack.c.h.b16 %v4582
  %v6131 = vunpack.c.l.b16 %v4583
  %v6132 = vunpack.c.h.b16 %v4583
  %v6133 = vunpack.c.l.b16 %v4584
  %v6134 = vunpack.c.h.b16 %v4584
  %v6135 = vunpack.c.l.b16 %v4585
  %v6136 = vunpack.c.h.b16 %v4585
  %v6137 = vunpack.c.l.b16 %v4586
  %v6138 = vunpack.c.h.b16 %v4586
  %v6139 = vunpack.c.l.b16 %v4587
  %v6140 = vunpack.c.h.b16 %v4587
  %v6141 = vunpack.c.l.b16 %v4588
  %v6142 = vunpack.c.h.b16 %v4588
  %v6143 = vunpack.c.l.b16 %v4589
  %v6144 = vunpack.c.h.b16 %v4589
  %v6145 = vunpack.c.l.b16 %v4590
  %v6146 = vunpack.c.h.b16 %v4590
  %v6147 = vunpack.c.l.b16 %v4591
  %v6148 = vunpack.c.h.b16 %v4591
  %v6149 = vunpack.c.l.b16 %v4592
  %v6150 = vunpack.c.h.b16 %v4592
  %v6151 = vunpack.c.l.b16 %v4593
  %v6152 = vunpack.c.h.b16 %v4593
  %v6153 = vunpack.c.l.b16 %v4594
  %v6154 = vunpack.c.h.b16 %v4594
  %v6155 = vunpack.c.l.b16 %v4595
  %v6156 = vunpack.c.h.b16 %v4595
  %v6157 = vunpack.c.l.b16 %v4596
  %v6158 = vunpack.c.h.b16 %v4596
  %v6159 = vunpack.c.l.b16 %v4597
  %v6160 = vunpack.c.h.b16 %v4597
  %v6161 = vunpack.c.l.b16 %v4598
  %v6162 = vunpack.c.h.b16 %v4598
  %v6163 = vunpack.c.l.b16 %v4599
  %v6164 = vunpack.c.h.b16 %v4599
  %v6165 = vunpack.c.l.b16 %v4600
  %v6166 = vunpack.c.h.b16 %v4600
  %v6167 = vunpack.c.l.b16 %v4601
  %v6168 = vunpack.c.h.b16 %v4601
  %v6169 = vunpack.c.l.b16 %v4602
  %v6170 = vunpack.c.h.b16 %v4602
  %v6171 = vunpack.c.l.b16 %v4603
  %v6172 = vunpack.c.h.b16 %v4603
  %v6173 = vunpack.c.l.b16 %v4604
  %v6174 = vunpack.c.h.b16 %v4604
  %v6175 = vunpack.c.l.b16 %v4605
  %v6176 = vunpack.c.h.b16 %v4605
  %v6177 = vunpack.c.l.b16 %v4606
  %v6178 = vunpack.c.h.b16 %v4606
  %v6179 = vunpack.c.l.b16 %v4607
  %v6180 = vunpack.c.h.b16 %v4607
  %v6181 = vunpack.c.l.b16 %v4608
  %v6182 = vunpack.c.h.b16 %v4608
  %v6183 = vunpack.c.l.b16 %v4609
  %v6184 = vunpack.c.h.b16 %v4609
  %v6185 = vunpack.c.l.b16 %v4610
  %v6186 = vunpack.c.h.b16 %v4610
  %v6187 = vunpack.c.l.b16 %v4611
  %v6188 = vunpack.c.h.b16 %v4611
  %v6189 = vunpack.c.l.b16 %v4612
  %v6190 = vunpack.c.h.b16 %v4612
  %v6191 = vunpack.c.l.b16 %v4613
  %v6192 = vunpack.c.h.b16 %v4613
  %v6193 = vunpack.c.l.b16 %v4614
  %v6194 = vunpack.c.h.b16 %v4614
  %v6195 = vunpack.c.l.b16 %v4615
  %v6196 = vunpack.c.h.b16 %v4615
  %v6197 = vunpack.c.l.b16 %v4616
  %v6198 = vunpack.c.h.b16 %v4616
  %v6199 = vunpack.c.l.b16 %v4617
  %v6200 = vunpack.c.h.b16 %v4617
  %v6201 = vunpack.c.l.b16 %v4618
  %v6202 = vunpack.c.h.b16 %v4618
  %v6203 = vunpack.c.l.b16 %v4619
  %v6204 = vunpack.c.h.b16 %v4619
  %v6205 = vunpack.c.l.b16 %v4620
  %v6206 = vunpack.c.h.b16 %v4620
  %v6207 = vunpack.c.l.b16 %v4621
  %v6208 = vunpack.c.h.b16 %v4621
  %v6209 = vunpack.c.l.b16 %v4622
  %v6210 = vunpack.c.h.b16 %v4622
  %v6211 = vunpack.c.l.b16 %v4623
  %v6212 = vunpack.c.h.b16 %v4623
  %v6213 = vunpack.c.l.b16 %v4624
  %v6214 = vunpack.c.h.b16 %v4624
  %v6215 = vunpack.c.l.b16 %v4625
  %v6216 = vunpack.c.h.b16 %v4625
  %v6217 = vunpack.c.l.b16 %v4626
  %v6218 = vunpack.c.h.b16 %v4626
  %v6219 = vunpack.c.l.b16 %v4627
  %v6220 = vunpack.c.h.b16 %v4627
  %v6221 = vunpack.c.l.b16 %v4628
  %v6222 = vunpack.c.h.b16 %v4628
  %v6223 = vunpack.c.l.b16 %v4629
  %v6224 = vunpack.c.h.b16 %v4629
  %v6225 = vunpack.c.l.b16 %v4630
  %v6226 = vunpack.c.h.b16 %v4630
  %v6227 = vunpack.c.l.b16 %v4631
  %v6228 = vunpack.c.h.b16 %v4631
  %v6229 = vunpack.c.l.b16 %v4632
  %v6230 = vunpack.c.h.b16 %v4632
  %v6231 = vunpack.c.l.b16 %v4633
  %v6232 = vunpack.c.h.b16 %v4633
  %v6233 = vunpack.c.l.b16 %v4634
  %v6234 = vunpack.c.h.b16 %v4634
  %v6235 = vunpack.c.l.b16 %v4635
  %v6236 = vunpack.c.h.b16 %v4635
  %v6237 = vunpack.c.l.b16 %v4636
  %v6238 = vunpack.c.h.b16 %v4636
  %v6239 = vunpack.c.l.b16 %v4637
  %v6240 = vunpack.c.h.b16 %v4637
  %v6241 = vunpack.c.l.b16 %v4638
  %v6242 = vunpack.c.h.b16 %v4638
  %v6243 = vunpack.c.l.b16 %v4639
  %v6244 = vunpack.c.h.b16 %v4639
  %v6245 = vunpack.c.l.b16 %v4640
  %v6246 = vunpack.c.h.b16 %v4640
  %v6247 = vunpack.c.l.b16 %v4641
  %v6248 = vunpack.c.h.b16 %v4641
  %v6249 = vunpack.c.l.b16 %v4642
  %v6250 = vunpack.c.h.b16 %v4642
  %v6251 = vunpack.c.l.b16 %v4643
  %v6252 = vunpack.c.h.b16 %v4643
  %v6253 = vunpack.c.l.b16 %v4644
  %v6254 = vunpack.c.h.b16 %v4644
  %v6255 = vunpack.c.l.b16 %v4645
  %v6256 = vunpack.c.h.b16 %v4645
  %v6257 = vunpack.c.l.b16 %v4646
  %v6258 = vunpack.c.h.b16 %v4646
  %v6259 = vunpack.c.l.b16 %v4647
  %v6260 = vunpack.c.h.b16 %v4647
  %v6261 = vpack.c.b16 %v5977, %v5973
  %v6262 = vpack.c.b16 %v5978, %v5974
  %v6263 = vpack.c.b16 %v5979, %v5975
  %v6264 = vpack.c.b16 %v5980, %v5976
  %v6265 = vpack.c.b16 %v5985, %v5981
  %v6266 = vpack.c.b16 %v5986, %v5982
  %v6267 = vpack.c.b16 %v5987, %v5983
  %v6268 = vpack.c.b16 %v5988, %v5984
  %v6269 = vpack.c.b16 %v5993, %v5989
  %v6270 = vpack.c.b16 %v5994, %v5990
  %v6271 = vpack.c.b16 %v5995, %v5991
  %v6272 = vpack.c.b16 %v5996, %v5992
  %v6273 = vpack.c.b16 %v6001, %v5997
  %v6274 = vpack.c.b16 %v6002, %v5998
  %v6275 = vpack.c.b16 %v6003, %v5999
  %v6276 = vpack.c.b16 %v6004, %v6000
  %v6277 = vpack.c.b16 %v6009, %v6005
  %v6278 = vpack.c.b16 %v6010, %v6006
  %v6279 = vpack.c.b16 %v6011, %v6007
  %v6280 = vpack.c.b16 %v6012, %v6008
  %v6281 = vpack.c.b16 %v6017, %v6013
  %v6282 = vpack.c.b16 %v6018, %v6014
  %v6283 = vpack.c.b16 %v6019, %v6015
  %v6284 = vpack.c.b16 %v6020, %v6016
  %v6285 = vpack.c.b16 %v6025, %v6021
  %v6286 = vpack.c.b16 %v6026, %v6022
  %v6287 = vpack.c.b16 %v6027, %v6023
  %v6288 = vpack.c.b16 %v6028, %v6024
  %v6289 = vpack.c.b16 %v6033, %v6029
  %v6290 = vpack.c.b16 %v6034, %v6030
  %v6291 = vpack.c.b16 %v6035, %v6031
  %v6292 = vpack.c.b16 %v6036, %v6032
  %v6293 = vpack.c.b16 %v6041, %v6037
  %v6294 = vpack.c.b16 %v6042, %v6038
  %v6295 = vpack.c.b16 %v6043, %v6039
  %v6296 = vpack.c.b16 %v6044, %v6040
  %v6297 = vpack.c.b16 %v6049, %v6045
  %v6298 = vpack.c.b16 %v6050, %v6046
  %v6299 = vpack.c.b16 %v6051, %v6047
  %v6300 = vpack.c.b16 %v6052, %v6048
  %v6301 = vpack.c.b16 %v6057, %v6053
  %v6302 = vpack.c.b16 %v6058, %v6054
  %v6303 = vpack.c.b16 %v6059, %v6055
  %v6304 = vpack.c.b16 %v6060, %v6056
  %v6305 = vpack.c.b16 %v6065, %v6061
  %v6306 = vpack.c.b16 %v6066, %v6062
  %v6307 = vpack.c.b16 %v6067, %v6063
  %v6308 = vpack.c.b16 %v6068, %v6064
  %v6309 = vpack.c.b16 %v6073, %v6069
  %v6310 = vpack.c.b16 %v6074, %v6070
  %v6311 = vpack.c.b16 %v6075, %v6071
  %v6312 = vpack.c.b16 %v6076, %v6072
  %v6313 = vpack.c.b16 %v6081, %v6077
  %v6314 = vpack.c.b16 %v6082, %v6078
  %v6315 = vpack.c.b16 %v6083, %v6079
  %v6316 = vpack.c.b16 %v6084, %v6080
  %v6317 = vpack.c.b16 %v6089, %v6085
  %v6318 = vpack.c.b16 %v6090, %v6086
  %v6319 = vpack.c.b16 %v6091, %v6087
  %v6320 = vpack.c.b16 %v6092, %v6088
  %v6321 = vpack.c.b16 %v6097, %v6093
  %v6322 = vpack.c.b16 %v6098, %v6094
  %v6323 = vpack.c.b16 %v6099, %v6095
  %v6324 = vpack.c.b16 %v6100, %v6096
  %v6325 = vpack.c.b16 %v6105, %v6101
  %v6326 = vpack.c.b16 %v6106, %v6102
  %v6327 = vpack.c.b16 %v6107, %v6103
  %v6328 = vpack.c.b16 %v6108, %v6104
  %v6329 = vpack.c.b16 %v6113, %v6109
  %v6330 = vpack.c.b16 %v6114, %v6110
  %v6331 = vpack.c.b16 %v6115, %v6111
  %v6332 = vpack.c.b16 %v6116, %v6112
  %v6333 = vpack.c.b16 %v6121, %v6117
  %v6334 = vpack.c.b16 %v6122, %v6118
  %v6335 = vpack.c.b16 %v6123, %v6119
  %v6336 = vpack.c.b16 %v6124, %v6120
  %v6337 = vpack.c.b16 %v6129, %v6125
  %v6338 = vpack.c.b16 %v6130, %v6126
  %v6339 = vpack.c.b16 %v6131, %v6127
  %v6340 = vpack.c.b16 %v6132, %v6128
  %v6341 = vpack.c.b16 %v6137, %v6133
  %v6342 = vpack.c.b16 %v6138, %v6134
  %v6343 = vpack.c.b16 %v6139, %v6135
  %v6344 = vpack.c.b16 %v6140, %v6136
  %v6345 = vpack.c.b16 %v6145, %v6141
  %v6346 = vpack.c.b16 %v6146, %v6142
  %v6347 = vpack.c.b16 %v6147, %v6143
  %v6348 = vpack.c.b16 %v6148, %v6144
  %v6349 = vpack.c.b16 %v6153, %v6149
  %v6350 = vpack.c.b16 %v6154, %v6150
  %v6351 = vpack.c.b16 %v6155, %v6151
  %v6352 = vpack.c.b16 %v6156, %v6152
  %v6353 = vpack.c.b16 %v6161, %v6157
  %v6354 = vpack.c.b16 %v6162, %v6158
  %v6355 = vpack.c.b16 %v6163, %v6159
  %v6356 = vpack.c.b16 %v6164, %v6160
  %v6357 = vpack.c.b16 %v6169, %v6165
  %v6358 = vpack.c.b16 %v6170, %v6166
  %v6359 = vpack.c.b16 %v6171, %v6167
  %v6360 = vpack.c.b16 %v6172, %v6168
  %v6361 = vpack.c.b16 %v6177, %v6173
  %v6362 = vpack.c.b16 %v6178, %v6174
  %v6363 = vpack.c.b16 %v6179, %v6175
  %v6364 = vpack.c.b16 %v6180, %v6176
  %v6365 = vpack.c.b16 %v6185, %v6181
  %v6366 = vpack.c.b16 %v6186, %v6182
  %v6367 = vpack.c.b16 %v6187, %v6183
  %v6368 = vpack.c.b16 %v6188, %v6184
  %v6369 = vpack.c.b16 %v6193, %v6189
  %v6370 = vpack.c.b16 %v6194, %v6190
  %v6371 = vpack.c.b16 %v6195, %v6191
  %v6372 = vpack.c.b16 %v6196, %v6192
  %v6373 = vpack.c.b16 %v6201, %v6197
  %v6374 = vpack.c.b16 %v6202, %v6198
  %v6375 = vpack.c.b16 %v6203, %v6199
  %v6376 = vpack.c.b16 %v6204, %v6200
  %v6377 = vpack.c.b16 %v6209, %v6205
  %v6378 = vpack.c.b16 %v6210, %v6206
  %v6379 = vpack.c.b16 %v6211, %v6207
  %v6380 = vpack.c.b16 %v6212, %v6208
  %v6381 = vpack.c.b16 %v6217, %v6213
  %v6382 = vpack.c.b16 %v6218, %v6214
  %v6383 = vpack.c.b16 %v6219, %v6215
  %v6384 = vpack.c.b16 %v6220, %v6216
  %v6385 = vpack.c.b16 %v6225, %v6221
  %v6386 = vpack.c.b16 %v6226, %v6222
  %v6387 = vpack.c.b16 %v6227, %v6223
  %v6388 = vpack.c.b16 %v6228, %v6224
  %v6389 = vpack.c.b16 %v6233, %v6229
  %v6390 = vpack.c.b16 %v6234, %v6230
  %v6391 = vpack.c.b16 %v6235, %v6231
  %v6392 = vpack.c.b16 %v6236, %v6232
  %v6393 = vpack.c.b16 %v6241, %v6237
  %v6394 = vpack.c.b16 %v6242, %v6238
  %v6395 = vpack.c.b16 %v6243, %v6239
  %v6396 = vpack.c.b16 %v6244, %v6240
  %v6397 = vpack.c.b16 %v6249, %v6245
  %v6398 = vpack.c.b16 %v6250, %v6246
  %v6399 = vpack.c.b16 %v6251, %v6247
  %v6400 = vpack.c.b16 %v6252, %v6248
  %v6401 = vpack.c.b16 %v6257, %v6253
  %v6402 = vpack.c.b16 %v6258, %v6254
  %v6403 = vpack.c.b16 %v6259, %v6255
  %v6404 = vpack.c.b16 %v6260, %v6256
  %6549 = vmatprep.subr.bf16.mxu0 %v6262
  %6550 = vmatpush1.bf16.msra.mxu0 %v6261
  %6551 = vmatprep.subr.bf16.mxu0 %v6266
  %6552 = vmatpush1.bf16.msra.mxu0 %v6265
  %6553 = vmatprep.subr.bf16.mxu0 %v6270
  %6554 = vmatpush1.bf16.msra.mxu0 %v6269
  %6555 = vmatprep.subr.bf16.mxu0 %v6274
  %6556 = vmatpush1.bf16.msra.mxu0 %v6273
  %6557 = vmatprep.subr.bf16.mxu0 %v6278
  %6558 = vmatpush1.bf16.msra.mxu0 %v6277
  %6559 = vmatprep.subr.bf16.mxu0 %v6282
  %6560 = vmatpush1.bf16.msra.mxu0 %v6281
  %6561 = vmatprep.subr.bf16.mxu0 %v6286
  %6562 = vmatpush1.bf16.msra.mxu0 %v6285
  %6563 = vmatprep.subr.bf16.mxu0 %v6290
  %6564 = vmatpush1.bf16.msra.mxu0 %v6289
  %6565 = vmatprep.subr.bf16.mxu0 %v6294
  %6566 = vmatpush1.bf16.msra.mxu0 %v6293
  %6567 = vmatprep.subr.bf16.mxu0 %v6298
  %6568 = vmatpush1.bf16.msra.mxu0 %v6297
  %6569 = vmatprep.subr.bf16.mxu0 %v6302
  %6570 = vmatpush1.bf16.msra.mxu0 %v6301
  %6571 = vmatprep.subr.bf16.mxu0 %v6306
  %6572 = vmatpush1.bf16.msra.mxu0 %v6305
  %6573 = vmatprep.subr.bf16.mxu0 %v6310
  %6574 = vmatpush1.bf16.msra.mxu0 %v6309
  %6575 = vmatprep.subr.bf16.mxu0 %v6314
  %6576 = vmatpush1.bf16.msra.mxu0 %v6313
  %6577 = vmatprep.subr.bf16.mxu0 %v6318
  %6578 = vmatpush1.bf16.msra.mxu0 %v6317
  %6579 = vmatprep.subr.bf16.mxu0 %v6322
  %6580 = vmatpush1.bf16.msra.mxu0 %v6321
  %6581 = vmatprep.mubr.bf16.mxu0 %v2533
  %6582 = vmatmul.mubr.bf16.gmra.mrb[0].mxu0 %v2532
  %v6583 = vpop.f32.mrb[0].mxu0
  %v6584 = vadd.f32 %v5692, %v6583
  %v6585 = vpop.f32.mrb[0].mxu0
  %v6586 = vadd.f32 %v5694, %v6585
  %v6587 = vpop.f32.mrb[0].mxu0
  %v6588 = vadd.f32 %v5696, %v6587
  %v6589 = vpop.f32.mrb[0].mxu0
  %v6590 = vadd.f32 %v5698, %v6589
  %6591 = vdwg.mxu0
  %6592 = vmatprep.subr.bf16.mxu0 %v6326
  %6593 = vmatpush1.bf16.msra.mxu0 %v6325
  %6594 = vmatprep.subr.bf16.mxu0 %v6330
  %6595 = vmatpush1.bf16.msra.mxu0 %v6329
  %6596 = vmatprep.subr.bf16.mxu0 %v6334
  %6597 = vmatpush1.bf16.msra.mxu0 %v6333
  %6598 = vmatprep.subr.bf16.mxu0 %v6338
  %6599 = vmatpush1.bf16.msra.mxu0 %v6337
  %6600 = vmatprep.subr.bf16.mxu0 %v6342
  %6601 = vmatpush1.bf16.msra.mxu0 %v6341
  %6602 = vmatprep.subr.bf16.mxu0 %v6346
  %6603 = vmatpush1.bf16.msra.mxu0 %v6345
  %6604 = vmatprep.subr.bf16.mxu0 %v6350
  %6605 = vmatpush1.bf16.msra.mxu0 %v6349
  %6606 = vmatprep.subr.bf16.mxu0 %v6354
  %6607 = vmatpush1.bf16.msra.mxu0 %v6353
  %6608 = vmatprep.subr.bf16.mxu0 %v6358
  %6609 = vmatpush1.bf16.msra.mxu0 %v6357
  %6610 = vmatprep.subr.bf16.mxu0 %v6362
  %6611 = vmatpush1.bf16.msra.mxu0 %v6361
  %6612 = vmatprep.subr.bf16.mxu0 %v6366
  %6613 = vmatpush1.bf16.msra.mxu0 %v6365
  %6614 = vmatprep.subr.bf16.mxu0 %v6370
  %6615 = vmatpush1.bf16.msra.mxu0 %v6369
  %6616 = vmatprep.subr.bf16.mxu0 %v6374
  %6617 = vmatpush1.bf16.msra.mxu0 %v6373
  %6618 = vmatprep.subr.bf16.mxu0 %v6378
  %6619 = vmatpush1.bf16.msra.mxu0 %v6377
  %6620 = vmatprep.subr.bf16.mxu0 %v6382
  %6621 = vmatpush1.bf16.msra.mxu0 %v6381
  %6622 = vmatprep.subr.bf16.mxu0 %v6386
  %6623 = vmatpush1.bf16.msra.mxu0 %v6385
  %6624 = vmatprep.mubr.bf16.mxu0 %v2535
  %6625 = vmatmul.mubr.bf16.gmra.mrb[0].mxu0 %v2534
  %v6626 = vpop.f32.mrb[0].mxu0
  %v6627 = vadd.f32 %v6584, %v6626
  %v6628 = vpop.f32.mrb[0].mxu0
  %v6629 = vadd.f32 %v6586, %v6628
  %v6630 = vpop.f32.mrb[0].mxu0
  %v6631 = vadd.f32 %v6588, %v6630
  %v6632 = vpop.f32.mrb[0].mxu0
  %v6633 = vadd.f32 %v6590, %v6632
  %6634 = vdwg.mxu0
  %6635 = vmatprep.subr.bf16.mxu0 %v6390
  %6636 = vmatpush1.bf16.msra.mxu0 %v6389
  %6637 = vmatprep.subr.bf16.mxu0 %v6394
  %6638 = vmatpush1.bf16.msra.mxu0 %v6393
  %6639 = vmatprep.subr.bf16.mxu0 %v6398
  %6640 = vmatpush1.bf16.msra.mxu0 %v6397
  %6641 = vmatprep.subr.bf16.mxu0 %v6402
  %6642 = vmatpush1.bf16.msra.mxu0 %v6401
  %6643 = vmatprep.subr.bf16.mxu0 0
  %6644 = vmatpush1.bf16.msra.mxu0 0
  %6645 = vmatprep.subr.bf16.mxu0 0
  %6646 = vmatpush1.bf16.msra.mxu0 0
  %6647 = vmatprep.subr.bf16.mxu0 0
  %6648 = vmatpush1.bf16.msra.mxu0 0
  %6649 = vmatprep.subr.bf16.mxu0 0
  %6650 = vmatpush1.bf16.msra.mxu0 0
  %6651 = vmatprep.subr.bf16.mxu0 0
  %6652 = vmatpush1.bf16.msra.mxu0 0
  %6653 = vmatprep.subr.bf16.mxu0 0
  %6654 = vmatpush1.bf16.msra.mxu0 0
  %6655 = vmatprep.subr.bf16.mxu0 0
  %6656 = vmatpush1.bf16.msra.mxu0 0
  %6657 = vmatprep.subr.bf16.mxu0 0
  %6658 = vmatpush1.bf16.msra.mxu0 0
  %6659 = vmatprep.subr.bf16.mxu0 0
  %6660 = vmatpush1.bf16.msra.mxu0 0
  %6661 = vmatprep.subr.bf16.mxu0 0
  %6662 = vmatpush1.bf16.msra.mxu0 0
  %6663 = vmatprep.subr.bf16.mxu0 0
  %6664 = vmatpush1.bf16.msra.mxu0 0
  %6665 = vmatprep.subr.bf16.mxu0 0
  %6666 = vmatpush1.bf16.msra.mxu0 0
  %6667 = vmatprep.mubr.bf16.mxu0 0
  %6668 = vmatmul.mubr.bf16.gmra.mrb[0].mxu0 %v3262
  %v6669 = vpop.f32.mrb[0].mxu0
  %v6670 = vadd.f32 %v6627, %v6669
  %v6671 = vpop.f32.mrb[0].mxu0
  %v6672 = vadd.f32 %v6629, %v6671
  %v6673 = vpop.f32.mrb[0].mxu0
  %v6674 = vadd.f32 %v6631, %v6673
  %v6675 = vpop.f32.mrb[0].mxu0
  %v6676 = vadd.f32 %v6633, %v6675
  %6677 = vdwg.mxu0
  %6678 = vmatprep.subr.bf16.mxu0 %v6264
  %6679 = vmatpush1.bf16.msra.mxu0 %v6263
  %6680 = vmatprep.subr.bf16.mxu0 %v6268
  %6681 = vmatpush1.bf16.msra.mxu0 %v6267
  %6682 = vmatprep.subr.bf16.mxu0 %v6272
  %6683 = vmatpush1.bf16.msra.mxu0 %v6271
  %6684 = vmatprep.subr.bf16.mxu0 %v6276
  %6685 = vmatpush1.bf16.msra.mxu0 %v6275
  %6686 = vmatprep.subr.bf16.mxu0 %v6280
  %6687 = vmatpush1.bf16.msra.mxu0 %v6279
  %6688 = vmatprep.subr.bf16.mxu0 %v6284
  %6689 = vmatpush1.bf16.msra.mxu0 %v6283
  %6690 = vmatprep.subr.bf16.mxu0 %v6288
  %6691 = vmatpush1.bf16.msra.mxu0 %v6287
  %6692 = vmatprep.subr.bf16.mxu0 %v6292
  %6693 = vmatpush1.bf16.msra.mxu0 %v6291
  %6694 = vmatprep.subr.bf16.mxu0 %v6296
  %6695 = vmatpush1.bf16.msra.mxu0 %v6295
  %6696 = vmatprep.subr.bf16.mxu0 %v6300
  %6697 = vmatpush1.bf16.msra.mxu0 %v6299
  %6698 = vmatprep.subr.bf16.mxu0 %v6304
  %6699 = vmatpush1.bf16.msra.mxu0 %v6303
  %6700 = vmatprep.subr.bf16.mxu0 %v6308
  %6701 = vmatpush1.bf16.msra.mxu0 %v6307
  %6702 = vmatprep.subr.bf16.mxu0 %v6312
  %6703 = vmatpush1.bf16.msra.mxu0 %v6311
  %6704 = vmatprep.subr.bf16.mxu0 %v6316
  %6705 = vmatpush1.bf16.msra.mxu0 %v6315
  %6706 = vmatprep.subr.bf16.mxu0 %v6320
  %6707 = vmatpush1.bf16.msra.mxu0 %v6319
  %6708 = vmatprep.subr.bf16.mxu0 %v6324
  %6709 = vmatpush1.bf16.msra.mxu0 %v6323
  %6710 = vmatprep.mubr.bf16.mxu0 %v2533
  %6711 = vmatmul.mubr.bf16.gmra.mrb[0].mxu0 %v2532
  %v6712 = vpop.f32.mrb[0].mxu0
  %v6713 = vadd.f32 %v5821, %v6712
  %v6714 = vpop.f32.mrb[0].mxu0
  %v6715 = vadd.f32 %v5823, %v6714
  %v6716 = vpop.f32.mrb[0].mxu0
  %v6717 = vadd.f32 %v5825, %v6716
  %v6718 = vpop.f32.mrb[0].mxu0
  %v6719 = vadd.f32 %v5827, %v6718
  %6720 = vdwg.mxu0
  %6721 = vmatprep.subr.bf16.mxu0 %v6328
  %6722 = vmatpush1.bf16.msra.mxu0 %v6327
  %6723 = vmatprep.subr.bf16.mxu0 %v6332
  %6724 = vmatpush1.bf16.msra.mxu0 %v6331
  %6725 = vmatprep.subr.bf16.mxu0 %v6336
  %6726 = vmatpush1.bf16.msra.mxu0 %v6335
  %6727 = vmatprep.subr.bf16.mxu0 %v6340
  %6728 = vmatpush1.bf16.msra.mxu0 %v6339
  %6729 = vmatprep.subr.bf16.mxu0 %v6344
  %6730 = vmatpush1.bf16.msra.mxu0 %v6343
  %6731 = vmatprep.subr.bf16.mxu0 %v6348
  %6732 = vmatpush1.bf16.msra.mxu0 %v6347
  %6733 = vmatprep.subr.bf16.mxu0 %v6352
  %6734 = vmatpush1.bf16.msra.mxu0 %v6351
  %6735 = vmatprep.subr.bf16.mxu0 %v6356
  %6736 = vmatpush1.bf16.msra.mxu0 %v6355
  %6737 = vmatprep.subr.bf16.mxu0 %v6360
  %6738 = vmatpush1.bf16.msra.mxu0 %v6359
  %6739 = vmatprep.subr.bf16.mxu0 %v6364
  %6740 = vmatpush1.bf16.msra.mxu0 %v6363
  %6741 = vmatprep.subr.bf16.mxu0 %v6368
  %6742 = vmatpush1.bf16.msra.mxu0 %v6367
  %6743 = vmatprep.subr.bf16.mxu0 %v6372
  %6744 = vmatpush1.bf16.msra.mxu0 %v6371
  %6745 = vmatprep.subr.bf16.mxu0 %v6376
  %6746 = vmatpush1.bf16.msra.mxu0 %v6375
  %6747 = vmatprep.subr.bf16.mxu0 %v6380
  %6748 = vmatpush1.bf16.msra.mxu0 %v6379
  %6749 = vmatprep.subr.bf16.mxu0 %v6384
  %6750 = vmatpush1.bf16.msra.mxu0 %v6383
  %6751 = vmatprep.subr.bf16.mxu0 %v6388
  %6752 = vmatpush1.bf16.msra.mxu0 %v6387
  %6753 = vmatprep.mubr.bf16.mxu0 %v2535
  %6754 = vmatmul.mubr.bf16.gmra.mrb[0].mxu0 %v2534
  %v6755 = vpop.f32.mrb[0].mxu0
  %v6756 = vadd.f32 %v6713, %v6755
  %v6757 = vpop.f32.mrb[0].mxu0
  %v6758 = vadd.f32 %v6715, %v6757
  %v6759 = vpop.f32.mrb[0].mxu0
  %v6760 = vadd.f32 %v6717, %v6759
  %v6761 = vpop.f32.mrb[0].mxu0
  %v6762 = vadd.f32 %v6719, %v6761
  %6763 = vdwg.mxu0
  %6764 = vmatprep.subr.bf16.mxu0 %v6392
  %6765 = vmatpush1.bf16.msra.mxu0 %v6391
  %6766 = vmatprep.subr.bf16.mxu0 %v6396
  %6767 = vmatpush1.bf16.msra.mxu0 %v6395
  %6768 = vmatprep.subr.bf16.mxu0 %v6400
  %6769 = vmatpush1.bf16.msra.mxu0 %v6399
  %6770 = vmatprep.subr.bf16.mxu0 %v6404
  %6771 = vmatpush1.bf16.msra.mxu0 %v6403
  %6772 = vmatprep.subr.bf16.mxu0 0
  %6773 = vmatpush1.bf16.msra.mxu0 0
  %6774 = vmatprep.subr.bf16.mxu0 0
  %6775 = vmatpush1.bf16.msra.mxu0 0
  %6776 = vmatprep.subr.bf16.mxu0 0
  %6777 = vmatpush1.bf16.msra.mxu0 0
  %6778 = vmatprep.subr.bf16.mxu0 0
  %6779 = vmatpush1.bf16.msra.mxu0 0
  %6780 = vmatprep.subr.bf16.mxu0 0
  %6781 = vmatpush1.bf16.msra.mxu0 0
  %6782 = vmatprep.subr.bf16.mxu0 0
  %6783 = vmatpush1.bf16.msra.mxu0 0
  %6784 = vmatprep.subr.bf16.mxu0 0
  %6785 = vmatpush1.bf16.msra.mxu0 0
  %6786 = vmatprep.subr.bf16.mxu0 0
  %6787 = vmatpush1.bf16.msra.mxu0 0
  %6788 = vmatprep.subr.bf16.mxu0 0
  %6789 = vmatpush1.bf16.msra.mxu0 0
  %6790 = vmatprep.subr.bf16.mxu0 0
  %6791 = vmatpush1.bf16.msra.mxu0 0
  %6792 = vmatprep.subr.bf16.mxu0 0
  %6793 = vmatpush1.bf16.msra.mxu0 0
  %6794 = vmatprep.subr.bf16.mxu0 0
  %6795 = vmatpush1.bf16.msra.mxu0 0
  %6796 = vmatprep.mubr.bf16.mxu0 0
  %6797 = vmatmul.mubr.bf16.gmra.mrb[0].mxu0 %v3262
  %v6798 = vpop.f32.mrb[0].mxu0
  %v6799 = vadd.f32 %v6756, %v6798
  %v6800 = vpop.f32.mrb[0].mxu0
  %v6801 = vadd.f32 %v6758, %v6800
  %v6802 = vpop.f32.mrb[0].mxu0
  %v6803 = vadd.f32 %v6760, %v6802
  %v6804 = vpop.f32.mrb[0].mxu0
  %v6805 = vadd.f32 %v6762, %v6804
  %6806 = vdwg.mxu0
  %vm6807 = vcmask 1045504
  %v6808 = vsel %vm6807, %v4370, 0.0
  %v6809 = vadd.f32 %v4366, %v6808
  %v6810 = vrot.slane %v6809, 4
  %v6811 = vadd.f32 %v6809, %v6810
  %v6812 = vrot.slane %v6811, 2
  %v6813 = vadd.f32 %v6811, %v6812
  %v6814 = vrot.slane %v6813, 1
  %v6815 = vadd.f32 %v6813, %v6814
  %v6816 = vsel %vm6807, %v4372, 0.0
  %v6817 = vadd.f32 %v4368, %v6816
  %v6818 = vrot.slane %v6817, 4
  %v6819 = vadd.f32 %v6817, %v6818
  %v6820 = vrot.slane %v6819, 2
  %v6821 = vadd.f32 %v6819, %v6820
  %v6822 = vrot.slane %v6821, 1
  %v6823 = vadd.f32 %v6821, %v6822
  %v6824 = vsel %vm6807, %v4499, 0.0
  %v6825 = vadd.f32 %v4495, %v6824
  %v6826 = vrot.slane %v6825, 4
  %v6827 = vadd.f32 %v6825, %v6826
  %v6828 = vrot.slane %v6827, 2
  %v6829 = vadd.f32 %v6827, %v6828
  %v6830 = vrot.slane %v6829, 1
  %v6831 = vadd.f32 %v6829, %v6830
  %v6832 = vsel %vm6807, %v4501, 0.0
  %v6833 = vadd.f32 %v4497, %v6832
  %v6834 = vrot.slane %v6833, 4
  %v6835 = vadd.f32 %v6833, %v6834
  %v6836 = vrot.slane %v6835, 2
  %v6837 = vadd.f32 %v6835, %v6836
  %v6838 = vrot.slane %v6837, 1
  %v6839 = vadd.f32 %v6837, %v6838
  %v6840 = vsel %vm6807, %v6674, 0.0
  %v6841 = vadd.f32 %v6670, %v6840
  %v6842 = vrot.slane %v6841, 4
  %v6843 = vadd.f32 %v6841, %v6842
  %v6844 = vrot.slane %v6843, 2
  %v6845 = vadd.f32 %v6843, %v6844
  %v6846 = vrot.slane %v6845, 1
  %v6847 = vadd.f32 %v6845, %v6846
  %v6848 = vsel %vm6807, %v6676, 0.0
  %v6849 = vadd.f32 %v6672, %v6848
  %v6850 = vrot.slane %v6849, 4
  %v6851 = vadd.f32 %v6849, %v6850
  %v6852 = vrot.slane %v6851, 2
  %v6853 = vadd.f32 %v6851, %v6852
  %v6854 = vrot.slane %v6853, 1
  %v6855 = vadd.f32 %v6853, %v6854
  %v6856 = vsel %vm6807, %v6803, 0.0
  %v6857 = vadd.f32 %v6799, %v6856
  %v6858 = vrot.slane %v6857, 4
  %v6859 = vadd.f32 %v6857, %v6858
  %v6860 = vrot.slane %v6859, 2
  %v6861 = vadd.f32 %v6859, %v6860
  %v6862 = vrot.slane %v6861, 1
  %v6863 = vadd.f32 %v6861, %v6862
  %v6864 = vsel %vm6807, %v6805, 0.0
  %v6865 = vadd.f32 %v6801, %v6864
  %v6866 = vrot.slane %v6865, 4
  %v6867 = vadd.f32 %v6865, %v6866
  %v6868 = vrot.slane %v6867, 2
  %v6869 = vadd.f32 %v6867, %v6868
  %v6870 = vrot.slane %v6869, 1
  %v6871 = vadd.f32 %v6869, %v6870
  %v6872 = vadd.f32 %v6815, %v6847
  %v6873 = vadd.f32 %v6823, %v6855
  %v6874 = vadd.f32 %v6831, %v6863
  %v6875 = vadd.f32 %v6839, %v6871
  %v6876 = vmul.f32 %v4366, %v4366
  %v6877 = vmul.f32 %v4368, %v4368
  %v6878 = vmul.f32 %v4495, %v4495
  %v6879 = vmul.f32 %v4497, %v4497
  %v6880 = vmul.f32 %v4370, %v4370
  %v6881 = vmul.f32 %v4372, %v4372
  %v6882 = vmul.f32 %v4499, %v4499
  %v6883 = vmul.f32 %v4501, %v4501
  %v6884 = vsel %vm6807, %v6880, 0.0
  %v6885 = vadd.f32 %v6876, %v6884
  %v6886 = vrot.slane %v6885, 4
  %v6887 = vadd.f32 %v6885, %v6886
  %v6888 = vrot.slane %v6887, 2
  %v6889 = vadd.f32 %v6887, %v6888
  %v6890 = vrot.slane %v6889, 1
  %v6891 = vadd.f32 %v6889, %v6890
  %v6892 = vsel %vm6807, %v6881, 0.0
  %v6893 = vadd.f32 %v6877, %v6892
  %v6894 = vrot.slane %v6893, 4
  %v6895 = vadd.f32 %v6893, %v6894
  %v6896 = vrot.slane %v6895, 2
  %v6897 = vadd.f32 %v6895, %v6896
  %v6898 = vrot.slane %v6897, 1
  %v6899 = vadd.f32 %v6897, %v6898
  %v6900 = vsel %vm6807, %v6882, 0.0
  %v6901 = vadd.f32 %v6878, %v6900
  %v6902 = vrot.slane %v6901, 4
  %v6903 = vadd.f32 %v6901, %v6902
  %v6904 = vrot.slane %v6903, 2
  %v6905 = vadd.f32 %v6903, %v6904
  %v6906 = vrot.slane %v6905, 1
  %v6907 = vadd.f32 %v6905, %v6906
  %v6908 = vsel %vm6807, %v6883, 0.0
  %v6909 = vadd.f32 %v6879, %v6908
  %v6910 = vrot.slane %v6909, 4
  %v6911 = vadd.f32 %v6909, %v6910
  %v6912 = vrot.slane %v6911, 2
  %v6913 = vadd.f32 %v6911, %v6912
  %v6914 = vrot.slane %v6913, 1
  %v6915 = vadd.f32 %v6913, %v6914
  %v6916 = vmul.f32 %v6670, %v6670
  %v6917 = vmul.f32 %v6672, %v6672
  %v6918 = vmul.f32 %v6799, %v6799
  %v6919 = vmul.f32 %v6801, %v6801
  %v6920 = vmul.f32 %v6674, %v6674
  %v6921 = vmul.f32 %v6676, %v6676
  %v6922 = vmul.f32 %v6803, %v6803
  %v6923 = vmul.f32 %v6805, %v6805
  %v6924 = vsel %vm6807, %v6920, 0.0
  %v6925 = vadd.f32 %v6916, %v6924
  %v6926 = vrot.slane %v6925, 4
  %v6927 = vadd.f32 %v6925, %v6926
  %v6928 = vrot.slane %v6927, 2
  %v6929 = vadd.f32 %v6927, %v6928
  %v6930 = vrot.slane %v6929, 1
  %v6931 = vadd.f32 %v6929, %v6930
  %v6932 = vsel %vm6807, %v6921, 0.0
  %v6933 = vadd.f32 %v6917, %v6932
  %v6934 = vrot.slane %v6933, 4
  %v6935 = vadd.f32 %v6933, %v6934
  %v6936 = vrot.slane %v6935, 2
  %v6937 = vadd.f32 %v6935, %v6936
  %v6938 = vrot.slane %v6937, 1
  %v6939 = vadd.f32 %v6937, %v6938
  %v6940 = vsel %vm6807, %v6922, 0.0
  %v6941 = vadd.f32 %v6918, %v6940
  %v6942 = vrot.slane %v6941, 4
  %v6943 = vadd.f32 %v6941, %v6942
  %v6944 = vrot.slane %v6943, 2
  %v6945 = vadd.f32 %v6943, %v6944
  %v6946 = vrot.slane %v6945, 1
  %v6947 = vadd.f32 %v6945, %v6946
  %v6948 = vsel %vm6807, %v6923, 0.0
  %v6949 = vadd.f32 %v6919, %v6948
  %v6950 = vrot.slane %v6949, 4
  %v6951 = vadd.f32 %v6949, %v6950
  %v6952 = vrot.slane %v6951, 2
  %v6953 = vadd.f32 %v6951, %v6952
  %v6954 = vrot.slane %v6953, 1
  %v6955 = vadd.f32 %v6953, %v6954
  %v6956 = vadd.f32 %v6891, %v6931
  %v6957 = vadd.f32 %v6899, %v6939
  %v6958 = vadd.f32 %v6907, %v6947
  %v6959 = vadd.f32 %v6915, %v6955
  %vm6960 = vcmask 1040384
  %v6961 = vsel %vm6960, %v6872, %v6956
  %v6962 = vsel %vm6960, %v6873, %v6957
  %v6963 = vsel %vm6960, %v6874, %v6958
  %v6964 = vsel %vm6960, %v6875, %v6959
  %v6965 = vld [vmem:[%s9] sm:$0xff]
  %v6966 = vld [vmem:[%s9 + $0x8] sm:$0xff]
  %v6967 = vld [vmem:[%s9 + $0x10] sm:$0xff]
  %v6968 = vld [vmem:[%s9 + $0x18] sm:$0xff]
  %v6969 = vld [vmem:[%s9 + $0x20] sm:$0xff]
  %v6970 = vld [vmem:[%s9 + $0x28] sm:$0xff]
  %v6971 = vld [vmem:[%s9 + $0x30] sm:$0xff]
  %v6972 = vld [vmem:[%s9 + $0x38] sm:$0xff]
  %v6973 = vld [vmem:[%s9 + $0x40] sm:$0xff]
  %v6974 = vld [vmem:[%s9 + $0x48] sm:$0xff]
  %v6975 = vld [vmem:[%s9 + $0x50] sm:$0xff]
  %v6976 = vld [vmem:[%s9 + $0x58] sm:$0xff]
  %v6977 = vld [vmem:[%s9 + $0x60] sm:$0xff]
  %v6978 = vld [vmem:[%s9 + $0x68] sm:$0xff]
  %v6979 = vld [vmem:[%s9 + $0x70] sm:$0xff]
  %v6980 = vld [vmem:[%s9 + $0x78] sm:$0xff]
  %v6981 = vld [vmem:[%s9 + $0x80] sm:$0xff]
  %v6982 = vld [vmem:[%s9 + $0x88] sm:$0xff]
  %v6983 = vld [vmem:[%s9 + $0x90] sm:$0xff]
  %v6984 = vld [vmem:[%s9 + $0x98] sm:$0xff]
  %v6985 = vld [vmem:[%s9 + $0xa0] sm:$0xff]
  %v6986 = vld [vmem:[%s9 + $0xa8] sm:$0xff]
  %v6987 = vld [vmem:[%s9 + $0xb0] sm:$0xff]
  %v6988 = vld [vmem:[%s9 + $0xb8] sm:$0xff]
  %v6989 = vld [vmem:[%s9 + $0xc0] sm:$0xff]
  %v6990 = vld [vmem:[%s9 + $0xc8] sm:$0xff]
  %v6991 = vld [vmem:[%s9 + $0xd0] sm:$0xff]
  %v6992 = vld [vmem:[%s9 + $0xd8] sm:$0xff]
  %v6993 = vld [vmem:[%s9 + $0xe0] sm:$0xff]
  %v6994 = vld [vmem:[%s9 + $0xe8] sm:$0xff]
  %v6995 = vld [vmem:[%s9 + $0xf0] sm:$0xff]
  %v6996 = vld [vmem:[%s9 + $0xf8] sm:$0xff]
  %v6997 = vld [vmem:[%s9 + $0x100] sm:$0xff]
  %v6998 = vld [vmem:[%s9 + $0x108] sm:$0xff]
  %v6999 = vld [vmem:[%s9 + $0x110] sm:$0xff]
  %v7000 = vld [vmem:[%s9 + $0x118] sm:$0xff]
  %v7001 = vld [vmem:[%s9 + $0x120] sm:$0xff]
  %v7002 = vld [vmem:[%s9 + $0x128] sm:$0xff]
  %v7003 = vld [vmem:[%s9 + $0x130] sm:$0xff]
  %v7004 = vld [vmem:[%s9 + $0x138] sm:$0xff]
  %v7005 = vld [vmem:[%s9 + $0x140] sm:$0xff]
  %v7006 = vld [vmem:[%s9 + $0x148] sm:$0xff]
  %v7007 = vld [vmem:[%s9 + $0x150] sm:$0xff]
  %v7008 = vld [vmem:[%s9 + $0x158] sm:$0xff]
  %v7009 = vld [vmem:[%s9 + $0x160] sm:$0xff]
  %v7010 = vld [vmem:[%s9 + $0x168] sm:$0xff]
  %v7011 = vld [vmem:[%s9 + $0x170] sm:$0xff]
  %v7012 = vld [vmem:[%s9 + $0x178] sm:$0xff]
  %v7013 = vld [vmem:[%s9 + $0x180] sm:$0xff]
  %v7014 = vld [vmem:[%s9 + $0x188] sm:$0xff]
  %v7015 = vld [vmem:[%s9 + $0x190] sm:$0xff]
  %v7016 = vld [vmem:[%s9 + $0x198] sm:$0xff]
  %v7017 = vld [vmem:[%s9 + $0x1a0] sm:$0xff]
  %v7018 = vld [vmem:[%s9 + $0x1a8] sm:$0xff]
  %v7019 = vld [vmem:[%s9 + $0x1b0] sm:$0xff]
  %v7020 = vld [vmem:[%s9 + $0x1b8] sm:$0xff]
  %v7021 = vld [vmem:[%s9 + $0x1c0] sm:$0xff]
  %v7022 = vld [vmem:[%s9 + $0x1c8] sm:$0xff]
  %v7023 = vld [vmem:[%s9 + $0x1d0] sm:$0xff]
  %v7024 = vld [vmem:[%s9 + $0x1d8] sm:$0xff]
  %v7025 = vld [vmem:[%s9 + $0x1e0] sm:$0xff]
  %v7026 = vld [vmem:[%s9 + $0x1e8] sm:$0xff]
  %v7027 = vld [vmem:[%s9 + $0x1f0] sm:$0xff]
  %v7028 = vld [vmem:[%s9 + $0x1f8] sm:$0xff]
  %7029 = vmatprep.subr.mxu0 0.0
  %7030 = vmatpush1.msra.mxu0 %v6965
  %7031 = vmatprep.subr.mxu0 0.0
  %7032 = vmatpush1.msra.mxu0 %v6966
  %7033 = vmatprep.subr.mxu0 0.0
  %7034 = vmatpush1.msra.mxu0 %v6967
  %7035 = vmatprep.subr.mxu0 0.0
  %7036 = vmatpush1.msra.mxu0 %v6968
  %7037 = vmatprep.subr.mxu0 0.0
  %7038 = vmatpush1.msra.mxu0 %v6969
  %7039 = vmatprep.subr.mxu0 0.0
  %7040 = vmatpush1.msra.mxu0 %v6970
  %7041 = vmatprep.subr.mxu0 0.0
  %7042 = vmatpush1.msra.mxu0 %v6971
  %7043 = vmatprep.subr.mxu0 0.0
  %7044 = vmatpush1.msra.mxu0 %v6972
  %7045 = vmatprep.subr.mxu0 0.0
  %7046 = vmatpush1.msra.mxu0 %v6973
  %7047 = vmatprep.subr.mxu0 0.0
  %7048 = vmatpush1.msra.mxu0 %v6974
  %7049 = vmatprep.subr.mxu0 0.0
  %7050 = vmatpush1.msra.mxu0 %v6975
  %7051 = vmatprep.subr.mxu0 0.0
  %7052 = vmatpush1.msra.mxu0 %v6976
  %7053 = vmatprep.subr.mxu0 0.0
  %7054 = vmatpush1.msra.mxu0 %v6977
  %7055 = vmatprep.subr.mxu0 0.0
  %7056 = vmatpush1.msra.mxu0 %v6978
  %7057 = vmatprep.subr.mxu0 0.0
  %7058 = vmatpush1.msra.mxu0 %v6979
  %7059 = vmatprep.subr.mxu0 0.0
  %7060 = vmatpush1.msra.mxu0 %v6980
  %7061 = vmatprep.subr.mxu0 0.0
  %7062 = vmatpush1.msra.mxu0 %v6981
  %7063 = vmatprep.subr.mxu0 0.0
  %7064 = vmatpush1.msra.mxu0 %v6982
  %7065 = vmatprep.subr.mxu0 0.0
  %7066 = vmatpush1.msra.mxu0 %v6983
  %7067 = vmatprep.subr.mxu0 0.0
  %7068 = vmatpush1.msra.mxu0 %v6984
  %7069 = vmatprep.subr.mxu0 0.0
  %7070 = vmatpush1.msra.mxu0 %v6985
  %7071 = vmatprep.subr.mxu0 0.0
  %7072 = vmatpush1.msra.mxu0 %v6986
  %7073 = vmatprep.subr.mxu0 0.0
  %7074 = vmatpush1.msra.mxu0 %v6987
  %7075 = vmatprep.subr.mxu0 0.0
  %7076 = vmatpush1.msra.mxu0 %v6988
  %7077 = vmatprep.subr.mxu0 0.0
  %7078 = vmatpush1.msra.mxu0 %v6989
  %7079 = vmatprep.subr.mxu0 0.0
  %7080 = vmatpush1.msra.mxu0 %v6990
  %7081 = vmatprep.subr.mxu0 0.0
  %7082 = vmatpush1.msra.mxu0 %v6991
  %7083 = vmatprep.subr.mxu0 0.0
  %7084 = vmatpush1.msra.mxu0 %v6992
  %7085 = vmatprep.subr.mxu0 0.0
  %7086 = vmatpush1.msra.mxu0 %v6993
  %7087 = vmatprep.subr.mxu0 0.0
  %7088 = vmatpush1.msra.mxu0 %v6994
  %7089 = vmatprep.subr.mxu0 0.0
  %7090 = vmatpush1.msra.mxu0 %v6995
  %7091 = vmatprep.subr.mxu0 0.0
  %7092 = vmatpush1.msra.mxu0 %v6996
  %7093 = vmatprep.mubr.f32.mxu0 %v6962
  %7094 = vmatmul.mubr.f32.gmra.mrb[0].mxu0 %v6961
  %v7095 = vpop.f32.mrb[0].mxu0
  %v7096 = vadd.f32 0.0, %v7095
  %v7097 = vpop.f32.mrb[0].mxu0
  %7098 = vdwg.mxu0
  %7099 = vmatprep.subr.mxu0 0.0
  %7100 = vmatpush1.msra.mxu0 %v6997
  %7101 = vmatprep.subr.mxu0 0.0
  %7102 = vmatpush1.msra.mxu0 %v6998
  %7103 = vmatprep.subr.mxu0 0.0
  %7104 = vmatpush1.msra.mxu0 %v6999
  %7105 = vmatprep.subr.mxu0 0.0
  %7106 = vmatpush1.msra.mxu0 %v7000
  %7107 = vmatprep.subr.mxu0 0.0
  %7108 = vmatpush1.msra.mxu0 %v7001
  %7109 = vmatprep.subr.mxu0 0.0
  %7110 = vmatpush1.msra.mxu0 %v7002
  %7111 = vmatprep.subr.mxu0 0.0
  %7112 = vmatpush1.msra.mxu0 %v7003
  %7113 = vmatprep.subr.mxu0 0.0
  %7114 = vmatpush1.msra.mxu0 %v7004
  %7115 = vmatprep.subr.mxu0 0.0
  %7116 = vmatpush1.msra.mxu0 %v7005
  %7117 = vmatprep.subr.mxu0 0.0
  %7118 = vmatpush1.msra.mxu0 %v7006
  %7119 = vmatprep.subr.mxu0 0.0
  %7120 = vmatpush1.msra.mxu0 %v7007
  %7121 = vmatprep.subr.mxu0 0.0
  %7122 = vmatpush1.msra.mxu0 %v7008
  %7123 = vmatprep.subr.mxu0 0.0
  %7124 = vmatpush1.msra.mxu0 %v7009
  %7125 = vmatprep.subr.mxu0 0.0
  %7126 = vmatpush1.msra.mxu0 %v7010
  %7127 = vmatprep.subr.mxu0 0.0
  %7128 = vmatpush1.msra.mxu0 %v7011
  %7129 = vmatprep.subr.mxu0 0.0
  %7130 = vmatpush1.msra.mxu0 %v7012
  %7131 = vmatprep.subr.mxu0 0.0
  %7132 = vmatpush1.msra.mxu0 %v7013
  %7133 = vmatprep.subr.mxu0 0.0
  %7134 = vmatpush1.msra.mxu0 %v7014
  %7135 = vmatprep.subr.mxu0 0.0
  %7136 = vmatpush1.msra.mxu0 %v7015
  %7137 = vmatprep.subr.mxu0 0.0
  %7138 = vmatpush1.msra.mxu0 %v7016
  %7139 = vmatprep.subr.mxu0 0.0
  %7140 = vmatpush1.msra.mxu0 %v7017
  %7141 = vmatprep.subr.mxu0 0.0
  %7142 = vmatpush1.msra.mxu0 %v7018
  %7143 = vmatprep.subr.mxu0 0.0
  %7144 = vmatpush1.msra.mxu0 %v7019
  %7145 = vmatprep.subr.mxu0 0.0
  %7146 = vmatpush1.msra.mxu0 %v7020
  %7147 = vmatprep.subr.mxu0 0.0
  %7148 = vmatpush1.msra.mxu0 %v7021
  %7149 = vmatprep.subr.mxu0 0.0
  %7150 = vmatpush1.msra.mxu0 %v7022
  %7151 = vmatprep.subr.mxu0 0.0
  %7152 = vmatpush1.msra.mxu0 %v7023
  %7153 = vmatprep.subr.mxu0 0.0
  %7154 = vmatpush1.msra.mxu0 %v7024
  %7155 = vmatprep.subr.mxu0 0.0
  %7156 = vmatpush1.msra.mxu0 %v7025
  %7157 = vmatprep.subr.mxu0 0.0
  %7158 = vmatpush1.msra.mxu0 %v7026
  %7159 = vmatprep.subr.mxu0 0.0
  %7160 = vmatpush1.msra.mxu0 %v7027
  %7161 = vmatprep.subr.mxu0 0.0
  %7162 = vmatpush1.msra.mxu0 %v7028
  %7163 = vmatprep.mubr.f32.mxu0 %v6964
  %7164 = vmatmul.mubr.f32.gmra.mrb[0].mxu0 %v6963
  %v7165 = vpop.f32.mrb[0].mxu0
  %v7166 = vadd.f32 %v7096, %v7165
  %v7167 = vpop.f32.mrb[0].mxu0
  %7168 = vdwg.mxu0
  %v7169 = vmul.f32 %v7166, 0.0025510204
  %v7170 = vmul.f32 %v7169, %v7169
  %v7172 = vrot.slane %v7170, 7
  %v7174 = vsub.f32 %v7169, %v7172
  %v7175 = vmax.f32 %v7174, 0.0
  %v7176 = vld [vmem:[%s5] sm:$0x1]
  %v7177 = vadd.f32 %v7175, 1e-05
  %v7178 = vrsqrt.pop %v7177
  %v7181 = vunpack.c.l.s4 1966171168
  %v7182 = vunpack.c.0.s8 %v7181
  %v7183 = vlaneseq
  %v7184 = vshrl.u32 %v7183, 7
  %v7185 = vsub.s32 %v7182, %v7184
  %v7186 = vrot.slane %v7178, %v7185
  %v7187 = vcombine.high %v7186, %v7186
  %v7189 = vunpack.c.l.s4 1966171168
  %v7190 = vunpack.c.0.s8 %v7189
  %v7191 = vlaneseq
  %v7192 = vshrl.u32 %v7191, 7
  %v7193 = vsub.s32 %v7190, %v7192
  %v7194 = vrot.slane %v7187, %v7193
  %v7196 = vmul.f32 %v7176, %v7194
  %v7197 = vld [vmem:[%s6] sm:$0x1]
  %v7198 = vmul.f32 %v7169, %v7196
  %v7199 = vsub.f32 %v7197, %v7198
  %v7201 = vlaneseq
  %v7202 = vshrl.u32 %v7201, 7
  %v7203 = vsub.s32 0, %v7202
  %v7204 = vrot.slane %v7199, %v7203
  %v7206 = vsel %vm6960, %v7196, %v7204
  %v7207 = vld [vmem:[%s10] sm:$0xff]
  %v7208 = vld [vmem:[%s10 + $0x8] sm:$0xff]
  %v7209 = vld [vmem:[%s10 + $0x10] sm:$0xff]
  %v7210 = vld [vmem:[%s10 + $0x18] sm:$0xff]
  %v7211 = vld [vmem:[%s10 + $0x20] sm:$0xff]
  %v7212 = vld [vmem:[%s10 + $0x28] sm:$0xff]
  %v7213 = vld [vmem:[%s10 + $0x30] sm:$0xff]
  %v7214 = vld [vmem:[%s10 + $0x38] sm:$0xff]
  %v7215 = vld [vmem:[%s10 + $0x40] sm:$0xff]
  %v7216 = vld [vmem:[%s10 + $0x48] sm:$0xff]
  %v7217 = vld [vmem:[%s10 + $0x50] sm:$0xff]
  %v7218 = vld [vmem:[%s10 + $0x58] sm:$0xff]
  %v7219 = vld [vmem:[%s10 + $0x60] sm:$0xff]
  %v7220 = vld [vmem:[%s10 + $0x68] sm:$0xff]
  %v7221 = vld [vmem:[%s10 + $0x70] sm:$0xff]
  %v7222 = vld [vmem:[%s10 + $0x78] sm:$0xff]
  %vm7223 = vcmask 261120
  %v7225 = vsel %vm7223, %v7206, 0
  %7227 = vmatprep.subr.mxu0 %v7208
  %7228 = vmatpush1.msra.mxu0 %v7207
  %7229 = vmatprep.subr.mxu0 %v7212
  %7230 = vmatpush1.msra.mxu0 %v7211
  %7231 = vmatprep.subr.mxu0 %v7216
  %7232 = vmatpush1.msra.mxu0 %v7215
  %7233 = vmatprep.subr.mxu0 %v7220
  %7234 = vmatpush1.msra.mxu0 %v7219
  %7235 = vmatprep.subr.mxu0 0.0
  %7236 = vmatpush1.msra.mxu0 0.0
  %7237 = vmatprep.subr.mxu0 0.0
  %7238 = vmatpush1.msra.mxu0 0.0
  %7239 = vmatprep.subr.mxu0 0.0
  %7240 = vmatpush1.msra.mxu0 0.0
  %7241 = vmatprep.subr.mxu0 0.0
  %7242 = vmatpush1.msra.mxu0 0.0
  %7243 = vmatprep.subr.mxu0 0.0
  %7244 = vmatpush1.msra.mxu0 0.0
  %7245 = vmatprep.subr.mxu0 0.0
  %7246 = vmatpush1.msra.mxu0 0.0
  %7247 = vmatprep.subr.mxu0 0.0
  %7248 = vmatpush1.msra.mxu0 0.0
  %7249 = vmatprep.subr.mxu0 0.0
  %7250 = vmatpush1.msra.mxu0 0.0
  %7251 = vmatprep.subr.mxu0 0.0
  %7252 = vmatpush1.msra.mxu0 0.0
  %7253 = vmatprep.subr.mxu0 0.0
  %7254 = vmatpush1.msra.mxu0 0.0
  %7255 = vmatprep.subr.mxu0 0.0
  %7256 = vmatpush1.msra.mxu0 0.0
  %7257 = vmatprep.subr.mxu0 0.0
  %7258 = vmatpush1.msra.mxu0 0.0
  %7259 = vmatprep.subr.mxu0 0.0
  %7260 = vmatpush1.msra.mxu0 0.0
  %7261 = vmatprep.subr.mxu0 0.0
  %7262 = vmatpush1.msra.mxu0 0.0
  %7263 = vmatprep.subr.mxu0 0.0
  %7264 = vmatpush1.msra.mxu0 0.0
  %7265 = vmatprep.subr.mxu0 0.0
  %7266 = vmatpush1.msra.mxu0 0.0
  %7267 = vmatprep.subr.mxu0 0.0
  %7268 = vmatpush1.msra.mxu0 0.0
  %7269 = vmatprep.subr.mxu0 0.0
  %7270 = vmatpush1.msra.mxu0 0.0
  %7271 = vmatprep.subr.mxu0 0.0
  %7272 = vmatpush1.msra.mxu0 0.0
  %7273 = vmatprep.subr.mxu0 0.0
  %7274 = vmatpush1.msra.mxu0 0.0
  %7275 = vmatprep.subr.mxu0 0.0
  %7276 = vmatpush1.msra.mxu0 0.0
  %7277 = vmatprep.subr.mxu0 0.0
  %7278 = vmatpush1.msra.mxu0 0.0
  %7279 = vmatprep.subr.mxu0 0.0
  %7280 = vmatpush1.msra.mxu0 0.0
  %7281 = vmatprep.subr.mxu0 0.0
  %7282 = vmatpush1.msra.mxu0 0.0
  %7283 = vmatprep.subr.mxu0 0.0
  %7284 = vmatpush1.msra.mxu0 0.0
  %7285 = vmatprep.subr.mxu0 0.0
  %7286 = vmatpush1.msra.mxu0 0.0
  %7287 = vmatprep.subr.mxu0 0.0
  %7288 = vmatpush1.msra.mxu0 0.0
  %7289 = vmatprep.subr.mxu0 0.0
  %7290 = vmatpush1.msra.mxu0 0.0
  %7291 = vmatprep.mubr.f32.mxu0 0.0
  %7292 = vmatmul.mubr.f32.gmra.mrb[0].mxu0 %v7225
  %v7293 = vpop.f32.mrb[0].mxu0
  %v7294 = vadd.f32 0.0, %v7293
  %v7295 = vpop.f32.mrb[0].mxu0
  %v7296 = vadd.f32 0.0, %v7295
  %7297 = vdwg.mxu0
  %7298 = vmatprep.subr.mxu0 %v7210
  %7299 = vmatpush1.msra.mxu0 %v7209
  %7300 = vmatprep.subr.mxu0 %v7214
  %7301 = vmatpush1.msra.mxu0 %v7213
  %7302 = vmatprep.subr.mxu0 %v7218
  %7303 = vmatpush1.msra.mxu0 %v7217
  %7304 = vmatprep.subr.mxu0 %v7222
  %7305 = vmatpush1.msra.mxu0 %v7221
  %7306 = vmatprep.subr.mxu0 0.0
  %7307 = vmatpush1.msra.mxu0 0.0
  %7308 = vmatprep.subr.mxu0 0.0
  %7309 = vmatpush1.msra.mxu0 0.0
  %7310 = vmatprep.subr.mxu0 0.0
  %7311 = vmatpush1.msra.mxu0 0.0
  %7312 = vmatprep.subr.mxu0 0.0
  %7313 = vmatpush1.msra.mxu0 0.0
  %7314 = vmatprep.subr.mxu0 0.0
  %7315 = vmatpush1.msra.mxu0 0.0
  %7316 = vmatprep.subr.mxu0 0.0
  %7317 = vmatpush1.msra.mxu0 0.0
  %7318 = vmatprep.subr.mxu0 0.0
  %7319 = vmatpush1.msra.mxu0 0.0
  %7320 = vmatprep.subr.mxu0 0.0
  %7321 = vmatpush1.msra.mxu0 0.0
  %7322 = vmatprep.subr.mxu0 0.0
  %7323 = vmatpush1.msra.mxu0 0.0
  %7324 = vmatprep.subr.mxu0 0.0
  %7325 = vmatpush1.msra.mxu0 0.0
  %7326 = vmatprep.subr.mxu0 0.0
  %7327 = vmatpush1.msra.mxu0 0.0
  %7328 = vmatprep.subr.mxu0 0.0
  %7329 = vmatpush1.msra.mxu0 0.0
  %7330 = vmatprep.subr.mxu0 0.0
  %7331 = vmatpush1.msra.mxu0 0.0
  %7332 = vmatprep.subr.mxu0 0.0
  %7333 = vmatpush1.msra.mxu0 0.0
  %7334 = vmatprep.subr.mxu0 0.0
  %7335 = vmatpush1.msra.mxu0 0.0
  %7336 = vmatprep.subr.mxu0 0.0
  %7337 = vmatpush1.msra.mxu0 0.0
  %7338 = vmatprep.subr.mxu0 0.0
  %7339 = vmatpush1.msra.mxu0 0.0
  %7340 = vmatprep.subr.mxu0 0.0
  %7341 = vmatpush1.msra.mxu0 0.0
  %7342 = vmatprep.subr.mxu0 0.0
  %7343 = vmatpush1.msra.mxu0 0.0
  %7344 = vmatprep.subr.mxu0 0.0
  %7345 = vmatpush1.msra.mxu0 0.0
  %7346 = vmatprep.subr.mxu0 0.0
  %7347 = vmatpush1.msra.mxu0 0.0
  %7348 = vmatprep.subr.mxu0 0.0
  %7349 = vmatpush1.msra.mxu0 0.0
  %7350 = vmatprep.subr.mxu0 0.0
  %7351 = vmatpush1.msra.mxu0 0.0
  %7352 = vmatprep.subr.mxu0 0.0
  %7353 = vmatpush1.msra.mxu0 0.0
  %7354 = vmatprep.subr.mxu0 0.0
  %7355 = vmatpush1.msra.mxu0 0.0
  %7356 = vmatprep.subr.mxu0 0.0
  %7357 = vmatpush1.msra.mxu0 0.0
  %7358 = vmatprep.subr.mxu0 0.0
  %7359 = vmatpush1.msra.mxu0 0.0
  %7360 = vmatprep.subr.mxu0 0.0
  %7361 = vmatpush1.msra.mxu0 0.0
  %7362 = vmatprep.mubr.f32.mxu0 0.0
  %7363 = vmatmul.mubr.f32.gmra.mrb[0].mxu0 %v7225
  %v7364 = vpop.f32.mrb[0].mxu0
  %v7365 = vadd.f32 0.0, %v7364
  %v7366 = vpop.f32.mrb[0].mxu0
  %v7367 = vadd.f32 0.0, %v7366
  %7368 = vdwg.mxu0
  %v7369 = vlaneseq
  %v7370 = vshrl.u32 %v7369, 7
  %v7371 = vsub.s32 0, %v7370
  %v7372 = vrot.slane %v7294, %v7371
  %v7373 = vlaneseq
  %v7374 = vshrl.u32 %v7373, 7
  %v7375 = vsub.s32 0, %v7374
  %v7376 = vrot.slane %v7296, %v7375
  %v7377 = vlaneseq
  %v7378 = vshrl.u32 %v7377, 7
  %v7379 = vsub.s32 0, %v7378
  %v7380 = vrot.slane %v7365, %v7379
  %v7381 = vlaneseq
  %v7382 = vshrl.u32 %v7381, 7
  %v7383 = vsub.s32 0, %v7382
  %v7384 = vrot.slane %v7367, %v7383
  %v7385 = vmul.f32 %v4366, %v7372
  %v7386 = vmul.f32 %v4368, %v7376
  %v7387 = vmul.f32 %v4495, %v7380
  %v7388 = vmul.f32 %v4497, %v7384
  %v7389 = vmul.f32 %v4370, %v7372
  %v7390 = vmul.f32 %v4372, %v7376
  %v7391 = vmul.f32 %v4499, %v7380
  %v7392 = vmul.f32 %v4501, %v7384
  %v7393 = vlaneseq
  %v7394 = vshrl.u32 %v7393, 7
  %v7395 = vsub.s32 1, %v7394
  %v7396 = vrot.slane %v7294, %v7395
  %v7397 = vlaneseq
  %v7398 = vshrl.u32 %v7397, 7
  %v7399 = vsub.s32 1, %v7398
  %v7400 = vrot.slane %v7296, %v7399
  %v7401 = vlaneseq
  %v7402 = vshrl.u32 %v7401, 7
  %v7403 = vsub.s32 1, %v7402
  %v7404 = vrot.slane %v7365, %v7403
  %v7405 = vlaneseq
  %v7406 = vshrl.u32 %v7405, 7
  %v7407 = vsub.s32 1, %v7406
  %v7408 = vrot.slane %v7367, %v7407
  %v7409 = vadd.f32 %v7385, %v7396
  %v7410 = vadd.f32 %v7386, %v7400
  %v7411 = vadd.f32 %v7387, %v7404
  %v7412 = vadd.f32 %v7388, %v7408
  %v7413 = vadd.f32 %v7389, %v7396
  %v7414 = vadd.f32 %v7390, %v7400
  %v7415 = vadd.f32 %v7391, %v7404
  %v7416 = vadd.f32 %v7392, %v7408
  %v7417 = vmax.f32 %v7409, 0.0
  %v7418 = vmax.f32 %v7410, 0.0
  %v7419 = vmax.f32 %v7411, 0.0
  %v7420 = vmax.f32 %v7412, 0.0
  %v7421 = vmax.f32 %v7413, 0.0
  %v7422 = vmax.f32 %v7414, 0.0
  %v7423 = vmax.f32 %v7415, 0.0
  %v7424 = vmax.f32 %v7416, 0.0
  %vm7433 = vcmask 1041408
  %v7434 = vrot.slane %v7417, 6
  %v7435 = vrot.slane %v7418, 6
  %v7436 = vrot.slane %v7419, 6
  %v7437 = vrot.slane %v7420, 6
  %v7438 = vrot.slane %v7421, 6
  %v7439 = vsel %vm7433, %v7434, %v7438
  %v7440 = vrot.slane %v7422, 6
  %v7441 = vsel %vm7433, %v7435, %v7440
  %v7442 = vrot.slane %v7423, 6
  %v7443 = vsel %vm7433, %v7436, %v7442
  %v7444 = vrot.slane %v7424, 6
  %v7445 = vsel %vm7433, %v7437, %v7444
  %7454 = vst [vmem:[#allocation3] sm:$0xfc] %v7434
  %7455 = vst [vmem:[#allocation3 + $0x8] sm:$0xfc] %v7435
  %7456 = vst [vmem:[#allocation3 + $0x10] sm:$0xfc] %v7436
  %7457 = vst [vmem:[#allocation3 + $0x18] sm:$0xfc] %v7437
  %7458 = vst [vmem:[#allocation3 + $0x20] sm:$0xff] %v7439
  %7459 = vst [vmem:[#allocation3 + $0x28] sm:$0xff] %v7441
  %7460 = vst [vmem:[#allocation3 + $0x30] sm:$0xff] %v7443
  %7461 = vst [vmem:[#allocation3 + $0x38] sm:$0xff] %v7445
  %v7462 = vmul.f32 %v6670, %v7372
  %v7463 = vmul.f32 %v6672, %v7376
  %v7464 = vmul.f32 %v6799, %v7380
  %v7465 = vmul.f32 %v6801, %v7384
  %v7466 = vmul.f32 %v6674, %v7372
  %v7467 = vmul.f32 %v6676, %v7376
  %v7468 = vmul.f32 %v6803, %v7380
  %v7469 = vmul.f32 %v6805, %v7384
  %v7470 = vadd.f32 %v7462, %v7396
  %v7471 = vadd.f32 %v7463, %v7400
  %v7472 = vadd.f32 %v7464, %v7404
  %v7473 = vadd.f32 %v7465, %v7408
  %v7474 = vadd.f32 %v7466, %v7396
  %v7475 = vadd.f32 %v7467, %v7400
  %v7476 = vadd.f32 %v7468, %v7404
  %v7477 = vadd.f32 %v7469, %v7408
  %v7478 = vmax.f32 %v7470, 0.0
  %v7479 = vmax.f32 %v7471, 0.0
  %v7480 = vmax.f32 %v7472, 0.0
  %v7481 = vmax.f32 %v7473, 0.0
  %v7482 = vmax.f32 %v7474, 0.0
  %v7483 = vmax.f32 %v7475, 0.0
  %v7484 = vmax.f32 %v7476, 0.0
  %v7485 = vmax.f32 %v7477, 0.0
  %v7494 = vrot.slane %v7478, 6
  %v7495 = vrot.slane %v7479, 6
  %v7496 = vrot.slane %v7480, 6
  %v7497 = vrot.slane %v7481, 6
  %v7498 = vrot.slane %v7482, 6
  %v7499 = vsel %vm7433, %v7494, %v7498
  %v7500 = vrot.slane %v7483, 6
  %v7501 = vsel %vm7433, %v7495, %v7500
  %v7502 = vrot.slane %v7484, 6
  %v7503 = vsel %vm7433, %v7496, %v7502
  %v7504 = vrot.slane %v7485, 6
  %v7505 = vsel %vm7433, %v7497, %v7504
  %7514 = vst [vmem:[#allocation4] sm:$0xfc] %v7494
  %7515 = vst [vmem:[#allocation4 + $0x8] sm:$0xfc] %v7495
  %7516 = vst [vmem:[#allocation4 + $0x10] sm:$0xfc] %v7496
  %7517 = vst [vmem:[#allocation4 + $0x18] sm:$0xfc] %v7497
  %7518 = vst [vmem:[#allocation4 + $0x20] sm:$0xff] %v7499
  %7519 = vst [vmem:[#allocation4 + $0x28] sm:$0xff] %v7501
  %7520 = vst [vmem:[#allocation4 + $0x30] sm:$0xff] %v7503
  %7521 = vst [vmem:[#allocation4 + $0x38] sm:$0xff] %v7505
  %v7522 = vld [vmem:[#allocation4] sm:$0xff]
  %v7523 = vld [vmem:[#allocation4 + $0x8] sm:$0xff]
  %v7524 = vld [vmem:[#allocation4 + $0x10] sm:$0xff]
  %v7525 = vld [vmem:[#allocation4 + $0x18] sm:$0xff]
  %v7526 = vld [vmem:[#allocation4 + $0x20] sm:$0x3f]
  %v7527 = vld [vmem:[#allocation4 + $0x28] sm:$0x3f]
  %v7528 = vld [vmem:[#allocation4 + $0x30] sm:$0x3f]
  %v7529 = vld [vmem:[#allocation4 + $0x38] sm:$0x3f]
  %v7530 = vpack.c.bf16 %v7526, %v7522
  %v7531 = vpack.c.bf16 %v7527, %v7523
  %v7532 = vpack.c.bf16 %v7528, %v7524
  %v7533 = vpack.c.bf16 %v7529, %v7525
  %v7534 = vld [vmem:[%s4] sm:$0xff]
  %v7535 = vld [vmem:[%s4 + $0x8] sm:$0xff]
  %v7536 = vld [vmem:[%s4 + $0x10] sm:$0xff]
  %v7537 = vld [vmem:[%s4 + $0x18] sm:$0xff]
  %v7538 = vld [vmem:[%s4 + $0x20] sm:$0xff]
  %v7539 = vld [vmem:[%s4 + $0x28] sm:$0xff]
  %v7540 = vld [vmem:[%s4 + $0x30] sm:$0xff]
  %v7541 = vld [vmem:[%s4 + $0x38] sm:$0xff]
  %v7542 = vld [vmem:[%s4 + $0x40] sm:$0xff]
  %v7543 = vld [vmem:[%s4 + $0x48] sm:$0xff]
  %v7544 = vld [vmem:[%s4 + $0x50] sm:$0xff]
  %v7545 = vld [vmem:[%s4 + $0x58] sm:$0xff]
  %v7546 = vld [vmem:[%s4 + $0x60] sm:$0xff]
  %v7547 = vld [vmem:[%s4 + $0x68] sm:$0xff]
  %v7548 = vld [vmem:[%s4 + $0x70] sm:$0xff]
  %v7549 = vld [vmem:[%s4 + $0x78] sm:$0xff]
  %v7550 = vld [vmem:[%s4 + $0x80] sm:$0xff]
  %v7551 = vld [vmem:[%s4 + $0x88] sm:$0xff]
  %v7552 = vld [vmem:[%s4 + $0x90] sm:$0xff]
  %v7553 = vld [vmem:[%s4 + $0x98] sm:$0xff]
  %v7554 = vld [vmem:[%s4 + $0xa0] sm:$0xff]
  %v7555 = vld [vmem:[%s4 + $0xa8] sm:$0xff]
  %v7556 = vld [vmem:[%s4 + $0xb0] sm:$0xff]
  %v7557 = vld [vmem:[%s4 + $0xb8] sm:$0xff]
  %v7558 = vld [vmem:[%s4 + $0xc0] sm:$0xff]
  %v7559 = vld [vmem:[%s4 + $0xc8] sm:$0xff]
  %v7560 = vld [vmem:[%s4 + $0xd0] sm:$0xff]
  %v7561 = vld [vmem:[%s4 + $0xd8] sm:$0xff]
  %v7562 = vld [vmem:[%s4 + $0xe0] sm:$0xff]
  %v7563 = vld [vmem:[%s4 + $0xe8] sm:$0xff]
  %v7564 = vld [vmem:[%s4 + $0xf0] sm:$0xff]
  %v7565 = vld [vmem:[%s4 + $0xf8] sm:$0xff]
  %v7566 = vld [vmem:[%s4 + $0x100] sm:$0xff]
  %v7567 = vld [vmem:[%s4 + $0x108] sm:$0xff]
  %v7568 = vld [vmem:[%s4 + $0x110] sm:$0xff]
  %v7569 = vld [vmem:[%s4 + $0x118] sm:$0xff]
  %v7570 = vld [vmem:[%s4 + $0x120] sm:$0xff]
  %v7571 = vld [vmem:[%s4 + $0x128] sm:$0xff]
  %v7572 = vld [vmem:[%s4 + $0x130] sm:$0xff]
  %v7573 = vld [vmem:[%s4 + $0x138] sm:$0xff]
  %v7574 = vld [vmem:[%s4 + $0x140] sm:$0xff]
  %v7575 = vld [vmem:[%s4 + $0x148] sm:$0xff]
  %v7576 = vld [vmem:[%s4 + $0x150] sm:$0xff]
  %v7577 = vld [vmem:[%s4 + $0x158] sm:$0xff]
  %v7578 = vld [vmem:[%s4 + $0x160] sm:$0xff]
  %v7579 = vld [vmem:[%s4 + $0x168] sm:$0xff]
  %v7580 = vld [vmem:[%s4 + $0x170] sm:$0xff]
  %v7581 = vld [vmem:[%s4 + $0x178] sm:$0xff]
  %v7582 = vld [vmem:[%s4 + $0x180] sm:$0xff]
  %v7583 = vld [vmem:[%s4 + $0x188] sm:$0xff]
  %v7584 = vld [vmem:[%s4 + $0x190] sm:$0xff]
  %v7585 = vld [vmem:[%s4 + $0x198] sm:$0xff]
  %v7586 = vld [vmem:[%s4 + $0x1a0] sm:$0xff]
  %v7587 = vld [vmem:[%s4 + $0x1a8] sm:$0xff]
  %v7588 = vld [vmem:[%s4 + $0x1b0] sm:$0xff]
  %v7589 = vld [vmem:[%s4 + $0x1b8] sm:$0xff]
  %v7590 = vld [vmem:[%s4 + $0x1c0] sm:$0xff]
  %v7591 = vld [vmem:[%s4 + $0x1c8] sm:$0xff]
  %v7592 = vld [vmem:[%s4 + $0x1d0] sm:$0xff]
  %v7593 = vld [vmem:[%s4 + $0x1d8] sm:$0xff]
  %v7594 = vld [vmem:[%s4 + $0x1e0] sm:$0xff]
  %v7595 = vld [vmem:[%s4 + $0x1e8] sm:$0xff]
  %v7596 = vld [vmem:[%s4 + $0x1f0] sm:$0xff]
  %v7597 = vld [vmem:[%s4 + $0x1f8] sm:$0xff]
  %v7598 = vld [vmem:[%s4 + $0x200] sm:$0xff]
  %v7599 = vld [vmem:[%s4 + $0x208] sm:$0xff]
  %v7600 = vld [vmem:[%s4 + $0x210] sm:$0xff]
  %v7601 = vld [vmem:[%s4 + $0x218] sm:$0xff]
  %v7602 = vld [vmem:[%s4 + $0x220] sm:$0xff]
  %v7603 = vld [vmem:[%s4 + $0x228] sm:$0xff]
  %v7604 = vld [vmem:[%s4 + $0x230] sm:$0xff]
  %v7605 = vld [vmem:[%s4 + $0x238] sm:$0xff]
  %v7606 = vld [vmem:[%s4 + $0x240] sm:$0xff]
  %v7607 = vld [vmem:[%s4 + $0x248] sm:$0xff]
  %v7608 = vld [vmem:[%s4 + $0x250] sm:$0xff]
  %v7609 = vld [vmem:[%s4 + $0x258] sm:$0xff]
  %v7610 = vld [vmem:[%s4 + $0x260] sm:$0xff]
  %v7611 = vld [vmem:[%s4 + $0x268] sm:$0xff]
  %v7612 = vld [vmem:[%s4 + $0x270] sm:$0xff]
  %v7613 = vld [vmem:[%s4 + $0x278] sm:$0xff]
  %v7614 = vld [vmem:[%s4 + $0x280] sm:$0xff]
  %v7615 = vld [vmem:[%s4 + $0x288] sm:$0xff]
  %v7616 = vld [vmem:[%s4 + $0x290] sm:$0xff]
  %v7617 = vld [vmem:[%s4 + $0x298] sm:$0xff]
  %v7618 = vld [vmem:[%s4 + $0x2a0] sm:$0xff]
  %v7619 = vld [vmem:[%s4 + $0x2a8] sm:$0xff]
  %v7620 = vld [vmem:[%s4 + $0x2b0] sm:$0xff]
  %v7621 = vld [vmem:[%s4 + $0x2b8] sm:$0xff]
  %v7622 = vld [vmem:[%s4 + $0x2c0] sm:$0xff]
  %v7623 = vld [vmem:[%s4 + $0x2c8] sm:$0xff]
  %v7624 = vld [vmem:[%s4 + $0x2d0] sm:$0xff]
  %v7625 = vld [vmem:[%s4 + $0x2d8] sm:$0xff]
  %v7626 = vld [vmem:[%s4 + $0x2e0] sm:$0xff]
  %v7627 = vld [vmem:[%s4 + $0x2e8] sm:$0xff]
  %v7628 = vld [vmem:[%s4 + $0x2f0] sm:$0xff]
  %v7629 = vld [vmem:[%s4 + $0x2f8] sm:$0xff]
  %v7630 = vld [vmem:[%s4 + $0x300] sm:$0xff]
  %v7631 = vld [vmem:[%s4 + $0x308] sm:$0xff]
  %v7632 = vld [vmem:[%s4 + $0x310] sm:$0xff]
  %v7633 = vld [vmem:[%s4 + $0x318] sm:$0xff]
  %v7634 = vld [vmem:[%s4 + $0x320] sm:$0xff]
  %v7635 = vld [vmem:[%s4 + $0x328] sm:$0xff]
  %v7636 = vld [vmem:[%s4 + $0x330] sm:$0xff]
  %v7637 = vld [vmem:[%s4 + $0x338] sm:$0xff]
  %v7638 = vld [vmem:[%s4 + $0x340] sm:$0xff]
  %v7639 = vld [vmem:[%s4 + $0x348] sm:$0xff]
  %v7640 = vld [vmem:[%s4 + $0x350] sm:$0xff]
  %v7641 = vld [vmem:[%s4 + $0x358] sm:$0xff]
  %v7642 = vld [vmem:[%s4 + $0x360] sm:$0xff]
  %v7643 = vld [vmem:[%s4 + $0x368] sm:$0xff]
  %v7644 = vld [vmem:[%s4 + $0x370] sm:$0xff]
  %v7645 = vld [vmem:[%s4 + $0x378] sm:$0xff]
  %v7646 = vld [vmem:[%s4 + $0x380] sm:$0xff]
  %v7647 = vld [vmem:[%s4 + $0x388] sm:$0xff]
  %v7648 = vld [vmem:[%s4 + $0x390] sm:$0xff]
  %v7649 = vld [vmem:[%s4 + $0x398] sm:$0xff]
  %v7650 = vld [vmem:[%s4 + $0x3a0] sm:$0xff]
  %v7651 = vld [vmem:[%s4 + $0x3a8] sm:$0xff]
  %v7652 = vld [vmem:[%s4 + $0x3b0] sm:$0xff]
  %v7653 = vld [vmem:[%s4 + $0x3b8] sm:$0xff]
  %v7654 = vld [vmem:[%s4 + $0x3c0] sm:$0xff]
  %v7655 = vld [vmem:[%s4 + $0x3c8] sm:$0xff]
  %v7656 = vld [vmem:[%s4 + $0x3d0] sm:$0xff]
  %v7657 = vld [vmem:[%s4 + $0x3d8] sm:$0xff]
  %v7658 = vld [vmem:[%s4 + $0x3e0] sm:$0xff]
  %v7659 = vld [vmem:[%s4 + $0x3e8] sm:$0xff]
  %v7660 = vld [vmem:[%s4 + $0x3f0] sm:$0xff]
  %v7661 = vld [vmem:[%s4 + $0x3f8] sm:$0xff]
  %v7662 = vld [vmem:[#allocation3] sm:$0xfc]
  %v7663 = vld [vmem:[#allocation3 + $0x8] sm:$0xfc]
  %v7664 = vld [vmem:[#allocation3 + $0x10] sm:$0xfc]
  %v7665 = vld [vmem:[#allocation3 + $0x18] sm:$0xfc]
  %v7666 = vld [vmem:[#allocation3 + $0x20] sm:$0xff]
  %v7667 = vld [vmem:[#allocation3 + $0x28] sm:$0xff]
  %v7668 = vld [vmem:[#allocation3 + $0x30] sm:$0xff]
  %v7669 = vld [vmem:[#allocation3 + $0x38] sm:$0xff]
  %v7670 = vpack.c.bf16 %v7666, %v7662
  %v7671 = vpack.c.bf16 %v7667, %v7663
  %v7672 = vpack.c.bf16 %v7668, %v7664
  %v7673 = vpack.c.bf16 %v7669, %v7665
  %s7674 = scalar_lea.vmem %s4, 1024
  %v7675 = vld [vmem:[%s7674] sm:$0xff]
  %v7676 = vld [vmem:[%s7674 + $0x8] sm:$0xff]
  %v7677 = vld [vmem:[%s7674 + $0x10] sm:$0xff]
  %v7678 = vld [vmem:[%s7674 + $0x18] sm:$0xff]
  %v7679 = vld [vmem:[%s7674 + $0x20] sm:$0xff]
  %v7680 = vld [vmem:[%s7674 + $0x28] sm:$0xff]
  %v7681 = vld [vmem:[%s7674 + $0x30] sm:$0xff]
  %v7682 = vld [vmem:[%s7674 + $0x38] sm:$0xff]
  %v7683 = vld [vmem:[%s7674 + $0x40] sm:$0xff]
  %v7684 = vld [vmem:[%s7674 + $0x48] sm:$0xff]
  %v7685 = vld [vmem:[%s7674 + $0x50] sm:$0xff]
  %v7686 = vld [vmem:[%s7674 + $0x58] sm:$0xff]
  %v7687 = vld [vmem:[%s7674 + $0x60] sm:$0xff]
  %v7688 = vld [vmem:[%s7674 + $0x68] sm:$0xff]
  %v7689 = vld [vmem:[%s7674 + $0x70] sm:$0xff]
  %v7690 = vld [vmem:[%s7674 + $0x78] sm:$0xff]
  %v7691 = vld [vmem:[%s7674 + $0x80] sm:$0xff]
  %v7692 = vld [vmem:[%s7674 + $0x88] sm:$0xff]
  %v7693 = vld [vmem:[%s7674 + $0x90] sm:$0xff]
  %v7694 = vld [vmem:[%s7674 + $0x98] sm:$0xff]
  %v7695 = vld [vmem:[%s7674 + $0xa0] sm:$0xff]
  %v7696 = vld [vmem:[%s7674 + $0xa8] sm:$0xff]
  %v7697 = vld [vmem:[%s7674 + $0xb0] sm:$0xff]
  %v7698 = vld [vmem:[%s7674 + $0xb8] sm:$0xff]
  %v7699 = vld [vmem:[%s7674 + $0xc0] sm:$0xff]
  %v7700 = vld [vmem:[%s7674 + $0xc8] sm:$0xff]
  %v7701 = vld [vmem:[%s7674 + $0xd0] sm:$0xff]
  %v7702 = vld [vmem:[%s7674 + $0xd8] sm:$0xff]
  %v7703 = vld [vmem:[%s7674 + $0xe0] sm:$0xff]
  %v7704 = vld [vmem:[%s7674 + $0xe8] sm:$0xff]
  %v7705 = vld [vmem:[%s7674 + $0xf0] sm:$0xff]
  %v7706 = vld [vmem:[%s7674 + $0xf8] sm:$0xff]
  %v7707 = vld [vmem:[%s7674 + $0x100] sm:$0xff]
  %v7708 = vld [vmem:[%s7674 + $0x108] sm:$0xff]
  %v7709 = vld [vmem:[%s7674 + $0x110] sm:$0xff]
  %v7710 = vld [vmem:[%s7674 + $0x118] sm:$0xff]
  %v7711 = vld [vmem:[%s7674 + $0x120] sm:$0xff]
  %v7712 = vld [vmem:[%s7674 + $0x128] sm:$0xff]
  %v7713 = vld [vmem:[%s7674 + $0x130] sm:$0xff]
  %v7714 = vld [vmem:[%s7674 + $0x138] sm:$0xff]
  %v7715 = vld [vmem:[%s7674 + $0x140] sm:$0xff]
  %v7716 = vld [vmem:[%s7674 + $0x148] sm:$0xff]
  %v7717 = vld [vmem:[%s7674 + $0x150] sm:$0xff]
  %v7718 = vld [vmem:[%s7674 + $0x158] sm:$0xff]
  %v7719 = vld [vmem:[%s7674 + $0x160] sm:$0xff]
  %v7720 = vld [vmem:[%s7674 + $0x168] sm:$0xff]
  %v7721 = vld [vmem:[%s7674 + $0x170] sm:$0xff]
  %v7722 = vld [vmem:[%s7674 + $0x178] sm:$0xff]
  %v7723 = vld [vmem:[%s7674 + $0x180] sm:$0xff]
  %v7724 = vld [vmem:[%s7674 + $0x188] sm:$0xff]
  %v7725 = vld [vmem:[%s7674 + $0x190] sm:$0xff]
  %v7726 = vld [vmem:[%s7674 + $0x198] sm:$0xff]
  %v7727 = vld [vmem:[%s7674 + $0x1a0] sm:$0xff]
  %v7728 = vld [vmem:[%s7674 + $0x1a8] sm:$0xff]
  %v7729 = vld [vmem:[%s7674 + $0x1b0] sm:$0xff]
  %v7730 = vld [vmem:[%s7674 + $0x1b8] sm:$0xff]
  %v7731 = vld [vmem:[%s7674 + $0x1c0] sm:$0xff]
  %v7732 = vld [vmem:[%s7674 + $0x1c8] sm:$0xff]
  %v7733 = vld [vmem:[%s7674 + $0x1d0] sm:$0xff]
  %v7734 = vld [vmem:[%s7674 + $0x1d8] sm:$0xff]
  %v7735 = vld [vmem:[%s7674 + $0x1e0] sm:$0xff]
  %v7736 = vld [vmem:[%s7674 + $0x1e8] sm:$0xff]
  %v7737 = vld [vmem:[%s7674 + $0x1f0] sm:$0xff]
  %v7738 = vld [vmem:[%s7674 + $0x1f8] sm:$0xff]
  %v7739 = vld [vmem:[%s7674 + $0x200] sm:$0xff]
  %v7740 = vld [vmem:[%s7674 + $0x208] sm:$0xff]
  %v7741 = vld [vmem:[%s7674 + $0x210] sm:$0xff]
  %v7742 = vld [vmem:[%s7674 + $0x218] sm:$0xff]
  %v7743 = vld [vmem:[%s7674 + $0x220] sm:$0xff]
  %v7744 = vld [vmem:[%s7674 + $0x228] sm:$0xff]
  %v7745 = vld [vmem:[%s7674 + $0x230] sm:$0xff]
  %v7746 = vld [vmem:[%s7674 + $0x238] sm:$0xff]
  %v7747 = vld [vmem:[%s7674 + $0x240] sm:$0xff]
  %v7748 = vld [vmem:[%s7674 + $0x248] sm:$0xff]
  %v7749 = vld [vmem:[%s7674 + $0x250] sm:$0xff]
  %v7750 = vld [vmem:[%s7674 + $0x258] sm:$0xff]
  %v7751 = vld [vmem:[%s7674 + $0x260] sm:$0xff]
  %v7752 = vld [vmem:[%s7674 + $0x268] sm:$0xff]
  %v7753 = vld [vmem:[%s7674 + $0x270] sm:$0xff]
  %v7754 = vld [vmem:[%s7674 + $0x278] sm:$0xff]
  %v7755 = vld [vmem:[%s7674 + $0x280] sm:$0xff]
  %v7756 = vld [vmem:[%s7674 + $0x288] sm:$0xff]
  %v7757 = vld [vmem:[%s7674 + $0x290] sm:$0xff]
  %v7758 = vld [vmem:[%s7674 + $0x298] sm:$0xff]
  %v7759 = vld [vmem:[%s7674 + $0x2a0] sm:$0xff]
  %v7760 = vld [vmem:[%s7674 + $0x2a8] sm:$0xff]
  %v7761 = vld [vmem:[%s7674 + $0x2b0] sm:$0xff]
  %v7762 = vld [vmem:[%s7674 + $0x2b8] sm:$0xff]
  %v7763 = vld [vmem:[%s7674 + $0x2c0] sm:$0xff]
  %v7764 = vld [vmem:[%s7674 + $0x2c8] sm:$0xff]
  %v7765 = vld [vmem:[%s7674 + $0x2d0] sm:$0xff]
  %v7766 = vld [vmem:[%s7674 + $0x2d8] sm:$0xff]
  %v7767 = vld [vmem:[%s7674 + $0x2e0] sm:$0xff]
  %v7768 = vld [vmem:[%s7674 + $0x2e8] sm:$0xff]
  %v7769 = vld [vmem:[%s7674 + $0x2f0] sm:$0xff]
  %v7770 = vld [vmem:[%s7674 + $0x2f8] sm:$0xff]
  %v7771 = vld [vmem:[%s7674 + $0x300] sm:$0xff]
  %v7772 = vld [vmem:[%s7674 + $0x308] sm:$0xff]
  %v7773 = vld [vmem:[%s7674 + $0x310] sm:$0xff]
  %v7774 = vld [vmem:[%s7674 + $0x318] sm:$0xff]
  %v7775 = vld [vmem:[%s7674 + $0x320] sm:$0xff]
  %v7776 = vld [vmem:[%s7674 + $0x328] sm:$0xff]
  %v7777 = vld [vmem:[%s7674 + $0x330] sm:$0xff]
  %v7778 = vld [vmem:[%s7674 + $0x338] sm:$0xff]
  %v7779 = vld [vmem:[%s7674 + $0x340] sm:$0xff]
  %v7780 = vld [vmem:[%s7674 + $0x348] sm:$0xff]
  %v7781 = vld [vmem:[%s7674 + $0x350] sm:$0xff]
  %v7782 = vld [vmem:[%s7674 + $0x358] sm:$0xff]
  %v7783 = vld [vmem:[%s7674 + $0x360] sm:$0xff]
  %v7784 = vld [vmem:[%s7674 + $0x368] sm:$0xff]
  %v7785 = vld [vmem:[%s7674 + $0x370] sm:$0xff]
  %v7786 = vld [vmem:[%s7674 + $0x378] sm:$0xff]
  %v7787 = vld [vmem:[%s7674 + $0x380] sm:$0xff]
  %v7788 = vld [vmem:[%s7674 + $0x388] sm:$0xff]
  %v7789 = vld [vmem:[%s7674 + $0x390] sm:$0xff]
  %v7790 = vld [vmem:[%s7674 + $0x398] sm:$0xff]
  %v7791 = vld [vmem:[%s7674 + $0x3a0] sm:$0xff]
  %v7792 = vld [vmem:[%s7674 + $0x3a8] sm:$0xff]
  %v7793 = vld [vmem:[%s7674 + $0x3b0] sm:$0xff]
  %v7794 = vld [vmem:[%s7674 + $0x3b8] sm:$0xff]
  %v7795 = vld [vmem:[%s7674 + $0x3c0] sm:$0xff]
  %v7796 = vld [vmem:[%s7674 + $0x3c8] sm:$0xff]
  %v7797 = vld [vmem:[%s7674 + $0x3d0] sm:$0xff]
  %v7798 = vld [vmem:[%s7674 + $0x3d8] sm:$0xff]
  %v7799 = vld [vmem:[%s7674 + $0x3e0] sm:$0xff]
  %v7800 = vld [vmem:[%s7674 + $0x3e8] sm:$0xff]
  %v7801 = vld [vmem:[%s7674 + $0x3f0] sm:$0xff]
  %v7802 = vld [vmem:[%s7674 + $0x3f8] sm:$0xff]
  %v7807 = vrot.slane %v7670, 1
  %v7808 = vrot.slane %v7671, 1
  %v7809 = vrot.slane %v7672, 1
  %v7810 = vrot.slane %v7673, 1
  %v7943 = vunpack.c.l.b16 %v7675
  %v7944 = vunpack.c.h.b16 %v7675
  %v7945 = vunpack.c.l.b16 %v7676
  %v7946 = vunpack.c.h.b16 %v7676
  %v7947 = vunpack.c.l.b16 %v7677
  %v7948 = vunpack.c.h.b16 %v7677
  %v7949 = vunpack.c.l.b16 %v7678
  %v7950 = vunpack.c.h.b16 %v7678
  %v7951 = vunpack.c.l.b16 %v7679
  %v7952 = vunpack.c.h.b16 %v7679
  %v7953 = vunpack.c.l.b16 %v7680
  %v7954 = vunpack.c.h.b16 %v7680
  %v7955 = vunpack.c.l.b16 %v7681
  %v7956 = vunpack.c.h.b16 %v7681
  %v7957 = vunpack.c.l.b16 %v7682
  %v7958 = vunpack.c.h.b16 %v7682
  %v7959 = vunpack.c.l.b16 %v7683
  %v7960 = vunpack.c.h.b16 %v7683
  %v7961 = vunpack.c.l.b16 %v7684
  %v7962 = vunpack.c.h.b16 %v7684
  %v7963 = vunpack.c.l.b16 %v7685
  %v7964 = vunpack.c.h.b16 %v7685
  %v7965 = vunpack.c.l.b16 %v7686
  %v7966 = vunpack.c.h.b16 %v7686
  %v7967 = vunpack.c.l.b16 %v7687
  %v7968 = vunpack.c.h.b16 %v7687
  %v7969 = vunpack.c.l.b16 %v7688
  %v7970 = vunpack.c.h.b16 %v7688
  %v7971 = vunpack.c.l.b16 %v7689
  %v7972 = vunpack.c.h.b16 %v7689
  %v7973 = vunpack.c.l.b16 %v7690
  %v7974 = vunpack.c.h.b16 %v7690
  %v7975 = vunpack.c.l.b16 %v7691
  %v7976 = vunpack.c.h.b16 %v7691
  %v7977 = vunpack.c.l.b16 %v7692
  %v7978 = vunpack.c.h.b16 %v7692
  %v7979 = vunpack.c.l.b16 %v7693
  %v7980 = vunpack.c.h.b16 %v7693
  %v7981 = vunpack.c.l.b16 %v7694
  %v7982 = vunpack.c.h.b16 %v7694
  %v7983 = vunpack.c.l.b16 %v7695
  %v7984 = vunpack.c.h.b16 %v7695
  %v7985 = vunpack.c.l.b16 %v7696
  %v7986 = vunpack.c.h.b16 %v7696
  %v7987 = vunpack.c.l.b16 %v7697
  %v7988 = vunpack.c.h.b16 %v7697
  %v7989 = vunpack.c.l.b16 %v7698
  %v7990 = vunpack.c.h.b16 %v7698
  %v7991 = vunpack.c.l.b16 %v7699
  %v7992 = vunpack.c.h.b16 %v7699
  %v7993 = vunpack.c.l.b16 %v7700
  %v7994 = vunpack.c.h.b16 %v7700
  %v7995 = vunpack.c.l.b16 %v7701
  %v7996 = vunpack.c.h.b16 %v7701
  %v7997 = vunpack.c.l.b16 %v7702
  %v7998 = vunpack.c.h.b16 %v7702
  %v7999 = vunpack.c.l.b16 %v7703
  %v8000 = vunpack.c.h.b16 %v7703
  %v8001 = vunpack.c.l.b16 %v7704
  %v8002 = vunpack.c.h.b16 %v7704
  %v8003 = vunpack.c.l.b16 %v7705
  %v8004 = vunpack.c.h.b16 %v7705
  %v8005 = vunpack.c.l.b16 %v7706
  %v8006 = vunpack.c.h.b16 %v7706
  %v8007 = vunpack.c.l.b16 %v7707
  %v8008 = vunpack.c.h.b16 %v7707
  %v8009 = vunpack.c.l.b16 %v7708
  %v8010 = vunpack.c.h.b16 %v7708
  %v8011 = vunpack.c.l.b16 %v7709
  %v8012 = vunpack.c.h.b16 %v7709
  %v8013 = vunpack.c.l.b16 %v7710
  %v8014 = vunpack.c.h.b16 %v7710
  %v8015 = vunpack.c.l.b16 %v7711
  %v8016 = vunpack.c.h.b16 %v7711
  %v8017 = vunpack.c.l.b16 %v7712
  %v8018 = vunpack.c.h.b16 %v7712
  %v8019 = vunpack.c.l.b16 %v7713
  %v8020 = vunpack.c.h.b16 %v7713
  %v8021 = vunpack.c.l.b16 %v7714
  %v8022 = vunpack.c.h.b16 %v7714
  %v8023 = vunpack.c.l.b16 %v7715
  %v8024 = vunpack.c.h.b16 %v7715
  %v8025 = vunpack.c.l.b16 %v7716
  %v8026 = vunpack.c.h.b16 %v7716
  %v8027 = vunpack.c.l.b16 %v7717
  %v8028 = vunpack.c.h.b16 %v7717
  %v8029 = vunpack.c.l.b16 %v7718
  %v8030 = vunpack.c.h.b16 %v7718
  %v8031 = vunpack.c.l.b16 %v7719
  %v8032 = vunpack.c.h.b16 %v7719
  %v8033 = vunpack.c.l.b16 %v7720
  %v8034 = vunpack.c.h.b16 %v7720
  %v8035 = vunpack.c.l.b16 %v7721
  %v8036 = vunpack.c.h.b16 %v7721
  %v8037 = vunpack.c.l.b16 %v7722
  %v8038 = vunpack.c.h.b16 %v7722
  %v8039 = vunpack.c.l.b16 %v7723
  %v8040 = vunpack.c.h.b16 %v7723
  %v8041 = vunpack.c.l.b16 %v7724
  %v8042 = vunpack.c.h.b16 %v7724
  %v8043 = vunpack.c.l.b16 %v7725
  %v8044 = vunpack.c.h.b16 %v7725
  %v8045 = vunpack.c.l.b16 %v7726
  %v8046 = vunpack.c.h.b16 %v7726
  %v8047 = vunpack.c.l.b16 %v7727
  %v8048 = vunpack.c.h.b16 %v7727
  %v8049 = vunpack.c.l.b16 %v7728
  %v8050 = vunpack.c.h.b16 %v7728
  %v8051 = vunpack.c.l.b16 %v7729
  %v8052 = vunpack.c.h.b16 %v7729
  %v8053 = vunpack.c.l.b16 %v7730
  %v8054 = vunpack.c.h.b16 %v7730
  %v8055 = vunpack.c.l.b16 %v7731
  %v8056 = vunpack.c.h.b16 %v7731
  %v8057 = vunpack.c.l.b16 %v7732
  %v8058 = vunpack.c.h.b16 %v7732
  %v8059 = vunpack.c.l.b16 %v7733
  %v8060 = vunpack.c.h.b16 %v7733
  %v8061 = vunpack.c.l.b16 %v7734
  %v8062 = vunpack.c.h.b16 %v7734
  %v8063 = vunpack.c.l.b16 %v7735
  %v8064 = vunpack.c.h.b16 %v7735
  %v8065 = vunpack.c.l.b16 %v7736
  %v8066 = vunpack.c.h.b16 %v7736
  %v8067 = vunpack.c.l.b16 %v7737
  %v8068 = vunpack.c.h.b16 %v7737
  %v8069 = vunpack.c.l.b16 %v7738
  %v8070 = vunpack.c.h.b16 %v7738
  %v8071 = vunpack.c.l.b16 %v7739
  %v8072 = vunpack.c.h.b16 %v7739
  %v8073 = vunpack.c.l.b16 %v7740
  %v8074 = vunpack.c.h.b16 %v7740
  %v8075 = vunpack.c.l.b16 %v7741
  %v8076 = vunpack.c.h.b16 %v7741
  %v8077 = vunpack.c.l.b16 %v7742
  %v8078 = vunpack.c.h.b16 %v7742
  %v8079 = vunpack.c.l.b16 %v7743
  %v8080 = vunpack.c.h.b16 %v7743
  %v8081 = vunpack.c.l.b16 %v7744
  %v8082 = vunpack.c.h.b16 %v7744
  %v8083 = vunpack.c.l.b16 %v7745
  %v8084 = vunpack.c.h.b16 %v7745
  %v8085 = vunpack.c.l.b16 %v7746
  %v8086 = vunpack.c.h.b16 %v7746
  %v8087 = vunpack.c.l.b16 %v7747
  %v8088 = vunpack.c.h.b16 %v7747
  %v8089 = vunpack.c.l.b16 %v7748
  %v8090 = vunpack.c.h.b16 %v7748
  %v8091 = vunpack.c.l.b16 %v7749
  %v8092 = vunpack.c.h.b16 %v7749
  %v8093 = vunpack.c.l.b16 %v7750
  %v8094 = vunpack.c.h.b16 %v7750
  %v8095 = vunpack.c.l.b16 %v7751
  %v8096 = vunpack.c.h.b16 %v7751
  %v8097 = vunpack.c.l.b16 %v7752
  %v8098 = vunpack.c.h.b16 %v7752
  %v8099 = vunpack.c.l.b16 %v7753
  %v8100 = vunpack.c.h.b16 %v7753
  %v8101 = vunpack.c.l.b16 %v7754
  %v8102 = vunpack.c.h.b16 %v7754
  %v8103 = vunpack.c.l.b16 %v7755
  %v8104 = vunpack.c.h.b16 %v7755
  %v8105 = vunpack.c.l.b16 %v7756
  %v8106 = vunpack.c.h.b16 %v7756
  %v8107 = vunpack.c.l.b16 %v7757
  %v8108 = vunpack.c.h.b16 %v7757
  %v8109 = vunpack.c.l.b16 %v7758
  %v8110 = vunpack.c.h.b16 %v7758
  %v8111 = vunpack.c.l.b16 %v7759
  %v8112 = vunpack.c.h.b16 %v7759
  %v8113 = vunpack.c.l.b16 %v7760
  %v8114 = vunpack.c.h.b16 %v7760
  %v8115 = vunpack.c.l.b16 %v7761
  %v8116 = vunpack.c.h.b16 %v7761
  %v8117 = vunpack.c.l.b16 %v7762
  %v8118 = vunpack.c.h.b16 %v7762
  %v8119 = vunpack.c.l.b16 %v7763
  %v8120 = vunpack.c.h.b16 %v7763
  %v8121 = vunpack.c.l.b16 %v7764
  %v8122 = vunpack.c.h.b16 %v7764
  %v8123 = vunpack.c.l.b16 %v7765
  %v8124 = vunpack.c.h.b16 %v7765
  %v8125 = vunpack.c.l.b16 %v7766
  %v8126 = vunpack.c.h.b16 %v7766
  %v8127 = vunpack.c.l.b16 %v7767
  %v8128 = vunpack.c.h.b16 %v7767
  %v8129 = vunpack.c.l.b16 %v7768
  %v8130 = vunpack.c.h.b16 %v7768
  %v8131 = vunpack.c.l.b16 %v7769
  %v8132 = vunpack.c.h.b16 %v7769
  %v8133 = vunpack.c.l.b16 %v7770
  %v8134 = vunpack.c.h.b16 %v7770
  %v8135 = vunpack.c.l.b16 %v7771
  %v8136 = vunpack.c.h.b16 %v7771
  %v8137 = vunpack.c.l.b16 %v7772
  %v8138 = vunpack.c.h.b16 %v7772
  %v8139 = vunpack.c.l.b16 %v7773
  %v8140 = vunpack.c.h.b16 %v7773
  %v8141 = vunpack.c.l.b16 %v7774
  %v8142 = vunpack.c.h.b16 %v7774
  %v8143 = vunpack.c.l.b16 %v7775
  %v8144 = vunpack.c.h.b16 %v7775
  %v8145 = vunpack.c.l.b16 %v7776
  %v8146 = vunpack.c.h.b16 %v7776
  %v8147 = vunpack.c.l.b16 %v7777
  %v8148 = vunpack.c.h.b16 %v7777
  %v8149 = vunpack.c.l.b16 %v7778
  %v8150 = vunpack.c.h.b16 %v7778
  %v8151 = vunpack.c.l.b16 %v7779
  %v8152 = vunpack.c.h.b16 %v7779
  %v8153 = vunpack.c.l.b16 %v7780
  %v8154 = vunpack.c.h.b16 %v7780
  %v8155 = vunpack.c.l.b16 %v7781
  %v8156 = vunpack.c.h.b16 %v7781
  %v8157 = vunpack.c.l.b16 %v7782
  %v8158 = vunpack.c.h.b16 %v7782
  %v8159 = vunpack.c.l.b16 %v7783
  %v8160 = vunpack.c.h.b16 %v7783
  %v8161 = vunpack.c.l.b16 %v7784
  %v8162 = vunpack.c.h.b16 %v7784
  %v8163 = vunpack.c.l.b16 %v7785
  %v8164 = vunpack.c.h.b16 %v7785
  %v8165 = vunpack.c.l.b16 %v7786
  %v8166 = vunpack.c.h.b16 %v7786
  %v8167 = vunpack.c.l.b16 %v7787
  %v8168 = vunpack.c.h.b16 %v7787
  %v8169 = vunpack.c.l.b16 %v7788
  %v8170 = vunpack.c.h.b16 %v7788
  %v8171 = vunpack.c.l.b16 %v7789
  %v8172 = vunpack.c.h.b16 %v7789
  %v8173 = vunpack.c.l.b16 %v7790
  %v8174 = vunpack.c.h.b16 %v7790
  %v8175 = vunpack.c.l.b16 %v7791
  %v8176 = vunpack.c.h.b16 %v7791
  %v8177 = vunpack.c.l.b16 %v7792
  %v8178 = vunpack.c.h.b16 %v7792
  %v8179 = vunpack.c.l.b16 %v7793
  %v8180 = vunpack.c.h.b16 %v7793
  %v8181 = vunpack.c.l.b16 %v7794
  %v8182 = vunpack.c.h.b16 %v7794
  %v8183 = vunpack.c.l.b16 %v7795
  %v8184 = vunpack.c.h.b16 %v7795
  %v8185 = vunpack.c.l.b16 %v7796
  %v8186 = vunpack.c.h.b16 %v7796
  %v8187 = vunpack.c.l.b16 %v7797
  %v8188 = vunpack.c.h.b16 %v7797
  %v8189 = vunpack.c.l.b16 %v7798
  %v8190 = vunpack.c.h.b16 %v7798
  %v8191 = vunpack.c.l.b16 %v7799
  %v8192 = vunpack.c.h.b16 %v7799
  %v8193 = vunpack.c.l.b16 %v7800
  %v8194 = vunpack.c.h.b16 %v7800
  %v8195 = vunpack.c.l.b16 %v7801
  %v8196 = vunpack.c.h.b16 %v7801
  %v8197 = vunpack.c.l.b16 %v7802
  %v8198 = vunpack.c.h.b16 %v7802
  %v8199 = vpack.c.b16 %v7947, %v7943
  %v8200 = vpack.c.b16 %v7948, %v7944
  %v8201 = vpack.c.b16 %v7949, %v7945
  %v8202 = vpack.c.b16 %v7950, %v7946
  %v8203 = vpack.c.b16 %v7955, %v7951
  %v8204 = vpack.c.b16 %v7956, %v7952
  %v8205 = vpack.c.b16 %v7957, %v7953
  %v8206 = vpack.c.b16 %v7958, %v7954
  %v8207 = vpack.c.b16 %v7963, %v7959
  %v8208 = vpack.c.b16 %v7964, %v7960
  %v8209 = vpack.c.b16 %v7965, %v7961
  %v8210 = vpack.c.b16 %v7966, %v7962
  %v8211 = vpack.c.b16 %v7971, %v7967
  %v8212 = vpack.c.b16 %v7972, %v7968
  %v8213 = vpack.c.b16 %v7973, %v7969
  %v8214 = vpack.c.b16 %v7974, %v7970
  %v8215 = vpack.c.b16 %v7979, %v7975
  %v8216 = vpack.c.b16 %v7980, %v7976
  %v8217 = vpack.c.b16 %v7981, %v7977
  %v8218 = vpack.c.b16 %v7982, %v7978
  %v8219 = vpack.c.b16 %v7987, %v7983
  %v8220 = vpack.c.b16 %v7988, %v7984
  %v8221 = vpack.c.b16 %v7989, %v7985
  %v8222 = vpack.c.b16 %v7990, %v7986
  %v8223 = vpack.c.b16 %v7995, %v7991
  %v8224 = vpack.c.b16 %v7996, %v7992
  %v8225 = vpack.c.b16 %v7997, %v7993
  %v8226 = vpack.c.b16 %v7998, %v7994
  %v8227 = vpack.c.b16 %v8003, %v7999
  %v8228 = vpack.c.b16 %v8004, %v8000
  %v8229 = vpack.c.b16 %v8005, %v8001
  %v8230 = vpack.c.b16 %v8006, %v8002
  %v8231 = vpack.c.b16 %v8011, %v8007
  %v8232 = vpack.c.b16 %v8012, %v8008
  %v8233 = vpack.c.b16 %v8013, %v8009
  %v8234 = vpack.c.b16 %v8014, %v8010
  %v8235 = vpack.c.b16 %v8019, %v8015
  %v8236 = vpack.c.b16 %v8020, %v8016
  %v8237 = vpack.c.b16 %v8021, %v8017
  %v8238 = vpack.c.b16 %v8022, %v8018
  %v8239 = vpack.c.b16 %v8027, %v8023
  %v8240 = vpack.c.b16 %v8028, %v8024
  %v8241 = vpack.c.b16 %v8029, %v8025
  %v8242 = vpack.c.b16 %v8030, %v8026
  %v8243 = vpack.c.b16 %v8035, %v8031
  %v8244 = vpack.c.b16 %v8036, %v8032
  %v8245 = vpack.c.b16 %v8037, %v8033
  %v8246 = vpack.c.b16 %v8038, %v8034
  %v8247 = vpack.c.b16 %v8043, %v8039
  %v8248 = vpack.c.b16 %v8044, %v8040
  %v8249 = vpack.c.b16 %v8045, %v8041
  %v8250 = vpack.c.b16 %v8046, %v8042
  %v8251 = vpack.c.b16 %v8051, %v8047
  %v8252 = vpack.c.b16 %v8052, %v8048
  %v8253 = vpack.c.b16 %v8053, %v8049
  %v8254 = vpack.c.b16 %v8054, %v8050
  %v8255 = vpack.c.b16 %v8059, %v8055
  %v8256 = vpack.c.b16 %v8060, %v8056
  %v8257 = vpack.c.b16 %v8061, %v8057
  %v8258 = vpack.c.b16 %v8062, %v8058
  %v8259 = vpack.c.b16 %v8067, %v8063
  %v8260 = vpack.c.b16 %v8068, %v8064
  %v8261 = vpack.c.b16 %v8069, %v8065
  %v8262 = vpack.c.b16 %v8070, %v8066
  %v8263 = vpack.c.b16 %v8075, %v8071
  %v8264 = vpack.c.b16 %v8076, %v8072
  %v8265 = vpack.c.b16 %v8077, %v8073
  %v8266 = vpack.c.b16 %v8078, %v8074
  %v8267 = vpack.c.b16 %v8083, %v8079
  %v8268 = vpack.c.b16 %v8084, %v8080
  %v8269 = vpack.c.b16 %v8085, %v8081
  %v8270 = vpack.c.b16 %v8086, %v8082
  %v8271 = vpack.c.b16 %v8091, %v8087
  %v8272 = vpack.c.b16 %v8092, %v8088
  %v8273 = vpack.c.b16 %v8093, %v8089
  %v8274 = vpack.c.b16 %v8094, %v8090
  %v8275 = vpack.c.b16 %v8099, %v8095
  %v8276 = vpack.c.b16 %v8100, %v8096
  %v8277 = vpack.c.b16 %v8101, %v8097
  %v8278 = vpack.c.b16 %v8102, %v8098
  %v8279 = vpack.c.b16 %v8107, %v8103
  %v8280 = vpack.c.b16 %v8108, %v8104
  %v8281 = vpack.c.b16 %v8109, %v8105
  %v8282 = vpack.c.b16 %v8110, %v8106
  %v8283 = vpack.c.b16 %v8115, %v8111
  %v8284 = vpack.c.b16 %v8116, %v8112
  %v8285 = vpack.c.b16 %v8117, %v8113
  %v8286 = vpack.c.b16 %v8118, %v8114
  %v8287 = vpack.c.b16 %v8123, %v8119
  %v8288 = vpack.c.b16 %v8124, %v8120
  %v8289 = vpack.c.b16 %v8125, %v8121
  %v8290 = vpack.c.b16 %v8126, %v8122
  %v8291 = vpack.c.b16 %v8131, %v8127
  %v8292 = vpack.c.b16 %v8132, %v8128
  %v8293 = vpack.c.b16 %v8133, %v8129
  %v8294 = vpack.c.b16 %v8134, %v8130
  %v8295 = vpack.c.b16 %v8139, %v8135
  %v8296 = vpack.c.b16 %v8140, %v8136
  %v8297 = vpack.c.b16 %v8141, %v8137
  %v8298 = vpack.c.b16 %v8142, %v8138
  %v8299 = vpack.c.b16 %v8147, %v8143
  %v8300 = vpack.c.b16 %v8148, %v8144
  %v8301 = vpack.c.b16 %v8149, %v8145
  %v8302 = vpack.c.b16 %v8150, %v8146
  %v8303 = vpack.c.b16 %v8155, %v8151
  %v8304 = vpack.c.b16 %v8156, %v8152
  %v8305 = vpack.c.b16 %v8157, %v8153
  %v8306 = vpack.c.b16 %v8158, %v8154
  %v8307 = vpack.c.b16 %v8163, %v8159
  %v8308 = vpack.c.b16 %v8164, %v8160
  %v8309 = vpack.c.b16 %v8165, %v8161
  %v8310 = vpack.c.b16 %v8166, %v8162
  %v8311 = vpack.c.b16 %v8171, %v8167
  %v8312 = vpack.c.b16 %v8172, %v8168
  %v8313 = vpack.c.b16 %v8173, %v8169
  %v8314 = vpack.c.b16 %v8174, %v8170
  %v8315 = vpack.c.b16 %v8179, %v8175
  %v8316 = vpack.c.b16 %v8180, %v8176
  %v8317 = vpack.c.b16 %v8181, %v8177
  %v8318 = vpack.c.b16 %v8182, %v8178
  %v8319 = vpack.c.b16 %v8187, %v8183
  %v8320 = vpack.c.b16 %v8188, %v8184
  %v8321 = vpack.c.b16 %v8189, %v8185
  %v8322 = vpack.c.b16 %v8190, %v8186
  %v8323 = vpack.c.b16 %v8195, %v8191
  %v8324 = vpack.c.b16 %v8196, %v8192
  %v8325 = vpack.c.b16 %v8197, %v8193
  %v8326 = vpack.c.b16 %v8198, %v8194
  %8455 = vmatprep.subr.bf16.mxu0 %v8200
  %8456 = vmatpush1.bf16.msra.mxu0 %v8199
  %8457 = vmatprep.subr.bf16.mxu0 %v8204
  %8458 = vmatpush1.bf16.msra.mxu0 %v8203
  %8459 = vmatprep.subr.bf16.mxu0 %v8208
  %8460 = vmatpush1.bf16.msra.mxu0 %v8207
  %8461 = vmatprep.subr.bf16.mxu0 %v8212
  %8462 = vmatpush1.bf16.msra.mxu0 %v8211
  %8463 = vmatprep.subr.bf16.mxu0 %v8216
  %8464 = vmatpush1.bf16.msra.mxu0 %v8215
  %8465 = vmatprep.subr.bf16.mxu0 %v8220
  %8466 = vmatpush1.bf16.msra.mxu0 %v8219
  %8467 = vmatprep.subr.bf16.mxu0 %v8224
  %8468 = vmatpush1.bf16.msra.mxu0 %v8223
  %8469 = vmatprep.subr.bf16.mxu0 %v8228
  %8470 = vmatpush1.bf16.msra.mxu0 %v8227
  %8471 = vmatprep.subr.bf16.mxu0 %v8232
  %8472 = vmatpush1.bf16.msra.mxu0 %v8231
  %8473 = vmatprep.subr.bf16.mxu0 %v8236
  %8474 = vmatpush1.bf16.msra.mxu0 %v8235
  %8475 = vmatprep.subr.bf16.mxu0 %v8240
  %8476 = vmatpush1.bf16.msra.mxu0 %v8239
  %8477 = vmatprep.subr.bf16.mxu0 %v8244
  %8478 = vmatpush1.bf16.msra.mxu0 %v8243
  %8479 = vmatprep.subr.bf16.mxu0 %v8248
  %8480 = vmatpush1.bf16.msra.mxu0 %v8247
  %8481 = vmatprep.subr.bf16.mxu0 %v8252
  %8482 = vmatpush1.bf16.msra.mxu0 %v8251
  %8483 = vmatprep.subr.bf16.mxu0 %v8256
  %8484 = vmatpush1.bf16.msra.mxu0 %v8255
  %8485 = vmatprep.subr.bf16.mxu0 %v8260
  %8486 = vmatpush1.bf16.msra.mxu0 %v8259
  %8487 = vmatprep.mubr.bf16.mxu0 %v7808
  %8488 = vmatmul.mubr.bf16.gmra.mrb[0].mxu0 %v7807
  %v8489 = vpop.f32.mrb[0].mxu0
  %v8490 = vadd.f32 0.0, %v8489
  %v8491 = vpop.f32.mrb[0].mxu0
  %v8492 = vadd.f32 0.0, %v8491
  %v8493 = vpop.f32.mrb[0].mxu0
  %v8494 = vadd.f32 0.0, %v8493
  %v8495 = vpop.f32.mrb[0].mxu0
  %v8496 = vadd.f32 0.0, %v8495
  %8497 = vdwg.mxu0
  %8498 = vmatprep.subr.bf16.mxu0 %v8264
  %8499 = vmatpush1.bf16.msra.mxu0 %v8263
  %8500 = vmatprep.subr.bf16.mxu0 %v8268
  %8501 = vmatpush1.bf16.msra.mxu0 %v8267
  %8502 = vmatprep.subr.bf16.mxu0 %v8272
  %8503 = vmatpush1.bf16.msra.mxu0 %v8271
  %8504 = vmatprep.subr.bf16.mxu0 %v8276
  %8505 = vmatpush1.bf16.msra.mxu0 %v8275
  %8506 = vmatprep.subr.bf16.mxu0 %v8280
  %8507 = vmatpush1.bf16.msra.mxu0 %v8279
  %8508 = vmatprep.subr.bf16.mxu0 %v8284
  %8509 = vmatpush1.bf16.msra.mxu0 %v8283
  %8510 = vmatprep.subr.bf16.mxu0 %v8288
  %8511 = vmatpush1.bf16.msra.mxu0 %v8287
  %8512 = vmatprep.subr.bf16.mxu0 %v8292
  %8513 = vmatpush1.bf16.msra.mxu0 %v8291
  %8514 = vmatprep.subr.bf16.mxu0 %v8296
  %8515 = vmatpush1.bf16.msra.mxu0 %v8295
  %8516 = vmatprep.subr.bf16.mxu0 %v8300
  %8517 = vmatpush1.bf16.msra.mxu0 %v8299
  %8518 = vmatprep.subr.bf16.mxu0 %v8304
  %8519 = vmatpush1.bf16.msra.mxu0 %v8303
  %8520 = vmatprep.subr.bf16.mxu0 %v8308
  %8521 = vmatpush1.bf16.msra.mxu0 %v8307
  %8522 = vmatprep.subr.bf16.mxu0 %v8312
  %8523 = vmatpush1.bf16.msra.mxu0 %v8311
  %8524 = vmatprep.subr.bf16.mxu0 %v8316
  %8525 = vmatpush1.bf16.msra.mxu0 %v8315
  %8526 = vmatprep.subr.bf16.mxu0 %v8320
  %8527 = vmatpush1.bf16.msra.mxu0 %v8319
  %8528 = vmatprep.subr.bf16.mxu0 %v8324
  %8529 = vmatpush1.bf16.msra.mxu0 %v8323
  %8530 = vmatprep.mubr.bf16.mxu0 %v7810
  %8531 = vmatmul.mubr.bf16.gmra.mrb[0].mxu0 %v7809
  %v8532 = vpop.f32.mrb[0].mxu0
  %v8533 = vadd.f32 %v8490, %v8532
  %v8534 = vpop.f32.mrb[0].mxu0
  %v8535 = vadd.f32 %v8492, %v8534
  %v8536 = vpop.f32.mrb[0].mxu0
  %v8537 = vadd.f32 %v8494, %v8536
  %v8538 = vpop.f32.mrb[0].mxu0
  %v8539 = vadd.f32 %v8496, %v8538
  %8540 = vdwg.mxu0
  %8541 = vmatprep.subr.bf16.mxu0 %v8202
  %8542 = vmatpush1.bf16.msra.mxu0 %v8201
  %8543 = vmatprep.subr.bf16.mxu0 %v8206
  %8544 = vmatpush1.bf16.msra.mxu0 %v8205
  %8545 = vmatprep.subr.bf16.mxu0 %v8210
  %8546 = vmatpush1.bf16.msra.mxu0 %v8209
  %8547 = vmatprep.subr.bf16.mxu0 %v8214
  %8548 = vmatpush1.bf16.msra.mxu0 %v8213
  %8549 = vmatprep.subr.bf16.mxu0 %v8218
  %8550 = vmatpush1.bf16.msra.mxu0 %v8217
  %8551 = vmatprep.subr.bf16.mxu0 %v8222
  %8552 = vmatpush1.bf16.msra.mxu0 %v8221
  %8553 = vmatprep.subr.bf16.mxu0 %v8226
  %8554 = vmatpush1.bf16.msra.mxu0 %v8225
  %8555 = vmatprep.subr.bf16.mxu0 %v8230
  %8556 = vmatpush1.bf16.msra.mxu0 %v8229
  %8557 = vmatprep.subr.bf16.mxu0 %v8234
  %8558 = vmatpush1.bf16.msra.mxu0 %v8233
  %8559 = vmatprep.subr.bf16.mxu0 %v8238
  %8560 = vmatpush1.bf16.msra.mxu0 %v8237
  %8561 = vmatprep.subr.bf16.mxu0 %v8242
  %8562 = vmatpush1.bf16.msra.mxu0 %v8241
  %8563 = vmatprep.subr.bf16.mxu0 %v8246
  %8564 = vmatpush1.bf16.msra.mxu0 %v8245
  %8565 = vmatprep.subr.bf16.mxu0 %v8250
  %8566 = vmatpush1.bf16.msra.mxu0 %v8249
  %8567 = vmatprep.subr.bf16.mxu0 %v8254
  %8568 = vmatpush1.bf16.msra.mxu0 %v8253
  %8569 = vmatprep.subr.bf16.mxu0 %v8258
  %8570 = vmatpush1.bf16.msra.mxu0 %v8257
  %8571 = vmatprep.subr.bf16.mxu0 %v8262
  %8572 = vmatpush1.bf16.msra.mxu0 %v8261
  %8573 = vmatprep.mubr.bf16.mxu0 %v7808
  %8574 = vmatmul.mubr.bf16.gmra.mrb[0].mxu0 %v7807
  %v8575 = vpop.f32.mrb[0].mxu0
  %v8576 = vadd.f32 0.0, %v8575
  %v8577 = vpop.f32.mrb[0].mxu0
  %v8578 = vadd.f32 0.0, %v8577
  %v8579 = vpop.f32.mrb[0].mxu0
  %v8580 = vadd.f32 0.0, %v8579
  %v8581 = vpop.f32.mrb[0].mxu0
  %v8582 = vadd.f32 0.0, %v8581
  %8583 = vdwg.mxu0
  %8584 = vmatprep.subr.bf16.mxu0 %v8266
  %8585 = vmatpush1.bf16.msra.mxu0 %v8265
  %8586 = vmatprep.subr.bf16.mxu0 %v8270
  %8587 = vmatpush1.bf16.msra.mxu0 %v8269
  %8588 = vmatprep.subr.bf16.mxu0 %v8274
  %8589 = vmatpush1.bf16.msra.mxu0 %v8273
  %8590 = vmatprep.subr.bf16.mxu0 %v8278
  %8591 = vmatpush1.bf16.msra.mxu0 %v8277
  %8592 = vmatprep.subr.bf16.mxu0 %v8282
  %8593 = vmatpush1.bf16.msra.mxu0 %v8281
  %8594 = vmatprep.subr.bf16.mxu0 %v8286
  %8595 = vmatpush1.bf16.msra.mxu0 %v8285
  %8596 = vmatprep.subr.bf16.mxu0 %v8290
  %8597 = vmatpush1.bf16.msra.mxu0 %v8289
  %8598 = vmatprep.subr.bf16.mxu0 %v8294
  %8599 = vmatpush1.bf16.msra.mxu0 %v8293
  %8600 = vmatprep.subr.bf16.mxu0 %v8298
  %8601 = vmatpush1.bf16.msra.mxu0 %v8297
  %8602 = vmatprep.subr.bf16.mxu0 %v8302
  %8603 = vmatpush1.bf16.msra.mxu0 %v8301
  %8604 = vmatprep.subr.bf16.mxu0 %v8306
  %8605 = vmatpush1.bf16.msra.mxu0 %v8305
  %8606 = vmatprep.subr.bf16.mxu0 %v8310
  %8607 = vmatpush1.bf16.msra.mxu0 %v8309
  %8608 = vmatprep.subr.bf16.mxu0 %v8314
  %8609 = vmatpush1.bf16.msra.mxu0 %v8313
  %8610 = vmatprep.subr.bf16.mxu0 %v8318
  %8611 = vmatpush1.bf16.msra.mxu0 %v8317
  %8612 = vmatprep.subr.bf16.mxu0 %v8322
  %8613 = vmatpush1.bf16.msra.mxu0 %v8321
  %8614 = vmatprep.subr.bf16.mxu0 %v8326
  %8615 = vmatpush1.bf16.msra.mxu0 %v8325
  %8616 = vmatprep.mubr.bf16.mxu0 %v7810
  %8617 = vmatmul.mubr.bf16.gmra.mrb[0].mxu0 %v7809
  %v8618 = vpop.f32.mrb[0].mxu0
  %v8619 = vadd.f32 %v8576, %v8618
  %v8620 = vpop.f32.mrb[0].mxu0
  %v8621 = vadd.f32 %v8578, %v8620
  %v8622 = vpop.f32.mrb[0].mxu0
  %v8623 = vadd.f32 %v8580, %v8622
  %v8624 = vpop.f32.mrb[0].mxu0
  %v8625 = vadd.f32 %v8582, %v8624
  %8626 = vdwg.mxu0
  %v8755 = vunpack.c.l.b16 %v7534
  %v8756 = vunpack.c.h.b16 %v7534
  %v8757 = vunpack.c.l.b16 %v7535
  %v8758 = vunpack.c.h.b16 %v7535
  %v8759 = vunpack.c.l.b16 %v7536
  %v8760 = vunpack.c.h.b16 %v7536
  %v8761 = vunpack.c.l.b16 %v7537
  %v8762 = vunpack.c.h.b16 %v7537
  %v8763 = vunpack.c.l.b16 %v7538
  %v8764 = vunpack.c.h.b16 %v7538
  %v8765 = vunpack.c.l.b16 %v7539
  %v8766 = vunpack.c.h.b16 %v7539
  %v8767 = vunpack.c.l.b16 %v7540
  %v8768 = vunpack.c.h.b16 %v7540
  %v8769 = vunpack.c.l.b16 %v7541
  %v8770 = vunpack.c.h.b16 %v7541
  %v8771 = vunpack.c.l.b16 %v7542
  %v8772 = vunpack.c.h.b16 %v7542
  %v8773 = vunpack.c.l.b16 %v7543
  %v8774 = vunpack.c.h.b16 %v7543
  %v8775 = vunpack.c.l.b16 %v7544
  %v8776 = vunpack.c.h.b16 %v7544
  %v8777 = vunpack.c.l.b16 %v7545
  %v8778 = vunpack.c.h.b16 %v7545
  %v8779 = vunpack.c.l.b16 %v7546
  %v8780 = vunpack.c.h.b16 %v7546
  %v8781 = vunpack.c.l.b16 %v7547
  %v8782 = vunpack.c.h.b16 %v7547
  %v8783 = vunpack.c.l.b16 %v7548
  %v8784 = vunpack.c.h.b16 %v7548
  %v8785 = vunpack.c.l.b16 %v7549
  %v8786 = vunpack.c.h.b16 %v7549
  %v8787 = vunpack.c.l.b16 %v7550
  %v8788 = vunpack.c.h.b16 %v7550
  %v8789 = vunpack.c.l.b16 %v7551
  %v8790 = vunpack.c.h.b16 %v7551
  %v8791 = vunpack.c.l.b16 %v7552
  %v8792 = vunpack.c.h.b16 %v7552
  %v8793 = vunpack.c.l.b16 %v7553
  %v8794 = vunpack.c.h.b16 %v7553
  %v8795 = vunpack.c.l.b16 %v7554
  %v8796 = vunpack.c.h.b16 %v7554
  %v8797 = vunpack.c.l.b16 %v7555
  %v8798 = vunpack.c.h.b16 %v7555
  %v8799 = vunpack.c.l.b16 %v7556
  %v8800 = vunpack.c.h.b16 %v7556
  %v8801 = vunpack.c.l.b16 %v7557
  %v8802 = vunpack.c.h.b16 %v7557
  %v8803 = vunpack.c.l.b16 %v7558
  %v8804 = vunpack.c.h.b16 %v7558
  %v8805 = vunpack.c.l.b16 %v7559
  %v8806 = vunpack.c.h.b16 %v7559
  %v8807 = vunpack.c.l.b16 %v7560
  %v8808 = vunpack.c.h.b16 %v7560
  %v8809 = vunpack.c.l.b16 %v7561
  %v8810 = vunpack.c.h.b16 %v7561
  %v8811 = vunpack.c.l.b16 %v7562
  %v8812 = vunpack.c.h.b16 %v7562
  %v8813 = vunpack.c.l.b16 %v7563
  %v8814 = vunpack.c.h.b16 %v7563
  %v8815 = vunpack.c.l.b16 %v7564
  %v8816 = vunpack.c.h.b16 %v7564
  %v8817 = vunpack.c.l.b16 %v7565
  %v8818 = vunpack.c.h.b16 %v7565
  %v8819 = vunpack.c.l.b16 %v7566
  %v8820 = vunpack.c.h.b16 %v7566
  %v8821 = vunpack.c.l.b16 %v7567
  %v8822 = vunpack.c.h.b16 %v7567
  %v8823 = vunpack.c.l.b16 %v7568
  %v8824 = vunpack.c.h.b16 %v7568
  %v8825 = vunpack.c.l.b16 %v7569
  %v8826 = vunpack.c.h.b16 %v7569
  %v8827 = vunpack.c.l.b16 %v7570
  %v8828 = vunpack.c.h.b16 %v7570
  %v8829 = vunpack.c.l.b16 %v7571
  %v8830 = vunpack.c.h.b16 %v7571
  %v8831 = vunpack.c.l.b16 %v7572
  %v8832 = vunpack.c.h.b16 %v7572
  %v8833 = vunpack.c.l.b16 %v7573
  %v8834 = vunpack.c.h.b16 %v7573
  %v8835 = vunpack.c.l.b16 %v7574
  %v8836 = vunpack.c.h.b16 %v7574
  %v8837 = vunpack.c.l.b16 %v7575
  %v8838 = vunpack.c.h.b16 %v7575
  %v8839 = vunpack.c.l.b16 %v7576
  %v8840 = vunpack.c.h.b16 %v7576
  %v8841 = vunpack.c.l.b16 %v7577
  %v8842 = vunpack.c.h.b16 %v7577
  %v8843 = vunpack.c.l.b16 %v7578
  %v8844 = vunpack.c.h.b16 %v7578
  %v8845 = vunpack.c.l.b16 %v7579
  %v8846 = vunpack.c.h.b16 %v7579
  %v8847 = vunpack.c.l.b16 %v7580
  %v8848 = vunpack.c.h.b16 %v7580
  %v8849 = vunpack.c.l.b16 %v7581
  %v8850 = vunpack.c.h.b16 %v7581
  %v8851 = vunpack.c.l.b16 %v7582
  %v8852 = vunpack.c.h.b16 %v7582
  %v8853 = vunpack.c.l.b16 %v7583
  %v8854 = vunpack.c.h.b16 %v7583
  %v8855 = vunpack.c.l.b16 %v7584
  %v8856 = vunpack.c.h.b16 %v7584
  %v8857 = vunpack.c.l.b16 %v7585
  %v8858 = vunpack.c.h.b16 %v7585
  %v8859 = vunpack.c.l.b16 %v7586
  %v8860 = vunpack.c.h.b16 %v7586
  %v8861 = vunpack.c.l.b16 %v7587
  %v8862 = vunpack.c.h.b16 %v7587
  %v8863 = vunpack.c.l.b16 %v7588
  %v8864 = vunpack.c.h.b16 %v7588
  %v8865 = vunpack.c.l.b16 %v7589
  %v8866 = vunpack.c.h.b16 %v7589
  %v8867 = vunpack.c.l.b16 %v7590
  %v8868 = vunpack.c.h.b16 %v7590
  %v8869 = vunpack.c.l.b16 %v7591
  %v8870 = vunpack.c.h.b16 %v7591
  %v8871 = vunpack.c.l.b16 %v7592
  %v8872 = vunpack.c.h.b16 %v7592
  %v8873 = vunpack.c.l.b16 %v7593
  %v8874 = vunpack.c.h.b16 %v7593
  %v8875 = vunpack.c.l.b16 %v7594
  %v8876 = vunpack.c.h.b16 %v7594
  %v8877 = vunpack.c.l.b16 %v7595
  %v8878 = vunpack.c.h.b16 %v7595
  %v8879 = vunpack.c.l.b16 %v7596
  %v8880 = vunpack.c.h.b16 %v7596
  %v8881 = vunpack.c.l.b16 %v7597
  %v8882 = vunpack.c.h.b16 %v7597
  %v8883 = vunpack.c.l.b16 %v7598
  %v8884 = vunpack.c.h.b16 %v7598
  %v8885 = vunpack.c.l.b16 %v7599
  %v8886 = vunpack.c.h.b16 %v7599
  %v8887 = vunpack.c.l.b16 %v7600
  %v8888 = vunpack.c.h.b16 %v7600
  %v8889 = vunpack.c.l.b16 %v7601
  %v8890 = vunpack.c.h.b16 %v7601
  %v8891 = vunpack.c.l.b16 %v7602
  %v8892 = vunpack.c.h.b16 %v7602
  %v8893 = vunpack.c.l.b16 %v7603
  %v8894 = vunpack.c.h.b16 %v7603
  %v8895 = vunpack.c.l.b16 %v7604
  %v8896 = vunpack.c.h.b16 %v7604
  %v8897 = vunpack.c.l.b16 %v7605
  %v8898 = vunpack.c.h.b16 %v7605
  %v8899 = vunpack.c.l.b16 %v7606
  %v8900 = vunpack.c.h.b16 %v7606
  %v8901 = vunpack.c.l.b16 %v7607
  %v8902 = vunpack.c.h.b16 %v7607
  %v8903 = vunpack.c.l.b16 %v7608
  %v8904 = vunpack.c.h.b16 %v7608
  %v8905 = vunpack.c.l.b16 %v7609
  %v8906 = vunpack.c.h.b16 %v7609
  %v8907 = vunpack.c.l.b16 %v7610
  %v8908 = vunpack.c.h.b16 %v7610
  %v8909 = vunpack.c.l.b16 %v7611
  %v8910 = vunpack.c.h.b16 %v7611
  %v8911 = vunpack.c.l.b16 %v7612
  %v8912 = vunpack.c.h.b16 %v7612
  %v8913 = vunpack.c.l.b16 %v7613
  %v8914 = vunpack.c.h.b16 %v7613
  %v8915 = vunpack.c.l.b16 %v7614
  %v8916 = vunpack.c.h.b16 %v7614
  %v8917 = vunpack.c.l.b16 %v7615
  %v8918 = vunpack.c.h.b16 %v7615
  %v8919 = vunpack.c.l.b16 %v7616
  %v8920 = vunpack.c.h.b16 %v7616
  %v8921 = vunpack.c.l.b16 %v7617
  %v8922 = vunpack.c.h.b16 %v7617
  %v8923 = vunpack.c.l.b16 %v7618
  %v8924 = vunpack.c.h.b16 %v7618
  %v8925 = vunpack.c.l.b16 %v7619
  %v8926 = vunpack.c.h.b16 %v7619
  %v8927 = vunpack.c.l.b16 %v7620
  %v8928 = vunpack.c.h.b16 %v7620
  %v8929 = vunpack.c.l.b16 %v7621
  %v8930 = vunpack.c.h.b16 %v7621
  %v8931 = vunpack.c.l.b16 %v7622
  %v8932 = vunpack.c.h.b16 %v7622
  %v8933 = vunpack.c.l.b16 %v7623
  %v8934 = vunpack.c.h.b16 %v7623
  %v8935 = vunpack.c.l.b16 %v7624
  %v8936 = vunpack.c.h.b16 %v7624
  %v8937 = vunpack.c.l.b16 %v7625
  %v8938 = vunpack.c.h.b16 %v7625
  %v8939 = vunpack.c.l.b16 %v7626
  %v8940 = vunpack.c.h.b16 %v7626
  %v8941 = vunpack.c.l.b16 %v7627
  %v8942 = vunpack.c.h.b16 %v7627
  %v8943 = vunpack.c.l.b16 %v7628
  %v8944 = vunpack.c.h.b16 %v7628
  %v8945 = vunpack.c.l.b16 %v7629
  %v8946 = vunpack.c.h.b16 %v7629
  %v8947 = vunpack.c.l.b16 %v7630
  %v8948 = vunpack.c.h.b16 %v7630
  %v8949 = vunpack.c.l.b16 %v7631
  %v8950 = vunpack.c.h.b16 %v7631
  %v8951 = vunpack.c.l.b16 %v7632
  %v8952 = vunpack.c.h.b16 %v7632
  %v8953 = vunpack.c.l.b16 %v7633
  %v8954 = vunpack.c.h.b16 %v7633
  %v8955 = vunpack.c.l.b16 %v7634
  %v8956 = vunpack.c.h.b16 %v7634
  %v8957 = vunpack.c.l.b16 %v7635
  %v8958 = vunpack.c.h.b16 %v7635
  %v8959 = vunpack.c.l.b16 %v7636
  %v8960 = vunpack.c.h.b16 %v7636
  %v8961 = vunpack.c.l.b16 %v7637
  %v8962 = vunpack.c.h.b16 %v7637
  %v8963 = vunpack.c.l.b16 %v7638
  %v8964 = vunpack.c.h.b16 %v7638
  %v8965 = vunpack.c.l.b16 %v7639
  %v8966 = vunpack.c.h.b16 %v7639
  %v8967 = vunpack.c.l.b16 %v7640
  %v8968 = vunpack.c.h.b16 %v7640
  %v8969 = vunpack.c.l.b16 %v7641
  %v8970 = vunpack.c.h.b16 %v7641
  %v8971 = vunpack.c.l.b16 %v7642
  %v8972 = vunpack.c.h.b16 %v7642
  %v8973 = vunpack.c.l.b16 %v7643
  %v8974 = vunpack.c.h.b16 %v7643
  %v8975 = vunpack.c.l.b16 %v7644
  %v8976 = vunpack.c.h.b16 %v7644
  %v8977 = vunpack.c.l.b16 %v7645
  %v8978 = vunpack.c.h.b16 %v7645
  %v8979 = vunpack.c.l.b16 %v7646
  %v8980 = vunpack.c.h.b16 %v7646
  %v8981 = vunpack.c.l.b16 %v7647
  %v8982 = vunpack.c.h.b16 %v7647
  %v8983 = vunpack.c.l.b16 %v7648
  %v8984 = vunpack.c.h.b16 %v7648
  %v8985 = vunpack.c.l.b16 %v7649
  %v8986 = vunpack.c.h.b16 %v7649
  %v8987 = vunpack.c.l.b16 %v7650
  %v8988 = vunpack.c.h.b16 %v7650
  %v8989 = vunpack.c.l.b16 %v7651
  %v8990 = vunpack.c.h.b16 %v7651
  %v8991 = vunpack.c.l.b16 %v7652
  %v8992 = vunpack.c.h.b16 %v7652
  %v8993 = vunpack.c.l.b16 %v7653
  %v8994 = vunpack.c.h.b16 %v7653
  %v8995 = vunpack.c.l.b16 %v7654
  %v8996 = vunpack.c.h.b16 %v7654
  %v8997 = vunpack.c.l.b16 %v7655
  %v8998 = vunpack.c.h.b16 %v7655
  %v8999 = vunpack.c.l.b16 %v7656
  %v9000 = vunpack.c.h.b16 %v7656
  %v9001 = vunpack.c.l.b16 %v7657
  %v9002 = vunpack.c.h.b16 %v7657
  %v9003 = vunpack.c.l.b16 %v7658
  %v9004 = vunpack.c.h.b16 %v7658
  %v9005 = vunpack.c.l.b16 %v7659
  %v9006 = vunpack.c.h.b16 %v7659
  %v9007 = vunpack.c.l.b16 %v7660
  %v9008 = vunpack.c.h.b16 %v7660
  %v9009 = vunpack.c.l.b16 %v7661
  %v9010 = vunpack.c.h.b16 %v7661
  %v9011 = vpack.c.b16 %v8759, %v8755
  %v9012 = vpack.c.b16 %v8760, %v8756
  %v9013 = vpack.c.b16 %v8761, %v8757
  %v9014 = vpack.c.b16 %v8762, %v8758
  %v9015 = vpack.c.b16 %v8767, %v8763
  %v9016 = vpack.c.b16 %v8768, %v8764
  %v9017 = vpack.c.b16 %v8769, %v8765
  %v9018 = vpack.c.b16 %v8770, %v8766
  %v9019 = vpack.c.b16 %v8775, %v8771
  %v9020 = vpack.c.b16 %v8776, %v8772
  %v9021 = vpack.c.b16 %v8777, %v8773
  %v9022 = vpack.c.b16 %v8778, %v8774
  %v9023 = vpack.c.b16 %v8783, %v8779
  %v9024 = vpack.c.b16 %v8784, %v8780
  %v9025 = vpack.c.b16 %v8785, %v8781
  %v9026 = vpack.c.b16 %v8786, %v8782
  %v9027 = vpack.c.b16 %v8791, %v8787
  %v9028 = vpack.c.b16 %v8792, %v8788
  %v9029 = vpack.c.b16 %v8793, %v8789
  %v9030 = vpack.c.b16 %v8794, %v8790
  %v9031 = vpack.c.b16 %v8799, %v8795
  %v9032 = vpack.c.b16 %v8800, %v8796
  %v9033 = vpack.c.b16 %v8801, %v8797
  %v9034 = vpack.c.b16 %v8802, %v8798
  %v9035 = vpack.c.b16 %v8807, %v8803
  %v9036 = vpack.c.b16 %v8808, %v8804
  %v9037 = vpack.c.b16 %v8809, %v8805
  %v9038 = vpack.c.b16 %v8810, %v8806
  %v9039 = vpack.c.b16 %v8815, %v8811
  %v9040 = vpack.c.b16 %v8816, %v8812
  %v9041 = vpack.c.b16 %v8817, %v8813
  %v9042 = vpack.c.b16 %v8818, %v8814
  %v9043 = vpack.c.b16 %v8823, %v8819
  %v9044 = vpack.c.b16 %v8824, %v8820
  %v9045 = vpack.c.b16 %v8825, %v8821
  %v9046 = vpack.c.b16 %v8826, %v8822
  %v9047 = vpack.c.b16 %v8831, %v8827
  %v9048 = vpack.c.b16 %v8832, %v8828
  %v9049 = vpack.c.b16 %v8833, %v8829
  %v9050 = vpack.c.b16 %v8834, %v8830
  %v9051 = vpack.c.b16 %v8839, %v8835
  %v9052 = vpack.c.b16 %v8840, %v8836
  %v9053 = vpack.c.b16 %v8841, %v8837
  %v9054 = vpack.c.b16 %v8842, %v8838
  %v9055 = vpack.c.b16 %v8847, %v8843
  %v9056 = vpack.c.b16 %v8848, %v8844
  %v9057 = vpack.c.b16 %v8849, %v8845
  %v9058 = vpack.c.b16 %v8850, %v8846
  %v9059 = vpack.c.b16 %v8855, %v8851
  %v9060 = vpack.c.b16 %v8856, %v8852
  %v9061 = vpack.c.b16 %v8857, %v8853
  %v9062 = vpack.c.b16 %v8858, %v8854
  %v9063 = vpack.c.b16 %v8863, %v8859
  %v9064 = vpack.c.b16 %v8864, %v8860
  %v9065 = vpack.c.b16 %v8865, %v8861
  %v9066 = vpack.c.b16 %v8866, %v8862
  %v9067 = vpack.c.b16 %v8871, %v8867
  %v9068 = vpack.c.b16 %v8872, %v8868
  %v9069 = vpack.c.b16 %v8873, %v8869
  %v9070 = vpack.c.b16 %v8874, %v8870
  %v9071 = vpack.c.b16 %v8879, %v8875
  %v9072 = vpack.c.b16 %v8880, %v8876
  %v9073 = vpack.c.b16 %v8881, %v8877
  %v9074 = vpack.c.b16 %v8882, %v8878
  %v9075 = vpack.c.b16 %v8887, %v8883
  %v9076 = vpack.c.b16 %v8888, %v8884
  %v9077 = vpack.c.b16 %v8889, %v8885
  %v9078 = vpack.c.b16 %v8890, %v8886
  %v9079 = vpack.c.b16 %v8895, %v8891
  %v9080 = vpack.c.b16 %v8896, %v8892
  %v9081 = vpack.c.b16 %v8897, %v8893
  %v9082 = vpack.c.b16 %v8898, %v8894
  %v9083 = vpack.c.b16 %v8903, %v8899
  %v9084 = vpack.c.b16 %v8904, %v8900
  %v9085 = vpack.c.b16 %v8905, %v8901
  %v9086 = vpack.c.b16 %v8906, %v8902
  %v9087 = vpack.c.b16 %v8911, %v8907
  %v9088 = vpack.c.b16 %v8912, %v8908
  %v9089 = vpack.c.b16 %v8913, %v8909
  %v9090 = vpack.c.b16 %v8914, %v8910
  %v9091 = vpack.c.b16 %v8919, %v8915
  %v9092 = vpack.c.b16 %v8920, %v8916
  %v9093 = vpack.c.b16 %v8921, %v8917
  %v9094 = vpack.c.b16 %v8922, %v8918
  %v9095 = vpack.c.b16 %v8927, %v8923
  %v9096 = vpack.c.b16 %v8928, %v8924
  %v9097 = vpack.c.b16 %v8929, %v8925
  %v9098 = vpack.c.b16 %v8930, %v8926
  %v9099 = vpack.c.b16 %v8935, %v8931
  %v9100 = vpack.c.b16 %v8936, %v8932
  %v9101 = vpack.c.b16 %v8937, %v8933
  %v9102 = vpack.c.b16 %v8938, %v8934
  %v9103 = vpack.c.b16 %v8943, %v8939
  %v9104 = vpack.c.b16 %v8944, %v8940
  %v9105 = vpack.c.b16 %v8945, %v8941
  %v9106 = vpack.c.b16 %v8946, %v8942
  %v9107 = vpack.c.b16 %v8951, %v8947
  %v9108 = vpack.c.b16 %v8952, %v8948
  %v9109 = vpack.c.b16 %v8953, %v8949
  %v9110 = vpack.c.b16 %v8954, %v8950
  %v9111 = vpack.c.b16 %v8959, %v8955
  %v9112 = vpack.c.b16 %v8960, %v8956
  %v9113 = vpack.c.b16 %v8961, %v8957
  %v9114 = vpack.c.b16 %v8962, %v8958
  %v9115 = vpack.c.b16 %v8967, %v8963
  %v9116 = vpack.c.b16 %v8968, %v8964
  %v9117 = vpack.c.b16 %v8969, %v8965
  %v9118 = vpack.c.b16 %v8970, %v8966
  %v9119 = vpack.c.b16 %v8975, %v8971
  %v9120 = vpack.c.b16 %v8976, %v8972
  %v9121 = vpack.c.b16 %v8977, %v8973
  %v9122 = vpack.c.b16 %v8978, %v8974
  %v9123 = vpack.c.b16 %v8983, %v8979
  %v9124 = vpack.c.b16 %v8984, %v8980
  %v9125 = vpack.c.b16 %v8985, %v8981
  %v9126 = vpack.c.b16 %v8986, %v8982
  %v9127 = vpack.c.b16 %v8991, %v8987
  %v9128 = vpack.c.b16 %v8992, %v8988
  %v9129 = vpack.c.b16 %v8993, %v8989
  %v9130 = vpack.c.b16 %v8994, %v8990
  %v9131 = vpack.c.b16 %v8999, %v8995
  %v9132 = vpack.c.b16 %v9000, %v8996
  %v9133 = vpack.c.b16 %v9001, %v8997
  %v9134 = vpack.c.b16 %v9002, %v8998
  %v9135 = vpack.c.b16 %v9007, %v9003
  %v9136 = vpack.c.b16 %v9008, %v9004
  %v9137 = vpack.c.b16 %v9009, %v9005
  %v9138 = vpack.c.b16 %v9010, %v9006
  %9267 = vmatprep.subr.bf16.mxu0 %v9012
  %9268 = vmatpush1.bf16.msra.mxu0 %v9011
  %9269 = vmatprep.subr.bf16.mxu0 %v9016
  %9270 = vmatpush1.bf16.msra.mxu0 %v9015
  %9271 = vmatprep.subr.bf16.mxu0 %v9020
  %9272 = vmatpush1.bf16.msra.mxu0 %v9019
  %9273 = vmatprep.subr.bf16.mxu0 %v9024
  %9274 = vmatpush1.bf16.msra.mxu0 %v9023
  %9275 = vmatprep.subr.bf16.mxu0 %v9028
  %9276 = vmatpush1.bf16.msra.mxu0 %v9027
  %9277 = vmatprep.subr.bf16.mxu0 %v9032
  %9278 = vmatpush1.bf16.msra.mxu0 %v9031
  %9279 = vmatprep.subr.bf16.mxu0 %v9036
  %9280 = vmatpush1.bf16.msra.mxu0 %v9035
  %9281 = vmatprep.subr.bf16.mxu0 %v9040
  %9282 = vmatpush1.bf16.msra.mxu0 %v9039
  %9283 = vmatprep.subr.bf16.mxu0 %v9044
  %9284 = vmatpush1.bf16.msra.mxu0 %v9043
  %9285 = vmatprep.subr.bf16.mxu0 %v9048
  %9286 = vmatpush1.bf16.msra.mxu0 %v9047
  %9287 = vmatprep.subr.bf16.mxu0 %v9052
  %9288 = vmatpush1.bf16.msra.mxu0 %v9051
  %9289 = vmatprep.subr.bf16.mxu0 %v9056
  %9290 = vmatpush1.bf16.msra.mxu0 %v9055
  %9291 = vmatprep.subr.bf16.mxu0 %v9060
  %9292 = vmatpush1.bf16.msra.mxu0 %v9059
  %9293 = vmatprep.subr.bf16.mxu0 %v9064
  %9294 = vmatpush1.bf16.msra.mxu0 %v9063
  %9295 = vmatprep.subr.bf16.mxu0 %v9068
  %9296 = vmatpush1.bf16.msra.mxu0 %v9067
  %9297 = vmatprep.subr.bf16.mxu0 %v9072
  %9298 = vmatpush1.bf16.msra.mxu0 %v9071
  %9299 = vmatprep.mubr.bf16.mxu0 %v7531
  %9300 = vmatmul.mubr.bf16.gmra.mrb[0].mxu0 %v7530
  %v9301 = vpop.f32.mrb[0].mxu0
  %v9302 = vadd.f32 %v8533, %v9301
  %v9303 = vpop.f32.mrb[0].mxu0
  %v9304 = vadd.f32 %v8535, %v9303
  %v9305 = vpop.f32.mrb[0].mxu0
  %v9306 = vadd.f32 %v8537, %v9305
  %v9307 = vpop.f32.mrb[0].mxu0
  %v9308 = vadd.f32 %v8539, %v9307
  %9309 = vdwg.mxu0
  %9310 = vmatprep.subr.bf16.mxu0 %v9076
  %9311 = vmatpush1.bf16.msra.mxu0 %v9075
  %9312 = vmatprep.subr.bf16.mxu0 %v9080
  %9313 = vmatpush1.bf16.msra.mxu0 %v9079
  %9314 = vmatprep.subr.bf16.mxu0 %v9084
  %9315 = vmatpush1.bf16.msra.mxu0 %v9083
  %9316 = vmatprep.subr.bf16.mxu0 %v9088
  %9317 = vmatpush1.bf16.msra.mxu0 %v9087
  %9318 = vmatprep.subr.bf16.mxu0 %v9092
  %9319 = vmatpush1.bf16.msra.mxu0 %v9091
  %9320 = vmatprep.subr.bf16.mxu0 %v9096
  %9321 = vmatpush1.bf16.msra.mxu0 %v9095
  %9322 = vmatprep.subr.bf16.mxu0 %v9100
  %9323 = vmatpush1.bf16.msra.mxu0 %v9099
  %9324 = vmatprep.subr.bf16.mxu0 %v9104
  %9325 = vmatpush1.bf16.msra.mxu0 %v9103
  %9326 = vmatprep.subr.bf16.mxu0 %v9108
  %9327 = vmatpush1.bf16.msra.mxu0 %v9107
  %9328 = vmatprep.subr.bf16.mxu0 %v9112
  %9329 = vmatpush1.bf16.msra.mxu0 %v9111
  %9330 = vmatprep.subr.bf16.mxu0 %v9116
  %9331 = vmatpush1.bf16.msra.mxu0 %v9115
  %9332 = vmatprep.subr.bf16.mxu0 %v9120
  %9333 = vmatpush1.bf16.msra.mxu0 %v9119
  %9334 = vmatprep.subr.bf16.mxu0 %v9124
  %9335 = vmatpush1.bf16.msra.mxu0 %v9123
  %9336 = vmatprep.subr.bf16.mxu0 %v9128
  %9337 = vmatpush1.bf16.msra.mxu0 %v9127
  %9338 = vmatprep.subr.bf16.mxu0 %v9132
  %9339 = vmatpush1.bf16.msra.mxu0 %v9131
  %9340 = vmatprep.subr.bf16.mxu0 %v9136
  %9341 = vmatpush1.bf16.msra.mxu0 %v9135
  %9342 = vmatprep.mubr.bf16.mxu0 %v7533
  %9343 = vmatmul.mubr.bf16.gmra.mrb[0].mxu0 %v7532
  %v9344 = vpop.f32.mrb[0].mxu0
  %v9345 = vadd.f32 %v9302, %v9344
  %v9346 = vpop.f32.mrb[0].mxu0
  %v9347 = vadd.f32 %v9304, %v9346
  %v9348 = vpop.f32.mrb[0].mxu0
  %v9349 = vadd.f32 %v9306, %v9348
  %v9350 = vpop.f32.mrb[0].mxu0
  %v9351 = vadd.f32 %v9308, %v9350
  %9352 = vdwg.mxu0
  %9353 = vmatprep.subr.bf16.mxu0 %v9014
  %9354 = vmatpush1.bf16.msra.mxu0 %v9013
  %9355 = vmatprep.subr.bf16.mxu0 %v9018
  %9356 = vmatpush1.bf16.msra.mxu0 %v9017
  %9357 = vmatprep.subr.bf16.mxu0 %v9022
  %9358 = vmatpush1.bf16.msra.mxu0 %v9021
  %9359 = vmatprep.subr.bf16.mxu0 %v9026
  %9360 = vmatpush1.bf16.msra.mxu0 %v9025
  %9361 = vmatprep.subr.bf16.mxu0 %v9030
  %9362 = vmatpush1.bf16.msra.mxu0 %v9029
  %9363 = vmatprep.subr.bf16.mxu0 %v9034
  %9364 = vmatpush1.bf16.msra.mxu0 %v9033
  %9365 = vmatprep.subr.bf16.mxu0 %v9038
  %9366 = vmatpush1.bf16.msra.mxu0 %v9037
  %9367 = vmatprep.subr.bf16.mxu0 %v9042
  %9368 = vmatpush1.bf16.msra.mxu0 %v9041
  %9369 = vmatprep.subr.bf16.mxu0 %v9046
  %9370 = vmatpush1.bf16.msra.mxu0 %v9045
  %9371 = vmatprep.subr.bf16.mxu0 %v9050
  %9372 = vmatpush1.bf16.msra.mxu0 %v9049
  %9373 = vmatprep.subr.bf16.mxu0 %v9054
  %9374 = vmatpush1.bf16.msra.mxu0 %v9053
  %9375 = vmatprep.subr.bf16.mxu0 %v9058
  %9376 = vmatpush1.bf16.msra.mxu0 %v9057
  %9377 = vmatprep.subr.bf16.mxu0 %v9062
  %9378 = vmatpush1.bf16.msra.mxu0 %v9061
  %9379 = vmatprep.subr.bf16.mxu0 %v9066
  %9380 = vmatpush1.bf16.msra.mxu0 %v9065
  %9381 = vmatprep.subr.bf16.mxu0 %v9070
  %9382 = vmatpush1.bf16.msra.mxu0 %v9069
  %9383 = vmatprep.subr.bf16.mxu0 %v9074
  %9384 = vmatpush1.bf16.msra.mxu0 %v9073
  %9385 = vmatprep.mubr.bf16.mxu0 %v7531
  %9386 = vmatmul.mubr.bf16.gmra.mrb[0].mxu0 %v7530
  %v9387 = vpop.f32.mrb[0].mxu0
  %v9388 = vadd.f32 %v8619, %v9387
  %v9389 = vpop.f32.mrb[0].mxu0
  %v9390 = vadd.f32 %v8621, %v9389
  %v9391 = vpop.f32.mrb[0].mxu0
  %v9392 = vadd.f32 %v8623, %v9391
  %v9393 = vpop.f32.mrb[0].mxu0
  %v9394 = vadd.f32 %v8625, %v9393
  %9395 = vdwg.mxu0
  %9396 = vmatprep.subr.bf16.mxu0 %v9078
  %9397 = vmatpush1.bf16.msra.mxu0 %v9077
  %9398 = vmatprep.subr.bf16.mxu0 %v9082
  %9399 = vmatpush1.bf16.msra.mxu0 %v9081
  %9400 = vmatprep.subr.bf16.mxu0 %v9086
  %9401 = vmatpush1.bf16.msra.mxu0 %v9085
  %9402 = vmatprep.subr.bf16.mxu0 %v9090
  %9403 = vmatpush1.bf16.msra.mxu0 %v9089
  %9404 = vmatprep.subr.bf16.mxu0 %v9094
  %9405 = vmatpush1.bf16.msra.mxu0 %v9093
  %9406 = vmatprep.subr.bf16.mxu0 %v9098
  %9407 = vmatpush1.bf16.msra.mxu0 %v9097
  %9408 = vmatprep.subr.bf16.mxu0 %v9102
  %9409 = vmatpush1.bf16.msra.mxu0 %v9101
  %9410 = vmatprep.subr.bf16.mxu0 %v9106
  %9411 = vmatpush1.bf16.msra.mxu0 %v9105
  %9412 = vmatprep.subr.bf16.mxu0 %v9110
  %9413 = vmatpush1.bf16.msra.mxu0 %v9109
  %9414 = vmatprep.subr.bf16.mxu0 %v9114
  %9415 = vmatpush1.bf16.msra.mxu0 %v9113
  %9416 = vmatprep.subr.bf16.mxu0 %v9118
  %9417 = vmatpush1.bf16.msra.mxu0 %v9117
  %9418 = vmatprep.subr.bf16.mxu0 %v9122
  %9419 = vmatpush1.bf16.msra.mxu0 %v9121
  %9420 = vmatprep.subr.bf16.mxu0 %v9126
  %9421 = vmatpush1.bf16.msra.mxu0 %v9125
  %9422 = vmatprep.subr.bf16.mxu0 %v9130
  %9423 = vmatpush1.bf16.msra.mxu0 %v9129
  %9424 = vmatprep.subr.bf16.mxu0 %v9134
  %9425 = vmatpush1.bf16.msra.mxu0 %v9133
  %9426 = vmatprep.subr.bf16.mxu0 %v9138
  %9427 = vmatpush1.bf16.msra.mxu0 %v9137
  %9428 = vmatprep.mubr.bf16.mxu0 %v7533
  %9429 = vmatmul.mubr.bf16.gmra.mrb[0].mxu0 %v7532
  %v9430 = vpop.f32.mrb[0].mxu0
  %v9431 = vadd.f32 %v9388, %v9430
  %v9432 = vpop.f32.mrb[0].mxu0
  %v9433 = vadd.f32 %v9390, %v9432
  %v9434 = vpop.f32.mrb[0].mxu0
  %v9435 = vadd.f32 %v9392, %v9434
  %v9436 = vpop.f32.mrb[0].mxu0
  %v9437 = vadd.f32 %v9394, %v9436
  %9438 = vdwg.mxu0
  %s9439 = scalar_lea.vmem %s4, 2048
  %v9440 = vld [vmem:[%s9439] sm:$0xff]
  %v9441 = vld [vmem:[%s9439 + $0x8] sm:$0xff]
  %v9442 = vld [vmem:[%s9439 + $0x10] sm:$0xff]
  %v9443 = vld [vmem:[%s9439 + $0x18] sm:$0xff]
  %v9444 = vld [vmem:[%s9439 + $0x20] sm:$0xff]
  %v9445 = vld [vmem:[%s9439 + $0x28] sm:$0xff]
  %v9446 = vld [vmem:[%s9439 + $0x30] sm:$0xff]
  %v9447 = vld [vmem:[%s9439 + $0x38] sm:$0xff]
  %v9448 = vld [vmem:[%s9439 + $0x40] sm:$0xff]
  %v9449 = vld [vmem:[%s9439 + $0x48] sm:$0xff]
  %v9450 = vld [vmem:[%s9439 + $0x50] sm:$0xff]
  %v9451 = vld [vmem:[%s9439 + $0x58] sm:$0xff]
  %v9452 = vld [vmem:[%s9439 + $0x60] sm:$0xff]
  %v9453 = vld [vmem:[%s9439 + $0x68] sm:$0xff]
  %v9454 = vld [vmem:[%s9439 + $0x70] sm:$0xff]
  %v9455 = vld [vmem:[%s9439 + $0x78] sm:$0xff]
  %v9456 = vld [vmem:[%s9439 + $0x80] sm:$0xff]
  %v9457 = vld [vmem:[%s9439 + $0x88] sm:$0xff]
  %v9458 = vld [vmem:[%s9439 + $0x90] sm:$0xff]
  %v9459 = vld [vmem:[%s9439 + $0x98] sm:$0xff]
  %v9460 = vld [vmem:[%s9439 + $0xa0] sm:$0xff]
  %v9461 = vld [vmem:[%s9439 + $0xa8] sm:$0xff]
  %v9462 = vld [vmem:[%s9439 + $0xb0] sm:$0xff]
  %v9463 = vld [vmem:[%s9439 + $0xb8] sm:$0xff]
  %v9464 = vld [vmem:[%s9439 + $0xc0] sm:$0xff]
  %v9465 = vld [vmem:[%s9439 + $0xc8] sm:$0xff]
  %v9466 = vld [vmem:[%s9439 + $0xd0] sm:$0xff]
  %v9467 = vld [vmem:[%s9439 + $0xd8] sm:$0xff]
  %v9468 = vld [vmem:[%s9439 + $0xe0] sm:$0xff]
  %v9469 = vld [vmem:[%s9439 + $0xe8] sm:$0xff]
  %v9470 = vld [vmem:[%s9439 + $0xf0] sm:$0xff]
  %v9471 = vld [vmem:[%s9439 + $0xf8] sm:$0xff]
  %v9472 = vld [vmem:[%s9439 + $0x100] sm:$0xff]
  %v9473 = vld [vmem:[%s9439 + $0x108] sm:$0xff]
  %v9474 = vld [vmem:[%s9439 + $0x110] sm:$0xff]
  %v9475 = vld [vmem:[%s9439 + $0x118] sm:$0xff]
  %v9476 = vld [vmem:[%s9439 + $0x120] sm:$0xff]
  %v9477 = vld [vmem:[%s9439 + $0x128] sm:$0xff]
  %v9478 = vld [vmem:[%s9439 + $0x130] sm:$0xff]
  %v9479 = vld [vmem:[%s9439 + $0x138] sm:$0xff]
  %v9480 = vld [vmem:[%s9439 + $0x140] sm:$0xff]
  %v9481 = vld [vmem:[%s9439 + $0x148] sm:$0xff]
  %v9482 = vld [vmem:[%s9439 + $0x150] sm:$0xff]
  %v9483 = vld [vmem:[%s9439 + $0x158] sm:$0xff]
  %v9484 = vld [vmem:[%s9439 + $0x160] sm:$0xff]
  %v9485 = vld [vmem:[%s9439 + $0x168] sm:$0xff]
  %v9486 = vld [vmem:[%s9439 + $0x170] sm:$0xff]
  %v9487 = vld [vmem:[%s9439 + $0x178] sm:$0xff]
  %v9488 = vld [vmem:[%s9439 + $0x180] sm:$0xff]
  %v9489 = vld [vmem:[%s9439 + $0x188] sm:$0xff]
  %v9490 = vld [vmem:[%s9439 + $0x190] sm:$0xff]
  %v9491 = vld [vmem:[%s9439 + $0x198] sm:$0xff]
  %v9492 = vld [vmem:[%s9439 + $0x1a0] sm:$0xff]
  %v9493 = vld [vmem:[%s9439 + $0x1a8] sm:$0xff]
  %v9494 = vld [vmem:[%s9439 + $0x1b0] sm:$0xff]
  %v9495 = vld [vmem:[%s9439 + $0x1b8] sm:$0xff]
  %v9496 = vld [vmem:[%s9439 + $0x1c0] sm:$0xff]
  %v9497 = vld [vmem:[%s9439 + $0x1c8] sm:$0xff]
  %v9498 = vld [vmem:[%s9439 + $0x1d0] sm:$0xff]
  %v9499 = vld [vmem:[%s9439 + $0x1d8] sm:$0xff]
  %v9500 = vld [vmem:[%s9439 + $0x1e0] sm:$0xff]
  %v9501 = vld [vmem:[%s9439 + $0x1e8] sm:$0xff]
  %v9502 = vld [vmem:[%s9439 + $0x1f0] sm:$0xff]
  %v9503 = vld [vmem:[%s9439 + $0x1f8] sm:$0xff]
  %v9504 = vld [vmem:[%s9439 + $0x200] sm:$0xff]
  %v9505 = vld [vmem:[%s9439 + $0x208] sm:$0xff]
  %v9506 = vld [vmem:[%s9439 + $0x210] sm:$0xff]
  %v9507 = vld [vmem:[%s9439 + $0x218] sm:$0xff]
  %v9508 = vld [vmem:[%s9439 + $0x220] sm:$0xff]
  %v9509 = vld [vmem:[%s9439 + $0x228] sm:$0xff]
  %v9510 = vld [vmem:[%s9439 + $0x230] sm:$0xff]
  %v9511 = vld [vmem:[%s9439 + $0x238] sm:$0xff]
  %v9512 = vld [vmem:[%s9439 + $0x240] sm:$0xff]
  %v9513 = vld [vmem:[%s9439 + $0x248] sm:$0xff]
  %v9514 = vld [vmem:[%s9439 + $0x250] sm:$0xff]
  %v9515 = vld [vmem:[%s9439 + $0x258] sm:$0xff]
  %v9516 = vld [vmem:[%s9439 + $0x260] sm:$0xff]
  %v9517 = vld [vmem:[%s9439 + $0x268] sm:$0xff]
  %v9518 = vld [vmem:[%s9439 + $0x270] sm:$0xff]
  %v9519 = vld [vmem:[%s9439 + $0x278] sm:$0xff]
  %v9520 = vld [vmem:[%s9439 + $0x280] sm:$0xff]
  %v9521 = vld [vmem:[%s9439 + $0x288] sm:$0xff]
  %v9522 = vld [vmem:[%s9439 + $0x290] sm:$0xff]
  %v9523 = vld [vmem:[%s9439 + $0x298] sm:$0xff]
  %v9524 = vld [vmem:[%s9439 + $0x2a0] sm:$0xff]
  %v9525 = vld [vmem:[%s9439 + $0x2a8] sm:$0xff]
  %v9526 = vld [vmem:[%s9439 + $0x2b0] sm:$0xff]
  %v9527 = vld [vmem:[%s9439 + $0x2b8] sm:$0xff]
  %v9528 = vld [vmem:[%s9439 + $0x2c0] sm:$0xff]
  %v9529 = vld [vmem:[%s9439 + $0x2c8] sm:$0xff]
  %v9530 = vld [vmem:[%s9439 + $0x2d0] sm:$0xff]
  %v9531 = vld [vmem:[%s9439 + $0x2d8] sm:$0xff]
  %v9532 = vld [vmem:[%s9439 + $0x2e0] sm:$0xff]
  %v9533 = vld [vmem:[%s9439 + $0x2e8] sm:$0xff]
  %v9534 = vld [vmem:[%s9439 + $0x2f0] sm:$0xff]
  %v9535 = vld [vmem:[%s9439 + $0x2f8] sm:$0xff]
  %v9536 = vld [vmem:[%s9439 + $0x300] sm:$0xff]
  %v9537 = vld [vmem:[%s9439 + $0x308] sm:$0xff]
  %v9538 = vld [vmem:[%s9439 + $0x310] sm:$0xff]
  %v9539 = vld [vmem:[%s9439 + $0x318] sm:$0xff]
  %v9540 = vld [vmem:[%s9439 + $0x320] sm:$0xff]
  %v9541 = vld [vmem:[%s9439 + $0x328] sm:$0xff]
  %v9542 = vld [vmem:[%s9439 + $0x330] sm:$0xff]
  %v9543 = vld [vmem:[%s9439 + $0x338] sm:$0xff]
  %v9544 = vld [vmem:[%s9439 + $0x340] sm:$0xff]
  %v9545 = vld [vmem:[%s9439 + $0x348] sm:$0xff]
  %v9546 = vld [vmem:[%s9439 + $0x350] sm:$0xff]
  %v9547 = vld [vmem:[%s9439 + $0x358] sm:$0xff]
  %v9548 = vld [vmem:[%s9439 + $0x360] sm:$0xff]
  %v9549 = vld [vmem:[%s9439 + $0x368] sm:$0xff]
  %v9550 = vld [vmem:[%s9439 + $0x370] sm:$0xff]
  %v9551 = vld [vmem:[%s9439 + $0x378] sm:$0xff]
  %v9552 = vld [vmem:[%s9439 + $0x380] sm:$0xff]
  %v9553 = vld [vmem:[%s9439 + $0x388] sm:$0xff]
  %v9554 = vld [vmem:[%s9439 + $0x390] sm:$0xff]
  %v9555 = vld [vmem:[%s9439 + $0x398] sm:$0xff]
  %v9556 = vld [vmem:[%s9439 + $0x3a0] sm:$0xff]
  %v9557 = vld [vmem:[%s9439 + $0x3a8] sm:$0xff]
  %v9558 = vld [vmem:[%s9439 + $0x3b0] sm:$0xff]
  %v9559 = vld [vmem:[%s9439 + $0x3b8] sm:$0xff]
  %v9560 = vld [vmem:[%s9439 + $0x3c0] sm:$0xff]
  %v9561 = vld [vmem:[%s9439 + $0x3c8] sm:$0xff]
  %v9562 = vld [vmem:[%s9439 + $0x3d0] sm:$0xff]
  %v9563 = vld [vmem:[%s9439 + $0x3d8] sm:$0xff]
  %v9564 = vld [vmem:[%s9439 + $0x3e0] sm:$0xff]
  %v9565 = vld [vmem:[%s9439 + $0x3e8] sm:$0xff]
  %v9566 = vld [vmem:[%s9439 + $0x3f0] sm:$0xff]
  %v9567 = vld [vmem:[%s9439 + $0x3f8] sm:$0xff]
  %v9568 = vld [vmem:[#allocation4] sm:$0xfc]
  %v9569 = vld [vmem:[#allocation4 + $0x8] sm:$0xfc]
  %v9570 = vld [vmem:[#allocation4 + $0x10] sm:$0xfc]
  %v9571 = vld [vmem:[#allocation4 + $0x18] sm:$0xfc]
  %v9572 = vld [vmem:[#allocation4 + $0x20] sm:$0xff]
  %v9573 = vld [vmem:[#allocation4 + $0x28] sm:$0xff]
  %v9574 = vld [vmem:[#allocation4 + $0x30] sm:$0xff]
  %v9575 = vld [vmem:[#allocation4 + $0x38] sm:$0xff]
  %v9576 = vpack.c.bf16 %v9572, %v9568
  %v9577 = vpack.c.bf16 %v9573, %v9569
  %v9578 = vpack.c.bf16 %v9574, %v9570
  %v9579 = vpack.c.bf16 %v9575, %v9571
  %s9580 = scalar_lea.vmem %s4, 3072
  %v9581 = vld [vmem:[%s9580] sm:$0xff]
  %v9582 = vld [vmem:[%s9580 + $0x8] sm:$0xff]
  %v9583 = vld [vmem:[%s9580 + $0x10] sm:$0xff]
  %v9584 = vld [vmem:[%s9580 + $0x18] sm:$0xff]
  %v9585 = vld [vmem:[%s9580 + $0x20] sm:$0xff]
  %v9586 = vld [vmem:[%s9580 + $0x28] sm:$0xff]
  %v9587 = vld [vmem:[%s9580 + $0x30] sm:$0xff]
  %v9588 = vld [vmem:[%s9580 + $0x38] sm:$0xff]
  %v9589 = vld [vmem:[%s9580 + $0x40] sm:$0xff]
  %v9590 = vld [vmem:[%s9580 + $0x48] sm:$0xff]
  %v9591 = vld [vmem:[%s9580 + $0x50] sm:$0xff]
  %v9592 = vld [vmem:[%s9580 + $0x58] sm:$0xff]
  %v9593 = vld [vmem:[%s9580 + $0x60] sm:$0xff]
  %v9594 = vld [vmem:[%s9580 + $0x68] sm:$0xff]
  %v9595 = vld [vmem:[%s9580 + $0x70] sm:$0xff]
  %v9596 = vld [vmem:[%s9580 + $0x78] sm:$0xff]
  %v9597 = vld [vmem:[%s9580 + $0x80] sm:$0xff]
  %v9598 = vld [vmem:[%s9580 + $0x88] sm:$0xff]
  %v9599 = vld [vmem:[%s9580 + $0x90] sm:$0xff]
  %v9600 = vld [vmem:[%s9580 + $0x98] sm:$0xff]
  %v9601 = vld [vmem:[%s9580 + $0xa0] sm:$0xff]
  %v9602 = vld [vmem:[%s9580 + $0xa8] sm:$0xff]
  %v9603 = vld [vmem:[%s9580 + $0xb0] sm:$0xff]
  %v9604 = vld [vmem:[%s9580 + $0xb8] sm:$0xff]
  %v9605 = vld [vmem:[%s9580 + $0xc0] sm:$0xff]
  %v9606 = vld [vmem:[%s9580 + $0xc8] sm:$0xff]
  %v9607 = vld [vmem:[%s9580 + $0xd0] sm:$0xff]
  %v9608 = vld [vmem:[%s9580 + $0xd8] sm:$0xff]
  %v9609 = vld [vmem:[%s9580 + $0xe0] sm:$0xff]
  %v9610 = vld [vmem:[%s9580 + $0xe8] sm:$0xff]
  %v9611 = vld [vmem:[%s9580 + $0xf0] sm:$0xff]
  %v9612 = vld [vmem:[%s9580 + $0xf8] sm:$0xff]
  %v9613 = vld [vmem:[%s9580 + $0x100] sm:$0xff]
  %v9614 = vld [vmem:[%s9580 + $0x108] sm:$0xff]
  %v9615 = vld [vmem:[%s9580 + $0x110] sm:$0xff]
  %v9616 = vld [vmem:[%s9580 + $0x118] sm:$0xff]
  %v9617 = vld [vmem:[%s9580 + $0x120] sm:$0xff]
  %v9618 = vld [vmem:[%s9580 + $0x128] sm:$0xff]
  %v9619 = vld [vmem:[%s9580 + $0x130] sm:$0xff]
  %v9620 = vld [vmem:[%s9580 + $0x138] sm:$0xff]
  %v9621 = vld [vmem:[%s9580 + $0x140] sm:$0xff]
  %v9622 = vld [vmem:[%s9580 + $0x148] sm:$0xff]
  %v9623 = vld [vmem:[%s9580 + $0x150] sm:$0xff]
  %v9624 = vld [vmem:[%s9580 + $0x158] sm:$0xff]
  %v9625 = vld [vmem:[%s9580 + $0x160] sm:$0xff]
  %v9626 = vld [vmem:[%s9580 + $0x168] sm:$0xff]
  %v9627 = vld [vmem:[%s9580 + $0x170] sm:$0xff]
  %v9628 = vld [vmem:[%s9580 + $0x178] sm:$0xff]
  %v9629 = vld [vmem:[%s9580 + $0x180] sm:$0xff]
  %v9630 = vld [vmem:[%s9580 + $0x188] sm:$0xff]
  %v9631 = vld [vmem:[%s9580 + $0x190] sm:$0xff]
  %v9632 = vld [vmem:[%s9580 + $0x198] sm:$0xff]
  %v9633 = vld [vmem:[%s9580 + $0x1a0] sm:$0xff]
  %v9634 = vld [vmem:[%s9580 + $0x1a8] sm:$0xff]
  %v9635 = vld [vmem:[%s9580 + $0x1b0] sm:$0xff]
  %v9636 = vld [vmem:[%s9580 + $0x1b8] sm:$0xff]
  %v9637 = vld [vmem:[%s9580 + $0x1c0] sm:$0xff]
  %v9638 = vld [vmem:[%s9580 + $0x1c8] sm:$0xff]
  %v9639 = vld [vmem:[%s9580 + $0x1d0] sm:$0xff]
  %v9640 = vld [vmem:[%s9580 + $0x1d8] sm:$0xff]
  %v9641 = vld [vmem:[%s9580 + $0x1e0] sm:$0xff]
  %v9642 = vld [vmem:[%s9580 + $0x1e8] sm:$0xff]
  %v9643 = vld [vmem:[%s9580 + $0x1f0] sm:$0xff]
  %v9644 = vld [vmem:[%s9580 + $0x1f8] sm:$0xff]
  %v9645 = vld [vmem:[%s9580 + $0x200] sm:$0xff]
  %v9646 = vld [vmem:[%s9580 + $0x208] sm:$0xff]
  %v9647 = vld [vmem:[%s9580 + $0x210] sm:$0xff]
  %v9648 = vld [vmem:[%s9580 + $0x218] sm:$0xff]
  %v9649 = vld [vmem:[%s9580 + $0x220] sm:$0xff]
  %v9650 = vld [vmem:[%s9580 + $0x228] sm:$0xff]
  %v9651 = vld [vmem:[%s9580 + $0x230] sm:$0xff]
  %v9652 = vld [vmem:[%s9580 + $0x238] sm:$0xff]
  %v9653 = vld [vmem:[%s9580 + $0x240] sm:$0xff]
  %v9654 = vld [vmem:[%s9580 + $0x248] sm:$0xff]
  %v9655 = vld [vmem:[%s9580 + $0x250] sm:$0xff]
  %v9656 = vld [vmem:[%s9580 + $0x258] sm:$0xff]
  %v9657 = vld [vmem:[%s9580 + $0x260] sm:$0xff]
  %v9658 = vld [vmem:[%s9580 + $0x268] sm:$0xff]
  %v9659 = vld [vmem:[%s9580 + $0x270] sm:$0xff]
  %v9660 = vld [vmem:[%s9580 + $0x278] sm:$0xff]
  %v9661 = vld [vmem:[%s9580 + $0x280] sm:$0xff]
  %v9662 = vld [vmem:[%s9580 + $0x288] sm:$0xff]
  %v9663 = vld [vmem:[%s9580 + $0x290] sm:$0xff]
  %v9664 = vld [vmem:[%s9580 + $0x298] sm:$0xff]
  %v9665 = vld [vmem:[%s9580 + $0x2a0] sm:$0xff]
  %v9666 = vld [vmem:[%s9580 + $0x2a8] sm:$0xff]
  %v9667 = vld [vmem:[%s9580 + $0x2b0] sm:$0xff]
  %v9668 = vld [vmem:[%s9580 + $0x2b8] sm:$0xff]
  %v9669 = vld [vmem:[%s9580 + $0x2c0] sm:$0xff]
  %v9670 = vld [vmem:[%s9580 + $0x2c8] sm:$0xff]
  %v9671 = vld [vmem:[%s9580 + $0x2d0] sm:$0xff]
  %v9672 = vld [vmem:[%s9580 + $0x2d8] sm:$0xff]
  %v9673 = vld [vmem:[%s9580 + $0x2e0] sm:$0xff]
  %v9674 = vld [vmem:[%s9580 + $0x2e8] sm:$0xff]
  %v9675 = vld [vmem:[%s9580 + $0x2f0] sm:$0xff]
  %v9676 = vld [vmem:[%s9580 + $0x2f8] sm:$0xff]
  %v9677 = vld [vmem:[%s9580 + $0x300] sm:$0xff]
  %v9678 = vld [vmem:[%s9580 + $0x308] sm:$0xff]
  %v9679 = vld [vmem:[%s9580 + $0x310] sm:$0xff]
  %v9680 = vld [vmem:[%s9580 + $0x318] sm:$0xff]
  %v9681 = vld [vmem:[%s9580 + $0x320] sm:$0xff]
  %v9682 = vld [vmem:[%s9580 + $0x328] sm:$0xff]
  %v9683 = vld [vmem:[%s9580 + $0x330] sm:$0xff]
  %v9684 = vld [vmem:[%s9580 + $0x338] sm:$0xff]
  %v9685 = vld [vmem:[%s9580 + $0x340] sm:$0xff]
  %v9686 = vld [vmem:[%s9580 + $0x348] sm:$0xff]
  %v9687 = vld [vmem:[%s9580 + $0x350] sm:$0xff]
  %v9688 = vld [vmem:[%s9580 + $0x358] sm:$0xff]
  %v9689 = vld [vmem:[%s9580 + $0x360] sm:$0xff]
  %v9690 = vld [vmem:[%s9580 + $0x368] sm:$0xff]
  %v9691 = vld [vmem:[%s9580 + $0x370] sm:$0xff]
  %v9692 = vld [vmem:[%s9580 + $0x378] sm:$0xff]
  %v9693 = vld [vmem:[%s9580 + $0x380] sm:$0xff]
  %v9694 = vld [vmem:[%s9580 + $0x388] sm:$0xff]
  %v9695 = vld [vmem:[%s9580 + $0x390] sm:$0xff]
  %v9696 = vld [vmem:[%s9580 + $0x398] sm:$0xff]
  %v9697 = vld [vmem:[%s9580 + $0x3a0] sm:$0xff]
  %v9698 = vld [vmem:[%s9580 + $0x3a8] sm:$0xff]
  %v9699 = vld [vmem:[%s9580 + $0x3b0] sm:$0xff]
  %v9700 = vld [vmem:[%s9580 + $0x3b8] sm:$0xff]
  %v9701 = vld [vmem:[%s9580 + $0x3c0] sm:$0xff]
  %v9702 = vld [vmem:[%s9580 + $0x3c8] sm:$0xff]
  %v9703 = vld [vmem:[%s9580 + $0x3d0] sm:$0xff]
  %v9704 = vld [vmem:[%s9580 + $0x3d8] sm:$0xff]
  %v9705 = vld [vmem:[%s9580 + $0x3e0] sm:$0xff]
  %v9706 = vld [vmem:[%s9580 + $0x3e8] sm:$0xff]
  %v9707 = vld [vmem:[%s9580 + $0x3f0] sm:$0xff]
  %v9708 = vld [vmem:[%s9580 + $0x3f8] sm:$0xff]
  %v9713 = vrot.slane %v9576, 1
  %v9714 = vrot.slane %v9577, 1
  %v9715 = vrot.slane %v9578, 1
  %v9716 = vrot.slane %v9579, 1
  %v9849 = vunpack.c.l.b16 %v9581
  %v9850 = vunpack.c.h.b16 %v9581
  %v9851 = vunpack.c.l.b16 %v9582
  %v9852 = vunpack.c.h.b16 %v9582
  %v9853 = vunpack.c.l.b16 %v9583
  %v9854 = vunpack.c.h.b16 %v9583
  %v9855 = vunpack.c.l.b16 %v9584
  %v9856 = vunpack.c.h.b16 %v9584
  %v9857 = vunpack.c.l.b16 %v9585
  %v9858 = vunpack.c.h.b16 %v9585
  %v9859 = vunpack.c.l.b16 %v9586
  %v9860 = vunpack.c.h.b16 %v9586
  %v9861 = vunpack.c.l.b16 %v9587
  %v9862 = vunpack.c.h.b16 %v9587
  %v9863 = vunpack.c.l.b16 %v9588
  %v9864 = vunpack.c.h.b16 %v9588
  %v9865 = vunpack.c.l.b16 %v9589
  %v9866 = vunpack.c.h.b16 %v9589
  %v9867 = vunpack.c.l.b16 %v9590
  %v9868 = vunpack.c.h.b16 %v9590
  %v9869 = vunpack.c.l.b16 %v9591
  %v9870 = vunpack.c.h.b16 %v9591
  %v9871 = vunpack.c.l.b16 %v9592
  %v9872 = vunpack.c.h.b16 %v9592
  %v9873 = vunpack.c.l.b16 %v9593
  %v9874 = vunpack.c.h.b16 %v9593
  %v9875 = vunpack.c.l.b16 %v9594
  %v9876 = vunpack.c.h.b16 %v9594
  %v9877 = vunpack.c.l.b16 %v9595
  %v9878 = vunpack.c.h.b16 %v9595
  %v9879 = vunpack.c.l.b16 %v9596
  %v9880 = vunpack.c.h.b16 %v9596
  %v9881 = vunpack.c.l.b16 %v9597
  %v9882 = vunpack.c.h.b16 %v9597
  %v9883 = vunpack.c.l.b16 %v9598
  %v9884 = vunpack.c.h.b16 %v9598
  %v9885 = vunpack.c.l.b16 %v9599
  %v9886 = vunpack.c.h.b16 %v9599
  %v9887 = vunpack.c.l.b16 %v9600
  %v9888 = vunpack.c.h.b16 %v9600
  %v9889 = vunpack.c.l.b16 %v9601
  %v9890 = vunpack.c.h.b16 %v9601
  %v9891 = vunpack.c.l.b16 %v9602
  %v9892 = vunpack.c.h.b16 %v9602
  %v9893 = vunpack.c.l.b16 %v9603
  %v9894 = vunpack.c.h.b16 %v9603
  %v9895 = vunpack.c.l.b16 %v9604
  %v9896 = vunpack.c.h.b16 %v9604
  %v9897 = vunpack.c.l.b16 %v9605
  %v9898 = vunpack.c.h.b16 %v9605
  %v9899 = vunpack.c.l.b16 %v9606
  %v9900 = vunpack.c.h.b16 %v9606
  %v9901 = vunpack.c.l.b16 %v9607
  %v9902 = vunpack.c.h.b16 %v9607
  %v9903 = vunpack.c.l.b16 %v9608
  %v9904 = vunpack.c.h.b16 %v9608
  %v9905 = vunpack.c.l.b16 %v9609
  %v9906 = vunpack.c.h.b16 %v9609
  %v9907 = vunpack.c.l.b16 %v9610
  %v9908 = vunpack.c.h.b16 %v9610
  %v9909 = vunpack.c.l.b16 %v9611
  %v9910 = vunpack.c.h.b16 %v9611
  %v9911 = vunpack.c.l.b16 %v9612
  %v9912 = vunpack.c.h.b16 %v9612
  %v9913 = vunpack.c.l.b16 %v9613
  %v9914 = vunpack.c.h.b16 %v9613
  %v9915 = vunpack.c.l.b16 %v9614
  %v9916 = vunpack.c.h.b16 %v9614
  %v9917 = vunpack.c.l.b16 %v9615
  %v9918 = vunpack.c.h.b16 %v9615
  %v9919 = vunpack.c.l.b16 %v9616
  %v9920 = vunpack.c.h.b16 %v9616
  %v9921 = vunpack.c.l.b16 %v9617
  %v9922 = vunpack.c.h.b16 %v9617
  %v9923 = vunpack.c.l.b16 %v9618
  %v9924 = vunpack.c.h.b16 %v9618
  %v9925 = vunpack.c.l.b16 %v9619
  %v9926 = vunpack.c.h.b16 %v9619
  %v9927 = vunpack.c.l.b16 %v9620
  %v9928 = vunpack.c.h.b16 %v9620
  %v9929 = vunpack.c.l.b16 %v9621
  %v9930 = vunpack.c.h.b16 %v9621
  %v9931 = vunpack.c.l.b16 %v9622
  %v9932 = vunpack.c.h.b16 %v9622
  %v9933 = vunpack.c.l.b16 %v9623
  %v9934 = vunpack.c.h.b16 %v9623
  %v9935 = vunpack.c.l.b16 %v9624
  %v9936 = vunpack.c.h.b16 %v9624
  %v9937 = vunpack.c.l.b16 %v9625
  %v9938 = vunpack.c.h.b16 %v9625
  %v9939 = vunpack.c.l.b16 %v9626
  %v9940 = vunpack.c.h.b16 %v9626
  %v9941 = vunpack.c.l.b16 %v9627
  %v9942 = vunpack.c.h.b16 %v9627
  %v9943 = vunpack.c.l.b16 %v9628
  %v9944 = vunpack.c.h.b16 %v9628
  %v9945 = vunpack.c.l.b16 %v9629
  %v9946 = vunpack.c.h.b16 %v9629
  %v9947 = vunpack.c.l.b16 %v9630
  %v9948 = vunpack.c.h.b16 %v9630
  %v9949 = vunpack.c.l.b16 %v9631
  %v9950 = vunpack.c.h.b16 %v9631
  %v9951 = vunpack.c.l.b16 %v9632
  %v9952 = vunpack.c.h.b16 %v9632
  %v9953 = vunpack.c.l.b16 %v9633
  %v9954 = vunpack.c.h.b16 %v9633
  %v9955 = vunpack.c.l.b16 %v9634
  %v9956 = vunpack.c.h.b16 %v9634
  %v9957 = vunpack.c.l.b16 %v9635
  %v9958 = vunpack.c.h.b16 %v9635
  %v9959 = vunpack.c.l.b16 %v9636
  %v9960 = vunpack.c.h.b16 %v9636
  %v9961 = vunpack.c.l.b16 %v9637
  %v9962 = vunpack.c.h.b16 %v9637
  %v9963 = vunpack.c.l.b16 %v9638
  %v9964 = vunpack.c.h.b16 %v9638
  %v9965 = vunpack.c.l.b16 %v9639
  %v9966 = vunpack.c.h.b16 %v9639
  %v9967 = vunpack.c.l.b16 %v9640
  %v9968 = vunpack.c.h.b16 %v9640
  %v9969 = vunpack.c.l.b16 %v9641
  %v9970 = vunpack.c.h.b16 %v9641
  %v9971 = vunpack.c.l.b16 %v9642
  %v9972 = vunpack.c.h.b16 %v9642
  %v9973 = vunpack.c.l.b16 %v9643
  %v9974 = vunpack.c.h.b16 %v9643
  %v9975 = vunpack.c.l.b16 %v9644
  %v9976 = vunpack.c.h.b16 %v9644
  %v9977 = vunpack.c.l.b16 %v9645
  %v9978 = vunpack.c.h.b16 %v9645
  %v9979 = vunpack.c.l.b16 %v9646
  %v9980 = vunpack.c.h.b16 %v9646
  %v9981 = vunpack.c.l.b16 %v9647
  %v9982 = vunpack.c.h.b16 %v9647
  %v9983 = vunpack.c.l.b16 %v9648
  %v9984 = vunpack.c.h.b16 %v9648
  %v9985 = vunpack.c.l.b16 %v9649
  %v9986 = vunpack.c.h.b16 %v9649
  %v9987 = vunpack.c.l.b16 %v9650
  %v9988 = vunpack.c.h.b16 %v9650
  %v9989 = vunpack.c.l.b16 %v9651
  %v9990 = vunpack.c.h.b16 %v9651
  %v9991 = vunpack.c.l.b16 %v9652
  %v9992 = vunpack.c.h.b16 %v9652
  %v9993 = vunpack.c.l.b16 %v9653
  %v9994 = vunpack.c.h.b16 %v9653
  %v9995 = vunpack.c.l.b16 %v9654
  %v9996 = vunpack.c.h.b16 %v9654
  %v9997 = vunpack.c.l.b16 %v9655
  %v9998 = vunpack.c.h.b16 %v9655
  %v9999 = vunpack.c.l.b16 %v9656
  %v10000 = vunpack.c.h.b16 %v9656
  %v10001 = vunpack.c.l.b16 %v9657
  %v10002 = vunpack.c.h.b16 %v9657
  %v10003 = vunpack.c.l.b16 %v9658
  %v10004 = vunpack.c.h.b16 %v9658
  %v10005 = vunpack.c.l.b16 %v9659
  %v10006 = vunpack.c.h.b16 %v9659
  %v10007 = vunpack.c.l.b16 %v9660
  %v10008 = vunpack.c.h.b16 %v9660
  %v10009 = vunpack.c.l.b16 %v9661
  %v10010 = vunpack.c.h.b16 %v9661
  %v10011 = vunpack.c.l.b16 %v9662
  %v10012 = vunpack.c.h.b16 %v9662
  %v10013 = vunpack.c.l.b16 %v9663
  %v10014 = vunpack.c.h.b16 %v9663
  %v10015 = vunpack.c.l.b16 %v9664
  %v10016 = vunpack.c.h.b16 %v9664
  %v10017 = vunpack.c.l.b16 %v9665
  %v10018 = vunpack.c.h.b16 %v9665
  %v10019 = vunpack.c.l.b16 %v9666
  %v10020 = vunpack.c.h.b16 %v9666
  %v10021 = vunpack.c.l.b16 %v9667
  %v10022 = vunpack.c.h.b16 %v9667
  %v10023 = vunpack.c.l.b16 %v9668
  %v10024 = vunpack.c.h.b16 %v9668
  %v10025 = vunpack.c.l.b16 %v9669
  %v10026 = vunpack.c.h.b16 %v9669
  %v10027 = vunpack.c.l.b16 %v9670
  %v10028 = vunpack.c.h.b16 %v9670
  %v10029 = vunpack.c.l.b16 %v9671
  %v10030 = vunpack.c.h.b16 %v9671
  %v10031 = vunpack.c.l.b16 %v9672
  %v10032 = vunpack.c.h.b16 %v9672
  %v10033 = vunpack.c.l.b16 %v9673
  %v10034 = vunpack.c.h.b16 %v9673
  %v10035 = vunpack.c.l.b16 %v9674
  %v10036 = vunpack.c.h.b16 %v9674
  %v10037 = vunpack.c.l.b16 %v9675
  %v10038 = vunpack.c.h.b16 %v9675
  %v10039 = vunpack.c.l.b16 %v9676
  %v10040 = vunpack.c.h.b16 %v9676
  %v10041 = vunpack.c.l.b16 %v9677
  %v10042 = vunpack.c.h.b16 %v9677
  %v10043 = vunpack.c.l.b16 %v9678
  %v10044 = vunpack.c.h.b16 %v9678
  %v10045 = vunpack.c.l.b16 %v9679
  %v10046 = vunpack.c.h.b16 %v9679
  %v10047 = vunpack.c.l.b16 %v9680
  %v10048 = vunpack.c.h.b16 %v9680
  %v10049 = vunpack.c.l.b16 %v9681
  %v10050 = vunpack.c.h.b16 %v9681
  %v10051 = vunpack.c.l.b16 %v9682
  %v10052 = vunpack.c.h.b16 %v9682
  %v10053 = vunpack.c.l.b16 %v9683
  %v10054 = vunpack.c.h.b16 %v9683
  %v10055 = vunpack.c.l.b16 %v9684
  %v10056 = vunpack.c.h.b16 %v9684
  %v10057 = vunpack.c.l.b16 %v9685
  %v10058 = vunpack.c.h.b16 %v9685
  %v10059 = vunpack.c.l.b16 %v9686
  %v10060 = vunpack.c.h.b16 %v9686
  %v10061 = vunpack.c.l.b16 %v9687
  %v10062 = vunpack.c.h.b16 %v9687
  %v10063 = vunpack.c.l.b16 %v9688
  %v10064 = vunpack.c.h.b16 %v9688
  %v10065 = vunpack.c.l.b16 %v9689
  %v10066 = vunpack.c.h.b16 %v9689
  %v10067 = vunpack.c.l.b16 %v9690
  %v10068 = vunpack.c.h.b16 %v9690
  %v10069 = vunpack.c.l.b16 %v9691
  %v10070 = vunpack.c.h.b16 %v9691
  %v10071 = vunpack.c.l.b16 %v9692
  %v10072 = vunpack.c.h.b16 %v9692
  %v10073 = vunpack.c.l.b16 %v9693
  %v10074 = vunpack.c.h.b16 %v9693
  %v10075 = vunpack.c.l.b16 %v9694
  %v10076 = vunpack.c.h.b16 %v9694
  %v10077 = vunpack.c.l.b16 %v9695
  %v10078 = vunpack.c.h.b16 %v9695
  %v10079 = vunpack.c.l.b16 %v9696
  %v10080 = vunpack.c.h.b16 %v9696
  %v10081 = vunpack.c.l.b16 %v9697
  %v10082 = vunpack.c.h.b16 %v9697
  %v10083 = vunpack.c.l.b16 %v9698
  %v10084 = vunpack.c.h.b16 %v9698
  %v10085 = vunpack.c.l.b16 %v9699
  %v10086 = vunpack.c.h.b16 %v9699
  %v10087 = vunpack.c.l.b16 %v9700
  %v10088 = vunpack.c.h.b16 %v9700
  %v10089 = vunpack.c.l.b16 %v9701
  %v10090 = vunpack.c.h.b16 %v9701
  %v10091 = vunpack.c.l.b16 %v9702
  %v10092 = vunpack.c.h.b16 %v9702
  %v10093 = vunpack.c.l.b16 %v9703
  %v10094 = vunpack.c.h.b16 %v9703
  %v10095 = vunpack.c.l.b16 %v9704
  %v10096 = vunpack.c.h.b16 %v9704
  %v10097 = vunpack.c.l.b16 %v9705
  %v10098 = vunpack.c.h.b16 %v9705
  %v10099 = vunpack.c.l.b16 %v9706
  %v10100 = vunpack.c.h.b16 %v9706
  %v10101 = vunpack.c.l.b16 %v9707
  %v10102 = vunpack.c.h.b16 %v9707
  %v10103 = vunpack.c.l.b16 %v9708
  %v10104 = vunpack.c.h.b16 %v9708
  %v10105 = vpack.c.b16 %v9853, %v9849
  %v10106 = vpack.c.b16 %v9854, %v9850
  %v10107 = vpack.c.b16 %v9855, %v9851
  %v10108 = vpack.c.b16 %v9856, %v9852
  %v10109 = vpack.c.b16 %v9861, %v9857
  %v10110 = vpack.c.b16 %v9862, %v9858
  %v10111 = vpack.c.b16 %v9863, %v9859
  %v10112 = vpack.c.b16 %v9864, %v9860
  %v10113 = vpack.c.b16 %v9869, %v9865
  %v10114 = vpack.c.b16 %v9870, %v9866
  %v10115 = vpack.c.b16 %v9871, %v9867
  %v10116 = vpack.c.b16 %v9872, %v9868
  %v10117 = vpack.c.b16 %v9877, %v9873
  %v10118 = vpack.c.b16 %v9878, %v9874
  %v10119 = vpack.c.b16 %v9879, %v9875
  %v10120 = vpack.c.b16 %v9880, %v9876
  %v10121 = vpack.c.b16 %v9885, %v9881
  %v10122 = vpack.c.b16 %v9886, %v9882
  %v10123 = vpack.c.b16 %v9887, %v9883
  %v10124 = vpack.c.b16 %v9888, %v9884
  %v10125 = vpack.c.b16 %v9893, %v9889
  %v10126 = vpack.c.b16 %v9894, %v9890
  %v10127 = vpack.c.b16 %v9895, %v9891
  %v10128 = vpack.c.b16 %v9896, %v9892
  %v10129 = vpack.c.b16 %v9901, %v9897
  %v10130 = vpack.c.b16 %v9902, %v9898
  %v10131 = vpack.c.b16 %v9903, %v9899
  %v10132 = vpack.c.b16 %v9904, %v9900
  %v10133 = vpack.c.b16 %v9909, %v9905
  %v10134 = vpack.c.b16 %v9910, %v9906
  %v10135 = vpack.c.b16 %v9911, %v9907
  %v10136 = vpack.c.b16 %v9912, %v9908
  %v10137 = vpack.c.b16 %v9917, %v9913
  %v10138 = vpack.c.b16 %v9918, %v9914
  %v10139 = vpack.c.b16 %v9919, %v9915
  %v10140 = vpack.c.b16 %v9920, %v9916
  %v10141 = vpack.c.b16 %v9925, %v9921
  %v10142 = vpack.c.b16 %v9926, %v9922
  %v10143 = vpack.c.b16 %v9927, %v9923
  %v10144 = vpack.c.b16 %v9928, %v9924
  %v10145 = vpack.c.b16 %v9933, %v9929
  %v10146 = vpack.c.b16 %v9934, %v9930
  %v10147 = vpack.c.b16 %v9935, %v9931
  %v10148 = vpack.c.b16 %v9936, %v9932
  %v10149 = vpack.c.b16 %v9941, %v9937
  %v10150 = vpack.c.b16 %v9942, %v9938
  %v10151 = vpack.c.b16 %v9943, %v9939
  %v10152 = vpack.c.b16 %v9944, %v9940
  %v10153 = vpack.c.b16 %v9949, %v9945
  %v10154 = vpack.c.b16 %v9950, %v9946
  %v10155 = vpack.c.b16 %v9951, %v9947
  %v10156 = vpack.c.b16 %v9952, %v9948
  %v10157 = vpack.c.b16 %v9957, %v9953
  %v10158 = vpack.c.b16 %v9958, %v9954
  %v10159 = vpack.c.b16 %v9959, %v9955
  %v10160 = vpack.c.b16 %v9960, %v9956
  %v10161 = vpack.c.b16 %v9965, %v9961
  %v10162 = vpack.c.b16 %v9966, %v9962
  %v10163 = vpack.c.b16 %v9967, %v9963
  %v10164 = vpack.c.b16 %v9968, %v9964
  %v10165 = vpack.c.b16 %v9973, %v9969
  %v10166 = vpack.c.b16 %v9974, %v9970
  %v10167 = vpack.c.b16 %v9975, %v9971
  %v10168 = vpack.c.b16 %v9976, %v9972
  %v10169 = vpack.c.b16 %v9981, %v9977
  %v10170 = vpack.c.b16 %v9982, %v9978
  %v10171 = vpack.c.b16 %v9983, %v9979
  %v10172 = vpack.c.b16 %v9984, %v9980
  %v10173 = vpack.c.b16 %v9989, %v9985
  %v10174 = vpack.c.b16 %v9990, %v9986
  %v10175 = vpack.c.b16 %v9991, %v9987
  %v10176 = vpack.c.b16 %v9992, %v9988
  %v10177 = vpack.c.b16 %v9997, %v9993
  %v10178 = vpack.c.b16 %v9998, %v9994
  %v10179 = vpack.c.b16 %v9999, %v9995
  %v10180 = vpack.c.b16 %v10000, %v9996
  %v10181 = vpack.c.b16 %v10005, %v10001
  %v10182 = vpack.c.b16 %v10006, %v10002
  %v10183 = vpack.c.b16 %v10007, %v10003
  %v10184 = vpack.c.b16 %v10008, %v10004
  %v10185 = vpack.c.b16 %v10013, %v10009
  %v10186 = vpack.c.b16 %v10014, %v10010
  %v10187 = vpack.c.b16 %v10015, %v10011
  %v10188 = vpack.c.b16 %v10016, %v10012
  %v10189 = vpack.c.b16 %v10021, %v10017
  %v10190 = vpack.c.b16 %v10022, %v10018
  %v10191 = vpack.c.b16 %v10023, %v10019
  %v10192 = vpack.c.b16 %v10024, %v10020
  %v10193 = vpack.c.b16 %v10029, %v10025
  %v10194 = vpack.c.b16 %v10030, %v10026
  %v10195 = vpack.c.b16 %v10031, %v10027
  %v10196 = vpack.c.b16 %v10032, %v10028
  %v10197 = vpack.c.b16 %v10037, %v10033
  %v10198 = vpack.c.b16 %v10038, %v10034
  %v10199 = vpack.c.b16 %v10039, %v10035
  %v10200 = vpack.c.b16 %v10040, %v10036
  %v10201 = vpack.c.b16 %v10045, %v10041
  %v10202 = vpack.c.b16 %v10046, %v10042
  %v10203 = vpack.c.b16 %v10047, %v10043
  %v10204 = vpack.c.b16 %v10048, %v10044
  %v10205 = vpack.c.b16 %v10053, %v10049
  %v10206 = vpack.c.b16 %v10054, %v10050
  %v10207 = vpack.c.b16 %v10055, %v10051
  %v10208 = vpack.c.b16 %v10056, %v10052
  %v10209 = vpack.c.b16 %v10061, %v10057
  %v10210 = vpack.c.b16 %v10062, %v10058
  %v10211 = vpack.c.b16 %v10063, %v10059
  %v10212 = vpack.c.b16 %v10064, %v10060
  %v10213 = vpack.c.b16 %v10069, %v10065
  %v10214 = vpack.c.b16 %v10070, %v10066
  %v10215 = vpack.c.b16 %v10071, %v10067
  %v10216 = vpack.c.b16 %v10072, %v10068
  %v10217 = vpack.c.b16 %v10077, %v10073
  %v10218 = vpack.c.b16 %v10078, %v10074
  %v10219 = vpack.c.b16 %v10079, %v10075
  %v10220 = vpack.c.b16 %v10080, %v10076
  %v10221 = vpack.c.b16 %v10085, %v10081
  %v10222 = vpack.c.b16 %v10086, %v10082
  %v10223 = vpack.c.b16 %v10087, %v10083
  %v10224 = vpack.c.b16 %v10088, %v10084
  %v10225 = vpack.c.b16 %v10093, %v10089
  %v10226 = vpack.c.b16 %v10094, %v10090
  %v10227 = vpack.c.b16 %v10095, %v10091
  %v10228 = vpack.c.b16 %v10096, %v10092
  %v10229 = vpack.c.b16 %v10101, %v10097
  %v10230 = vpack.c.b16 %v10102, %v10098
  %v10231 = vpack.c.b16 %v10103, %v10099
  %v10232 = vpack.c.b16 %v10104, %v10100
  %10361 = vmatprep.subr.bf16.mxu0 %v10106
  %10362 = vmatpush1.bf16.msra.mxu0 %v10105
  %10363 = vmatprep.subr.bf16.mxu0 %v10110
  %10364 = vmatpush1.bf16.msra.mxu0 %v10109
  %10365 = vmatprep.subr.bf16.mxu0 %v10114
  %10366 = vmatpush1.bf16.msra.mxu0 %v10113
  %10367 = vmatprep.subr.bf16.mxu0 %v10118
  %10368 = vmatpush1.bf16.msra.mxu0 %v10117
  %10369 = vmatprep.subr.bf16.mxu0 %v10122
  %10370 = vmatpush1.bf16.msra.mxu0 %v10121
  %10371 = vmatprep.subr.bf16.mxu0 %v10126
  %10372 = vmatpush1.bf16.msra.mxu0 %v10125
  %10373 = vmatprep.subr.bf16.mxu0 %v10130
  %10374 = vmatpush1.bf16.msra.mxu0 %v10129
  %10375 = vmatprep.subr.bf16.mxu0 %v10134
  %10376 = vmatpush1.bf16.msra.mxu0 %v10133
  %10377 = vmatprep.subr.bf16.mxu0 %v10138
  %10378 = vmatpush1.bf16.msra.mxu0 %v10137
  %10379 = vmatprep.subr.bf16.mxu0 %v10142
  %10380 = vmatpush1.bf16.msra.mxu0 %v10141
  %10381 = vmatprep.subr.bf16.mxu0 %v10146
  %10382 = vmatpush1.bf16.msra.mxu0 %v10145
  %10383 = vmatprep.subr.bf16.mxu0 %v10150
  %10384 = vmatpush1.bf16.msra.mxu0 %v10149
  %10385 = vmatprep.subr.bf16.mxu0 %v10154
  %10386 = vmatpush1.bf16.msra.mxu0 %v10153
  %10387 = vmatprep.subr.bf16.mxu0 %v10158
  %10388 = vmatpush1.bf16.msra.mxu0 %v10157
  %10389 = vmatprep.subr.bf16.mxu0 %v10162
  %10390 = vmatpush1.bf16.msra.mxu0 %v10161
  %10391 = vmatprep.subr.bf16.mxu0 %v10166
  %10392 = vmatpush1.bf16.msra.mxu0 %v10165
  %10393 = vmatprep.mubr.bf16.mxu0 %v9714
  %10394 = vmatmul.mubr.bf16.gmra.mrb[0].mxu0 %v9713
  %v10395 = vpop.f32.mrb[0].mxu0
  %v10396 = vadd.f32 0.0, %v10395
  %v10397 = vpop.f32.mrb[0].mxu0
  %v10398 = vadd.f32 0.0, %v10397
  %v10399 = vpop.f32.mrb[0].mxu0
  %v10400 = vadd.f32 0.0, %v10399
  %v10401 = vpop.f32.mrb[0].mxu0
  %v10402 = vadd.f32 0.0, %v10401
  %10403 = vdwg.mxu0
  %10404 = vmatprep.subr.bf16.mxu0 %v10170
  %10405 = vmatpush1.bf16.msra.mxu0 %v10169
  %10406 = vmatprep.subr.bf16.mxu0 %v10174
  %10407 = vmatpush1.bf16.msra.mxu0 %v10173
  %10408 = vmatprep.subr.bf16.mxu0 %v10178
  %10409 = vmatpush1.bf16.msra.mxu0 %v10177
  %10410 = vmatprep.subr.bf16.mxu0 %v10182
  %10411 = vmatpush1.bf16.msra.mxu0 %v10181
  %10412 = vmatprep.subr.bf16.mxu0 %v10186
  %10413 = vmatpush1.bf16.msra.mxu0 %v10185
  %10414 = vmatprep.subr.bf16.mxu0 %v10190
  %10415 = vmatpush1.bf16.msra.mxu0 %v10189
  %10416 = vmatprep.subr.bf16.mxu0 %v10194
  %10417 = vmatpush1.bf16.msra.mxu0 %v10193
  %10418 = vmatprep.subr.bf16.mxu0 %v10198
  %10419 = vmatpush1.bf16.msra.mxu0 %v10197
  %10420 = vmatprep.subr.bf16.mxu0 %v10202
  %10421 = vmatpush1.bf16.msra.mxu0 %v10201
  %10422 = vmatprep.subr.bf16.mxu0 %v10206
  %10423 = vmatpush1.bf16.msra.mxu0 %v10205
  %10424 = vmatprep.subr.bf16.mxu0 %v10210
  %10425 = vmatpush1.bf16.msra.mxu0 %v10209
  %10426 = vmatprep.subr.bf16.mxu0 %v10214
  %10427 = vmatpush1.bf16.msra.mxu0 %v10213
  %10428 = vmatprep.subr.bf16.mxu0 %v10218
  %10429 = vmatpush1.bf16.msra.mxu0 %v10217
  %10430 = vmatprep.subr.bf16.mxu0 %v10222
  %10431 = vmatpush1.bf16.msra.mxu0 %v10221
  %10432 = vmatprep.subr.bf16.mxu0 %v10226
  %10433 = vmatpush1.bf16.msra.mxu0 %v10225
  %10434 = vmatprep.subr.bf16.mxu0 %v10230
  %10435 = vmatpush1.bf16.msra.mxu0 %v10229
  %10436 = vmatprep.mubr.bf16.mxu0 %v9716
  %10437 = vmatmul.mubr.bf16.gmra.mrb[0].mxu0 %v9715
  %v10438 = vpop.f32.mrb[0].mxu0
  %v10439 = vadd.f32 %v10396, %v10438
  %v10440 = vpop.f32.mrb[0].mxu0
  %v10441 = vadd.f32 %v10398, %v10440
  %v10442 = vpop.f32.mrb[0].mxu0
  %v10443 = vadd.f32 %v10400, %v10442
  %v10444 = vpop.f32.mrb[0].mxu0
  %v10445 = vadd.f32 %v10402, %v10444
  %10446 = vdwg.mxu0
  %10447 = vmatprep.subr.bf16.mxu0 %v10108
  %10448 = vmatpush1.bf16.msra.mxu0 %v10107
  %10449 = vmatprep.subr.bf16.mxu0 %v10112
  %10450 = vmatpush1.bf16.msra.mxu0 %v10111
  %10451 = vmatprep.subr.bf16.mxu0 %v10116
  %10452 = vmatpush1.bf16.msra.mxu0 %v10115
  %10453 = vmatprep.subr.bf16.mxu0 %v10120
  %10454 = vmatpush1.bf16.msra.mxu0 %v10119
  %10455 = vmatprep.subr.bf16.mxu0 %v10124
  %10456 = vmatpush1.bf16.msra.mxu0 %v10123
  %10457 = vmatprep.subr.bf16.mxu0 %v10128
  %10458 = vmatpush1.bf16.msra.mxu0 %v10127
  %10459 = vmatprep.subr.bf16.mxu0 %v10132
  %10460 = vmatpush1.bf16.msra.mxu0 %v10131
  %10461 = vmatprep.subr.bf16.mxu0 %v10136
  %10462 = vmatpush1.bf16.msra.mxu0 %v10135
  %10463 = vmatprep.subr.bf16.mxu0 %v10140
  %10464 = vmatpush1.bf16.msra.mxu0 %v10139
  %10465 = vmatprep.subr.bf16.mxu0 %v10144
  %10466 = vmatpush1.bf16.msra.mxu0 %v10143
  %10467 = vmatprep.subr.bf16.mxu0 %v10148
  %10468 = vmatpush1.bf16.msra.mxu0 %v10147
  %10469 = vmatprep.subr.bf16.mxu0 %v10152
  %10470 = vmatpush1.bf16.msra.mxu0 %v10151
  %10471 = vmatprep.subr.bf16.mxu0 %v10156
  %10472 = vmatpush1.bf16.msra.mxu0 %v10155
  %10473 = vmatprep.subr.bf16.mxu0 %v10160
  %10474 = vmatpush1.bf16.msra.mxu0 %v10159
  %10475 = vmatprep.subr.bf16.mxu0 %v10164
  %10476 = vmatpush1.bf16.msra.mxu0 %v10163
  %10477 = vmatprep.subr.bf16.mxu0 %v10168
  %10478 = vmatpush1.bf16.msra.mxu0 %v10167
  %10479 = vmatprep.mubr.bf16.mxu0 %v9714
  %10480 = vmatmul.mubr.bf16.gmra.mrb[0].mxu0 %v9713
  %v10481 = vpop.f32.mrb[0].mxu0
  %v10482 = vadd.f32 0.0, %v10481
  %v10483 = vpop.f32.mrb[0].mxu0
  %v10484 = vadd.f32 0.0, %v10483
  %v10485 = vpop.f32.mrb[0].mxu0
  %v10486 = vadd.f32 0.0, %v10485
  %v10487 = vpop.f32.mrb[0].mxu0
  %v10488 = vadd.f32 0.0, %v10487
  %10489 = vdwg.mxu0
  %10490 = vmatprep.subr.bf16.mxu0 %v10172
  %10491 = vmatpush1.bf16.msra.mxu0 %v10171
  %10492 = vmatprep.subr.bf16.mxu0 %v10176
  %10493 = vmatpush1.bf16.msra.mxu0 %v10175
  %10494 = vmatprep.subr.bf16.mxu0 %v10180
  %10495 = vmatpush1.bf16.msra.mxu0 %v10179
  %10496 = vmatprep.subr.bf16.mxu0 %v10184
  %10497 = vmatpush1.bf16.msra.mxu0 %v10183
  %10498 = vmatprep.subr.bf16.mxu0 %v10188
  %10499 = vmatpush1.bf16.msra.mxu0 %v10187
  %10500 = vmatprep.subr.bf16.mxu0 %v10192
  %10501 = vmatpush1.bf16.msra.mxu0 %v10191
  %10502 = vmatprep.subr.bf16.mxu0 %v10196
  %10503 = vmatpush1.bf16.msra.mxu0 %v10195
  %10504 = vmatprep.subr.bf16.mxu0 %v10200
  %10505 = vmatpush1.bf16.msra.mxu0 %v10199
  %10506 = vmatprep.subr.bf16.mxu0 %v10204
  %10507 = vmatpush1.bf16.msra.mxu0 %v10203
  %10508 = vmatprep.subr.bf16.mxu0 %v10208
  %10509 = vmatpush1.bf16.msra.mxu0 %v10207
  %10510 = vmatprep.subr.bf16.mxu0 %v10212
  %10511 = vmatpush1.bf16.msra.mxu0 %v10211
  %10512 = vmatprep.subr.bf16.mxu0 %v10216
  %10513 = vmatpush1.bf16.msra.mxu0 %v10215
  %10514 = vmatprep.subr.bf16.mxu0 %v10220
  %10515 = vmatpush1.bf16.msra.mxu0 %v10219
  %10516 = vmatprep.subr.bf16.mxu0 %v10224
  %10517 = vmatpush1.bf16.msra.mxu0 %v10223
  %10518 = vmatprep.subr.bf16.mxu0 %v10228
  %10519 = vmatpush1.bf16.msra.mxu0 %v10227
  %10520 = vmatprep.subr.bf16.mxu0 %v10232
  %10521 = vmatpush1.bf16.msra.mxu0 %v10231
  %10522 = vmatprep.mubr.bf16.mxu0 %v9716
  %10523 = vmatmul.mubr.bf16.gmra.mrb[0].mxu0 %v9715
  %v10524 = vpop.f32.mrb[0].mxu0
  %v10525 = vadd.f32 %v10482, %v10524
  %v10526 = vpop.f32.mrb[0].mxu0
  %v10527 = vadd.f32 %v10484, %v10526
  %v10528 = vpop.f32.mrb[0].mxu0
  %v10529 = vadd.f32 %v10486, %v10528
  %v10530 = vpop.f32.mrb[0].mxu0
  %v10531 = vadd.f32 %v10488, %v10530
  %10532 = vdwg.mxu0
  %v10661 = vunpack.c.l.b16 %v9440
  %v10662 = vunpack.c.h.b16 %v9440
  %v10663 = vunpack.c.l.b16 %v9441
  %v10664 = vunpack.c.h.b16 %v9441
  %v10665 = vunpack.c.l.b16 %v9442
  %v10666 = vunpack.c.h.b16 %v9442
  %v10667 = vunpack.c.l.b16 %v9443
  %v10668 = vunpack.c.h.b16 %v9443
  %v10669 = vunpack.c.l.b16 %v9444
  %v10670 = vunpack.c.h.b16 %v9444
  %v10671 = vunpack.c.l.b16 %v9445
  %v10672 = vunpack.c.h.b16 %v9445
  %v10673 = vunpack.c.l.b16 %v9446
  %v10674 = vunpack.c.h.b16 %v9446
  %v10675 = vunpack.c.l.b16 %v9447
  %v10676 = vunpack.c.h.b16 %v9447
  %v10677 = vunpack.c.l.b16 %v9448
  %v10678 = vunpack.c.h.b16 %v9448
  %v10679 = vunpack.c.l.b16 %v9449
  %v10680 = vunpack.c.h.b16 %v9449
  %v10681 = vunpack.c.l.b16 %v9450
  %v10682 = vunpack.c.h.b16 %v9450
  %v10683 = vunpack.c.l.b16 %v9451
  %v10684 = vunpack.c.h.b16 %v9451
  %v10685 = vunpack.c.l.b16 %v9452
  %v10686 = vunpack.c.h.b16 %v9452
  %v10687 = vunpack.c.l.b16 %v9453
  %v10688 = vunpack.c.h.b16 %v9453
  %v10689 = vunpack.c.l.b16 %v9454
  %v10690 = vunpack.c.h.b16 %v9454
  %v10691 = vunpack.c.l.b16 %v9455
  %v10692 = vunpack.c.h.b16 %v9455
  %v10693 = vunpack.c.l.b16 %v9456
  %v10694 = vunpack.c.h.b16 %v9456
  %v10695 = vunpack.c.l.b16 %v9457
  %v10696 = vunpack.c.h.b16 %v9457
  %v10697 = vunpack.c.l.b16 %v9458
  %v10698 = vunpack.c.h.b16 %v9458
  %v10699 = vunpack.c.l.b16 %v9459
  %v10700 = vunpack.c.h.b16 %v9459
  %v10701 = vunpack.c.l.b16 %v9460
  %v10702 = vunpack.c.h.b16 %v9460
  %v10703 = vunpack.c.l.b16 %v9461
  %v10704 = vunpack.c.h.b16 %v9461
  %v10705 = vunpack.c.l.b16 %v9462
  %v10706 = vunpack.c.h.b16 %v9462
  %v10707 = vunpack.c.l.b16 %v9463
  %v10708 = vunpack.c.h.b16 %v9463
  %v10709 = vunpack.c.l.b16 %v9464
  %v10710 = vunpack.c.h.b16 %v9464
  %v10711 = vunpack.c.l.b16 %v9465
  %v10712 = vunpack.c.h.b16 %v9465
  %v10713 = vunpack.c.l.b16 %v9466
  %v10714 = vunpack.c.h.b16 %v9466
  %v10715 = vunpack.c.l.b16 %v9467
  %v10716 = vunpack.c.h.b16 %v9467
  %v10717 = vunpack.c.l.b16 %v9468
  %v10718 = vunpack.c.h.b16 %v9468
  %v10719 = vunpack.c.l.b16 %v9469
  %v10720 = vunpack.c.h.b16 %v9469
  %v10721 = vunpack.c.l.b16 %v9470
  %v10722 = vunpack.c.h.b16 %v9470
  %v10723 = vunpack.c.l.b16 %v9471
  %v10724 = vunpack.c.h.b16 %v9471
  %v10725 = vunpack.c.l.b16 %v9472
  %v10726 = vunpack.c.h.b16 %v9472
  %v10727 = vunpack.c.l.b16 %v9473
  %v10728 = vunpack.c.h.b16 %v9473
  %v10729 = vunpack.c.l.b16 %v9474
  %v10730 = vunpack.c.h.b16 %v9474
  %v10731 = vunpack.c.l.b16 %v9475
  %v10732 = vunpack.c.h.b16 %v9475
  %v10733 = vunpack.c.l.b16 %v9476
  %v10734 = vunpack.c.h.b16 %v9476
  %v10735 = vunpack.c.l.b16 %v9477
  %v10736 = vunpack.c.h.b16 %v9477
  %v10737 = vunpack.c.l.b16 %v9478
  %v10738 = vunpack.c.h.b16 %v9478
  %v10739 = vunpack.c.l.b16 %v9479
  %v10740 = vunpack.c.h.b16 %v9479
  %v10741 = vunpack.c.l.b16 %v9480
  %v10742 = vunpack.c.h.b16 %v9480
  %v10743 = vunpack.c.l.b16 %v9481
  %v10744 = vunpack.c.h.b16 %v9481
  %v10745 = vunpack.c.l.b16 %v9482
  %v10746 = vunpack.c.h.b16 %v9482
  %v10747 = vunpack.c.l.b16 %v9483
  %v10748 = vunpack.c.h.b16 %v9483
  %v10749 = vunpack.c.l.b16 %v9484
  %v10750 = vunpack.c.h.b16 %v9484
  %v10751 = vunpack.c.l.b16 %v9485
  %v10752 = vunpack.c.h.b16 %v9485
  %v10753 = vunpack.c.l.b16 %v9486
  %v10754 = vunpack.c.h.b16 %v9486
  %v10755 = vunpack.c.l.b16 %v9487
  %v10756 = vunpack.c.h.b16 %v9487
  %v10757 = vunpack.c.l.b16 %v9488
  %v10758 = vunpack.c.h.b16 %v9488
  %v10759 = vunpack.c.l.b16 %v9489
  %v10760 = vunpack.c.h.b16 %v9489
  %v10761 = vunpack.c.l.b16 %v9490
  %v10762 = vunpack.c.h.b16 %v9490
  %v10763 = vunpack.c.l.b16 %v9491
  %v10764 = vunpack.c.h.b16 %v9491
  %v10765 = vunpack.c.l.b16 %v9492
  %v10766 = vunpack.c.h.b16 %v9492
  %v10767 = vunpack.c.l.b16 %v9493
  %v10768 = vunpack.c.h.b16 %v9493
  %v10769 = vunpack.c.l.b16 %v9494
  %v10770 = vunpack.c.h.b16 %v9494
  %v10771 = vunpack.c.l.b16 %v9495
  %v10772 = vunpack.c.h.b16 %v9495
  %v10773 = vunpack.c.l.b16 %v9496
  %v10774 = vunpack.c.h.b16 %v9496
  %v10775 = vunpack.c.l.b16 %v9497
  %v10776 = vunpack.c.h.b16 %v9497
  %v10777 = vunpack.c.l.b16 %v9498
  %v10778 = vunpack.c.h.b16 %v9498
  %v10779 = vunpack.c.l.b16 %v9499
  %v10780 = vunpack.c.h.b16 %v9499
  %v10781 = vunpack.c.l.b16 %v9500
  %v10782 = vunpack.c.h.b16 %v9500
  %v10783 = vunpack.c.l.b16 %v9501
  %v10784 = vunpack.c.h.b16 %v9501
  %v10785 = vunpack.c.l.b16 %v9502
  %v10786 = vunpack.c.h.b16 %v9502
  %v10787 = vunpack.c.l.b16 %v9503
  %v10788 = vunpack.c.h.b16 %v9503
  %v10789 = vunpack.c.l.b16 %v9504
  %v10790 = vunpack.c.h.b16 %v9504
  %v10791 = vunpack.c.l.b16 %v9505
  %v10792 = vunpack.c.h.b16 %v9505
  %v10793 = vunpack.c.l.b16 %v9506
  %v10794 = vunpack.c.h.b16 %v9506
  %v10795 = vunpack.c.l.b16 %v9507
  %v10796 = vunpack.c.h.b16 %v9507
  %v10797 = vunpack.c.l.b16 %v9508
  %v10798 = vunpack.c.h.b16 %v9508
  %v10799 = vunpack.c.l.b16 %v9509
  %v10800 = vunpack.c.h.b16 %v9509
  %v10801 = vunpack.c.l.b16 %v9510
  %v10802 = vunpack.c.h.b16 %v9510
  %v10803 = vunpack.c.l.b16 %v9511
  %v10804 = vunpack.c.h.b16 %v9511
  %v10805 = vunpack.c.l.b16 %v9512
  %v10806 = vunpack.c.h.b16 %v9512
  %v10807 = vunpack.c.l.b16 %v9513
  %v10808 = vunpack.c.h.b16 %v9513
  %v10809 = vunpack.c.l.b16 %v9514
  %v10810 = vunpack.c.h.b16 %v9514
  %v10811 = vunpack.c.l.b16 %v9515
  %v10812 = vunpack.c.h.b16 %v9515
  %v10813 = vunpack.c.l.b16 %v9516
  %v10814 = vunpack.c.h.b16 %v9516
  %v10815 = vunpack.c.l.b16 %v9517
  %v10816 = vunpack.c.h.b16 %v9517
  %v10817 = vunpack.c.l.b16 %v9518
  %v10818 = vunpack.c.h.b16 %v9518
  %v10819 = vunpack.c.l.b16 %v9519
  %v10820 = vunpack.c.h.b16 %v9519
  %v10821 = vunpack.c.l.b16 %v9520
  %v10822 = vunpack.c.h.b16 %v9520
  %v10823 = vunpack.c.l.b16 %v9521
  %v10824 = vunpack.c.h.b16 %v9521
  %v10825 = vunpack.c.l.b16 %v9522
  %v10826 = vunpack.c.h.b16 %v9522
  %v10827 = vunpack.c.l.b16 %v9523
  %v10828 = vunpack.c.h.b16 %v9523
  %v10829 = vunpack.c.l.b16 %v9524
  %v10830 = vunpack.c.h.b16 %v9524
  %v10831 = vunpack.c.l.b16 %v9525
  %v10832 = vunpack.c.h.b16 %v9525
  %v10833 = vunpack.c.l.b16 %v9526
  %v10834 = vunpack.c.h.b16 %v9526
  %v10835 = vunpack.c.l.b16 %v9527
  %v10836 = vunpack.c.h.b16 %v9527
  %v10837 = vunpack.c.l.b16 %v9528
  %v10838 = vunpack.c.h.b16 %v9528
  %v10839 = vunpack.c.l.b16 %v9529
  %v10840 = vunpack.c.h.b16 %v9529
  %v10841 = vunpack.c.l.b16 %v9530
  %v10842 = vunpack.c.h.b16 %v9530
  %v10843 = vunpack.c.l.b16 %v9531
  %v10844 = vunpack.c.h.b16 %v9531
  %v10845 = vunpack.c.l.b16 %v9532
  %v10846 = vunpack.c.h.b16 %v9532
  %v10847 = vunpack.c.l.b16 %v9533
  %v10848 = vunpack.c.h.b16 %v9533
  %v10849 = vunpack.c.l.b16 %v9534
  %v10850 = vunpack.c.h.b16 %v9534
  %v10851 = vunpack.c.l.b16 %v9535
  %v10852 = vunpack.c.h.b16 %v9535
  %v10853 = vunpack.c.l.b16 %v9536
  %v10854 = vunpack.c.h.b16 %v9536
  %v10855 = vunpack.c.l.b16 %v9537
  %v10856 = vunpack.c.h.b16 %v9537
  %v10857 = vunpack.c.l.b16 %v9538
  %v10858 = vunpack.c.h.b16 %v9538
  %v10859 = vunpack.c.l.b16 %v9539
  %v10860 = vunpack.c.h.b16 %v9539
  %v10861 = vunpack.c.l.b16 %v9540
  %v10862 = vunpack.c.h.b16 %v9540
  %v10863 = vunpack.c.l.b16 %v9541
  %v10864 = vunpack.c.h.b16 %v9541
  %v10865 = vunpack.c.l.b16 %v9542
  %v10866 = vunpack.c.h.b16 %v9542
  %v10867 = vunpack.c.l.b16 %v9543
  %v10868 = vunpack.c.h.b16 %v9543
  %v10869 = vunpack.c.l.b16 %v9544
  %v10870 = vunpack.c.h.b16 %v9544
  %v10871 = vunpack.c.l.b16 %v9545
  %v10872 = vunpack.c.h.b16 %v9545
  %v10873 = vunpack.c.l.b16 %v9546
  %v10874 = vunpack.c.h.b16 %v9546
  %v10875 = vunpack.c.l.b16 %v9547
  %v10876 = vunpack.c.h.b16 %v9547
  %v10877 = vunpack.c.l.b16 %v9548
  %v10878 = vunpack.c.h.b16 %v9548
  %v10879 = vunpack.c.l.b16 %v9549
  %v10880 = vunpack.c.h.b16 %v9549
  %v10881 = vunpack.c.l.b16 %v9550
  %v10882 = vunpack.c.h.b16 %v9550
  %v10883 = vunpack.c.l.b16 %v9551
  %v10884 = vunpack.c.h.b16 %v9551
  %v10885 = vunpack.c.l.b16 %v9552
  %v10886 = vunpack.c.h.b16 %v9552
  %v10887 = vunpack.c.l.b16 %v9553
  %v10888 = vunpack.c.h.b16 %v9553
  %v10889 = vunpack.c.l.b16 %v9554
  %v10890 = vunpack.c.h.b16 %v9554
  %v10891 = vunpack.c.l.b16 %v9555
  %v10892 = vunpack.c.h.b16 %v9555
  %v10893 = vunpack.c.l.b16 %v9556
  %v10894 = vunpack.c.h.b16 %v9556
  %v10895 = vunpack.c.l.b16 %v9557
  %v10896 = vunpack.c.h.b16 %v9557
  %v10897 = vunpack.c.l.b16 %v9558
  %v10898 = vunpack.c.h.b16 %v9558
  %v10899 = vunpack.c.l.b16 %v9559
  %v10900 = vunpack.c.h.b16 %v9559
  %v10901 = vunpack.c.l.b16 %v9560
  %v10902 = vunpack.c.h.b16 %v9560
  %v10903 = vunpack.c.l.b16 %v9561
  %v10904 = vunpack.c.h.b16 %v9561
  %v10905 = vunpack.c.l.b16 %v9562
  %v10906 = vunpack.c.h.b16 %v9562
  %v10907 = vunpack.c.l.b16 %v9563
  %v10908 = vunpack.c.h.b16 %v9563
  %v10909 = vunpack.c.l.b16 %v9564
  %v10910 = vunpack.c.h.b16 %v9564
  %v10911 = vunpack.c.l.b16 %v9565
  %v10912 = vunpack.c.h.b16 %v9565
  %v10913 = vunpack.c.l.b16 %v9566
  %v10914 = vunpack.c.h.b16 %v9566
  %v10915 = vunpack.c.l.b16 %v9567
  %v10916 = vunpack.c.h.b16 %v9567
  %v10917 = vpack.c.b16 %v10665, %v10661
  %v10918 = vpack.c.b16 %v10666, %v10662
  %v10919 = vpack.c.b16 %v10667, %v10663
  %v10920 = vpack.c.b16 %v10668, %v10664
  %v10921 = vpack.c.b16 %v10673, %v10669
  %v10922 = vpack.c.b16 %v10674, %v10670
  %v10923 = vpack.c.b16 %v10675, %v10671
  %v10924 = vpack.c.b16 %v10676, %v10672
  %v10925 = vpack.c.b16 %v10681, %v10677
  %v10926 = vpack.c.b16 %v10682, %v10678
  %v10927 = vpack.c.b16 %v10683, %v10679
  %v10928 = vpack.c.b16 %v10684, %v10680
  %v10929 = vpack.c.b16 %v10689, %v10685
  %v10930 = vpack.c.b16 %v10690, %v10686
  %v10931 = vpack.c.b16 %v10691, %v10687
  %v10932 = vpack.c.b16 %v10692, %v10688
  %v10933 = vpack.c.b16 %v10697, %v10693
  %v10934 = vpack.c.b16 %v10698, %v10694
  %v10935 = vpack.c.b16 %v10699, %v10695
  %v10936 = vpack.c.b16 %v10700, %v10696
  %v10937 = vpack.c.b16 %v10705, %v10701
  %v10938 = vpack.c.b16 %v10706, %v10702
  %v10939 = vpack.c.b16 %v10707, %v10703
  %v10940 = vpack.c.b16 %v10708, %v10704
  %v10941 = vpack.c.b16 %v10713, %v10709
  %v10942 = vpack.c.b16 %v10714, %v10710
  %v10943 = vpack.c.b16 %v10715, %v10711
  %v10944 = vpack.c.b16 %v10716, %v10712
  %v10945 = vpack.c.b16 %v10721, %v10717
  %v10946 = vpack.c.b16 %v10722, %v10718
  %v10947 = vpack.c.b16 %v10723, %v10719
  %v10948 = vpack.c.b16 %v10724, %v10720
  %v10949 = vpack.c.b16 %v10729, %v10725
  %v10950 = vpack.c.b16 %v10730, %v10726
  %v10951 = vpack.c.b16 %v10731, %v10727
  %v10952 = vpack.c.b16 %v10732, %v10728
  %v10953 = vpack.c.b16 %v10737, %v10733
  %v10954 = vpack.c.b16 %v10738, %v10734
  %v10955 = vpack.c.b16 %v10739, %v10735
  %v10956 = vpack.c.b16 %v10740, %v10736
  %v10957 = vpack.c.b16 %v10745, %v10741
  %v10958 = vpack.c.b16 %v10746, %v10742
  %v10959 = vpack.c.b16 %v10747, %v10743
  %v10960 = vpack.c.b16 %v10748, %v10744
  %v10961 = vpack.c.b16 %v10753, %v10749
  %v10962 = vpack.c.b16 %v10754, %v10750
  %v10963 = vpack.c.b16 %v10755, %v10751
  %v10964 = vpack.c.b16 %v10756, %v10752
  %v10965 = vpack.c.b16 %v10761, %v10757
  %v10966 = vpack.c.b16 %v10762, %v10758
  %v10967 = vpack.c.b16 %v10763, %v10759
  %v10968 = vpack.c.b16 %v10764, %v10760
  %v10969 = vpack.c.b16 %v10769, %v10765
  %v10970 = vpack.c.b16 %v10770, %v10766
  %v10971 = vpack.c.b16 %v10771, %v10767
  %v10972 = vpack.c.b16 %v10772, %v10768
  %v10973 = vpack.c.b16 %v10777, %v10773
  %v10974 = vpack.c.b16 %v10778, %v10774
  %v10975 = vpack.c.b16 %v10779, %v10775
  %v10976 = vpack.c.b16 %v10780, %v10776
  %v10977 = vpack.c.b16 %v10785, %v10781
  %v10978 = vpack.c.b16 %v10786, %v10782
  %v10979 = vpack.c.b16 %v10787, %v10783
  %v10980 = vpack.c.b16 %v10788, %v10784
  %v10981 = vpack.c.b16 %v10793, %v10789
  %v10982 = vpack.c.b16 %v10794, %v10790
  %v10983 = vpack.c.b16 %v10795, %v10791
  %v10984 = vpack.c.b16 %v10796, %v10792
  %v10985 = vpack.c.b16 %v10801, %v10797
  %v10986 = vpack.c.b16 %v10802, %v10798
  %v10987 = vpack.c.b16 %v10803, %v10799
  %v10988 = vpack.c.b16 %v10804, %v10800
  %v10989 = vpack.c.b16 %v10809, %v10805
  %v10990 = vpack.c.b16 %v10810, %v10806
  %v10991 = vpack.c.b16 %v10811, %v10807
  %v10992 = vpack.c.b16 %v10812, %v10808
  %v10993 = vpack.c.b16 %v10817, %v10813
  %v10994 = vpack.c.b16 %v10818, %v10814
  %v10995 = vpack.c.b16 %v10819, %v10815
  %v10996 = vpack.c.b16 %v10820, %v10816
  %v10997 = vpack.c.b16 %v10825, %v10821
  %v10998 = vpack.c.b16 %v10826, %v10822
  %v10999 = vpack.c.b16 %v10827, %v10823
  %v11000 = vpack.c.b16 %v10828, %v10824
  %v11001 = vpack.c.b16 %v10833, %v10829
  %v11002 = vpack.c.b16 %v10834, %v10830
  %v11003 = vpack.c.b16 %v10835, %v10831
  %v11004 = vpack.c.b16 %v10836, %v10832
  %v11005 = vpack.c.b16 %v10841, %v10837
  %v11006 = vpack.c.b16 %v10842, %v10838
  %v11007 = vpack.c.b16 %v10843, %v10839
  %v11008 = vpack.c.b16 %v10844, %v10840
  %v11009 = vpack.c.b16 %v10849, %v10845
  %v11010 = vpack.c.b16 %v10850, %v10846
  %v11011 = vpack.c.b16 %v10851, %v10847
  %v11012 = vpack.c.b16 %v10852, %v10848
  %v11013 = vpack.c.b16 %v10857, %v10853
  %v11014 = vpack.c.b16 %v10858, %v10854
  %v11015 = vpack.c.b16 %v10859, %v10855
  %v11016 = vpack.c.b16 %v10860, %v10856
  %v11017 = vpack.c.b16 %v10865, %v10861
  %v11018 = vpack.c.b16 %v10866, %v10862
  %v11019 = vpack.c.b16 %v10867, %v10863
  %v11020 = vpack.c.b16 %v10868, %v10864
  %v11021 = vpack.c.b16 %v10873, %v10869
  %v11022 = vpack.c.b16 %v10874, %v10870
  %v11023 = vpack.c.b16 %v10875, %v10871
  %v11024 = vpack.c.b16 %v10876, %v10872
  %v11025 = vpack.c.b16 %v10881, %v10877
  %v11026 = vpack.c.b16 %v10882, %v10878
  %v11027 = vpack.c.b16 %v10883, %v10879
  %v11028 = vpack.c.b16 %v10884, %v10880
  %v11029 = vpack.c.b16 %v10889, %v10885
  %v11030 = vpack.c.b16 %v10890, %v10886
  %v11031 = vpack.c.b16 %v10891, %v10887
  %v11032 = vpack.c.b16 %v10892, %v10888
  %v11033 = vpack.c.b16 %v10897, %v10893
  %v11034 = vpack.c.b16 %v10898, %v10894
  %v11035 = vpack.c.b16 %v10899, %v10895
  %v11036 = vpack.c.b16 %v10900, %v10896
  %v11037 = vpack.c.b16 %v10905, %v10901
  %v11038 = vpack.c.b16 %v10906, %v10902
  %v11039 = vpack.c.b16 %v10907, %v10903
  %v11040 = vpack.c.b16 %v10908, %v10904
  %v11041 = vpack.c.b16 %v10913, %v10909
  %v11042 = vpack.c.b16 %v10914, %v10910
  %v11043 = vpack.c.b16 %v10915, %v10911
  %v11044 = vpack.c.b16 %v10916, %v10912
  %11173 = vmatprep.subr.bf16.mxu0 %v10918
  %11174 = vmatpush1.bf16.msra.mxu0 %v10917
  %11175 = vmatprep.subr.bf16.mxu0 %v10922
  %11176 = vmatpush1.bf16.msra.mxu0 %v10921
  %11177 = vmatprep.subr.bf16.mxu0 %v10926
  %11178 = vmatpush1.bf16.msra.mxu0 %v10925
  %11179 = vmatprep.subr.bf16.mxu0 %v10930
  %11180 = vmatpush1.bf16.msra.mxu0 %v10929
  %11181 = vmatprep.subr.bf16.mxu0 %v10934
  %11182 = vmatpush1.bf16.msra.mxu0 %v10933
  %11183 = vmatprep.subr.bf16.mxu0 %v10938
  %11184 = vmatpush1.bf16.msra.mxu0 %v10937
  %11185 = vmatprep.subr.bf16.mxu0 %v10942
  %11186 = vmatpush1.bf16.msra.mxu0 %v10941
  %11187 = vmatprep.subr.bf16.mxu0 %v10946
  %11188 = vmatpush1.bf16.msra.mxu0 %v10945
  %11189 = vmatprep.subr.bf16.mxu0 %v10950
  %11190 = vmatpush1.bf16.msra.mxu0 %v10949
  %11191 = vmatprep.subr.bf16.mxu0 %v10954
  %11192 = vmatpush1.bf16.msra.mxu0 %v10953
  %11193 = vmatprep.subr.bf16.mxu0 %v10958
  %11194 = vmatpush1.bf16.msra.mxu0 %v10957
  %11195 = vmatprep.subr.bf16.mxu0 %v10962
  %11196 = vmatpush1.bf16.msra.mxu0 %v10961
  %11197 = vmatprep.subr.bf16.mxu0 %v10966
  %11198 = vmatpush1.bf16.msra.mxu0 %v10965
  %11199 = vmatprep.subr.bf16.mxu0 %v10970
  %11200 = vmatpush1.bf16.msra.mxu0 %v10969
  %11201 = vmatprep.subr.bf16.mxu0 %v10974
  %11202 = vmatpush1.bf16.msra.mxu0 %v10973
  %11203 = vmatprep.subr.bf16.mxu0 %v10978
  %11204 = vmatpush1.bf16.msra.mxu0 %v10977
  %11205 = vmatprep.mubr.bf16.mxu0 %v7808
  %11206 = vmatmul.mubr.bf16.gmra.mrb[0].mxu0 %v7807
  %v11207 = vpop.f32.mrb[0].mxu0
  %v11208 = vadd.f32 %v10439, %v11207
  %v11209 = vpop.f32.mrb[0].mxu0
  %v11210 = vadd.f32 %v10441, %v11209
  %v11211 = vpop.f32.mrb[0].mxu0
  %v11212 = vadd.f32 %v10443, %v11211
  %v11213 = vpop.f32.mrb[0].mxu0
  %v11214 = vadd.f32 %v10445, %v11213
  %11215 = vdwg.mxu0
  %11216 = vmatprep.subr.bf16.mxu0 %v10982
  %11217 = vmatpush1.bf16.msra.mxu0 %v10981
  %11218 = vmatprep.subr.bf16.mxu0 %v10986
  %11219 = vmatpush1.bf16.msra.mxu0 %v10985
  %11220 = vmatprep.subr.bf16.mxu0 %v10990
  %11221 = vmatpush1.bf16.msra.mxu0 %v10989
  %11222 = vmatprep.subr.bf16.mxu0 %v10994
  %11223 = vmatpush1.bf16.msra.mxu0 %v10993
  %11224 = vmatprep.subr.bf16.mxu0 %v10998
  %11225 = vmatpush1.bf16.msra.mxu0 %v10997
  %11226 = vmatprep.subr.bf16.mxu0 %v11002
  %11227 = vmatpush1.bf16.msra.mxu0 %v11001
  %11228 = vmatprep.subr.bf16.mxu0 %v11006
  %11229 = vmatpush1.bf16.msra.mxu0 %v11005
  %11230 = vmatprep.subr.bf16.mxu0 %v11010
  %11231 = vmatpush1.bf16.msra.mxu0 %v11009
  %11232 = vmatprep.subr.bf16.mxu0 %v11014
  %11233 = vmatpush1.bf16.msra.mxu0 %v11013
  %11234 = vmatprep.subr.bf16.mxu0 %v11018
  %11235 = vmatpush1.bf16.msra.mxu0 %v11017
  %11236 = vmatprep.subr.bf16.mxu0 %v11022
  %11237 = vmatpush1.bf16.msra.mxu0 %v11021
  %11238 = vmatprep.subr.bf16.mxu0 %v11026
  %11239 = vmatpush1.bf16.msra.mxu0 %v11025
  %11240 = vmatprep.subr.bf16.mxu0 %v11030
  %11241 = vmatpush1.bf16.msra.mxu0 %v11029
  %11242 = vmatprep.subr.bf16.mxu0 %v11034
  %11243 = vmatpush1.bf16.msra.mxu0 %v11033
  %11244 = vmatprep.subr.bf16.mxu0 %v11038
  %11245 = vmatpush1.bf16.msra.mxu0 %v11037
  %11246 = vmatprep.subr.bf16.mxu0 %v11042
  %11247 = vmatpush1.bf16.msra.mxu0 %v11041
  %11248 = vmatprep.mubr.bf16.mxu0 %v7810
  %11249 = vmatmul.mubr.bf16.gmra.mrb[0].mxu0 %v7809
  %v11250 = vpop.f32.mrb[0].mxu0
  %v11251 = vadd.f32 %v11208, %v11250
  %v11252 = vpop.f32.mrb[0].mxu0
  %v11253 = vadd.f32 %v11210, %v11252
  %v11254 = vpop.f32.mrb[0].mxu0
  %v11255 = vadd.f32 %v11212, %v11254
  %v11256 = vpop.f32.mrb[0].mxu0
  %v11257 = vadd.f32 %v11214, %v11256
  %11258 = vdwg.mxu0
  %11259 = vmatprep.subr.bf16.mxu0 %v10920
  %11260 = vmatpush1.bf16.msra.mxu0 %v10919
  %11261 = vmatprep.subr.bf16.mxu0 %v10924
  %11262 = vmatpush1.bf16.msra.mxu0 %v10923
  %11263 = vmatprep.subr.bf16.mxu0 %v10928
  %11264 = vmatpush1.bf16.msra.mxu0 %v10927
  %11265 = vmatprep.subr.bf16.mxu0 %v10932
  %11266 = vmatpush1.bf16.msra.mxu0 %v10931
  %11267 = vmatprep.subr.bf16.mxu0 %v10936
  %11268 = vmatpush1.bf16.msra.mxu0 %v10935
  %11269 = vmatprep.subr.bf16.mxu0 %v10940
  %11270 = vmatpush1.bf16.msra.mxu0 %v10939
  %11271 = vmatprep.subr.bf16.mxu0 %v10944
  %11272 = vmatpush1.bf16.msra.mxu0 %v10943
  %11273 = vmatprep.subr.bf16.mxu0 %v10948
  %11274 = vmatpush1.bf16.msra.mxu0 %v10947
  %11275 = vmatprep.subr.bf16.mxu0 %v10952
  %11276 = vmatpush1.bf16.msra.mxu0 %v10951
  %11277 = vmatprep.subr.bf16.mxu0 %v10956
  %11278 = vmatpush1.bf16.msra.mxu0 %v10955
  %11279 = vmatprep.subr.bf16.mxu0 %v10960
  %11280 = vmatpush1.bf16.msra.mxu0 %v10959
  %11281 = vmatprep.subr.bf16.mxu0 %v10964
  %11282 = vmatpush1.bf16.msra.mxu0 %v10963
  %11283 = vmatprep.subr.bf16.mxu0 %v10968
  %11284 = vmatpush1.bf16.msra.mxu0 %v10967
  %11285 = vmatprep.subr.bf16.mxu0 %v10972
  %11286 = vmatpush1.bf16.msra.mxu0 %v10971
  %11287 = vmatprep.subr.bf16.mxu0 %v10976
  %11288 = vmatpush1.bf16.msra.mxu0 %v10975
  %11289 = vmatprep.subr.bf16.mxu0 %v10980
  %11290 = vmatpush1.bf16.msra.mxu0 %v10979
  %11291 = vmatprep.mubr.bf16.mxu0 %v7808
  %11292 = vmatmul.mubr.bf16.gmra.mrb[0].mxu0 %v7807
  %v11293 = vpop.f32.mrb[0].mxu0
  %v11294 = vadd.f32 %v10525, %v11293
  %v11295 = vpop.f32.mrb[0].mxu0
  %v11296 = vadd.f32 %v10527, %v11295
  %v11297 = vpop.f32.mrb[0].mxu0
  %v11298 = vadd.f32 %v10529, %v11297
  %v11299 = vpop.f32.mrb[0].mxu0
  %v11300 = vadd.f32 %v10531, %v11299
  %11301 = vdwg.mxu0
  %11302 = vmatprep.subr.bf16.mxu0 %v10984
  %11303 = vmatpush1.bf16.msra.mxu0 %v10983
  %11304 = vmatprep.subr.bf16.mxu0 %v10988
  %11305 = vmatpush1.bf16.msra.mxu0 %v10987
  %11306 = vmatprep.subr.bf16.mxu0 %v10992
  %11307 = vmatpush1.bf16.msra.mxu0 %v10991
  %11308 = vmatprep.subr.bf16.mxu0 %v10996
  %11309 = vmatpush1.bf16.msra.mxu0 %v10995
  %11310 = vmatprep.subr.bf16.mxu0 %v11000
  %11311 = vmatpush1.bf16.msra.mxu0 %v10999
  %11312 = vmatprep.subr.bf16.mxu0 %v11004
  %11313 = vmatpush1.bf16.msra.mxu0 %v11003
  %11314 = vmatprep.subr.bf16.mxu0 %v11008
  %11315 = vmatpush1.bf16.msra.mxu0 %v11007
  %11316 = vmatprep.subr.bf16.mxu0 %v11012
  %11317 = vmatpush1.bf16.msra.mxu0 %v11011
  %11318 = vmatprep.subr.bf16.mxu0 %v11016
  %11319 = vmatpush1.bf16.msra.mxu0 %v11015
  %11320 = vmatprep.subr.bf16.mxu0 %v11020
  %11321 = vmatpush1.bf16.msra.mxu0 %v11019
  %11322 = vmatprep.subr.bf16.mxu0 %v11024
  %11323 = vmatpush1.bf16.msra.mxu0 %v11023
  %11324 = vmatprep.subr.bf16.mxu0 %v11028
  %11325 = vmatpush1.bf16.msra.mxu0 %v11027
  %11326 = vmatprep.subr.bf16.mxu0 %v11032
  %11327 = vmatpush1.bf16.msra.mxu0 %v11031
  %11328 = vmatprep.subr.bf16.mxu0 %v11036
  %11329 = vmatpush1.bf16.msra.mxu0 %v11035
  %11330 = vmatprep.subr.bf16.mxu0 %v11040
  %11331 = vmatpush1.bf16.msra.mxu0 %v11039
  %11332 = vmatprep.subr.bf16.mxu0 %v11044
  %11333 = vmatpush1.bf16.msra.mxu0 %v11043
  %11334 = vmatprep.mubr.bf16.mxu0 %v7810
  %11335 = vmatmul.mubr.bf16.gmra.mrb[0].mxu0 %v7809
  %v11336 = vpop.f32.mrb[0].mxu0
  %v11337 = vadd.f32 %v11294, %v11336
  %v11338 = vpop.f32.mrb[0].mxu0
  %v11339 = vadd.f32 %v11296, %v11338
  %v11340 = vpop.f32.mrb[0].mxu0
  %v11341 = vadd.f32 %v11298, %v11340
  %v11342 = vpop.f32.mrb[0].mxu0
  %v11343 = vadd.f32 %v11300, %v11342
  %11344 = vdwg.mxu0
  %11345 = vmatprep.subr.bf16.mxu0 %v8200
  %11346 = vmatpush1.bf16.msra.mxu0 %v8199
  %11347 = vmatprep.subr.bf16.mxu0 %v8204
  %11348 = vmatpush1.bf16.msra.mxu0 %v8203
  %11349 = vmatprep.subr.bf16.mxu0 %v8208
  %11350 = vmatpush1.bf16.msra.mxu0 %v8207
  %11351 = vmatprep.subr.bf16.mxu0 %v8212
  %11352 = vmatpush1.bf16.msra.mxu0 %v8211
  %11353 = vmatprep.subr.bf16.mxu0 %v8216
  %11354 = vmatpush1.bf16.msra.mxu0 %v8215
  %11355 = vmatprep.subr.bf16.mxu0 %v8220
  %11356 = vmatpush1.bf16.msra.mxu0 %v8219
  %11357 = vmatprep.subr.bf16.mxu0 %v8224
  %11358 = vmatpush1.bf16.msra.mxu0 %v8223
  %11359 = vmatprep.subr.bf16.mxu0 %v8228
  %11360 = vmatpush1.bf16.msra.mxu0 %v8227
  %11361 = vmatprep.subr.bf16.mxu0 %v8232
  %11362 = vmatpush1.bf16.msra.mxu0 %v8231
  %11363 = vmatprep.subr.bf16.mxu0 %v8236
  %11364 = vmatpush1.bf16.msra.mxu0 %v8235
  %11365 = vmatprep.subr.bf16.mxu0 %v8240
  %11366 = vmatpush1.bf16.msra.mxu0 %v8239
  %11367 = vmatprep.subr.bf16.mxu0 %v8244
  %11368 = vmatpush1.bf16.msra.mxu0 %v8243
  %11369 = vmatprep.subr.bf16.mxu0 %v8248
  %11370 = vmatpush1.bf16.msra.mxu0 %v8247
  %11371 = vmatprep.subr.bf16.mxu0 %v8252
  %11372 = vmatpush1.bf16.msra.mxu0 %v8251
  %11373 = vmatprep.subr.bf16.mxu0 %v8256
  %11374 = vmatpush1.bf16.msra.mxu0 %v8255
  %11375 = vmatprep.subr.bf16.mxu0 %v8260
  %11376 = vmatpush1.bf16.msra.mxu0 %v8259
  %11377 = vmatprep.mubr.bf16.mxu0 %v9714
  %11378 = vmatmul.mubr.bf16.gmra.mrb[0].mxu0 %v9713
  %v11379 = vpop.f32.mrb[0].mxu0
  %v11380 = vadd.f32 0.0, %v11379
  %v11381 = vpop.f32.mrb[0].mxu0
  %v11382 = vadd.f32 0.0, %v11381
  %v11383 = vpop.f32.mrb[0].mxu0
  %v11384 = vadd.f32 0.0, %v11383
  %v11385 = vpop.f32.mrb[0].mxu0
  %v11386 = vadd.f32 0.0, %v11385
  %11387 = vdwg.mxu0
  %11388 = vmatprep.subr.bf16.mxu0 %v8264
  %11389 = vmatpush1.bf16.msra.mxu0 %v8263
  %11390 = vmatprep.subr.bf16.mxu0 %v8268
  %11391 = vmatpush1.bf16.msra.mxu0 %v8267
  %11392 = vmatprep.subr.bf16.mxu0 %v8272
  %11393 = vmatpush1.bf16.msra.mxu0 %v8271
  %11394 = vmatprep.subr.bf16.mxu0 %v8276
  %11395 = vmatpush1.bf16.msra.mxu0 %v8275
  %11396 = vmatprep.subr.bf16.mxu0 %v8280
  %11397 = vmatpush1.bf16.msra.mxu0 %v8279
  %11398 = vmatprep.subr.bf16.mxu0 %v8284
  %11399 = vmatpush1.bf16.msra.mxu0 %v8283
  %11400 = vmatprep.subr.bf16.mxu0 %v8288
  %11401 = vmatpush1.bf16.msra.mxu0 %v8287
  %11402 = vmatprep.subr.bf16.mxu0 %v8292
  %11403 = vmatpush1.bf16.msra.mxu0 %v8291
  %11404 = vmatprep.subr.bf16.mxu0 %v8296
  %11405 = vmatpush1.bf16.msra.mxu0 %v8295
  %11406 = vmatprep.subr.bf16.mxu0 %v8300
  %11407 = vmatpush1.bf16.msra.mxu0 %v8299
  %11408 = vmatprep.subr.bf16.mxu0 %v8304
  %11409 = vmatpush1.bf16.msra.mxu0 %v8303
  %11410 = vmatprep.subr.bf16.mxu0 %v8308
  %11411 = vmatpush1.bf16.msra.mxu0 %v8307
  %11412 = vmatprep.subr.bf16.mxu0 %v8312
  %11413 = vmatpush1.bf16.msra.mxu0 %v8311
  %11414 = vmatprep.subr.bf16.mxu0 %v8316
  %11415 = vmatpush1.bf16.msra.mxu0 %v8315
  %11416 = vmatprep.subr.bf16.mxu0 %v8320
  %11417 = vmatpush1.bf16.msra.mxu0 %v8319
  %11418 = vmatprep.subr.bf16.mxu0 %v8324
  %11419 = vmatpush1.bf16.msra.mxu0 %v8323
  %11420 = vmatprep.mubr.bf16.mxu0 %v9716
  %11421 = vmatmul.mubr.bf16.gmra.mrb[0].mxu0 %v9715
  %v11422 = vpop.f32.mrb[0].mxu0
  %v11423 = vadd.f32 %v11380, %v11422
  %v11424 = vpop.f32.mrb[0].mxu0
  %v11425 = vadd.f32 %v11382, %v11424
  %v11426 = vpop.f32.mrb[0].mxu0
  %v11427 = vadd.f32 %v11384, %v11426
  %v11428 = vpop.f32.mrb[0].mxu0
  %v11429 = vadd.f32 %v11386, %v11428
  %11430 = vdwg.mxu0
  %11431 = vmatprep.subr.bf16.mxu0 %v8202
  %11432 = vmatpush1.bf16.msra.mxu0 %v8201
  %11433 = vmatprep.subr.bf16.mxu0 %v8206
  %11434 = vmatpush1.bf16.msra.mxu0 %v8205
  %11435 = vmatprep.subr.bf16.mxu0 %v8210
  %11436 = vmatpush1.bf16.msra.mxu0 %v8209
  %11437 = vmatprep.subr.bf16.mxu0 %v8214
  %11438 = vmatpush1.bf16.msra.mxu0 %v8213
  %11439 = vmatprep.subr.bf16.mxu0 %v8218
  %11440 = vmatpush1.bf16.msra.mxu0 %v8217
  %11441 = vmatprep.subr.bf16.mxu0 %v8222
  %11442 = vmatpush1.bf16.msra.mxu0 %v8221
  %11443 = vmatprep.subr.bf16.mxu0 %v8226
  %11444 = vmatpush1.bf16.msra.mxu0 %v8225
  %11445 = vmatprep.subr.bf16.mxu0 %v8230
  %11446 = vmatpush1.bf16.msra.mxu0 %v8229
  %11447 = vmatprep.subr.bf16.mxu0 %v8234
  %11448 = vmatpush1.bf16.msra.mxu0 %v8233
  %11449 = vmatprep.subr.bf16.mxu0 %v8238
  %11450 = vmatpush1.bf16.msra.mxu0 %v8237
  %11451 = vmatprep.subr.bf16.mxu0 %v8242
  %11452 = vmatpush1.bf16.msra.mxu0 %v8241
  %11453 = vmatprep.subr.bf16.mxu0 %v8246
  %11454 = vmatpush1.bf16.msra.mxu0 %v8245
  %11455 = vmatprep.subr.bf16.mxu0 %v8250
  %11456 = vmatpush1.bf16.msra.mxu0 %v8249
  %11457 = vmatprep.subr.bf16.mxu0 %v8254
  %11458 = vmatpush1.bf16.msra.mxu0 %v8253
  %11459 = vmatprep.subr.bf16.mxu0 %v8258
  %11460 = vmatpush1.bf16.msra.mxu0 %v8257
  %11461 = vmatprep.subr.bf16.mxu0 %v8262
  %11462 = vmatpush1.bf16.msra.mxu0 %v8261
  %11463 = vmatprep.mubr.bf16.mxu0 %v9714
  %11464 = vmatmul.mubr.bf16.gmra.mrb[0].mxu0 %v9713
  %v11465 = vpop.f32.mrb[0].mxu0
  %v11466 = vadd.f32 0.0, %v11465
  %v11467 = vpop.f32.mrb[0].mxu0
  %v11468 = vadd.f32 0.0, %v11467
  %v11469 = vpop.f32.mrb[0].mxu0
  %v11470 = vadd.f32 0.0, %v11469
  %v11471 = vpop.f32.mrb[0].mxu0
  %v11472 = vadd.f32 0.0, %v11471
  %11473 = vdwg.mxu0
  %11474 = vmatprep.subr.bf16.mxu0 %v8266
  %11475 = vmatpush1.bf16.msra.mxu0 %v8265
  %11476 = vmatprep.subr.bf16.mxu0 %v8270
  %11477 = vmatpush1.bf16.msra.mxu0 %v8269
  %11478 = vmatprep.subr.bf16.mxu0 %v8274
  %11479 = vmatpush1.bf16.msra.mxu0 %v8273
  %11480 = vmatprep.subr.bf16.mxu0 %v8278
  %11481 = vmatpush1.bf16.msra.mxu0 %v8277
  %11482 = vmatprep.subr.bf16.mxu0 %v8282
  %11483 = vmatpush1.bf16.msra.mxu0 %v8281
  %11484 = vmatprep.subr.bf16.mxu0 %v8286
  %11485 = vmatpush1.bf16.msra.mxu0 %v8285
  %11486 = vmatprep.subr.bf16.mxu0 %v8290
  %11487 = vmatpush1.bf16.msra.mxu0 %v8289
  %11488 = vmatprep.subr.bf16.mxu0 %v8294
  %11489 = vmatpush1.bf16.msra.mxu0 %v8293
  %11490 = vmatprep.subr.bf16.mxu0 %v8298
  %11491 = vmatpush1.bf16.msra.mxu0 %v8297
  %11492 = vmatprep.subr.bf16.mxu0 %v8302
  %11493 = vmatpush1.bf16.msra.mxu0 %v8301
  %11494 = vmatprep.subr.bf16.mxu0 %v8306
  %11495 = vmatpush1.bf16.msra.mxu0 %v8305
  %11496 = vmatprep.subr.bf16.mxu0 %v8310
  %11497 = vmatpush1.bf16.msra.mxu0 %v8309
  %11498 = vmatprep.subr.bf16.mxu0 %v8314
  %11499 = vmatpush1.bf16.msra.mxu0 %v8313
  %11500 = vmatprep.subr.bf16.mxu0 %v8318
  %11501 = vmatpush1.bf16.msra.mxu0 %v8317
  %11502 = vmatprep.subr.bf16.mxu0 %v8322
  %11503 = vmatpush1.bf16.msra.mxu0 %v8321
  %11504 = vmatprep.subr.bf16.mxu0 %v8326
  %11505 = vmatpush1.bf16.msra.mxu0 %v8325
  %11506 = vmatprep.mubr.bf16.mxu0 %v9716
  %11507 = vmatmul.mubr.bf16.gmra.mrb[0].mxu0 %v9715
  %v11508 = vpop.f32.mrb[0].mxu0
  %v11509 = vadd.f32 %v11466, %v11508
  %v11510 = vpop.f32.mrb[0].mxu0
  %v11511 = vadd.f32 %v11468, %v11510
  %v11512 = vpop.f32.mrb[0].mxu0
  %v11513 = vadd.f32 %v11470, %v11512
  %v11514 = vpop.f32.mrb[0].mxu0
  %v11515 = vadd.f32 %v11472, %v11514
  %11516 = vdwg.mxu0
  %11517 = vmatprep.subr.bf16.mxu0 %v9012
  %11518 = vmatpush1.bf16.msra.mxu0 %v9011
  %11519 = vmatprep.subr.bf16.mxu0 %v9016
  %11520 = vmatpush1.bf16.msra.mxu0 %v9015
  %11521 = vmatprep.subr.bf16.mxu0 %v9020
  %11522 = vmatpush1.bf16.msra.mxu0 %v9019
  %11523 = vmatprep.subr.bf16.mxu0 %v9024
  %11524 = vmatpush1.bf16.msra.mxu0 %v9023
  %11525 = vmatprep.subr.bf16.mxu0 %v9028
  %11526 = vmatpush1.bf16.msra.mxu0 %v9027
  %11527 = vmatprep.subr.bf16.mxu0 %v9032
  %11528 = vmatpush1.bf16.msra.mxu0 %v9031
  %11529 = vmatprep.subr.bf16.mxu0 %v9036
  %11530 = vmatpush1.bf16.msra.mxu0 %v9035
  %11531 = vmatprep.subr.bf16.mxu0 %v9040
  %11532 = vmatpush1.bf16.msra.mxu0 %v9039
  %11533 = vmatprep.subr.bf16.mxu0 %v9044
  %11534 = vmatpush1.bf16.msra.mxu0 %v9043
  %11535 = vmatprep.subr.bf16.mxu0 %v9048
  %11536 = vmatpush1.bf16.msra.mxu0 %v9047
  %11537 = vmatprep.subr.bf16.mxu0 %v9052
  %11538 = vmatpush1.bf16.msra.mxu0 %v9051
  %11539 = vmatprep.subr.bf16.mxu0 %v9056
  %11540 = vmatpush1.bf16.msra.mxu0 %v9055
  %11541 = vmatprep.subr.bf16.mxu0 %v9060
  %11542 = vmatpush1.bf16.msra.mxu0 %v9059
  %11543 = vmatprep.subr.bf16.mxu0 %v9064
  %11544 = vmatpush1.bf16.msra.mxu0 %v9063
  %11545 = vmatprep.subr.bf16.mxu0 %v9068
  %11546 = vmatpush1.bf16.msra.mxu0 %v9067
  %11547 = vmatprep.subr.bf16.mxu0 %v9072
  %11548 = vmatpush1.bf16.msra.mxu0 %v9071
  %11549 = vmatprep.mubr.bf16.mxu0 %v7808
  %11550 = vmatmul.mubr.bf16.gmra.mrb[0].mxu0 %v7807
  %v11551 = vpop.f32.mrb[0].mxu0
  %v11552 = vadd.f32 %v11423, %v11551
  %v11553 = vpop.f32.mrb[0].mxu0
  %v11554 = vadd.f32 %v11425, %v11553
  %v11555 = vpop.f32.mrb[0].mxu0
  %v11556 = vadd.f32 %v11427, %v11555
  %v11557 = vpop.f32.mrb[0].mxu0
  %v11558 = vadd.f32 %v11429, %v11557
  %11559 = vdwg.mxu0
  %11560 = vmatprep.subr.bf16.mxu0 %v9076
  %11561 = vmatpush1.bf16.msra.mxu0 %v9075
  %11562 = vmatprep.subr.bf16.mxu0 %v9080
  %11563 = vmatpush1.bf16.msra.mxu0 %v9079
  %11564 = vmatprep.subr.bf16.mxu0 %v9084
  %11565 = vmatpush1.bf16.msra.mxu0 %v9083
  %11566 = vmatprep.subr.bf16.mxu0 %v9088
  %11567 = vmatpush1.bf16.msra.mxu0 %v9087
  %11568 = vmatprep.subr.bf16.mxu0 %v9092
  %11569 = vmatpush1.bf16.msra.mxu0 %v9091
  %11570 = vmatprep.subr.bf16.mxu0 %v9096
  %11571 = vmatpush1.bf16.msra.mxu0 %v9095
  %11572 = vmatprep.subr.bf16.mxu0 %v9100
  %11573 = vmatpush1.bf16.msra.mxu0 %v9099
  %11574 = vmatprep.subr.bf16.mxu0 %v9104
  %11575 = vmatpush1.bf16.msra.mxu0 %v9103
  %11576 = vmatprep.subr.bf16.mxu0 %v9108
  %11577 = vmatpush1.bf16.msra.mxu0 %v9107
  %11578 = vmatprep.subr.bf16.mxu0 %v9112
  %11579 = vmatpush1.bf16.msra.mxu0 %v9111
  %11580 = vmatprep.subr.bf16.mxu0 %v9116
  %11581 = vmatpush1.bf16.msra.mxu0 %v9115
  %11582 = vmatprep.subr.bf16.mxu0 %v9120
  %11583 = vmatpush1.bf16.msra.mxu0 %v9119
  %11584 = vmatprep.subr.bf16.mxu0 %v9124
  %11585 = vmatpush1.bf16.msra.mxu0 %v9123
  %11586 = vmatprep.subr.bf16.mxu0 %v9128
  %11587 = vmatpush1.bf16.msra.mxu0 %v9127
  %11588 = vmatprep.subr.bf16.mxu0 %v9132
  %11589 = vmatpush1.bf16.msra.mxu0 %v9131
  %11590 = vmatprep.subr.bf16.mxu0 %v9136
  %11591 = vmatpush1.bf16.msra.mxu0 %v9135
  %11592 = vmatprep.mubr.bf16.mxu0 %v7810
  %11593 = vmatmul.mubr.bf16.gmra.mrb[0].mxu0 %v7809
  %v11594 = vpop.f32.mrb[0].mxu0
  %v11595 = vadd.f32 %v11552, %v11594
  %v11596 = vpop.f32.mrb[0].mxu0
  %v11597 = vadd.f32 %v11554, %v11596
  %v11598 = vpop.f32.mrb[0].mxu0
  %v11599 = vadd.f32 %v11556, %v11598
  %v11600 = vpop.f32.mrb[0].mxu0
  %v11601 = vadd.f32 %v11558, %v11600
  %11602 = vdwg.mxu0
  %11603 = vmatprep.subr.bf16.mxu0 %v9014
  %11604 = vmatpush1.bf16.msra.mxu0 %v9013
  %11605 = vmatprep.subr.bf16.mxu0 %v9018
  %11606 = vmatpush1.bf16.msra.mxu0 %v9017
  %11607 = vmatprep.subr.bf16.mxu0 %v9022
  %11608 = vmatpush1.bf16.msra.mxu0 %v9021
  %11609 = vmatprep.subr.bf16.mxu0 %v9026
  %11610 = vmatpush1.bf16.msra.mxu0 %v9025
  %11611 = vmatprep.subr.bf16.mxu0 %v9030
  %11612 = vmatpush1.bf16.msra.mxu0 %v9029
  %11613 = vmatprep.subr.bf16.mxu0 %v9034
  %11614 = vmatpush1.bf16.msra.mxu0 %v9033
  %11615 = vmatprep.subr.bf16.mxu0 %v9038
  %11616 = vmatpush1.bf16.msra.mxu0 %v9037
  %11617 = vmatprep.subr.bf16.mxu0 %v9042
  %11618 = vmatpush1.bf16.msra.mxu0 %v9041
  %11619 = vmatprep.subr.bf16.mxu0 %v9046
  %11620 = vmatpush1.bf16.msra.mxu0 %v9045
  %11621 = vmatprep.subr.bf16.mxu0 %v9050
  %11622 = vmatpush1.bf16.msra.mxu0 %v9049
  %11623 = vmatprep.subr.bf16.mxu0 %v9054
  %11624 = vmatpush1.bf16.msra.mxu0 %v9053
  %11625 = vmatprep.subr.bf16.mxu0 %v9058
  %11626 = vmatpush1.bf16.msra.mxu0 %v9057
  %11627 = vmatprep.subr.bf16.mxu0 %v9062
  %11628 = vmatpush1.bf16.msra.mxu0 %v9061
  %11629 = vmatprep.subr.bf16.mxu0 %v9066
  %11630 = vmatpush1.bf16.msra.mxu0 %v9065
  %11631 = vmatprep.subr.bf16.mxu0 %v9070
  %11632 = vmatpush1.bf16.msra.mxu0 %v9069
  %11633 = vmatprep.subr.bf16.mxu0 %v9074
  %11634 = vmatpush1.bf16.msra.mxu0 %v9073
  %11635 = vmatprep.mubr.bf16.mxu0 %v7808
  %11636 = vmatmul.mubr.bf16.gmra.mrb[0].mxu0 %v7807
  %v11637 = vpop.f32.mrb[0].mxu0
  %v11638 = vadd.f32 %v11509, %v11637
  %v11639 = vpop.f32.mrb[0].mxu0
  %v11640 = vadd.f32 %v11511, %v11639
  %v11641 = vpop.f32.mrb[0].mxu0
  %v11642 = vadd.f32 %v11513, %v11641
  %v11643 = vpop.f32.mrb[0].mxu0
  %v11644 = vadd.f32 %v11515, %v11643
  %11645 = vdwg.mxu0
  %11646 = vmatprep.subr.bf16.mxu0 %v9078
  %11647 = vmatpush1.bf16.msra.mxu0 %v9077
  %11648 = vmatprep.subr.bf16.mxu0 %v9082
  %11649 = vmatpush1.bf16.msra.mxu0 %v9081
  %11650 = vmatprep.subr.bf16.mxu0 %v9086
  %11651 = vmatpush1.bf16.msra.mxu0 %v9085
  %11652 = vmatprep.subr.bf16.mxu0 %v9090
  %11653 = vmatpush1.bf16.msra.mxu0 %v9089
  %11654 = vmatprep.subr.bf16.mxu0 %v9094
  %11655 = vmatpush1.bf16.msra.mxu0 %v9093
  %11656 = vmatprep.subr.bf16.mxu0 %v9098
  %11657 = vmatpush1.bf16.msra.mxu0 %v9097
  %11658 = vmatprep.subr.bf16.mxu0 %v9102
  %11659 = vmatpush1.bf16.msra.mxu0 %v9101
  %11660 = vmatprep.subr.bf16.mxu0 %v9106
  %11661 = vmatpush1.bf16.msra.mxu0 %v9105
  %11662 = vmatprep.subr.bf16.mxu0 %v9110
  %11663 = vmatpush1.bf16.msra.mxu0 %v9109
  %11664 = vmatprep.subr.bf16.mxu0 %v9114
  %11665 = vmatpush1.bf16.msra.mxu0 %v9113
  %11666 = vmatprep.subr.bf16.mxu0 %v9118
  %11667 = vmatpush1.bf16.msra.mxu0 %v9117
  %11668 = vmatprep.subr.bf16.mxu0 %v9122
  %11669 = vmatpush1.bf16.msra.mxu0 %v9121
  %11670 = vmatprep.subr.bf16.mxu0 %v9126
  %11671 = vmatpush1.bf16.msra.mxu0 %v9125
  %11672 = vmatprep.subr.bf16.mxu0 %v9130
  %11673 = vmatpush1.bf16.msra.mxu0 %v9129
  %11674 = vmatprep.subr.bf16.mxu0 %v9134
  %11675 = vmatpush1.bf16.msra.mxu0 %v9133
  %11676 = vmatprep.subr.bf16.mxu0 %v9138
  %11677 = vmatpush1.bf16.msra.mxu0 %v9137
  %11678 = vmatprep.mubr.bf16.mxu0 %v7810
  %11679 = vmatmul.mubr.bf16.gmra.mrb[0].mxu0 %v7809
  %v11680 = vpop.f32.mrb[0].mxu0
  %v11681 = vadd.f32 %v11638, %v11680
  %v11682 = vpop.f32.mrb[0].mxu0
  %v11683 = vadd.f32 %v11640, %v11682
  %v11684 = vpop.f32.mrb[0].mxu0
  %v11685 = vadd.f32 %v11642, %v11684
  %v11686 = vpop.f32.mrb[0].mxu0
  %v11687 = vadd.f32 %v11644, %v11686
  %11688 = vdwg.mxu0
  %v11689 = vld [vmem:[#allocation3] sm:$0xf0]
  %v11690 = vld [vmem:[#allocation3 + $0x8] sm:$0xf0]
  %v11691 = vld [vmem:[#allocation3 + $0x10] sm:$0xf0]
  %v11692 = vld [vmem:[#allocation3 + $0x18] sm:$0xf0]
  %v11693 = vld [vmem:[#allocation3 + $0x20] sm:$0xff]
  %v11694 = vld [vmem:[#allocation3 + $0x28] sm:$0xff]
  %v11695 = vld [vmem:[#allocation3 + $0x30] sm:$0xff]
  %v11696 = vld [vmem:[#allocation3 + $0x38] sm:$0xff]
  %v11697 = vld [vmem:[#allocation3 + $0x40] sm:$0x3]
  %v11698 = vld [vmem:[#allocation3 + $0x48] sm:$0x3]
  %v11699 = vld [vmem:[#allocation3 + $0x50] sm:$0x3]
  %v11700 = vld [vmem:[#allocation3 + $0x58] sm:$0x3]
  %v11701 = vpack.c.bf16 %v11693, %v11689
  %v11702 = vpack.c.bf16 %v11694, %v11690
  %v11703 = vpack.c.bf16 %v11695, %v11691
  %v11704 = vpack.c.bf16 %v11696, %v11692
  %v11705 = vpack.c.bf16 %v11697, %v11697
  %v11706 = vpack.c.bf16 %v11698, %v11698
  %v11707 = vpack.c.bf16 %v11699, %v11699
  %v11708 = vpack.c.bf16 %v11700, %v11700
  %v11717 = vrot.slane %v11701, 2
  %v11718 = vrot.slane %v11705, 2
  %v11719 = vsel %vm4828, %v11717, %v11718
  %v11720 = vrot.slane %v11702, 2
  %v11721 = vrot.slane %v11706, 2
  %v11722 = vsel %vm4828, %v11720, %v11721
  %v11723 = vrot.slane %v11703, 2
  %v11724 = vrot.slane %v11707, 2
  %v11725 = vsel %vm4828, %v11723, %v11724
  %v11726 = vrot.slane %v11704, 2
  %v11727 = vrot.slane %v11708, 2
  %v11728 = vsel %vm4828, %v11726, %v11727
  %11733 = vmatprep.subr.bf16.mxu0 %v10106
  %11734 = vmatpush1.bf16.msra.mxu0 %v10105
  %11735 = vmatprep.subr.bf16.mxu0 %v10110
  %11736 = vmatpush1.bf16.msra.mxu0 %v10109
  %11737 = vmatprep.subr.bf16.mxu0 %v10114
  %11738 = vmatpush1.bf16.msra.mxu0 %v10113
  %11739 = vmatprep.subr.bf16.mxu0 %v10118
  %11740 = vmatpush1.bf16.msra.mxu0 %v10117
  %11741 = vmatprep.subr.bf16.mxu0 %v10122
  %11742 = vmatpush1.bf16.msra.mxu0 %v10121
  %11743 = vmatprep.subr.bf16.mxu0 %v10126
  %11744 = vmatpush1.bf16.msra.mxu0 %v10125
  %11745 = vmatprep.subr.bf16.mxu0 %v10130
  %11746 = vmatpush1.bf16.msra.mxu0 %v10129
  %11747 = vmatprep.subr.bf16.mxu0 %v10134
  %11748 = vmatpush1.bf16.msra.mxu0 %v10133
  %11749 = vmatprep.subr.bf16.mxu0 %v10138
  %11750 = vmatpush1.bf16.msra.mxu0 %v10137
  %11751 = vmatprep.subr.bf16.mxu0 %v10142
  %11752 = vmatpush1.bf16.msra.mxu0 %v10141
  %11753 = vmatprep.subr.bf16.mxu0 %v10146
  %11754 = vmatpush1.bf16.msra.mxu0 %v10145
  %11755 = vmatprep.subr.bf16.mxu0 %v10150
  %11756 = vmatpush1.bf16.msra.mxu0 %v10149
  %11757 = vmatprep.subr.bf16.mxu0 %v10154
  %11758 = vmatpush1.bf16.msra.mxu0 %v10153
  %11759 = vmatprep.subr.bf16.mxu0 %v10158
  %11760 = vmatpush1.bf16.msra.mxu0 %v10157
  %11761 = vmatprep.subr.bf16.mxu0 %v10162
  %11762 = vmatpush1.bf16.msra.mxu0 %v10161
  %11763 = vmatprep.subr.bf16.mxu0 %v10166
  %11764 = vmatpush1.bf16.msra.mxu0 %v10165
  %11765 = vmatprep.mubr.bf16.mxu0 %v11722
  %11766 = vmatmul.mubr.bf16.gmra.mrb[0].mxu0 %v11719
  %v11767 = vpop.f32.mrb[0].mxu0
  %v11768 = vadd.f32 0.0, %v11767
  %v11769 = vpop.f32.mrb[0].mxu0
  %v11770 = vadd.f32 0.0, %v11769
  %v11771 = vpop.f32.mrb[0].mxu0
  %v11772 = vadd.f32 0.0, %v11771
  %v11773 = vpop.f32.mrb[0].mxu0
  %v11774 = vadd.f32 0.0, %v11773
  %11775 = vdwg.mxu0
  %11776 = vmatprep.subr.bf16.mxu0 %v10170
  %11777 = vmatpush1.bf16.msra.mxu0 %v10169
  %11778 = vmatprep.subr.bf16.mxu0 %v10174
  %11779 = vmatpush1.bf16.msra.mxu0 %v10173
  %11780 = vmatprep.subr.bf16.mxu0 %v10178
  %11781 = vmatpush1.bf16.msra.mxu0 %v10177
  %11782 = vmatprep.subr.bf16.mxu0 %v10182
  %11783 = vmatpush1.bf16.msra.mxu0 %v10181
  %11784 = vmatprep.subr.bf16.mxu0 %v10186
  %11785 = vmatpush1.bf16.msra.mxu0 %v10185
  %11786 = vmatprep.subr.bf16.mxu0 %v10190
  %11787 = vmatpush1.bf16.msra.mxu0 %v10189
  %11788 = vmatprep.subr.bf16.mxu0 %v10194
  %11789 = vmatpush1.bf16.msra.mxu0 %v10193
  %11790 = vmatprep.subr.bf16.mxu0 %v10198
  %11791 = vmatpush1.bf16.msra.mxu0 %v10197
  %11792 = vmatprep.subr.bf16.mxu0 %v10202
  %11793 = vmatpush1.bf16.msra.mxu0 %v10201
  %11794 = vmatprep.subr.bf16.mxu0 %v10206
  %11795 = vmatpush1.bf16.msra.mxu0 %v10205
  %11796 = vmatprep.subr.bf16.mxu0 %v10210
  %11797 = vmatpush1.bf16.msra.mxu0 %v10209
  %11798 = vmatprep.subr.bf16.mxu0 %v10214
  %11799 = vmatpush1.bf16.msra.mxu0 %v10213
  %11800 = vmatprep.subr.bf16.mxu0 %v10218
  %11801 = vmatpush1.bf16.msra.mxu0 %v10217
  %11802 = vmatprep.subr.bf16.mxu0 %v10222
  %11803 = vmatpush1.bf16.msra.mxu0 %v10221
  %11804 = vmatprep.subr.bf16.mxu0 %v10226
  %11805 = vmatpush1.bf16.msra.mxu0 %v10225
  %11806 = vmatprep.subr.bf16.mxu0 %v10230
  %11807 = vmatpush1.bf16.msra.mxu0 %v10229
  %11808 = vmatprep.mubr.bf16.mxu0 %v11728
  %11809 = vmatmul.mubr.bf16.gmra.mrb[0].mxu0 %v11725
  %v11810 = vpop.f32.mrb[0].mxu0
  %v11811 = vadd.f32 %v11768, %v11810
  %v11812 = vpop.f32.mrb[0].mxu0
  %v11813 = vadd.f32 %v11770, %v11812
  %v11814 = vpop.f32.mrb[0].mxu0
  %v11815 = vadd.f32 %v11772, %v11814
  %v11816 = vpop.f32.mrb[0].mxu0
  %v11817 = vadd.f32 %v11774, %v11816
  %11818 = vdwg.mxu0
  %11819 = vmatprep.subr.bf16.mxu0 %v10108
  %11820 = vmatpush1.bf16.msra.mxu0 %v10107
  %11821 = vmatprep.subr.bf16.mxu0 %v10112
  %11822 = vmatpush1.bf16.msra.mxu0 %v10111
  %11823 = vmatprep.subr.bf16.mxu0 %v10116
  %11824 = vmatpush1.bf16.msra.mxu0 %v10115
  %11825 = vmatprep.subr.bf16.mxu0 %v10120
  %11826 = vmatpush1.bf16.msra.mxu0 %v10119
  %11827 = vmatprep.subr.bf16.mxu0 %v10124
  %11828 = vmatpush1.bf16.msra.mxu0 %v10123
  %11829 = vmatprep.subr.bf16.mxu0 %v10128
  %11830 = vmatpush1.bf16.msra.mxu0 %v10127
  %11831 = vmatprep.subr.bf16.mxu0 %v10132
  %11832 = vmatpush1.bf16.msra.mxu0 %v10131
  %11833 = vmatprep.subr.bf16.mxu0 %v10136
  %11834 = vmatpush1.bf16.msra.mxu0 %v10135
  %11835 = vmatprep.subr.bf16.mxu0 %v10140
  %11836 = vmatpush1.bf16.msra.mxu0 %v10139
  %11837 = vmatprep.subr.bf16.mxu0 %v10144
  %11838 = vmatpush1.bf16.msra.mxu0 %v10143
  %11839 = vmatprep.subr.bf16.mxu0 %v10148
  %11840 = vmatpush1.bf16.msra.mxu0 %v10147
  %11841 = vmatprep.subr.bf16.mxu0 %v10152
  %11842 = vmatpush1.bf16.msra.mxu0 %v10151
  %11843 = vmatprep.subr.bf16.mxu0 %v10156
  %11844 = vmatpush1.bf16.msra.mxu0 %v10155
  %11845 = vmatprep.subr.bf16.mxu0 %v10160
  %11846 = vmatpush1.bf16.msra.mxu0 %v10159
  %11847 = vmatprep.subr.bf16.mxu0 %v10164
  %11848 = vmatpush1.bf16.msra.mxu0 %v10163
  %11849 = vmatprep.subr.bf16.mxu0 %v10168
  %11850 = vmatpush1.bf16.msra.mxu0 %v10167
  %11851 = vmatprep.mubr.bf16.mxu0 %v11722
  %11852 = vmatmul.mubr.bf16.gmra.mrb[0].mxu0 %v11719
  %v11853 = vpop.f32.mrb[0].mxu0
  %v11854 = vadd.f32 0.0, %v11853
  %v11855 = vpop.f32.mrb[0].mxu0
  %v11856 = vadd.f32 0.0, %v11855
  %v11857 = vpop.f32.mrb[0].mxu0
  %v11858 = vadd.f32 0.0, %v11857
  %v11859 = vpop.f32.mrb[0].mxu0
  %v11860 = vadd.f32 0.0, %v11859
  %11861 = vdwg.mxu0
  %11862 = vmatprep.subr.bf16.mxu0 %v10172
  %11863 = vmatpush1.bf16.msra.mxu0 %v10171
  %11864 = vmatprep.subr.bf16.mxu0 %v10176
  %11865 = vmatpush1.bf16.msra.mxu0 %v10175
  %11866 = vmatprep.subr.bf16.mxu0 %v10180
  %11867 = vmatpush1.bf16.msra.mxu0 %v10179
  %11868 = vmatprep.subr.bf16.mxu0 %v10184
  %11869 = vmatpush1.bf16.msra.mxu0 %v10183
  %11870 = vmatprep.subr.bf16.mxu0 %v10188
  %11871 = vmatpush1.bf16.msra.mxu0 %v10187
  %11872 = vmatprep.subr.bf16.mxu0 %v10192
  %11873 = vmatpush1.bf16.msra.mxu0 %v10191
  %11874 = vmatprep.subr.bf16.mxu0 %v10196
  %11875 = vmatpush1.bf16.msra.mxu0 %v10195
  %11876 = vmatprep.subr.bf16.mxu0 %v10200
  %11877 = vmatpush1.bf16.msra.mxu0 %v10199
  %11878 = vmatprep.subr.bf16.mxu0 %v10204
  %11879 = vmatpush1.bf16.msra.mxu0 %v10203
  %11880 = vmatprep.subr.bf16.mxu0 %v10208
  %11881 = vmatpush1.bf16.msra.mxu0 %v10207
  %11882 = vmatprep.subr.bf16.mxu0 %v10212
  %11883 = vmatpush1.bf16.msra.mxu0 %v10211
  %11884 = vmatprep.subr.bf16.mxu0 %v10216
  %11885 = vmatpush1.bf16.msra.mxu0 %v10215
  %11886 = vmatprep.subr.bf16.mxu0 %v10220
  %11887 = vmatpush1.bf16.msra.mxu0 %v10219
  %11888 = vmatprep.subr.bf16.mxu0 %v10224
  %11889 = vmatpush1.bf16.msra.mxu0 %v10223
  %11890 = vmatprep.subr.bf16.mxu0 %v10228
  %11891 = vmatpush1.bf16.msra.mxu0 %v10227
  %11892 = vmatprep.subr.bf16.mxu0 %v10232
  %11893 = vmatpush1.bf16.msra.mxu0 %v10231
  %11894 = vmatprep.mubr.bf16.mxu0 %v11728
  %11895 = vmatmul.mubr.bf16.gmra.mrb[0].mxu0 %v11725
  %v11896 = vpop.f32.mrb[0].mxu0
  %v11897 = vadd.f32 %v11854, %v11896
  %v11898 = vpop.f32.mrb[0].mxu0
  %v11899 = vadd.f32 %v11856, %v11898
  %v11900 = vpop.f32.mrb[0].mxu0
  %v11901 = vadd.f32 %v11858, %v11900
  %v11902 = vpop.f32.mrb[0].mxu0
  %v11903 = vadd.f32 %v11860, %v11902
  %11904 = vdwg.mxu0
  %11905 = vmatprep.subr.bf16.mxu0 %v10918
  %11906 = vmatpush1.bf16.msra.mxu0 %v10917
  %11907 = vmatprep.subr.bf16.mxu0 %v10922
  %11908 = vmatpush1.bf16.msra.mxu0 %v10921
  %11909 = vmatprep.subr.bf16.mxu0 %v10926
  %11910 = vmatpush1.bf16.msra.mxu0 %v10925
  %11911 = vmatprep.subr.bf16.mxu0 %v10930
  %11912 = vmatpush1.bf16.msra.mxu0 %v10929
  %11913 = vmatprep.subr.bf16.mxu0 %v10934
  %11914 = vmatpush1.bf16.msra.mxu0 %v10933
  %11915 = vmatprep.subr.bf16.mxu0 %v10938
  %11916 = vmatpush1.bf16.msra.mxu0 %v10937
  %11917 = vmatprep.subr.bf16.mxu0 %v10942
  %11918 = vmatpush1.bf16.msra.mxu0 %v10941
  %11919 = vmatprep.subr.bf16.mxu0 %v10946
  %11920 = vmatpush1.bf16.msra.mxu0 %v10945
  %11921 = vmatprep.subr.bf16.mxu0 %v10950
  %11922 = vmatpush1.bf16.msra.mxu0 %v10949
  %11923 = vmatprep.subr.bf16.mxu0 %v10954
  %11924 = vmatpush1.bf16.msra.mxu0 %v10953
  %11925 = vmatprep.subr.bf16.mxu0 %v10958
  %11926 = vmatpush1.bf16.msra.mxu0 %v10957
  %11927 = vmatprep.subr.bf16.mxu0 %v10962
  %11928 = vmatpush1.bf16.msra.mxu0 %v10961
  %11929 = vmatprep.subr.bf16.mxu0 %v10966
  %11930 = vmatpush1.bf16.msra.mxu0 %v10965
  %11931 = vmatprep.subr.bf16.mxu0 %v10970
  %11932 = vmatpush1.bf16.msra.mxu0 %v10969
  %11933 = vmatprep.subr.bf16.mxu0 %v10974
  %11934 = vmatpush1.bf16.msra.mxu0 %v10973
  %11935 = vmatprep.subr.bf16.mxu0 %v10978
  %11936 = vmatpush1.bf16.msra.mxu0 %v10977
  %11937 = vmatprep.mubr.bf16.mxu0 %v9714
  %11938 = vmatmul.mubr.bf16.gmra.mrb[0].mxu0 %v9713
  %v11939 = vpop.f32.mrb[0].mxu0
  %v11940 = vadd.f32 %v11811, %v11939
  %v11941 = vpop.f32.mrb[0].mxu0
  %v11942 = vadd.f32 %v11813, %v11941
  %v11943 = vpop.f32.mrb[0].mxu0
  %v11944 = vadd.f32 %v11815, %v11943
  %v11945 = vpop.f32.mrb[0].mxu0
  %v11946 = vadd.f32 %v11817, %v11945
  %11947 = vdwg.mxu0
  %11948 = vmatprep.subr.bf16.mxu0 %v10982
  %11949 = vmatpush1.bf16.msra.mxu0 %v10981
  %11950 = vmatprep.subr.bf16.mxu0 %v10986
  %11951 = vmatpush1.bf16.msra.mxu0 %v10985
  %11952 = vmatprep.subr.bf16.mxu0 %v10990
  %11953 = vmatpush1.bf16.msra.mxu0 %v10989
  %11954 = vmatprep.subr.bf16.mxu0 %v10994
  %11955 = vmatpush1.bf16.msra.mxu0 %v10993
  %11956 = vmatprep.subr.bf16.mxu0 %v10998
  %11957 = vmatpush1.bf16.msra.mxu0 %v10997
  %11958 = vmatprep.subr.bf16.mxu0 %v11002
  %11959 = vmatpush1.bf16.msra.mxu0 %v11001
  %11960 = vmatprep.subr.bf16.mxu0 %v11006
  %11961 = vmatpush1.bf16.msra.mxu0 %v11005
  %11962 = vmatprep.subr.bf16.mxu0 %v11010
  %11963 = vmatpush1.bf16.msra.mxu0 %v11009
  %11964 = vmatprep.subr.bf16.mxu0 %v11014
  %11965 = vmatpush1.bf16.msra.mxu0 %v11013
  %11966 = vmatprep.subr.bf16.mxu0 %v11018
  %11967 = vmatpush1.bf16.msra.mxu0 %v11017
  %11968 = vmatprep.subr.bf16.mxu0 %v11022
  %11969 = vmatpush1.bf16.msra.mxu0 %v11021
  %11970 = vmatprep.subr.bf16.mxu0 %v11026
  %11971 = vmatpush1.bf16.msra.mxu0 %v11025
  %11972 = vmatprep.subr.bf16.mxu0 %v11030
  %11973 = vmatpush1.bf16.msra.mxu0 %v11029
  %11974 = vmatprep.subr.bf16.mxu0 %v11034
  %11975 = vmatpush1.bf16.msra.mxu0 %v11033
  %11976 = vmatprep.subr.bf16.mxu0 %v11038
  %11977 = vmatpush1.bf16.msra.mxu0 %v11037
  %11978 = vmatprep.subr.bf16.mxu0 %v11042
  %11979 = vmatpush1.bf16.msra.mxu0 %v11041
  %11980 = vmatprep.mubr.bf16.mxu0 %v9716
  %11981 = vmatmul.mubr.bf16.gmra.mrb[0].mxu0 %v9715
  %v11982 = vpop.f32.mrb[0].mxu0
  %v11983 = vadd.f32 %v11940, %v11982
  %v11984 = vpop.f32.mrb[0].mxu0
  %v11985 = vadd.f32 %v11942, %v11984
  %v11986 = vpop.f32.mrb[0].mxu0
  %v11987 = vadd.f32 %v11944, %v11986
  %v11988 = vpop.f32.mrb[0].mxu0
  %v11989 = vadd.f32 %v11946, %v11988
  %11990 = vdwg.mxu0
  %11991 = vmatprep.subr.bf16.mxu0 %v10920
  %11992 = vmatpush1.bf16.msra.mxu0 %v10919
  %11993 = vmatprep.subr.bf16.mxu0 %v10924
  %11994 = vmatpush1.bf16.msra.mxu0 %v10923
  %11995 = vmatprep.subr.bf16.mxu0 %v10928
  %11996 = vmatpush1.bf16.msra.mxu0 %v10927
  %11997 = vmatprep.subr.bf16.mxu0 %v10932
  %11998 = vmatpush1.bf16.msra.mxu0 %v10931
  %11999 = vmatprep.subr.bf16.mxu0 %v10936
  %12000 = vmatpush1.bf16.msra.mxu0 %v10935
  %12001 = vmatprep.subr.bf16.mxu0 %v10940
  %12002 = vmatpush1.bf16.msra.mxu0 %v10939
  %12003 = vmatprep.subr.bf16.mxu0 %v10944
  %12004 = vmatpush1.bf16.msra.mxu0 %v10943
  %12005 = vmatprep.subr.bf16.mxu0 %v10948
  %12006 = vmatpush1.bf16.msra.mxu0 %v10947
  %12007 = vmatprep.subr.bf16.mxu0 %v10952
  %12008 = vmatpush1.bf16.msra.mxu0 %v10951
  %12009 = vmatprep.subr.bf16.mxu0 %v10956
  %12010 = vmatpush1.bf16.msra.mxu0 %v10955
  %12011 = vmatprep.subr.bf16.mxu0 %v10960
  %12012 = vmatpush1.bf16.msra.mxu0 %v10959
  %12013 = vmatprep.subr.bf16.mxu0 %v10964
  %12014 = vmatpush1.bf16.msra.mxu0 %v10963
  %12015 = vmatprep.subr.bf16.mxu0 %v10968
  %12016 = vmatpush1.bf16.msra.mxu0 %v10967
  %12017 = vmatprep.subr.bf16.mxu0 %v10972
  %12018 = vmatpush1.bf16.msra.mxu0 %v10971
  %12019 = vmatprep.subr.bf16.mxu0 %v10976
  %12020 = vmatpush1.bf16.msra.mxu0 %v10975
  %12021 = vmatprep.subr.bf16.mxu0 %v10980
  %12022 = vmatpush1.bf16.msra.mxu0 %v10979
  %12023 = vmatprep.mubr.bf16.mxu0 %v9714
  %12024 = vmatmul.mubr.bf16.gmra.mrb[0].mxu0 %v9713
  %v12025 = vpop.f32.mrb[0].mxu0
  %v12026 = vadd.f32 %v11897, %v12025
  %v12027 = vpop.f32.mrb[0].mxu0
  %v12028 = vadd.f32 %v11899, %v12027
  %v12029 = vpop.f32.mrb[0].mxu0
  %v12030 = vadd.f32 %v11901, %v12029
  %v12031 = vpop.f32.mrb[0].mxu0
  %v12032 = vadd.f32 %v11903, %v12031
  %12033 = vdwg.mxu0
  %12034 = vmatprep.subr.bf16.mxu0 %v10984
  %12035 = vmatpush1.bf16.msra.mxu0 %v10983
  %12036 = vmatprep.subr.bf16.mxu0 %v10988
  %12037 = vmatpush1.bf16.msra.mxu0 %v10987
  %12038 = vmatprep.subr.bf16.mxu0 %v10992
  %12039 = vmatpush1.bf16.msra.mxu0 %v10991
  %12040 = vmatprep.subr.bf16.mxu0 %v10996
  %12041 = vmatpush1.bf16.msra.mxu0 %v10995
  %12042 = vmatprep.subr.bf16.mxu0 %v11000
  %12043 = vmatpush1.bf16.msra.mxu0 %v10999
  %12044 = vmatprep.subr.bf16.mxu0 %v11004
  %12045 = vmatpush1.bf16.msra.mxu0 %v11003
  %12046 = vmatprep.subr.bf16.mxu0 %v11008
  %12047 = vmatpush1.bf16.msra.mxu0 %v11007
  %12048 = vmatprep.subr.bf16.mxu0 %v11012
  %12049 = vmatpush1.bf16.msra.mxu0 %v11011
  %12050 = vmatprep.subr.bf16.mxu0 %v11016
  %12051 = vmatpush1.bf16.msra.mxu0 %v11015
  %12052 = vmatprep.subr.bf16.mxu0 %v11020
  %12053 = vmatpush1.bf16.msra.mxu0 %v11019
  %12054 = vmatprep.subr.bf16.mxu0 %v11024
  %12055 = vmatpush1.bf16.msra.mxu0 %v11023
  %12056 = vmatprep.subr.bf16.mxu0 %v11028
  %12057 = vmatpush1.bf16.msra.mxu0 %v11027
  %12058 = vmatprep.subr.bf16.mxu0 %v11032
  %12059 = vmatpush1.bf16.msra.mxu0 %v11031
  %12060 = vmatprep.subr.bf16.mxu0 %v11036
  %12061 = vmatpush1.bf16.msra.mxu0 %v11035
  %12062 = vmatprep.subr.bf16.mxu0 %v11040
  %12063 = vmatpush1.bf16.msra.mxu0 %v11039
  %12064 = vmatprep.subr.bf16.mxu0 %v11044
  %12065 = vmatpush1.bf16.msra.mxu0 %v11043
  %12066 = vmatprep.mubr.bf16.mxu0 %v9716
  %12067 = vmatmul.mubr.bf16.gmra.mrb[0].mxu0 %v9715
  %v12068 = vpop.f32.mrb[0].mxu0
  %v12069 = vadd.f32 %v12026, %v12068
  %v12070 = vpop.f32.mrb[0].mxu0
  %v12071 = vadd.f32 %v12028, %v12070
  %v12072 = vpop.f32.mrb[0].mxu0
  %v12073 = vadd.f32 %v12030, %v12072
  %v12074 = vpop.f32.mrb[0].mxu0
  %v12075 = vadd.f32 %v12032, %v12074
  %12076 = vdwg.mxu0
  %v12077 = vsel %vm6807, %v9349, 0.0
  %v12078 = vadd.f32 %v9345, %v12077
  %v12079 = vrot.slane %v12078, 4
  %v12080 = vadd.f32 %v12078, %v12079
  %v12081 = vrot.slane %v12080, 2
  %v12082 = vadd.f32 %v12080, %v12081
  %v12083 = vrot.slane %v12082, 1
  %v12084 = vadd.f32 %v12082, %v12083
  %v12085 = vsel %vm6807, %v9351, 0.0
  %v12086 = vadd.f32 %v9347, %v12085
  %v12087 = vrot.slane %v12086, 4
  %v12088 = vadd.f32 %v12086, %v12087
  %v12089 = vrot.slane %v12088, 2
  %v12090 = vadd.f32 %v12088, %v12089
  %v12091 = vrot.slane %v12090, 1
  %v12092 = vadd.f32 %v12090, %v12091
  %v12093 = vsel %vm6807, %v9435, 0.0
  %v12094 = vadd.f32 %v9431, %v12093
  %v12095 = vrot.slane %v12094, 4
  %v12096 = vadd.f32 %v12094, %v12095
  %v12097 = vrot.slane %v12096, 2
  %v12098 = vadd.f32 %v12096, %v12097
  %v12099 = vrot.slane %v12098, 1
  %v12100 = vadd.f32 %v12098, %v12099
  %v12101 = vsel %vm52, %v9433, 0.0
  %vm12102 = vcmask 521216
  %v12103 = vsel %vm12102, %v9437, 0.0
  %v12104 = vadd.f32 %v12101, %v12103
  %v12105 = vrot.slane %v12104, 4
  %v12106 = vadd.f32 %v12104, %v12105
  %v12107 = vrot.slane %v12106, 2
  %v12108 = vadd.f32 %v12106, %v12107
  %v12109 = vrot.slane %v12108, 1
  %v12110 = vadd.f32 %v12108, %v12109
  %v12111 = vmul.f32 %v9345, %v9345
  %v12112 = vmul.f32 %v9347, %v9347
  %v12113 = vmul.f32 %v9431, %v9431
  %v12114 = vmul.f32 %v9433, %v9433
  %v12115 = vmul.f32 %v9349, %v9349
  %v12116 = vmul.f32 %v9351, %v9351
  %v12117 = vmul.f32 %v9435, %v9435
  %v12118 = vmul.f32 %v9437, %v9437
  %v12119 = vsel %vm6807, %v12115, 0.0
  %v12120 = vadd.f32 %v12111, %v12119
  %v12121 = vrot.slane %v12120, 4
  %v12122 = vadd.f32 %v12120, %v12121
  %v12123 = vrot.slane %v12122, 2
  %v12124 = vadd.f32 %v12122, %v12123
  %v12125 = vrot.slane %v12124, 1
  %v12126 = vadd.f32 %v12124, %v12125
  %v12127 = vsel %vm6807, %v12116, 0.0
  %v12128 = vadd.f32 %v12112, %v12127
  %v12129 = vrot.slane %v12128, 4
  %v12130 = vadd.f32 %v12128, %v12129
  %v12131 = vrot.slane %v12130, 2
  %v12132 = vadd.f32 %v12130, %v12131
  %v12133 = vrot.slane %v12132, 1
  %v12134 = vadd.f32 %v12132, %v12133
  %v12135 = vsel %vm6807, %v12117, 0.0
  %v12136 = vadd.f32 %v12113, %v12135
  %v12137 = vrot.slane %v12136, 4
  %v12138 = vadd.f32 %v12136, %v12137
  %v12139 = vrot.slane %v12138, 2
  %v12140 = vadd.f32 %v12138, %v12139
  %v12141 = vrot.slane %v12140, 1
  %v12142 = vadd.f32 %v12140, %v12141
  %v12143 = vsel %vm52, %v12114, 0.0
  %v12144 = vsel %vm12102, %v12118, 0.0
  %v12145 = vadd.f32 %v12143, %v12144
  %v12146 = vrot.slane %v12145, 4
  %v12147 = vadd.f32 %v12145, %v12146
  %v12148 = vrot.slane %v12147, 2
  %v12149 = vadd.f32 %v12147, %v12148
  %v12150 = vrot.slane %v12149, 1
  %v12151 = vadd.f32 %v12149, %v12150
  %v12152 = vsel %vm6807, %v11255, 0.0
  %v12153 = vadd.f32 %v11251, %v12152
  %v12154 = vrot.slane %v12153, 4
  %v12155 = vadd.f32 %v12153, %v12154
  %v12156 = vrot.slane %v12155, 2
  %v12157 = vadd.f32 %v12155, %v12156
  %v12158 = vrot.slane %v12157, 1
  %v12159 = vadd.f32 %v12157, %v12158
  %v12160 = vsel %vm6807, %v11257, 0.0
  %v12161 = vadd.f32 %v11253, %v12160
  %v12162 = vrot.slane %v12161, 4
  %v12163 = vadd.f32 %v12161, %v12162
  %v12164 = vrot.slane %v12163, 2
  %v12165 = vadd.f32 %v12163, %v12164
  %v12166 = vrot.slane %v12165, 1
  %v12167 = vadd.f32 %v12165, %v12166
  %v12168 = vsel %vm6807, %v11341, 0.0
  %v12169 = vadd.f32 %v11337, %v12168
  %v12170 = vrot.slane %v12169, 4
  %v12171 = vadd.f32 %v12169, %v12170
  %v12172 = vrot.slane %v12171, 2
  %v12173 = vadd.f32 %v12171, %v12172
  %v12174 = vrot.slane %v12173, 1
  %v12175 = vadd.f32 %v12173, %v12174
  %v12176 = vsel %vm52, %v11339, 0.0
  %v12177 = vsel %vm12102, %v11343, 0.0
  %v12178 = vadd.f32 %v12176, %v12177
  %v12179 = vrot.slane %v12178, 4
  %v12180 = vadd.f32 %v12178, %v12179
  %v12181 = vrot.slane %v12180, 2
  %v12182 = vadd.f32 %v12180, %v12181
  %v12183 = vrot.slane %v12182, 1
  %v12184 = vadd.f32 %v12182, %v12183
  %v12185 = vadd.f32 %v12084, %v12159
  %v12186 = vadd.f32 %v12092, %v12167
  %v12187 = vadd.f32 %v12100, %v12175
  %v12188 = vadd.f32 %v12110, %v12184
  %v12189 = vmul.f32 %v11251, %v11251
  %v12190 = vmul.f32 %v11253, %v11253
  %v12191 = vmul.f32 %v11337, %v11337
  %v12192 = vmul.f32 %v11339, %v11339
  %v12193 = vmul.f32 %v11255, %v11255
  %v12194 = vmul.f32 %v11257, %v11257
  %v12195 = vmul.f32 %v11341, %v11341
  %v12196 = vmul.f32 %v11343, %v11343
  %v12197 = vsel %vm6807, %v12193, 0.0
  %v12198 = vadd.f32 %v12189, %v12197
  %v12199 = vrot.slane %v12198, 4
  %v12200 = vadd.f32 %v12198, %v12199
  %v12201 = vrot.slane %v12200, 2
  %v12202 = vadd.f32 %v12200, %v12201
  %v12203 = vrot.slane %v12202, 1
  %v12204 = vadd.f32 %v12202, %v12203
  %v12205 = vsel %vm6807, %v12194, 0.0
  %v12206 = vadd.f32 %v12190, %v12205
  %v12207 = vrot.slane %v12206, 4
  %v12208 = vadd.f32 %v12206, %v12207
  %v12209 = vrot.slane %v12208, 2
  %v12210 = vadd.f32 %v12208, %v12209
  %v12211 = vrot.slane %v12210, 1
  %v12212 = vadd.f32 %v12210, %v12211
  %v12213 = vsel %vm6807, %v12195, 0.0
  %v12214 = vadd.f32 %v12191, %v12213
  %v12215 = vrot.slane %v12214, 4
  %v12216 = vadd.f32 %v12214, %v12215
  %v12217 = vrot.slane %v12216, 2
  %v12218 = vadd.f32 %v12216, %v12217
  %v12219 = vrot.slane %v12218, 1
  %v12220 = vadd.f32 %v12218, %v12219
  %v12221 = vsel %vm52, %v12192, 0.0
  %v12222 = vsel %vm12102, %v12196, 0.0
  %v12223 = vadd.f32 %v12221, %v12222
  %v12224 = vrot.slane %v12223, 4
  %v12225 = vadd.f32 %v12223, %v12224
  %v12226 = vrot.slane %v12225, 2
  %v12227 = vadd.f32 %v12225, %v12226
  %v12228 = vrot.slane %v12227, 1
  %v12229 = vadd.f32 %v12227, %v12228
  %v12230 = vadd.f32 %v12126, %v12204
  %v12231 = vadd.f32 %v12134, %v12212
  %v12232 = vadd.f32 %v12142, %v12220
  %v12233 = vadd.f32 %v12151, %v12229
  %v12234 = vsel %vm6807, %v11599, 0.0
  %v12235 = vadd.f32 %v11595, %v12234
  %v12236 = vrot.slane %v12235, 4
  %v12237 = vadd.f32 %v12235, %v12236
  %v12238 = vrot.slane %v12237, 2
  %v12239 = vadd.f32 %v12237, %v12238
  %v12240 = vrot.slane %v12239, 1
  %v12241 = vadd.f32 %v12239, %v12240
  %v12242 = vsel %vm6807, %v11601, 0.0
  %v12243 = vadd.f32 %v11597, %v12242
  %v12244 = vrot.slane %v12243, 4
  %v12245 = vadd.f32 %v12243, %v12244
  %v12246 = vrot.slane %v12245, 2
  %v12247 = vadd.f32 %v12245, %v12246
  %v12248 = vrot.slane %v12247, 1
  %v12249 = vadd.f32 %v12247, %v12248
  %v12250 = vsel %vm6807, %v11685, 0.0
  %v12251 = vadd.f32 %v11681, %v12250
  %v12252 = vrot.slane %v12251, 4
  %v12253 = vadd.f32 %v12251, %v12252
  %v12254 = vrot.slane %v12253, 2
  %v12255 = vadd.f32 %v12253, %v12254
  %v12256 = vrot.slane %v12255, 1
  %v12257 = vadd.f32 %v12255, %v12256
  %v12258 = vsel %vm52, %v11683, 0.0
  %v12259 = vsel %vm12102, %v11687, 0.0
  %v12260 = vadd.f32 %v12258, %v12259
  %v12261 = vrot.slane %v12260, 4
  %v12262 = vadd.f32 %v12260, %v12261
  %v12263 = vrot.slane %v12262, 2
  %v12264 = vadd.f32 %v12262, %v12263
  %v12265 = vrot.slane %v12264, 1
  %v12266 = vadd.f32 %v12264, %v12265
  %v12267 = vadd.f32 %v12185, %v12241
  %v12268 = vadd.f32 %v12186, %v12249
  %v12269 = vadd.f32 %v12187, %v12257
  %v12270 = vadd.f32 %v12188, %v12266
  %v12271 = vmul.f32 %v11595, %v11595
  %v12272 = vmul.f32 %v11597, %v11597
  %v12273 = vmul.f32 %v11681, %v11681
  %v12274 = vmul.f32 %v11683, %v11683
  %v12275 = vmul.f32 %v11599, %v11599
  %v12276 = vmul.f32 %v11601, %v11601
  %v12277 = vmul.f32 %v11685, %v11685
  %v12278 = vmul.f32 %v11687, %v11687
  %v12279 = vsel %vm6807, %v12275, 0.0
  %v12280 = vadd.f32 %v12271, %v12279
  %v12281 = vrot.slane %v12280, 4
  %v12282 = vadd.f32 %v12280, %v12281
  %v12283 = vrot.slane %v12282, 2
  %v12284 = vadd.f32 %v12282, %v12283
  %v12285 = vrot.slane %v12284, 1
  %v12286 = vadd.f32 %v12284, %v12285
  %v12287 = vsel %vm6807, %v12276, 0.0
  %v12288 = vadd.f32 %v12272, %v12287
  %v12289 = vrot.slane %v12288, 4
  %v12290 = vadd.f32 %v12288, %v12289
  %v12291 = vrot.slane %v12290, 2
  %v12292 = vadd.f32 %v12290, %v12291
  %v12293 = vrot.slane %v12292, 1
  %v12294 = vadd.f32 %v12292, %v12293
  %v12295 = vsel %vm6807, %v12277, 0.0
  %v12296 = vadd.f32 %v12273, %v12295
  %v12297 = vrot.slane %v12296, 4
  %v12298 = vadd.f32 %v12296, %v12297
  %v12299 = vrot.slane %v12298, 2
  %v12300 = vadd.f32 %v12298, %v12299
  %v12301 = vrot.slane %v12300, 1
  %v12302 = vadd.f32 %v12300, %v12301
  %v12303 = vsel %vm52, %v12274, 0.0
  %v12304 = vsel %vm12102, %v12278, 0.0
  %v12305 = vadd.f32 %v12303, %v12304
  %v12306 = vrot.slane %v12305, 4
  %v12307 = vadd.f32 %v12305, %v12306
  %v12308 = vrot.slane %v12307, 2
  %v12309 = vadd.f32 %v12307, %v12308
  %v12310 = vrot.slane %v12309, 1
  %v12311 = vadd.f32 %v12309, %v12310
  %v12312 = vadd.f32 %v12230, %v12286
  %v12313 = vadd.f32 %v12231, %v12294
  %v12314 = vadd.f32 %v12232, %v12302
  %v12315 = vadd.f32 %v12233, %v12311
  %v12316 = vsel %vm6807, %v11987, 0.0
  %v12317 = vadd.f32 %v11983, %v12316
  %v12318 = vrot.slane %v12317, 4
  %v12319 = vadd.f32 %v12317, %v12318
  %v12320 = vrot.slane %v12319, 2
  %v12321 = vadd.f32 %v12319, %v12320
  %v12322 = vrot.slane %v12321, 1
  %v12323 = vadd.f32 %v12321, %v12322
  %v12324 = vsel %vm6807, %v11989, 0.0
  %v12325 = vadd.f32 %v11985, %v12324
  %v12326 = vrot.slane %v12325, 4
  %v12327 = vadd.f32 %v12325, %v12326
  %v12328 = vrot.slane %v12327, 2
  %v12329 = vadd.f32 %v12327, %v12328
  %v12330 = vrot.slane %v12329, 1
  %v12331 = vadd.f32 %v12329, %v12330
  %v12332 = vsel %vm6807, %v12073, 0.0
  %v12333 = vadd.f32 %v12069, %v12332
  %v12334 = vrot.slane %v12333, 4
  %v12335 = vadd.f32 %v12333, %v12334
  %v12336 = vrot.slane %v12335, 2
  %v12337 = vadd.f32 %v12335, %v12336
  %v12338 = vrot.slane %v12337, 1
  %v12339 = vadd.f32 %v12337, %v12338
  %v12340 = vsel %vm52, %v12071, 0.0
  %v12341 = vsel %vm12102, %v12075, 0.0
  %v12342 = vadd.f32 %v12340, %v12341
  %v12343 = vrot.slane %v12342, 4
  %v12344 = vadd.f32 %v12342, %v12343
  %v12345 = vrot.slane %v12344, 2
  %v12346 = vadd.f32 %v12344, %v12345
  %v12347 = vrot.slane %v12346, 1
  %v12348 = vadd.f32 %v12346, %v12347
  %v12349 = vadd.f32 %v12267, %v12323
  %v12350 = vadd.f32 %v12268, %v12331
  %v12351 = vadd.f32 %v12269, %v12339
  %v12352 = vadd.f32 %v12270, %v12348
  %v12353 = vmul.f32 %v11983, %v11983
  %v12354 = vmul.f32 %v11985, %v11985
  %v12355 = vmul.f32 %v12069, %v12069
  %v12356 = vmul.f32 %v12071, %v12071
  %v12357 = vmul.f32 %v11987, %v11987
  %v12358 = vmul.f32 %v11989, %v11989
  %v12359 = vmul.f32 %v12073, %v12073
  %v12360 = vmul.f32 %v12075, %v12075
  %v12361 = vsel %vm6807, %v12357, 0.0
  %v12362 = vadd.f32 %v12353, %v12361
  %v12363 = vrot.slane %v12362, 4
  %v12364 = vadd.f32 %v12362, %v12363
  %v12365 = vrot.slane %v12364, 2
  %v12366 = vadd.f32 %v12364, %v12365
  %v12367 = vrot.slane %v12366, 1
  %v12368 = vadd.f32 %v12366, %v12367
  %v12369 = vsel %vm6807, %v12358, 0.0
  %v12370 = vadd.f32 %v12354, %v12369
  %v12371 = vrot.slane %v12370, 4
  %v12372 = vadd.f32 %v12370, %v12371
  %v12373 = vrot.slane %v12372, 2
  %v12374 = vadd.f32 %v12372, %v12373
  %v12375 = vrot.slane %v12374, 1
  %v12376 = vadd.f32 %v12374, %v12375
  %v12377 = vsel %vm6807, %v12359, 0.0
  %v12378 = vadd.f32 %v12355, %v12377
  %v12379 = vrot.slane %v12378, 4
  %v12380 = vadd.f32 %v12378, %v12379
  %v12381 = vrot.slane %v12380, 2
  %v12382 = vadd.f32 %v12380, %v12381
  %v12383 = vrot.slane %v12382, 1
  %v12384 = vadd.f32 %v12382, %v12383
  %v12385 = vsel %vm52, %v12356, 0.0
  %v12386 = vsel %vm12102, %v12360, 0.0
  %v12387 = vadd.f32 %v12385, %v12386
  %v12388 = vrot.slane %v12387, 4
  %v12389 = vadd.f32 %v12387, %v12388
  %v12390 = vrot.slane %v12389, 2
  %v12391 = vadd.f32 %v12389, %v12390
  %v12392 = vrot.slane %v12391, 1
  %v12393 = vadd.f32 %v12391, %v12392
  %v12394 = vadd.f32 %v12312, %v12368
  %v12395 = vadd.f32 %v12313, %v12376
  %v12396 = vadd.f32 %v12314, %v12384
  %v12397 = vadd.f32 %v12315, %v12393
  %v12398 = vsel %vm6960, %v12349, %v12394
  %v12399 = vsel %vm6960, %v12350, %v12395
  %v12400 = vsel %vm6960, %v12351, %v12396
  %v12401 = vsel %vm6960, %v12352, %v12397
  %v12402 = vld [vmem:[%s11] sm:$0xff]
  %v12403 = vld [vmem:[%s11 + $0x8] sm:$0xff]
  %v12404 = vld [vmem:[%s11 + $0x10] sm:$0xff]
  %v12405 = vld [vmem:[%s11 + $0x18] sm:$0xff]
  %v12406 = vld [vmem:[%s11 + $0x20] sm:$0xff]
  %v12407 = vld [vmem:[%s11 + $0x28] sm:$0xff]
  %v12408 = vld [vmem:[%s11 + $0x30] sm:$0xff]
  %v12409 = vld [vmem:[%s11 + $0x38] sm:$0xff]
  %v12410 = vld [vmem:[%s11 + $0x40] sm:$0xff]
  %v12411 = vld [vmem:[%s11 + $0x48] sm:$0xff]
  %v12412 = vld [vmem:[%s11 + $0x50] sm:$0xff]
  %v12413 = vld [vmem:[%s11 + $0x58] sm:$0xff]
  %v12414 = vld [vmem:[%s11 + $0x60] sm:$0xff]
  %v12415 = vld [vmem:[%s11 + $0x68] sm:$0xff]
  %v12416 = vld [vmem:[%s11 + $0x70] sm:$0xff]
  %v12417 = vld [vmem:[%s11 + $0x78] sm:$0xff]
  %v12418 = vld [vmem:[%s11 + $0x80] sm:$0xff]
  %v12419 = vld [vmem:[%s11 + $0x88] sm:$0xff]
  %v12420 = vld [vmem:[%s11 + $0x90] sm:$0xff]
  %v12421 = vld [vmem:[%s11 + $0x98] sm:$0xff]
  %v12422 = vld [vmem:[%s11 + $0xa0] sm:$0xff]
  %v12423 = vld [vmem:[%s11 + $0xa8] sm:$0xff]
  %v12424 = vld [vmem:[%s11 + $0xb0] sm:$0xff]
  %v12425 = vld [vmem:[%s11 + $0xb8] sm:$0xff]
  %v12426 = vld [vmem:[%s11 + $0xc0] sm:$0xff]
  %v12427 = vld [vmem:[%s11 + $0xc8] sm:$0xff]
  %v12428 = vld [vmem:[%s11 + $0xd0] sm:$0xff]
  %v12429 = vld [vmem:[%s11 + $0xd8] sm:$0xff]
  %v12430 = vld [vmem:[%s11 + $0xe0] sm:$0xff]
  %v12431 = vld [vmem:[%s11 + $0xe8] sm:$0xff]
  %v12432 = vld [vmem:[%s11 + $0xf0] sm:$0xff]
  %v12433 = vld [vmem:[%s11 + $0xf8] sm:$0xff]
  %v12434 = vld [vmem:[%s11 + $0x100] sm:$0xff]
  %v12435 = vld [vmem:[%s11 + $0x108] sm:$0xff]
  %v12436 = vld [vmem:[%s11 + $0x110] sm:$0xff]
  %v12437 = vld [vmem:[%s11 + $0x118] sm:$0xff]
  %v12438 = vld [vmem:[%s11 + $0x120] sm:$0xff]
  %v12439 = vld [vmem:[%s11 + $0x128] sm:$0xff]
  %v12440 = vld [vmem:[%s11 + $0x130] sm:$0xff]
  %v12441 = vld [vmem:[%s11 + $0x138] sm:$0xff]
  %v12442 = vld [vmem:[%s11 + $0x140] sm:$0xff]
  %v12443 = vld [vmem:[%s11 + $0x148] sm:$0xff]
  %v12444 = vld [vmem:[%s11 + $0x150] sm:$0xff]
  %v12445 = vld [vmem:[%s11 + $0x158] sm:$0xff]
  %v12446 = vld [vmem:[%s11 + $0x160] sm:$0xff]
  %v12447 = vld [vmem:[%s11 + $0x168] sm:$0xff]
  %v12448 = vld [vmem:[%s11 + $0x170] sm:$0xff]
  %v12449 = vld [vmem:[%s11 + $0x178] sm:$0xff]
  %v12450 = vld [vmem:[%s11 + $0x180] sm:$0xff]
  %v12451 = vld [vmem:[%s11 + $0x188] sm:$0xff]
  %v12452 = vld [vmem:[%s11 + $0x190] sm:$0xff]
  %v12453 = vld [vmem:[%s11 + $0x198] sm:$0xff]
  %v12454 = vld [vmem:[%s11 + $0x1a0] sm:$0xff]
  %v12455 = vld [vmem:[%s11 + $0x1a8] sm:$0xff]
  %v12456 = vld [vmem:[%s11 + $0x1b0] sm:$0xff]
  %v12457 = vld [vmem:[%s11 + $0x1b8] sm:$0xff]
  %v12459 = vsel %vm52, %v12401, 0
  %12461 = vmatprep.subr.mxu0 0.0
  %12462 = vmatpush1.msra.mxu0 %v12402
  %12463 = vmatprep.subr.mxu0 0.0
  %12464 = vmatpush1.msra.mxu0 %v12403
  %12465 = vmatprep.subr.mxu0 0.0
  %12466 = vmatpush1.msra.mxu0 %v12404
  %12467 = vmatprep.subr.mxu0 0.0
  %12468 = vmatpush1.msra.mxu0 %v12405
  %12469 = vmatprep.subr.mxu0 0.0
  %12470 = vmatpush1.msra.mxu0 %v12406
  %12471 = vmatprep.subr.mxu0 0.0
  %12472 = vmatpush1.msra.mxu0 %v12407
  %12473 = vmatprep.subr.mxu0 0.0
  %12474 = vmatpush1.msra.mxu0 %v12408
  %12475 = vmatprep.subr.mxu0 0.0
  %12476 = vmatpush1.msra.mxu0 %v12409
  %12477 = vmatprep.subr.mxu0 0.0
  %12478 = vmatpush1.msra.mxu0 %v12410
  %12479 = vmatprep.subr.mxu0 0.0
  %12480 = vmatpush1.msra.mxu0 %v12411
  %12481 = vmatprep.subr.mxu0 0.0
  %12482 = vmatpush1.msra.mxu0 %v12412
  %12483 = vmatprep.subr.mxu0 0.0
  %12484 = vmatpush1.msra.mxu0 %v12413
  %12485 = vmatprep.subr.mxu0 0.0
  %12486 = vmatpush1.msra.mxu0 %v12414
  %12487 = vmatprep.subr.mxu0 0.0
  %12488 = vmatpush1.msra.mxu0 %v12415
  %12489 = vmatprep.subr.mxu0 0.0
  %12490 = vmatpush1.msra.mxu0 %v12416
  %12491 = vmatprep.subr.mxu0 0.0
  %12492 = vmatpush1.msra.mxu0 %v12417
  %12493 = vmatprep.subr.mxu0 0.0
  %12494 = vmatpush1.msra.mxu0 %v12418
  %12495 = vmatprep.subr.mxu0 0.0
  %12496 = vmatpush1.msra.mxu0 %v12419
  %12497 = vmatprep.subr.mxu0 0.0
  %12498 = vmatpush1.msra.mxu0 %v12420
  %12499 = vmatprep.subr.mxu0 0.0
  %12500 = vmatpush1.msra.mxu0 %v12421
  %12501 = vmatprep.subr.mxu0 0.0
  %12502 = vmatpush1.msra.mxu0 %v12422
  %12503 = vmatprep.subr.mxu0 0.0
  %12504 = vmatpush1.msra.mxu0 %v12423
  %12505 = vmatprep.subr.mxu0 0.0
  %12506 = vmatpush1.msra.mxu0 %v12424
  %12507 = vmatprep.subr.mxu0 0.0
  %12508 = vmatpush1.msra.mxu0 %v12425
  %12509 = vmatprep.subr.mxu0 0.0
  %12510 = vmatpush1.msra.mxu0 %v12426
  %12511 = vmatprep.subr.mxu0 0.0
  %12512 = vmatpush1.msra.mxu0 %v12427
  %12513 = vmatprep.subr.mxu0 0.0
  %12514 = vmatpush1.msra.mxu0 %v12428
  %12515 = vmatprep.subr.mxu0 0.0
  %12516 = vmatpush1.msra.mxu0 %v12429
  %12517 = vmatprep.subr.mxu0 0.0
  %12518 = vmatpush1.msra.mxu0 %v12430
  %12519 = vmatprep.subr.mxu0 0.0
  %12520 = vmatpush1.msra.mxu0 %v12431
  %12521 = vmatprep.subr.mxu0 0.0
  %12522 = vmatpush1.msra.mxu0 %v12432
  %12523 = vmatprep.subr.mxu0 0.0
  %12524 = vmatpush1.msra.mxu0 %v12433
  %12525 = vmatprep.mubr.f32.mxu0 %v12399
  %12526 = vmatmul.mubr.f32.gmra.mrb[0].mxu0 %v12398
  %v12527 = vpop.f32.mrb[0].mxu0
  %v12528 = vadd.f32 0.0, %v12527
  %v12529 = vpop.f32.mrb[0].mxu0
  %12530 = vdwg.mxu0
  %12531 = vmatprep.subr.mxu0 0.0
  %12532 = vmatpush1.msra.mxu0 %v12434
  %12533 = vmatprep.subr.mxu0 0.0
  %12534 = vmatpush1.msra.mxu0 %v12435
  %12535 = vmatprep.subr.mxu0 0.0
  %12536 = vmatpush1.msra.mxu0 %v12436
  %12537 = vmatprep.subr.mxu0 0.0
  %12538 = vmatpush1.msra.mxu0 %v12437
  %12539 = vmatprep.subr.mxu0 0.0
  %12540 = vmatpush1.msra.mxu0 %v12438
  %12541 = vmatprep.subr.mxu0 0.0
  %12542 = vmatpush1.msra.mxu0 %v12439
  %12543 = vmatprep.subr.mxu0 0.0
  %12544 = vmatpush1.msra.mxu0 %v12440
  %12545 = vmatprep.subr.mxu0 0.0
  %12546 = vmatpush1.msra.mxu0 %v12441
  %12547 = vmatprep.subr.mxu0 0.0
  %12548 = vmatpush1.msra.mxu0 %v12442
  %12549 = vmatprep.subr.mxu0 0.0
  %12550 = vmatpush1.msra.mxu0 %v12443
  %12551 = vmatprep.subr.mxu0 0.0
  %12552 = vmatpush1.msra.mxu0 %v12444
  %12553 = vmatprep.subr.mxu0 0.0
  %12554 = vmatpush1.msra.mxu0 %v12445
  %12555 = vmatprep.subr.mxu0 0.0
  %12556 = vmatpush1.msra.mxu0 %v12446
  %12557 = vmatprep.subr.mxu0 0.0
  %12558 = vmatpush1.msra.mxu0 %v12447
  %12559 = vmatprep.subr.mxu0 0.0
  %12560 = vmatpush1.msra.mxu0 %v12448
  %12561 = vmatprep.subr.mxu0 0.0
  %12562 = vmatpush1.msra.mxu0 %v12449
  %12563 = vmatprep.subr.mxu0 0.0
  %12564 = vmatpush1.msra.mxu0 %v12450
  %12565 = vmatprep.subr.mxu0 0.0
  %12566 = vmatpush1.msra.mxu0 %v12451
  %12567 = vmatprep.subr.mxu0 0.0
  %12568 = vmatpush1.msra.mxu0 %v12452
  %12569 = vmatprep.subr.mxu0 0.0
  %12570 = vmatpush1.msra.mxu0 %v12453
  %12571 = vmatprep.subr.mxu0 0.0
  %12572 = vmatpush1.msra.mxu0 %v12454
  %12573 = vmatprep.subr.mxu0 0.0
  %12574 = vmatpush1.msra.mxu0 %v12455
  %12575 = vmatprep.subr.mxu0 0.0
  %12576 = vmatpush1.msra.mxu0 %v12456
  %12577 = vmatprep.subr.mxu0 0.0
  %12578 = vmatpush1.msra.mxu0 %v12457
  %12579 = vmatprep.subr.mxu0 0.0
  %12580 = vmatpush1.msra.mxu0 0.0
  %12581 = vmatprep.subr.mxu0 0.0
  %12582 = vmatpush1.msra.mxu0 0.0
  %12583 = vmatprep.subr.mxu0 0.0
  %12584 = vmatpush1.msra.mxu0 0.0
  %12585 = vmatprep.subr.mxu0 0.0
  %12586 = vmatpush1.msra.mxu0 0.0
  %12587 = vmatprep.subr.mxu0 0.0
  %12588 = vmatpush1.msra.mxu0 0.0
  %12589 = vmatprep.subr.mxu0 0.0
  %12590 = vmatpush1.msra.mxu0 0.0
  %12591 = vmatprep.subr.mxu0 0.0
  %12592 = vmatpush1.msra.mxu0 0.0
  %12593 = vmatprep.subr.mxu0 0.0
  %12594 = vmatpush1.msra.mxu0 0.0
  %12595 = vmatprep.mubr.f32.mxu0 %v12459
  %12596 = vmatmul.mubr.f32.gmra.mrb[0].mxu0 %v12400
  %v12597 = vpop.f32.mrb[0].mxu0
  %v12598 = vadd.f32 %v12528, %v12597
  %v12599 = vpop.f32.mrb[0].mxu0
  %12600 = vdwg.mxu0
  %v12601 = vmul.f32 %v12598, 0.0006377551
  %v12602 = vmul.f32 %v12601, %v12601
  %v12604 = vrot.slane %v12602, 7
  %v12606 = vsub.f32 %v12601, %v12604
  %v12607 = vmax.f32 %v12606, 0.0
  %v12608 = vld [vmem:[%s7] sm:$0x1]
  %v12609 = vadd.f32 %v12607, 1e-05
  %v12610 = vrsqrt.pop %v12609
  %v12613 = vunpack.c.l.s4 1966171168
  %v12614 = vunpack.c.0.s8 %v12613
  %v12615 = vlaneseq
  %v12616 = vshrl.u32 %v12615, 7
  %v12617 = vsub.s32 %v12614, %v12616
  %v12618 = vrot.slane %v12610, %v12617
  %v12619 = vcombine.high %v12618, %v12618
  %v12621 = vunpack.c.l.s4 1966171168
  %v12622 = vunpack.c.0.s8 %v12621
  %v12623 = vlaneseq
  %v12624 = vshrl.u32 %v12623, 7
  %v12625 = vsub.s32 %v12622, %v12624
  %v12626 = vrot.slane %v12619, %v12625
  %v12628 = vmul.f32 %v12608, %v12626
  %v12629 = vld [vmem:[%s8] sm:$0x1]
  %v12630 = vmul.f32 %v12601, %v12628
  %v12631 = vsub.f32 %v12629, %v12630
  %v12633 = vlaneseq
  %v12634 = vshrl.u32 %v12633, 7
  %v12635 = vsub.s32 0, %v12634
  %v12636 = vrot.slane %v12631, %v12635
  %v12638 = vsel %vm6960, %v12628, %v12636
  %v12639 = vld [vmem:[%s12] sm:$0xff]
  %v12640 = vld [vmem:[%s12 + $0x8] sm:$0xff]
  %v12641 = vld [vmem:[%s12 + $0x10] sm:$0xff]
  %v12642 = vld [vmem:[%s12 + $0x18] sm:$0xff]
  %v12643 = vld [vmem:[%s12 + $0x20] sm:$0xff]
  %v12644 = vld [vmem:[%s12 + $0x28] sm:$0xff]
  %v12645 = vld [vmem:[%s12 + $0x30] sm:$0xff]
  %v12646 = vld [vmem:[%s12 + $0x38] sm:$0xff]
  %vm12647 = vcmask 130048
  %v12649 = vsel %vm12647, %v12638, 0
  %12651 = vmatprep.subr.mxu0 %v12640
  %12652 = vmatpush1.msra.mxu0 %v12639
  %12653 = vmatprep.subr.mxu0 %v12644
  %12654 = vmatpush1.msra.mxu0 %v12643
  %12655 = vmatprep.subr.mxu0 0.0
  %12656 = vmatpush1.msra.mxu0 0.0
  %12657 = vmatprep.subr.mxu0 0.0
  %12658 = vmatpush1.msra.mxu0 0.0
  %12659 = vmatprep.subr.mxu0 0.0
  %12660 = vmatpush1.msra.mxu0 0.0
  %12661 = vmatprep.subr.mxu0 0.0
  %12662 = vmatpush1.msra.mxu0 0.0
  %12663 = vmatprep.subr.mxu0 0.0
  %12664 = vmatpush1.msra.mxu0 0.0
  %12665 = vmatprep.subr.mxu0 0.0
  %12666 = vmatpush1.msra.mxu0 0.0
  %12667 = vmatprep.subr.mxu0 0.0
  %12668 = vmatpush1.msra.mxu0 0.0
  %12669 = vmatprep.subr.mxu0 0.0
  %12670 = vmatpush1.msra.mxu0 0.0
  %12671 = vmatprep.subr.mxu0 0.0
  %12672 = vmatpush1.msra.mxu0 0.0
  %12673 = vmatprep.subr.mxu0 0.0
  %12674 = vmatpush1.msra.mxu0 0.0
  %12675 = vmatprep.subr.mxu0 0.0
  %12676 = vmatpush1.msra.mxu0 0.0
  %12677 = vmatprep.subr.mxu0 0.0
  %12678 = vmatpush1.msra.mxu0 0.0
  %12679 = vmatprep.subr.mxu0 0.0
  %12680 = vmatpush1.msra.mxu0 0.0
  %12681 = vmatprep.subr.mxu0 0.0
  %12682 = vmatpush1.msra.mxu0 0.0
  %12683 = vmatprep.subr.mxu0 0.0
  %12684 = vmatpush1.msra.mxu0 0.0
  %12685 = vmatprep.subr.mxu0 0.0
  %12686 = vmatpush1.msra.mxu0 0.0
  %12687 = vmatprep.subr.mxu0 0.0
  %12688 = vmatpush1.msra.mxu0 0.0
  %12689 = vmatprep.subr.mxu0 0.0
  %12690 = vmatpush1.msra.mxu0 0.0
  %12691 = vmatprep.subr.mxu0 0.0
  %12692 = vmatpush1.msra.mxu0 0.0
  %12693 = vmatprep.subr.mxu0 0.0
  %12694 = vmatpush1.msra.mxu0 0.0
  %12695 = vmatprep.subr.mxu0 0.0
  %12696 = vmatpush1.msra.mxu0 0.0
  %12697 = vmatprep.subr.mxu0 0.0
  %12698 = vmatpush1.msra.mxu0 0.0
  %12699 = vmatprep.subr.mxu0 0.0
  %12700 = vmatpush1.msra.mxu0 0.0
  %12701 = vmatprep.subr.mxu0 0.0
  %12702 = vmatpush1.msra.mxu0 0.0
  %12703 = vmatprep.subr.mxu0 0.0
  %12704 = vmatpush1.msra.mxu0 0.0
  %12705 = vmatprep.subr.mxu0 0.0
  %12706 = vmatpush1.msra.mxu0 0.0
  %12707 = vmatprep.subr.mxu0 0.0
  %12708 = vmatpush1.msra.mxu0 0.0
  %12709 = vmatprep.subr.mxu0 0.0
  %12710 = vmatpush1.msra.mxu0 0.0
  %12711 = vmatprep.subr.mxu0 0.0
  %12712 = vmatpush1.msra.mxu0 0.0
  %12713 = vmatprep.subr.mxu0 0.0
  %12714 = vmatpush1.msra.mxu0 0.0
  %12715 = vmatprep.mubr.f32.mxu0 0.0
  %12716 = vmatmul.mubr.f32.gmra.mrb[0].mxu0 %v12649
  %v12717 = vpop.f32.mrb[0].mxu0
  %v12718 = vadd.f32 0.0, %v12717
  %v12719 = vpop.f32.mrb[0].mxu0
  %v12720 = vadd.f32 0.0, %v12719
  %12721 = vdwg.mxu0
  %12722 = vmatprep.subr.mxu0 %v12642
  %12723 = vmatpush1.msra.mxu0 %v12641
  %12724 = vmatprep.subr.mxu0 %v12646
  %12725 = vmatpush1.msra.mxu0 %v12645
  %12726 = vmatprep.subr.mxu0 0.0
  %12727 = vmatpush1.msra.mxu0 0.0
  %12728 = vmatprep.subr.mxu0 0.0
  %12729 = vmatpush1.msra.mxu0 0.0
  %12730 = vmatprep.subr.mxu0 0.0
  %12731 = vmatpush1.msra.mxu0 0.0
  %12732 = vmatprep.subr.mxu0 0.0
  %12733 = vmatpush1.msra.mxu0 0.0
  %12734 = vmatprep.subr.mxu0 0.0
  %12735 = vmatpush1.msra.mxu0 0.0
  %12736 = vmatprep.subr.mxu0 0.0
  %12737 = vmatpush1.msra.mxu0 0.0
  %12738 = vmatprep.subr.mxu0 0.0
  %12739 = vmatpush1.msra.mxu0 0.0
  %12740 = vmatprep.subr.mxu0 0.0
  %12741 = vmatpush1.msra.mxu0 0.0
  %12742 = vmatprep.subr.mxu0 0.0
  %12743 = vmatpush1.msra.mxu0 0.0
  %12744 = vmatprep.subr.mxu0 0.0
  %12745 = vmatpush1.msra.mxu0 0.0
  %12746 = vmatprep.subr.mxu0 0.0
  %12747 = vmatpush1.msra.mxu0 0.0
  %12748 = vmatprep.subr.mxu0 0.0
  %12749 = vmatpush1.msra.mxu0 0.0
  %12750 = vmatprep.subr.mxu0 0.0
  %12751 = vmatpush1.msra.mxu0 0.0
  %12752 = vmatprep.subr.mxu0 0.0
  %12753 = vmatpush1.msra.mxu0 0.0
  %12754 = vmatprep.subr.mxu0 0.0
  %12755 = vmatpush1.msra.mxu0 0.0
  %12756 = vmatprep.subr.mxu0 0.0
  %12757 = vmatpush1.msra.mxu0 0.0
  %12758 = vmatprep.subr.mxu0 0.0
  %12759 = vmatpush1.msra.mxu0 0.0
  %12760 = vmatprep.subr.mxu0 0.0
  %12761 = vmatpush1.msra.mxu0 0.0
  %12762 = vmatprep.subr.mxu0 0.0
  %12763 = vmatpush1.msra.mxu0 0.0
  %12764 = vmatprep.subr.mxu0 0.0
  %12765 = vmatpush1.msra.mxu0 0.0
  %12766 = vmatprep.subr.mxu0 0.0
  %12767 = vmatpush1.msra.mxu0 0.0
  %12768 = vmatprep.subr.mxu0 0.0
  %12769 = vmatpush1.msra.mxu0 0.0
  %12770 = vmatprep.subr.mxu0 0.0
  %12771 = vmatpush1.msra.mxu0 0.0
  %12772 = vmatprep.subr.mxu0 0.0
  %12773 = vmatpush1.msra.mxu0 0.0
  %12774 = vmatprep.subr.mxu0 0.0
  %12775 = vmatpush1.msra.mxu0 0.0
  %12776 = vmatprep.subr.mxu0 0.0
  %12777 = vmatpush1.msra.mxu0 0.0
  %12778 = vmatprep.subr.mxu0 0.0
  %12779 = vmatpush1.msra.mxu0 0.0
  %12780 = vmatprep.subr.mxu0 0.0
  %12781 = vmatpush1.msra.mxu0 0.0
  %12782 = vmatprep.subr.mxu0 0.0
  %12783 = vmatpush1.msra.mxu0 0.0
  %12784 = vmatprep.subr.mxu0 0.0
  %12785 = vmatpush1.msra.mxu0 0.0
  %12786 = vmatprep.mubr.f32.mxu0 0.0
  %12787 = vmatmul.mubr.f32.gmra.mrb[0].mxu0 %v12649
  %v12788 = vpop.f32.mrb[0].mxu0
  %v12789 = vadd.f32 0.0, %v12788
  %v12790 = vpop.f32.mrb[0].mxu0
  %v12791 = vadd.f32 0.0, %v12790
  %12792 = vdwg.mxu0
  %v12793 = vlaneseq
  %v12794 = vshrl.u32 %v12793, 7
  %v12795 = vsub.s32 0, %v12794
  %v12796 = vrot.slane %v12718, %v12795
  %v12797 = vlaneseq
  %v12798 = vshrl.u32 %v12797, 7
  %v12799 = vsub.s32 0, %v12798
  %v12800 = vrot.slane %v12720, %v12799
  %v12801 = vlaneseq
  %v12802 = vshrl.u32 %v12801, 7
  %v12803 = vsub.s32 0, %v12802
  %v12804 = vrot.slane %v12789, %v12803
  %v12805 = vlaneseq
  %v12806 = vshrl.u32 %v12805, 7
  %v12807 = vsub.s32 0, %v12806
  %v12808 = vrot.slane %v12791, %v12807
  %v12809 = vmul.f32 %v9345, %v12796
  %v12810 = vmul.f32 %v9347, %v12800
  %v12811 = vmul.f32 %v9431, %v12804
  %v12812 = vmul.f32 %v9433, %v12808
  %v12813 = vmul.f32 %v9349, %v12796
  %v12814 = vmul.f32 %v9351, %v12800
  %v12815 = vmul.f32 %v9435, %v12804
  %v12816 = vmul.f32 %v9437, %v12808
  %v12817 = vlaneseq
  %v12818 = vshrl.u32 %v12817, 7
  %v12819 = vsub.s32 1, %v12818
  %v12820 = vrot.slane %v12718, %v12819
  %v12821 = vlaneseq
  %v12822 = vshrl.u32 %v12821, 7
  %v12823 = vsub.s32 1, %v12822
  %v12824 = vrot.slane %v12720, %v12823
  %v12825 = vlaneseq
  %v12826 = vshrl.u32 %v12825, 7
  %v12827 = vsub.s32 1, %v12826
  %v12828 = vrot.slane %v12789, %v12827
  %v12829 = vlaneseq
  %v12830 = vshrl.u32 %v12829, 7
  %v12831 = vsub.s32 1, %v12830
  %v12832 = vrot.slane %v12791, %v12831
  %v12833 = vadd.f32 %v12809, %v12820
  %v12834 = vadd.f32 %v12810, %v12824
  %v12835 = vadd.f32 %v12811, %v12828
  %v12836 = vadd.f32 %v12812, %v12832
  %v12837 = vadd.f32 %v12813, %v12820
  %v12838 = vadd.f32 %v12814, %v12824
  %v12839 = vadd.f32 %v12815, %v12828
  %v12840 = vadd.f32 %v12816, %v12832
  %v12841 = vmax.f32 %v12833, 0.0
  %v12842 = vmax.f32 %v12834, 0.0
  %v12843 = vmax.f32 %v12835, 0.0
  %v12844 = vmax.f32 %v12836, 0.0
  %v12845 = vmax.f32 %v12837, 0.0
  %v12846 = vmax.f32 %v12838, 0.0
  %v12847 = vmax.f32 %v12839, 0.0
  %v12848 = vmax.f32 %v12840, 0.0
  %v12849 = vld [vmem:[%s13] sm:$0xff]
  %v12850 = vld [vmem:[%s13 + $0x8] sm:$0xff]
  %v12851 = vld [vmem:[%s13 + $0x10] sm:$0xff]
  %v12852 = vld [vmem:[%s13 + $0x18] sm:$0xff]
  %v12853 = vld [vmem:[%s13 + $0x20] sm:$0xff]
  %v12854 = vld [vmem:[%s13 + $0x28] sm:$0xff]
  %v12855 = vld [vmem:[%s13 + $0x30] sm:$0xff]
  %v12856 = vld [vmem:[%s13 + $0x38] sm:$0xff]
  %v12857 = vld [vmem:[%s13 + $0x40] sm:$0xff]
  %v12858 = vld [vmem:[%s13 + $0x48] sm:$0xff]
  %v12859 = vld [vmem:[%s13 + $0x50] sm:$0xff]
  %v12860 = vld [vmem:[%s13 + $0x58] sm:$0xff]
  %v12861 = vld [vmem:[%s13 + $0x60] sm:$0xff]
  %v12862 = vld [vmem:[%s13 + $0x68] sm:$0xff]
  %v12863 = vld [vmem:[%s13 + $0x70] sm:$0xff]
  %v12864 = vld [vmem:[%s13 + $0x78] sm:$0xff]
  %v12865 = vld [vmem:[%s13 + $0x80] sm:$0xff]
  %v12866 = vld [vmem:[%s13 + $0x88] sm:$0xff]
  %v12867 = vld [vmem:[%s13 + $0x90] sm:$0xff]
  %v12868 = vld [vmem:[%s13 + $0x98] sm:$0xff]
  %v12869 = vld [vmem:[%s13 + $0xa0] sm:$0xff]
  %v12870 = vld [vmem:[%s13 + $0xa8] sm:$0xff]
  %v12871 = vld [vmem:[%s13 + $0xb0] sm:$0xff]
  %v12872 = vld [vmem:[%s13 + $0xb8] sm:$0xff]
  %v12873 = vld [vmem:[%s13 + $0xc0] sm:$0xff]
  %v12874 = vld [vmem:[%s13 + $0xc8] sm:$0xff]
  %v12875 = vld [vmem:[%s13 + $0xd0] sm:$0xff]
  %v12876 = vld [vmem:[%s13 + $0xd8] sm:$0xff]
  %v12877 = vld [vmem:[%s13 + $0xe0] sm:$0xff]
  %v12878 = vld [vmem:[%s13 + $0xe8] sm:$0xff]
  %v12879 = vld [vmem:[%s13 + $0xf0] sm:$0xff]
  %v12880 = vld [vmem:[%s13 + $0xf8] sm:$0xff]
  %v12881 = vld [vmem:[%s13 + $0x100] sm:$0xff]
  %v12882 = vld [vmem:[%s13 + $0x108] sm:$0xff]
  %v12883 = vld [vmem:[%s13 + $0x110] sm:$0xff]
  %v12884 = vld [vmem:[%s13 + $0x118] sm:$0xff]
  %v12885 = vld [vmem:[%s13 + $0x120] sm:$0xff]
  %v12886 = vld [vmem:[%s13 + $0x128] sm:$0xff]
  %v12887 = vld [vmem:[%s13 + $0x130] sm:$0xff]
  %v12888 = vld [vmem:[%s13 + $0x138] sm:$0xff]
  %v12889 = vld [vmem:[%s13 + $0x140] sm:$0xff]
  %v12890 = vld [vmem:[%s13 + $0x148] sm:$0xff]
  %v12891 = vld [vmem:[%s13 + $0x150] sm:$0xff]
  %v12892 = vld [vmem:[%s13 + $0x158] sm:$0xff]
  %v12893 = vld [vmem:[%s13 + $0x160] sm:$0xff]
  %v12894 = vld [vmem:[%s13 + $0x168] sm:$0xff]
  %v12895 = vld [vmem:[%s13 + $0x170] sm:$0xff]
  %v12896 = vld [vmem:[%s13 + $0x178] sm:$0xff]
  %v12897 = vld [vmem:[%s13 + $0x180] sm:$0xff]
  %v12898 = vld [vmem:[%s13 + $0x188] sm:$0xff]
  %v12899 = vld [vmem:[%s13 + $0x190] sm:$0xff]
  %v12900 = vld [vmem:[%s13 + $0x198] sm:$0xff]
  %v12901 = vld [vmem:[%s13 + $0x1a0] sm:$0xff]
  %v12902 = vld [vmem:[%s13 + $0x1a8] sm:$0xff]
  %v12903 = vld [vmem:[%s13 + $0x1b0] sm:$0xff]
  %v12904 = vld [vmem:[%s13 + $0x1b8] sm:$0xff]
  %v12905 = vmul.f32 %v11251, %v12796
  %v12906 = vmul.f32 %v11253, %v12800
  %v12907 = vmul.f32 %v11337, %v12804
  %v12908 = vmul.f32 %v11339, %v12808
  %v12909 = vmul.f32 %v11255, %v12796
  %v12910 = vmul.f32 %v11257, %v12800
  %v12911 = vmul.f32 %v11341, %v12804
  %v12912 = vmul.f32 %v11343, %v12808
  %v12913 = vadd.f32 %v12905, %v12820
  %v12914 = vadd.f32 %v12906, %v12824
  %v12915 = vadd.f32 %v12907, %v12828
  %v12916 = vadd.f32 %v12908, %v12832
  %v12917 = vadd.f32 %v12909, %v12820
  %v12918 = vadd.f32 %v12910, %v12824
  %v12919 = vadd.f32 %v12911, %v12828
  %v12920 = vadd.f32 %v12912, %v12832
  %v12921 = vmax.f32 %v12913, 0.0
  %v12922 = vmax.f32 %v12914, 0.0
  %v12923 = vmax.f32 %v12915, 0.0
  %v12924 = vmax.f32 %v12916, 0.0
  %v12925 = vmax.f32 %v12917, 0.0
  %v12926 = vmax.f32 %v12918, 0.0
  %v12927 = vmax.f32 %v12919, 0.0
  %v12928 = vmax.f32 %v12920, 0.0
  %s12929 = scalar_lea.vmem %s13, 448
  %v12930 = vld [vmem:[%s12929] sm:$0xff]
  %v12931 = vld [vmem:[%s12929 + $0x8] sm:$0xff]
  %v12932 = vld [vmem:[%s12929 + $0x10] sm:$0xff]
  %v12933 = vld [vmem:[%s12929 + $0x18] sm:$0xff]
  %v12934 = vld [vmem:[%s12929 + $0x20] sm:$0xff]
  %v12935 = vld [vmem:[%s12929 + $0x28] sm:$0xff]
  %v12936 = vld [vmem:[%s12929 + $0x30] sm:$0xff]
  %v12937 = vld [vmem:[%s12929 + $0x38] sm:$0xff]
  %v12938 = vld [vmem:[%s12929 + $0x40] sm:$0xff]
  %v12939 = vld [vmem:[%s12929 + $0x48] sm:$0xff]
  %v12940 = vld [vmem:[%s12929 + $0x50] sm:$0xff]
  %v12941 = vld [vmem:[%s12929 + $0x58] sm:$0xff]
  %v12942 = vld [vmem:[%s12929 + $0x60] sm:$0xff]
  %v12943 = vld [vmem:[%s12929 + $0x68] sm:$0xff]
  %v12944 = vld [vmem:[%s12929 + $0x70] sm:$0xff]
  %v12945 = vld [vmem:[%s12929 + $0x78] sm:$0xff]
  %v12946 = vld [vmem:[%s12929 + $0x80] sm:$0xff]
  %v12947 = vld [vmem:[%s12929 + $0x88] sm:$0xff]
  %v12948 = vld [vmem:[%s12929 + $0x90] sm:$0xff]
  %v12949 = vld [vmem:[%s12929 + $0x98] sm:$0xff]
  %v12950 = vld [vmem:[%s12929 + $0xa0] sm:$0xff]
  %v12951 = vld [vmem:[%s12929 + $0xa8] sm:$0xff]
  %v12952 = vld [vmem:[%s12929 + $0xb0] sm:$0xff]
  %v12953 = vld [vmem:[%s12929 + $0xb8] sm:$0xff]
  %v12954 = vld [vmem:[%s12929 + $0xc0] sm:$0xff]
  %v12955 = vld [vmem:[%s12929 + $0xc8] sm:$0xff]
  %v12956 = vld [vmem:[%s12929 + $0xd0] sm:$0xff]
  %v12957 = vld [vmem:[%s12929 + $0xd8] sm:$0xff]
  %v12958 = vld [vmem:[%s12929 + $0xe0] sm:$0xff]
  %v12959 = vld [vmem:[%s12929 + $0xe8] sm:$0xff]
  %v12960 = vld [vmem:[%s12929 + $0xf0] sm:$0xff]
  %v12961 = vld [vmem:[%s12929 + $0xf8] sm:$0xff]
  %v12962 = vld [vmem:[%s12929 + $0x100] sm:$0xff]
  %v12963 = vld [vmem:[%s12929 + $0x108] sm:$0xff]
  %v12964 = vld [vmem:[%s12929 + $0x110] sm:$0xff]
  %v12965 = vld [vmem:[%s12929 + $0x118] sm:$0xff]
  %v12966 = vld [vmem:[%s12929 + $0x120] sm:$0xff]
  %v12967 = vld [vmem:[%s12929 + $0x128] sm:$0xff]
  %v12968 = vld [vmem:[%s12929 + $0x130] sm:$0xff]
  %v12969 = vld [vmem:[%s12929 + $0x138] sm:$0xff]
  %v12970 = vld [vmem:[%s12929 + $0x140] sm:$0xff]
  %v12971 = vld [vmem:[%s12929 + $0x148] sm:$0xff]
  %v12972 = vld [vmem:[%s12929 + $0x150] sm:$0xff]
  %v12973 = vld [vmem:[%s12929 + $0x158] sm:$0xff]
  %v12974 = vld [vmem:[%s12929 + $0x160] sm:$0xff]
  %v12975 = vld [vmem:[%s12929 + $0x168] sm:$0xff]
  %v12976 = vld [vmem:[%s12929 + $0x170] sm:$0xff]
  %v12977 = vld [vmem:[%s12929 + $0x178] sm:$0xff]
  %v12978 = vld [vmem:[%s12929 + $0x180] sm:$0xff]
  %v12979 = vld [vmem:[%s12929 + $0x188] sm:$0xff]
  %v12980 = vld [vmem:[%s12929 + $0x190] sm:$0xff]
  %v12981 = vld [vmem:[%s12929 + $0x198] sm:$0xff]
  %v12982 = vld [vmem:[%s12929 + $0x1a0] sm:$0xff]
  %v12983 = vld [vmem:[%s12929 + $0x1a8] sm:$0xff]
  %v12984 = vld [vmem:[%s12929 + $0x1b0] sm:$0xff]
  %v12985 = vld [vmem:[%s12929 + $0x1b8] sm:$0xff]
  %v12987 = vsel %vm52, %v12924, 0
  %v12990 = vsel %vm52, %v12928, 0
  %12992 = vmatprep.subr.mxu0 0.0
  %12993 = vmatpush1.msra.mxu0 %v12930
  %12994 = vmatprep.subr.mxu0 0.0
  %12995 = vmatpush1.msra.mxu0 %v12931
  %12996 = vmatprep.subr.mxu0 0.0
  %12997 = vmatpush1.msra.mxu0 %v12932
  %12998 = vmatprep.subr.mxu0 0.0
  %12999 = vmatpush1.msra.mxu0 %v12933
  %13000 = vmatprep.subr.mxu0 0.0
  %13001 = vmatpush1.msra.mxu0 %v12934
  %13002 = vmatprep.subr.mxu0 0.0
  %13003 = vmatpush1.msra.mxu0 %v12935
  %13004 = vmatprep.subr.mxu0 0.0
  %13005 = vmatpush1.msra.mxu0 %v12936
  %13006 = vmatprep.subr.mxu0 0.0
  %13007 = vmatpush1.msra.mxu0 %v12937
  %13008 = vmatprep.subr.mxu0 0.0
  %13009 = vmatpush1.msra.mxu0 %v12938
  %13010 = vmatprep.subr.mxu0 0.0
  %13011 = vmatpush1.msra.mxu0 %v12939
  %13012 = vmatprep.subr.mxu0 0.0
  %13013 = vmatpush1.msra.mxu0 %v12940
  %13014 = vmatprep.subr.mxu0 0.0
  %13015 = vmatpush1.msra.mxu0 %v12941
  %13016 = vmatprep.subr.mxu0 0.0
  %13017 = vmatpush1.msra.mxu0 %v12942
  %13018 = vmatprep.subr.mxu0 0.0
  %13019 = vmatpush1.msra.mxu0 %v12943
  %13020 = vmatprep.subr.mxu0 0.0
  %13021 = vmatpush1.msra.mxu0 %v12944
  %13022 = vmatprep.subr.mxu0 0.0
  %13023 = vmatpush1.msra.mxu0 %v12945
  %13024 = vmatprep.subr.mxu0 0.0
  %13025 = vmatpush1.msra.mxu0 %v12946
  %13026 = vmatprep.subr.mxu0 0.0
  %13027 = vmatpush1.msra.mxu0 %v12947
  %13028 = vmatprep.subr.mxu0 0.0
  %13029 = vmatpush1.msra.mxu0 %v12948
  %13030 = vmatprep.subr.mxu0 0.0
  %13031 = vmatpush1.msra.mxu0 %v12949
  %13032 = vmatprep.subr.mxu0 0.0
  %13033 = vmatpush1.msra.mxu0 %v12950
  %13034 = vmatprep.subr.mxu0 0.0
  %13035 = vmatpush1.msra.mxu0 %v12951
  %13036 = vmatprep.subr.mxu0 0.0
  %13037 = vmatpush1.msra.mxu0 %v12952
  %13038 = vmatprep.subr.mxu0 0.0
  %13039 = vmatpush1.msra.mxu0 %v12953
  %13040 = vmatprep.subr.mxu0 0.0
  %13041 = vmatpush1.msra.mxu0 %v12954
  %13042 = vmatprep.subr.mxu0 0.0
  %13043 = vmatpush1.msra.mxu0 %v12955
  %13044 = vmatprep.subr.mxu0 0.0
  %13045 = vmatpush1.msra.mxu0 %v12956
  %13046 = vmatprep.subr.mxu0 0.0
  %13047 = vmatpush1.msra.mxu0 %v12957
  %13048 = vmatprep.subr.mxu0 0.0
  %13049 = vmatpush1.msra.mxu0 %v12958
  %13050 = vmatprep.subr.mxu0 0.0
  %13051 = vmatpush1.msra.mxu0 %v12959
  %13052 = vmatprep.subr.mxu0 0.0
  %13053 = vmatpush1.msra.mxu0 %v12960
  %13054 = vmatprep.subr.mxu0 0.0
  %13055 = vmatpush1.msra.mxu0 %v12961
  %13056 = vmatprep.mubr.f32.mxu0 %v12922
  %13057 = vmatmul.mubr.f32.gmra.mrb[0].mxu0 %v12921
  %v13058 = vpop.f32.mrb[0].mxu0
  %v13059 = vadd.f32 0.0, %v13058
  %v13060 = vpop.f32.mrb[0].mxu0
  %13061 = vmatprep.mubr.f32.mxu0 %v12926
  %13062 = vmatmul.mubr.f32.gmra.mrb[0].mxu0 %v12925
  %v13063 = vpop.f32.mrb[0].mxu0
  %v13064 = vadd.f32 0.0, %v13063
  %v13065 = vpop.f32.mrb[0].mxu0
  %13066 = vdwg.mxu0
  %13067 = vmatprep.subr.mxu0 0.0
  %13068 = vmatpush1.msra.mxu0 %v12962
  %13069 = vmatprep.subr.mxu0 0.0
  %13070 = vmatpush1.msra.mxu0 %v12963
  %13071 = vmatprep.subr.mxu0 0.0
  %13072 = vmatpush1.msra.mxu0 %v12964
  %13073 = vmatprep.subr.mxu0 0.0
  %13074 = vmatpush1.msra.mxu0 %v12965
  %13075 = vmatprep.subr.mxu0 0.0
  %13076 = vmatpush1.msra.mxu0 %v12966
  %13077 = vmatprep.subr.mxu0 0.0
  %13078 = vmatpush1.msra.mxu0 %v12967
  %13079 = vmatprep.subr.mxu0 0.0
  %13080 = vmatpush1.msra.mxu0 %v12968
  %13081 = vmatprep.subr.mxu0 0.0
  %13082 = vmatpush1.msra.mxu0 %v12969
  %13083 = vmatprep.subr.mxu0 0.0
  %13084 = vmatpush1.msra.mxu0 %v12970
  %13085 = vmatprep.subr.mxu0 0.0
  %13086 = vmatpush1.msra.mxu0 %v12971
  %13087 = vmatprep.subr.mxu0 0.0
  %13088 = vmatpush1.msra.mxu0 %v12972
  %13089 = vmatprep.subr.mxu0 0.0
  %13090 = vmatpush1.msra.mxu0 %v12973
  %13091 = vmatprep.subr.mxu0 0.0
  %13092 = vmatpush1.msra.mxu0 %v12974
  %13093 = vmatprep.subr.mxu0 0.0
  %13094 = vmatpush1.msra.mxu0 %v12975
  %13095 = vmatprep.subr.mxu0 0.0
  %13096 = vmatpush1.msra.mxu0 %v12976
  %13097 = vmatprep.subr.mxu0 0.0
  %13098 = vmatpush1.msra.mxu0 %v12977
  %13099 = vmatprep.subr.mxu0 0.0
  %13100 = vmatpush1.msra.mxu0 %v12978
  %13101 = vmatprep.subr.mxu0 0.0
  %13102 = vmatpush1.msra.mxu0 %v12979
  %13103 = vmatprep.subr.mxu0 0.0
  %13104 = vmatpush1.msra.mxu0 %v12980
  %13105 = vmatprep.subr.mxu0 0.0
  %13106 = vmatpush1.msra.mxu0 %v12981
  %13107 = vmatprep.subr.mxu0 0.0
  %13108 = vmatpush1.msra.mxu0 %v12982
  %13109 = vmatprep.subr.mxu0 0.0
  %13110 = vmatpush1.msra.mxu0 %v12983
  %13111 = vmatprep.subr.mxu0 0.0
  %13112 = vmatpush1.msra.mxu0 %v12984
  %13113 = vmatprep.subr.mxu0 0.0
  %13114 = vmatpush1.msra.mxu0 %v12985
  %13115 = vmatprep.subr.mxu0 0.0
  %13116 = vmatpush1.msra.mxu0 0.0
  %13117 = vmatprep.subr.mxu0 0.0
  %13118 = vmatpush1.msra.mxu0 0.0
  %13119 = vmatprep.subr.mxu0 0.0
  %13120 = vmatpush1.msra.mxu0 0.0
  %13121 = vmatprep.subr.mxu0 0.0
  %13122 = vmatpush1.msra.mxu0 0.0
  %13123 = vmatprep.subr.mxu0 0.0
  %13124 = vmatpush1.msra.mxu0 0.0
  %13125 = vmatprep.subr.mxu0 0.0
  %13126 = vmatpush1.msra.mxu0 0.0
  %13127 = vmatprep.subr.mxu0 0.0
  %13128 = vmatpush1.msra.mxu0 0.0
  %13129 = vmatprep.subr.mxu0 0.0
  %13130 = vmatpush1.msra.mxu0 0.0
  %13131 = vmatprep.mubr.f32.mxu0 %v12987
  %13132 = vmatmul.mubr.f32.gmra.mrb[0].mxu0 %v12923
  %v13133 = vpop.f32.mrb[0].mxu0
  %v13134 = vadd.f32 %v13059, %v13133
  %v13135 = vpop.f32.mrb[0].mxu0
  %13136 = vmatprep.mubr.f32.mxu0 %v12990
  %13137 = vmatmul.mubr.f32.gmra.mrb[0].mxu0 %v12927
  %v13138 = vpop.f32.mrb[0].mxu0
  %v13139 = vadd.f32 %v13064, %v13138
  %v13140 = vpop.f32.mrb[0].mxu0
  %13141 = vdwg.mxu0
  %v13143 = vsel %vm52, %v12844, 0
  %v13146 = vsel %vm52, %v12848, 0
  %13148 = vmatprep.subr.mxu0 0.0
  %13149 = vmatpush1.msra.mxu0 %v12849
  %13150 = vmatprep.subr.mxu0 0.0
  %13151 = vmatpush1.msra.mxu0 %v12850
  %13152 = vmatprep.subr.mxu0 0.0
  %13153 = vmatpush1.msra.mxu0 %v12851
  %13154 = vmatprep.subr.mxu0 0.0
  %13155 = vmatpush1.msra.mxu0 %v12852
  %13156 = vmatprep.subr.mxu0 0.0
  %13157 = vmatpush1.msra.mxu0 %v12853
  %13158 = vmatprep.subr.mxu0 0.0
  %13159 = vmatpush1.msra.mxu0 %v12854
  %13160 = vmatprep.subr.mxu0 0.0
  %13161 = vmatpush1.msra.mxu0 %v12855
  %13162 = vmatprep.subr.mxu0 0.0
  %13163 = vmatpush1.msra.mxu0 %v12856
  %13164 = vmatprep.subr.mxu0 0.0
  %13165 = vmatpush1.msra.mxu0 %v12857
  %13166 = vmatprep.subr.mxu0 0.0
  %13167 = vmatpush1.msra.mxu0 %v12858
  %13168 = vmatprep.subr.mxu0 0.0
  %13169 = vmatpush1.msra.mxu0 %v12859
  %13170 = vmatprep.subr.mxu0 0.0
  %13171 = vmatpush1.msra.mxu0 %v12860
  %13172 = vmatprep.subr.mxu0 0.0
  %13173 = vmatpush1.msra.mxu0 %v12861
  %13174 = vmatprep.subr.mxu0 0.0
  %13175 = vmatpush1.msra.mxu0 %v12862
  %13176 = vmatprep.subr.mxu0 0.0
  %13177 = vmatpush1.msra.mxu0 %v12863
  %13178 = vmatprep.subr.mxu0 0.0
  %13179 = vmatpush1.msra.mxu0 %v12864
  %13180 = vmatprep.subr.mxu0 0.0
  %13181 = vmatpush1.msra.mxu0 %v12865
  %13182 = vmatprep.subr.mxu0 0.0
  %13183 = vmatpush1.msra.mxu0 %v12866
  %13184 = vmatprep.subr.mxu0 0.0
  %13185 = vmatpush1.msra.mxu0 %v12867
  %13186 = vmatprep.subr.mxu0 0.0
  %13187 = vmatpush1.msra.mxu0 %v12868
  %13188 = vmatprep.subr.mxu0 0.0
  %13189 = vmatpush1.msra.mxu0 %v12869
  %13190 = vmatprep.subr.mxu0 0.0
  %13191 = vmatpush1.msra.mxu0 %v12870
  %13192 = vmatprep.subr.mxu0 0.0
  %13193 = vmatpush1.msra.mxu0 %v12871
  %13194 = vmatprep.subr.mxu0 0.0
  %13195 = vmatpush1.msra.mxu0 %v12872
  %13196 = vmatprep.subr.mxu0 0.0
  %13197 = vmatpush1.msra.mxu0 %v12873
  %13198 = vmatprep.subr.mxu0 0.0
  %13199 = vmatpush1.msra.mxu0 %v12874
  %13200 = vmatprep.subr.mxu0 0.0
  %13201 = vmatpush1.msra.mxu0 %v12875
  %13202 = vmatprep.subr.mxu0 0.0
  %13203 = vmatpush1.msra.mxu0 %v12876
  %13204 = vmatprep.subr.mxu0 0.0
  %13205 = vmatpush1.msra.mxu0 %v12877
  %13206 = vmatprep.subr.mxu0 0.0
  %13207 = vmatpush1.msra.mxu0 %v12878
  %13208 = vmatprep.subr.mxu0 0.0
  %13209 = vmatpush1.msra.mxu0 %v12879
  %13210 = vmatprep.subr.mxu0 0.0
  %13211 = vmatpush1.msra.mxu0 %v12880
  %13212 = vmatprep.mubr.f32.mxu0 %v12842
  %13213 = vmatmul.mubr.f32.gmra.mrb[0].mxu0 %v12841
  %v13214 = vpop.f32.mrb[0].mxu0
  %v13215 = vadd.f32 %v13134, %v13214
  %v13216 = vpop.f32.mrb[0].mxu0
  %13217 = vmatprep.mubr.f32.mxu0 %v12846
  %13218 = vmatmul.mubr.f32.gmra.mrb[0].mxu0 %v12845
  %v13219 = vpop.f32.mrb[0].mxu0
  %v13220 = vadd.f32 %v13139, %v13219
  %v13221 = vpop.f32.mrb[0].mxu0
  %13222 = vdwg.mxu0
  %13223 = vmatprep.subr.mxu0 0.0
  %13224 = vmatpush1.msra.mxu0 %v12881
  %13225 = vmatprep.subr.mxu0 0.0
  %13226 = vmatpush1.msra.mxu0 %v12882
  %13227 = vmatprep.subr.mxu0 0.0
  %13228 = vmatpush1.msra.mxu0 %v12883
  %13229 = vmatprep.subr.mxu0 0.0
  %13230 = vmatpush1.msra.mxu0 %v12884
  %13231 = vmatprep.subr.mxu0 0.0
  %13232 = vmatpush1.msra.mxu0 %v12885
  %13233 = vmatprep.subr.mxu0 0.0
  %13234 = vmatpush1.msra.mxu0 %v12886
  %13235 = vmatprep.subr.mxu0 0.0
  %13236 = vmatpush1.msra.mxu0 %v12887
  %13237 = vmatprep.subr.mxu0 0.0
  %13238 = vmatpush1.msra.mxu0 %v12888
  %13239 = vmatprep.subr.mxu0 0.0
  %13240 = vmatpush1.msra.mxu0 %v12889
  %13241 = vmatprep.subr.mxu0 0.0
  %13242 = vmatpush1.msra.mxu0 %v12890
  %13243 = vmatprep.subr.mxu0 0.0
  %13244 = vmatpush1.msra.mxu0 %v12891
  %13245 = vmatprep.subr.mxu0 0.0
  %13246 = vmatpush1.msra.mxu0 %v12892
  %13247 = vmatprep.subr.mxu0 0.0
  %13248 = vmatpush1.msra.mxu0 %v12893
  %13249 = vmatprep.subr.mxu0 0.0
  %13250 = vmatpush1.msra.mxu0 %v12894
  %13251 = vmatprep.subr.mxu0 0.0
  %13252 = vmatpush1.msra.mxu0 %v12895
  %13253 = vmatprep.subr.mxu0 0.0
  %13254 = vmatpush1.msra.mxu0 %v12896
  %13255 = vmatprep.subr.mxu0 0.0
  %13256 = vmatpush1.msra.mxu0 %v12897
  %13257 = vmatprep.subr.mxu0 0.0
  %13258 = vmatpush1.msra.mxu0 %v12898
  %13259 = vmatprep.subr.mxu0 0.0
  %13260 = vmatpush1.msra.mxu0 %v12899
  %13261 = vmatprep.subr.mxu0 0.0
  %13262 = vmatpush1.msra.mxu0 %v12900
  %13263 = vmatprep.subr.mxu0 0.0
  %13264 = vmatpush1.msra.mxu0 %v12901
  %13265 = vmatprep.subr.mxu0 0.0
  %13266 = vmatpush1.msra.mxu0 %v12902
  %13267 = vmatprep.subr.mxu0 0.0
  %13268 = vmatpush1.msra.mxu0 %v12903
  %13269 = vmatprep.subr.mxu0 0.0
  %13270 = vmatpush1.msra.mxu0 %v12904
  %13271 = vmatprep.subr.mxu0 0.0
  %13272 = vmatpush1.msra.mxu0 0.0
  %13273 = vmatprep.subr.mxu0 0.0
  %13274 = vmatpush1.msra.mxu0 0.0
  %13275 = vmatprep.subr.mxu0 0.0
  %13276 = vmatpush1.msra.mxu0 0.0
  %13277 = vmatprep.subr.mxu0 0.0
  %13278 = vmatpush1.msra.mxu0 0.0
  %13279 = vmatprep.subr.mxu0 0.0
  %13280 = vmatpush1.msra.mxu0 0.0
  %13281 = vmatprep.subr.mxu0 0.0
  %13282 = vmatpush1.msra.mxu0 0.0
  %13283 = vmatprep.subr.mxu0 0.0
  %13284 = vmatpush1.msra.mxu0 0.0
  %13285 = vmatprep.subr.mxu0 0.0
  %13286 = vmatpush1.msra.mxu0 0.0
  %13287 = vmatprep.mubr.f32.mxu0 %v13143
  %13288 = vmatmul.mubr.f32.gmra.mrb[0].mxu0 %v12843
  %v13289 = vpop.f32.mrb[0].mxu0
  %v13290 = vadd.f32 %v13215, %v13289
  %v13291 = vpop.f32.mrb[0].mxu0
  %13292 = vmatprep.mubr.f32.mxu0 %v13146
  %13293 = vmatmul.mubr.f32.gmra.mrb[0].mxu0 %v12847
  %v13294 = vpop.f32.mrb[0].mxu0
  %v13295 = vadd.f32 %v13220, %v13294
  %v13296 = vpop.f32.mrb[0].mxu0
  %13297 = vdwg.mxu0
  %v13298 = vmul.f32 %v11595, %v12796
  %v13299 = vmul.f32 %v11597, %v12800
  %v13300 = vmul.f32 %v11681, %v12804
  %v13301 = vmul.f32 %v11683, %v12808
  %v13302 = vmul.f32 %v11599, %v12796
  %v13303 = vmul.f32 %v11601, %v12800
  %v13304 = vmul.f32 %v11685, %v12804
  %v13305 = vmul.f32 %v11687, %v12808
  %v13306 = vadd.f32 %v13298, %v12820
  %v13307 = vadd.f32 %v13299, %v12824
  %v13308 = vadd.f32 %v13300, %v12828
  %v13309 = vadd.f32 %v13301, %v12832
  %v13310 = vadd.f32 %v13302, %v12820
  %v13311 = vadd.f32 %v13303, %v12824
  %v13312 = vadd.f32 %v13304, %v12828
  %v13313 = vadd.f32 %v13305, %v12832
  %v13314 = vmax.f32 %v13306, 0.0
  %v13315 = vmax.f32 %v13307, 0.0
  %v13316 = vmax.f32 %v13308, 0.0
  %v13317 = vmax.f32 %v13309, 0.0
  %v13318 = vmax.f32 %v13310, 0.0
  %v13319 = vmax.f32 %v13311, 0.0
  %v13320 = vmax.f32 %v13312, 0.0
  %v13321 = vmax.f32 %v13313, 0.0
  %s13322 = scalar_lea.vmem %s13, 896
  %v13323 = vld [vmem:[%s13322] sm:$0xff]
  %v13324 = vld [vmem:[%s13322 + $0x8] sm:$0xff]
  %v13325 = vld [vmem:[%s13322 + $0x10] sm:$0xff]
  %v13326 = vld [vmem:[%s13322 + $0x18] sm:$0xff]
  %v13327 = vld [vmem:[%s13322 + $0x20] sm:$0xff]
  %v13328 = vld [vmem:[%s13322 + $0x28] sm:$0xff]
  %v13329 = vld [vmem:[%s13322 + $0x30] sm:$0xff]
  %v13330 = vld [vmem:[%s13322 + $0x38] sm:$0xff]
  %v13331 = vld [vmem:[%s13322 + $0x40] sm:$0xff]
  %v13332 = vld [vmem:[%s13322 + $0x48] sm:$0xff]
  %v13333 = vld [vmem:[%s13322 + $0x50] sm:$0xff]
  %v13334 = vld [vmem:[%s13322 + $0x58] sm:$0xff]
  %v13335 = vld [vmem:[%s13322 + $0x60] sm:$0xff]
  %v13336 = vld [vmem:[%s13322 + $0x68] sm:$0xff]
  %v13337 = vld [vmem:[%s13322 + $0x70] sm:$0xff]
  %v13338 = vld [vmem:[%s13322 + $0x78] sm:$0xff]
  %v13339 = vld [vmem:[%s13322 + $0x80] sm:$0xff]
  %v13340 = vld [vmem:[%s13322 + $0x88] sm:$0xff]
  %v13341 = vld [vmem:[%s13322 + $0x90] sm:$0xff]
  %v13342 = vld [vmem:[%s13322 + $0x98] sm:$0xff]
  %v13343 = vld [vmem:[%s13322 + $0xa0] sm:$0xff]
  %v13344 = vld [vmem:[%s13322 + $0xa8] sm:$0xff]
  %v13345 = vld [vmem:[%s13322 + $0xb0] sm:$0xff]
  %v13346 = vld [vmem:[%s13322 + $0xb8] sm:$0xff]
  %v13347 = vld [vmem:[%s13322 + $0xc0] sm:$0xff]
  %v13348 = vld [vmem:[%s13322 + $0xc8] sm:$0xff]
  %v13349 = vld [vmem:[%s13322 + $0xd0] sm:$0xff]
  %v13350 = vld [vmem:[%s13322 + $0xd8] sm:$0xff]
  %v13351 = vld [vmem:[%s13322 + $0xe0] sm:$0xff]
  %v13352 = vld [vmem:[%s13322 + $0xe8] sm:$0xff]
  %v13353 = vld [vmem:[%s13322 + $0xf0] sm:$0xff]
  %v13354 = vld [vmem:[%s13322 + $0xf8] sm:$0xff]
  %v13355 = vld [vmem:[%s13322 + $0x100] sm:$0xff]
  %v13356 = vld [vmem:[%s13322 + $0x108] sm:$0xff]
  %v13357 = vld [vmem:[%s13322 + $0x110] sm:$0xff]
  %v13358 = vld [vmem:[%s13322 + $0x118] sm:$0xff]
  %v13359 = vld [vmem:[%s13322 + $0x120] sm:$0xff]
  %v13360 = vld [vmem:[%s13322 + $0x128] sm:$0xff]
  %v13361 = vld [vmem:[%s13322 + $0x130] sm:$0xff]
  %v13362 = vld [vmem:[%s13322 + $0x138] sm:$0xff]
  %v13363 = vld [vmem:[%s13322 + $0x140] sm:$0xff]
  %v13364 = vld [vmem:[%s13322 + $0x148] sm:$0xff]
  %v13365 = vld [vmem:[%s13322 + $0x150] sm:$0xff]
  %v13366 = vld [vmem:[%s13322 + $0x158] sm:$0xff]
  %v13367 = vld [vmem:[%s13322 + $0x160] sm:$0xff]
  %v13368 = vld [vmem:[%s13322 + $0x168] sm:$0xff]
  %v13369 = vld [vmem:[%s13322 + $0x170] sm:$0xff]
  %v13370 = vld [vmem:[%s13322 + $0x178] sm:$0xff]
  %v13371 = vld [vmem:[%s13322 + $0x180] sm:$0xff]
  %v13372 = vld [vmem:[%s13322 + $0x188] sm:$0xff]
  %v13373 = vld [vmem:[%s13322 + $0x190] sm:$0xff]
  %v13374 = vld [vmem:[%s13322 + $0x198] sm:$0xff]
  %v13375 = vld [vmem:[%s13322 + $0x1a0] sm:$0xff]
  %v13376 = vld [vmem:[%s13322 + $0x1a8] sm:$0xff]
  %v13377 = vld [vmem:[%s13322 + $0x1b0] sm:$0xff]
  %v13378 = vld [vmem:[%s13322 + $0x1b8] sm:$0xff]
  %v13380 = vsel %vm52, %v13317, 0
  %v13383 = vsel %vm52, %v13321, 0
  %13385 = vmatprep.subr.mxu0 0.0
  %13386 = vmatpush1.msra.mxu0 %v13323
  %13387 = vmatprep.subr.mxu0 0.0
  %13388 = vmatpush1.msra.mxu0 %v13324
  %13389 = vmatprep.subr.mxu0 0.0
  %13390 = vmatpush1.msra.mxu0 %v13325
  %13391 = vmatprep.subr.mxu0 0.0
  %13392 = vmatpush1.msra.mxu0 %v13326
  %13393 = vmatprep.subr.mxu0 0.0
  %13394 = vmatpush1.msra.mxu0 %v13327
  %13395 = vmatprep.subr.mxu0 0.0
  %13396 = vmatpush1.msra.mxu0 %v13328
  %13397 = vmatprep.subr.mxu0 0.0
  %13398 = vmatpush1.msra.mxu0 %v13329
  %13399 = vmatprep.subr.mxu0 0.0
  %13400 = vmatpush1.msra.mxu0 %v13330
  %13401 = vmatprep.subr.mxu0 0.0
  %13402 = vmatpush1.msra.mxu0 %v13331
  %13403 = vmatprep.subr.mxu0 0.0
  %13404 = vmatpush1.msra.mxu0 %v13332
  %13405 = vmatprep.subr.mxu0 0.0
  %13406 = vmatpush1.msra.mxu0 %v13333
  %13407 = vmatprep.subr.mxu0 0.0
  %13408 = vmatpush1.msra.mxu0 %v13334
  %13409 = vmatprep.subr.mxu0 0.0
  %13410 = vmatpush1.msra.mxu0 %v13335
  %13411 = vmatprep.subr.mxu0 0.0
  %13412 = vmatpush1.msra.mxu0 %v13336
  %13413 = vmatprep.subr.mxu0 0.0
  %13414 = vmatpush1.msra.mxu0 %v13337
  %13415 = vmatprep.subr.mxu0 0.0
  %13416 = vmatpush1.msra.mxu0 %v13338
  %13417 = vmatprep.subr.mxu0 0.0
  %13418 = vmatpush1.msra.mxu0 %v13339
  %13419 = vmatprep.subr.mxu0 0.0
  %13420 = vmatpush1.msra.mxu0 %v13340
  %13421 = vmatprep.subr.mxu0 0.0
  %13422 = vmatpush1.msra.mxu0 %v13341
  %13423 = vmatprep.subr.mxu0 0.0
  %13424 = vmatpush1.msra.mxu0 %v13342
  %13425 = vmatprep.subr.mxu0 0.0
  %13426 = vmatpush1.msra.mxu0 %v13343
  %13427 = vmatprep.subr.mxu0 0.0
  %13428 = vmatpush1.msra.mxu0 %v13344
  %13429 = vmatprep.subr.mxu0 0.0
  %13430 = vmatpush1.msra.mxu0 %v13345
  %13431 = vmatprep.subr.mxu0 0.0
  %13432 = vmatpush1.msra.mxu0 %v13346
  %13433 = vmatprep.subr.mxu0 0.0
  %13434 = vmatpush1.msra.mxu0 %v13347
  %13435 = vmatprep.subr.mxu0 0.0
  %13436 = vmatpush1.msra.mxu0 %v13348
  %13437 = vmatprep.subr.mxu0 0.0
  %13438 = vmatpush1.msra.mxu0 %v13349
  %13439 = vmatprep.subr.mxu0 0.0
  %13440 = vmatpush1.msra.mxu0 %v13350
  %13441 = vmatprep.subr.mxu0 0.0
  %13442 = vmatpush1.msra.mxu0 %v13351
  %13443 = vmatprep.subr.mxu0 0.0
  %13444 = vmatpush1.msra.mxu0 %v13352
  %13445 = vmatprep.subr.mxu0 0.0
  %13446 = vmatpush1.msra.mxu0 %v13353
  %13447 = vmatprep.subr.mxu0 0.0
  %13448 = vmatpush1.msra.mxu0 %v13354
  %13449 = vmatprep.mubr.f32.mxu0 %v13315
  %13450 = vmatmul.mubr.f32.gmra.mrb[0].mxu0 %v13314
  %v13451 = vpop.f32.mrb[0].mxu0
  %v13452 = vadd.f32 0.0, %v13451
  %v13453 = vpop.f32.mrb[0].mxu0
  %13454 = vmatprep.mubr.f32.mxu0 %v13319
  %13455 = vmatmul.mubr.f32.gmra.mrb[0].mxu0 %v13318
  %v13456 = vpop.f32.mrb[0].mxu0
  %v13457 = vadd.f32 0.0, %v13456
  %v13458 = vpop.f32.mrb[0].mxu0
  %13459 = vdwg.mxu0
  %13460 = vmatprep.subr.mxu0 0.0
  %13461 = vmatpush1.msra.mxu0 %v13355
  %13462 = vmatprep.subr.mxu0 0.0
  %13463 = vmatpush1.msra.mxu0 %v13356
  %13464 = vmatprep.subr.mxu0 0.0
  %13465 = vmatpush1.msra.mxu0 %v13357
  %13466 = vmatprep.subr.mxu0 0.0
  %13467 = vmatpush1.msra.mxu0 %v13358
  %13468 = vmatprep.subr.mxu0 0.0
  %13469 = vmatpush1.msra.mxu0 %v13359
  %13470 = vmatprep.subr.mxu0 0.0
  %13471 = vmatpush1.msra.mxu0 %v13360
  %13472 = vmatprep.subr.mxu0 0.0
  %13473 = vmatpush1.msra.mxu0 %v13361
  %13474 = vmatprep.subr.mxu0 0.0
  %13475 = vmatpush1.msra.mxu0 %v13362
  %13476 = vmatprep.subr.mxu0 0.0
  %13477 = vmatpush1.msra.mxu0 %v13363
  %13478 = vmatprep.subr.mxu0 0.0
  %13479 = vmatpush1.msra.mxu0 %v13364
  %13480 = vmatprep.subr.mxu0 0.0
  %13481 = vmatpush1.msra.mxu0 %v13365
  %13482 = vmatprep.subr.mxu0 0.0
  %13483 = vmatpush1.msra.mxu0 %v13366
  %13484 = vmatprep.subr.mxu0 0.0
  %13485 = vmatpush1.msra.mxu0 %v13367
  %13486 = vmatprep.subr.mxu0 0.0
  %13487 = vmatpush1.msra.mxu0 %v13368
  %13488 = vmatprep.subr.mxu0 0.0
  %13489 = vmatpush1.msra.mxu0 %v13369
  %13490 = vmatprep.subr.mxu0 0.0
  %13491 = vmatpush1.msra.mxu0 %v13370
  %13492 = vmatprep.subr.mxu0 0.0
  %13493 = vmatpush1.msra.mxu0 %v13371
  %13494 = vmatprep.subr.mxu0 0.0
  %13495 = vmatpush1.msra.mxu0 %v13372
  %13496 = vmatprep.subr.mxu0 0.0
  %13497 = vmatpush1.msra.mxu0 %v13373
  %13498 = vmatprep.subr.mxu0 0.0
  %13499 = vmatpush1.msra.mxu0 %v13374
  %13500 = vmatprep.subr.mxu0 0.0
  %13501 = vmatpush1.msra.mxu0 %v13375
  %13502 = vmatprep.subr.mxu0 0.0
  %13503 = vmatpush1.msra.mxu0 %v13376
  %13504 = vmatprep.subr.mxu0 0.0
  %13505 = vmatpush1.msra.mxu0 %v13377
  %13506 = vmatprep.subr.mxu0 0.0
  %13507 = vmatpush1.msra.mxu0 %v13378
  %13508 = vmatprep.subr.mxu0 0.0
  %13509 = vmatpush1.msra.mxu0 0.0
  %13510 = vmatprep.subr.mxu0 0.0
  %13511 = vmatpush1.msra.mxu0 0.0
  %13512 = vmatprep.subr.mxu0 0.0
  %13513 = vmatpush1.msra.mxu0 0.0
  %13514 = vmatprep.subr.mxu0 0.0
  %13515 = vmatpush1.msra.mxu0 0.0
  %13516 = vmatprep.subr.mxu0 0.0
  %13517 = vmatpush1.msra.mxu0 0.0
  %13518 = vmatprep.subr.mxu0 0.0
  %13519 = vmatpush1.msra.mxu0 0.0
  %13520 = vmatprep.subr.mxu0 0.0
  %13521 = vmatpush1.msra.mxu0 0.0
  %13522 = vmatprep.subr.mxu0 0.0
  %13523 = vmatpush1.msra.mxu0 0.0
  %13524 = vmatprep.mubr.f32.mxu0 %v13380
  %13525 = vmatmul.mubr.f32.gmra.mrb[0].mxu0 %v13316
  %v13526 = vpop.f32.mrb[0].mxu0
  %v13527 = vadd.f32 %v13452, %v13526
  %v13528 = vpop.f32.mrb[0].mxu0
  %13529 = vmatprep.mubr.f32.mxu0 %v13383
  %13530 = vmatmul.mubr.f32.gmra.mrb[0].mxu0 %v13320
  %v13531 = vpop.f32.mrb[0].mxu0
  %v13532 = vadd.f32 %v13457, %v13531
  %v13533 = vpop.f32.mrb[0].mxu0
  %13534 = vdwg.mxu0
  %v13535 = vadd.f32 %v13290, %v13527
  %v13536 = vadd.f32 %v13295, %v13532
  %v13537 = vmul.f32 %v11983, %v12796
  %v13538 = vmul.f32 %v11985, %v12800
  %v13539 = vmul.f32 %v12069, %v12804
  %v13540 = vmul.f32 %v12071, %v12808
  %v13541 = vmul.f32 %v11987, %v12796
  %v13542 = vmul.f32 %v11989, %v12800
  %v13543 = vmul.f32 %v12073, %v12804
  %v13544 = vmul.f32 %v12075, %v12808
  %v13545 = vadd.f32 %v13537, %v12820
  %v13546 = vadd.f32 %v13538, %v12824
  %v13547 = vadd.f32 %v13539, %v12828
  %v13548 = vadd.f32 %v13540, %v12832
  %v13549 = vadd.f32 %v13541, %v12820
  %v13550 = vadd.f32 %v13542, %v12824
  %v13551 = vadd.f32 %v13543, %v12828
  %v13552 = vadd.f32 %v13544, %v12832
  %v13553 = vmax.f32 %v13545, 0.0
  %v13554 = vmax.f32 %v13546, 0.0
  %v13555 = vmax.f32 %v13547, 0.0
  %v13556 = vmax.f32 %v13548, 0.0
  %v13557 = vmax.f32 %v13549, 0.0
  %v13558 = vmax.f32 %v13550, 0.0
  %v13559 = vmax.f32 %v13551, 0.0
  %v13560 = vmax.f32 %v13552, 0.0
  %s13561 = scalar_lea.vmem %s13, 1344
  %v13562 = vld [vmem:[%s13561] sm:$0xff]
  %v13563 = vld [vmem:[%s13561 + $0x8] sm:$0xff]
  %v13564 = vld [vmem:[%s13561 + $0x10] sm:$0xff]
  %v13565 = vld [vmem:[%s13561 + $0x18] sm:$0xff]
  %v13566 = vld [vmem:[%s13561 + $0x20] sm:$0xff]
  %v13567 = vld [vmem:[%s13561 + $0x28] sm:$0xff]
  %v13568 = vld [vmem:[%s13561 + $0x30] sm:$0xff]
  %v13569 = vld [vmem:[%s13561 + $0x38] sm:$0xff]
  %v13570 = vld [vmem:[%s13561 + $0x40] sm:$0xff]
  %v13571 = vld [vmem:[%s13561 + $0x48] sm:$0xff]
  %v13572 = vld [vmem:[%s13561 + $0x50] sm:$0xff]
  %v13573 = vld [vmem:[%s13561 + $0x58] sm:$0xff]
  %v13574 = vld [vmem:[%s13561 + $0x60] sm:$0xff]
  %v13575 = vld [vmem:[%s13561 + $0x68] sm:$0xff]
  %v13576 = vld [vmem:[%s13561 + $0x70] sm:$0xff]
  %v13577 = vld [vmem:[%s13561 + $0x78] sm:$0xff]
  %v13578 = vld [vmem:[%s13561 + $0x80] sm:$0xff]
  %v13579 = vld [vmem:[%s13561 + $0x88] sm:$0xff]
  %v13580 = vld [vmem:[%s13561 + $0x90] sm:$0xff]
  %v13581 = vld [vmem:[%s13561 + $0x98] sm:$0xff]
  %v13582 = vld [vmem:[%s13561 + $0xa0] sm:$0xff]
  %v13583 = vld [vmem:[%s13561 + $0xa8] sm:$0xff]
  %v13584 = vld [vmem:[%s13561 + $0xb0] sm:$0xff]
  %v13585 = vld [vmem:[%s13561 + $0xb8] sm:$0xff]
  %v13586 = vld [vmem:[%s13561 + $0xc0] sm:$0xff]
  %v13587 = vld [vmem:[%s13561 + $0xc8] sm:$0xff]
  %v13588 = vld [vmem:[%s13561 + $0xd0] sm:$0xff]
  %v13589 = vld [vmem:[%s13561 + $0xd8] sm:$0xff]
  %v13590 = vld [vmem:[%s13561 + $0xe0] sm:$0xff]
  %v13591 = vld [vmem:[%s13561 + $0xe8] sm:$0xff]
  %v13592 = vld [vmem:[%s13561 + $0xf0] sm:$0xff]
  %v13593 = vld [vmem:[%s13561 + $0xf8] sm:$0xff]
  %v13594 = vld [vmem:[%s13561 + $0x100] sm:$0xff]
  %v13595 = vld [vmem:[%s13561 + $0x108] sm:$0xff]
  %v13596 = vld [vmem:[%s13561 + $0x110] sm:$0xff]
  %v13597 = vld [vmem:[%s13561 + $0x118] sm:$0xff]
  %v13598 = vld [vmem:[%s13561 + $0x120] sm:$0xff]
  %v13599 = vld [vmem:[%s13561 + $0x128] sm:$0xff]
  %v13600 = vld [vmem:[%s13561 + $0x130] sm:$0xff]
  %v13601 = vld [vmem:[%s13561 + $0x138] sm:$0xff]
  %v13602 = vld [vmem:[%s13561 + $0x140] sm:$0xff]
  %v13603 = vld [vmem:[%s13561 + $0x148] sm:$0xff]
  %v13604 = vld [vmem:[%s13561 + $0x150] sm:$0xff]
  %v13605 = vld [vmem:[%s13561 + $0x158] sm:$0xff]
  %v13606 = vld [vmem:[%s13561 + $0x160] sm:$0xff]
  %v13607 = vld [vmem:[%s13561 + $0x168] sm:$0xff]
  %v13608 = vld [vmem:[%s13561 + $0x170] sm:$0xff]
  %v13609 = vld [vmem:[%s13561 + $0x178] sm:$0xff]
  %v13610 = vld [vmem:[%s13561 + $0x180] sm:$0xff]
  %v13611 = vld [vmem:[%s13561 + $0x188] sm:$0xff]
  %v13612 = vld [vmem:[%s13561 + $0x190] sm:$0xff]
  %v13613 = vld [vmem:[%s13561 + $0x198] sm:$0xff]
  %v13614 = vld [vmem:[%s13561 + $0x1a0] sm:$0xff]
  %v13615 = vld [vmem:[%s13561 + $0x1a8] sm:$0xff]
  %v13616 = vld [vmem:[%s13561 + $0x1b0] sm:$0xff]
  %v13617 = vld [vmem:[%s13561 + $0x1b8] sm:$0xff]
  %v13619 = vsel %vm52, %v13556, 0
  %v13622 = vsel %vm52, %v13560, 0
  %13624 = vmatprep.subr.mxu0 0.0
  %13625 = vmatpush1.msra.mxu0 %v13562
  %13626 = vmatprep.subr.mxu0 0.0
  %13627 = vmatpush1.msra.mxu0 %v13563
  %13628 = vmatprep.subr.mxu0 0.0
  %13629 = vmatpush1.msra.mxu0 %v13564
  %13630 = vmatprep.subr.mxu0 0.0
  %13631 = vmatpush1.msra.mxu0 %v13565
  %13632 = vmatprep.subr.mxu0 0.0
  %13633 = vmatpush1.msra.mxu0 %v13566
  %13634 = vmatprep.subr.mxu0 0.0
  %13635 = vmatpush1.msra.mxu0 %v13567
  %13636 = vmatprep.subr.mxu0 0.0
  %13637 = vmatpush1.msra.mxu0 %v13568
  %13638 = vmatprep.subr.mxu0 0.0
  %13639 = vmatpush1.msra.mxu0 %v13569
  %13640 = vmatprep.subr.mxu0 0.0
  %13641 = vmatpush1.msra.mxu0 %v13570
  %13642 = vmatprep.subr.mxu0 0.0
  %13643 = vmatpush1.msra.mxu0 %v13571
  %13644 = vmatprep.subr.mxu0 0.0
  %13645 = vmatpush1.msra.mxu0 %v13572
  %13646 = vmatprep.subr.mxu0 0.0
  %13647 = vmatpush1.msra.mxu0 %v13573
  %13648 = vmatprep.subr.mxu0 0.0
  %13649 = vmatpush1.msra.mxu0 %v13574
  %13650 = vmatprep.subr.mxu0 0.0
  %13651 = vmatpush1.msra.mxu0 %v13575
  %13652 = vmatprep.subr.mxu0 0.0
  %13653 = vmatpush1.msra.mxu0 %v13576
  %13654 = vmatprep.subr.mxu0 0.0
  %13655 = vmatpush1.msra.mxu0 %v13577
  %13656 = vmatprep.subr.mxu0 0.0
  %13657 = vmatpush1.msra.mxu0 %v13578
  %13658 = vmatprep.subr.mxu0 0.0
  %13659 = vmatpush1.msra.mxu0 %v13579
  %13660 = vmatprep.subr.mxu0 0.0
  %13661 = vmatpush1.msra.mxu0 %v13580
  %13662 = vmatprep.subr.mxu0 0.0
  %13663 = vmatpush1.msra.mxu0 %v13581
  %13664 = vmatprep.subr.mxu0 0.0
  %13665 = vmatpush1.msra.mxu0 %v13582
  %13666 = vmatprep.subr.mxu0 0.0
  %13667 = vmatpush1.msra.mxu0 %v13583
  %13668 = vmatprep.subr.mxu0 0.0
  %13669 = vmatpush1.msra.mxu0 %v13584
  %13670 = vmatprep.subr.mxu0 0.0
  %13671 = vmatpush1.msra.mxu0 %v13585
  %13672 = vmatprep.subr.mxu0 0.0
  %13673 = vmatpush1.msra.mxu0 %v13586
  %13674 = vmatprep.subr.mxu0 0.0
  %13675 = vmatpush1.msra.mxu0 %v13587
  %13676 = vmatprep.subr.mxu0 0.0
  %13677 = vmatpush1.msra.mxu0 %v13588
  %13678 = vmatprep.subr.mxu0 0.0
  %13679 = vmatpush1.msra.mxu0 %v13589
  %13680 = vmatprep.subr.mxu0 0.0
  %13681 = vmatpush1.msra.mxu0 %v13590
  %13682 = vmatprep.subr.mxu0 0.0
  %13683 = vmatpush1.msra.mxu0 %v13591
  %13684 = vmatprep.subr.mxu0 0.0
  %13685 = vmatpush1.msra.mxu0 %v13592
  %13686 = vmatprep.subr.mxu0 0.0
  %13687 = vmatpush1.msra.mxu0 %v13593
  %13688 = vmatprep.mubr.f32.mxu0 %v13554
  %13689 = vmatmul.mubr.f32.gmra.mrb[0].mxu0 %v13553
  %v13690 = vpop.f32.mrb[0].mxu0
  %v13691 = vadd.f32 0.0, %v13690
  %v13692 = vpop.f32.mrb[0].mxu0
  %13693 = vmatprep.mubr.f32.mxu0 %v13558
  %13694 = vmatmul.mubr.f32.gmra.mrb[0].mxu0 %v13557
  %v13695 = vpop.f32.mrb[0].mxu0
  %v13696 = vadd.f32 0.0, %v13695
  %v13697 = vpop.f32.mrb[0].mxu0
  %13698 = vdwg.mxu0
  %13699 = vmatprep.subr.mxu0 0.0
  %13700 = vmatpush1.msra.mxu0 %v13594
  %13701 = vmatprep.subr.mxu0 0.0
  %13702 = vmatpush1.msra.mxu0 %v13595
  %13703 = vmatprep.subr.mxu0 0.0
  %13704 = vmatpush1.msra.mxu0 %v13596
  %13705 = vmatprep.subr.mxu0 0.0
  %13706 = vmatpush1.msra.mxu0 %v13597
  %13707 = vmatprep.subr.mxu0 0.0
  %13708 = vmatpush1.msra.mxu0 %v13598
  %13709 = vmatprep.subr.mxu0 0.0
  %13710 = vmatpush1.msra.mxu0 %v13599
  %13711 = vmatprep.subr.mxu0 0.0
  %13712 = vmatpush1.msra.mxu0 %v13600
  %13713 = vmatprep.subr.mxu0 0.0
  %13714 = vmatpush1.msra.mxu0 %v13601
  %13715 = vmatprep.subr.mxu0 0.0
  %13716 = vmatpush1.msra.mxu0 %v13602
  %13717 = vmatprep.subr.mxu0 0.0
  %13718 = vmatpush1.msra.mxu0 %v13603
  %13719 = vmatprep.subr.mxu0 0.0
  %13720 = vmatpush1.msra.mxu0 %v13604
  %13721 = vmatprep.subr.mxu0 0.0
  %13722 = vmatpush1.msra.mxu0 %v13605
  %13723 = vmatprep.subr.mxu0 0.0
  %13724 = vmatpush1.msra.mxu0 %v13606
  %13725 = vmatprep.subr.mxu0 0.0
  %13726 = vmatpush1.msra.mxu0 %v13607
  %13727 = vmatprep.subr.mxu0 0.0
  %13728 = vmatpush1.msra.mxu0 %v13608
  %13729 = vmatprep.subr.mxu0 0.0
  %13730 = vmatpush1.msra.mxu0 %v13609
  %13731 = vmatprep.subr.mxu0 0.0
  %13732 = vmatpush1.msra.mxu0 %v13610
  %13733 = vmatprep.subr.mxu0 0.0
  %13734 = vmatpush1.msra.mxu0 %v13611
  %13735 = vmatprep.subr.mxu0 0.0
  %13736 = vmatpush1.msra.mxu0 %v13612
  %13737 = vmatprep.subr.mxu0 0.0
  %13738 = vmatpush1.msra.mxu0 %v13613
  %13739 = vmatprep.subr.mxu0 0.0
  %13740 = vmatpush1.msra.mxu0 %v13614
  %13741 = vmatprep.subr.mxu0 0.0
  %13742 = vmatpush1.msra.mxu0 %v13615
  %13743 = vmatprep.subr.mxu0 0.0
  %13744 = vmatpush1.msra.mxu0 %v13616
  %13745 = vmatprep.subr.mxu0 0.0
  %13746 = vmatpush1.msra.mxu0 %v13617
  %13747 = vmatprep.subr.mxu0 0.0
  %13748 = vmatpush1.msra.mxu0 0.0
  %13749 = vmatprep.subr.mxu0 0.0
  %13750 = vmatpush1.msra.mxu0 0.0
  %13751 = vmatprep.subr.mxu0 0.0
  %13752 = vmatpush1.msra.mxu0 0.0
  %13753 = vmatprep.subr.mxu0 0.0
  %13754 = vmatpush1.msra.mxu0 0.0
  %13755 = vmatprep.subr.mxu0 0.0
  %13756 = vmatpush1.msra.mxu0 0.0
  %13757 = vmatprep.subr.mxu0 0.0
  %13758 = vmatpush1.msra.mxu0 0.0
  %13759 = vmatprep.subr.mxu0 0.0
  %13760 = vmatpush1.msra.mxu0 0.0
  %13761 = vmatprep.subr.mxu0 0.0
  %13762 = vmatpush1.msra.mxu0 0.0
  %13763 = vmatprep.mubr.f32.mxu0 %v13619
  %13764 = vmatmul.mubr.f32.gmra.mrb[0].mxu0 %v13555
  %v13765 = vpop.f32.mrb[0].mxu0
  %v13766 = vadd.f32 %v13691, %v13765
  %v13767 = vpop.f32.mrb[0].mxu0
  %13768 = vmatprep.mubr.f32.mxu0 %v13622
  %13769 = vmatmul.mubr.f32.gmra.mrb[0].mxu0 %v13559
  %v13770 = vpop.f32.mrb[0].mxu0
  %v13771 = vadd.f32 %v13696, %v13770
  %v13772 = vpop.f32.mrb[0].mxu0
  %13773 = vdwg.mxu0
  %v13774 = vadd.f32 %v13535, %v13766
  %v13775 = vadd.f32 %v13536, %v13771
  %v13776 = vtanh.pop %v13774
  %v13777 = vtanh.pop %v13775
  %vm13778 = vcmask 916480
  %13779 = vst.msk [vmem:[%s14] sm:$0xff] %vm13778, %v13776
  %vm13780 = vcmask 914432
  %13781 = vst.msk [vmem:[%s14 + $0x8] sm:$0x3f] %vm13780, %v13777
  // Predicated region
  $region58: #{generator_forward.1} parent=0 // pred_check
    _
  $region59: #{generator_forward.1} parent=0 // pred_check_branch
    %13783 = sbr.rel (0) target = $region61
  $region60: #{generator_forward.1} parent=0 // pred_region
    _
  $region61: #{generator_forward.1} parent=0 // pred_fallthru
    _
  // Predicated region
  $region62: #{generator_forward.1} parent=0 // pred_check
    _
  $region63: #{generator_forward.1} parent=0 // pred_check_branch
    %13785 = sbr.rel (0) target = $region65
  $region64: #{generator_forward.1} parent=0 // pred_region
    _
  $region65: #{generator_forward.1} parent=0 // pred_fallthru
    _

</llo_original>
